<compile_context>
chip_gen: v6e
topology: v6e:2x2x1
jax: 0.10.0
libtpu: 0.0.40
codegen_flags: <defaults>
</compile_context>

<pallas_src>
import functools

import numpy as np
import jax
import jax.numpy as jnp
from jax import lax
from jax.experimental import pallas as pl
from jax.experimental.pallas import tpu as pltpu


# -----------------------------------------------------------------------------
# Fused forward kernel: one grid step == one batch element.
# -----------------------------------------------------------------------------
def _lstm_model_kernel(xe_ref, xo_ref, w1_ref, b1_ref, w2_ref, b2_ref,
                       wp_ref, bp_ref, whh1_ref, wl2_ref, bl2_ref,
                       fc1w_ref, fc1b_ref, fc2w_ref, fc2b_ref, o_ref,
                       a1_ref, a2_ref, *, T, H, W, C1, C2, H1, H2):
    Wp = W + 2
    Hh, Wh = H // 2, W // 2
    Hq = H // 4
    L1 = W * C1               # conv1 lane width per H-parity (x-major, c-minor)
    P1L = L1 - C1             # pool1 lane width (uncompacted; odd blocks junk)
    L2 = Wh * C2              # conv2 lane width
    P2L = L2 - C2             # pool2 lane width (uncompacted)

    xe = xe_ref[0]            # (T, Hh, W)  even image rows
    xo = xo_ref[0]            # (T, Hh, W)  odd image rows

    # ---- conv1 + ReLU: row-wise im2col (both H-parities per row) -> 1 matmul
    # a1[t*Hh + y2, q*Wp + j] = zero-padded image[t, 2*y2 + q, j], q = 0..3
    a1_ref[...] = jnp.zeros_like(a1_ref)
    for t in range(T):
        r0 = t * Hh
        xe_t, xo_t = xe[t], xo[t]
        a1_ref[r0 + 1:r0 + Hh, 0 * Wp + 1:0 * Wp + 1 + W] = xo_t[0:Hh - 1, :]
        a1_ref[r0:r0 + Hh, 1 * Wp + 1:1 * Wp + 1 + W] = xe_t
        a1_ref[r0:r0 + Hh, 2 * Wp + 1:2 * Wp + 1 + W] = xo_t
        a1_ref[r0:r0 + Hh - 1, 3 * Wp + 1:3 * Wp + 1 + W] = xe_t[1:Hh, :]
    h1 = jnp.dot(a1_ref[...].astype(jnp.bfloat16), w1_ref[...],
                 preferred_element_type=jnp.float32)
    h1 = jnp.maximum(h1 + b1_ref[...], 0.0)          # (T*Hh, 2*L1)

    # ---- maxpool1 2x2/2: H-pairs and W-pairs are both lane slices -----------
    vh1 = jnp.maximum(h1[:, :L1], h1[:, L1:])        # H-direction pairs
    m1 = jnp.maximum(vh1[:, :P1L], vh1[:, C1:])      # W-direction pairs
    # m1[t*Hh + y2, 2*x2*C1 + c] = pool1[t, y2, x2, c]; odd C1-blocks hold
    # finite junk that only meets all-zero rows of w2_ref below.

    # ---- conv2 + ReLU: row-wise im2col over pool1 rows -----------------------
    a2_ref[...] = jnp.zeros_like(a2_ref)
    for t in range(T):
        r0 = t * Hh
        a2_ref[r0 + 1:r0 + Hh, 0 * P1L:1 * P1L] = m1[r0:r0 + Hh - 1, :]
        a2_ref[r0:r0 + Hh, 1 * P1L:2 * P1L] = m1[r0:r0 + Hh, :]
        a2_ref[r0:r0 + Hh - 1, 2 * P1L:3 * P1L] = m1[r0 + 1:r0 + Hh, :]
    h2 = jnp.dot(a2_ref[...].astype(jnp.bfloat16), w2_ref[...],
                 preferred_element_type=jnp.float32)
    h2 = jnp.maximum(h2 + b2_ref[...], 0.0)          # (T*Hh, L2)

    # ---- maxpool2 (W-pairs in lanes) + LSTM1 input projection ---------------
    vw2 = jnp.maximum(h2[:, :P2L], h2[:, C2:])       # (T*Hh, P2L)
    bp = bp_ref[...]                                 # (1, 4*H1)
    pre = [bp] * T
    for y4 in range(Hq):
        wslab = wp_ref[y4]                           # (P2L, 4*H1) bf16
        for t in range(T):
            r = t * Hh + 2 * y4
            m2row = jnp.maximum(vw2[r:r + 1, :], vw2[r + 1:r + 2, :])
            pre[t] = pre[t] + jnp.dot(m2row.astype(jnp.bfloat16), wslab,
                                      preferred_element_type=jnp.float32)

    # ---- LSTM1 -> LSTM2 recurrence (PyTorch gate order i, f, g, o) ----------
    def cell(gates, c, hs):
        i = jax.nn.sigmoid(gates[:, 0 * hs:1 * hs])
        f = jax.nn.sigmoid(gates[:, 1 * hs:2 * hs])
        g = jnp.tanh(gates[:, 2 * hs:3 * hs])
        o = jax.nn.sigmoid(gates[:, 3 * hs:4 * hs])
        c_new = f * c + i * g
        return o * jnp.tanh(c_new), c_new

    whh1 = whh1_ref[...]
    wl2 = wl2_ref[...]
    bl2 = bl2_ref[...]
    h1v = jnp.zeros((1, H1), jnp.float32)
    c1v = jnp.zeros((1, H1), jnp.float32)
    h2v = jnp.zeros((1, H2), jnp.float32)
    c2v = jnp.zeros((1, H2), jnp.float32)
    for t in range(T):                               # static unroll (T small)
        g1 = pre[t] + jnp.dot(h1v, whh1, preferred_element_type=jnp.float32)
        h1v, c1v = cell(g1, c1v, H1)
        hcat = jnp.concatenate([h1v, h2v], axis=1)   # fused layer-2 matmul
        g2 = jnp.dot(hcat, wl2, preferred_element_type=jnp.float32) + bl2
        h2v, c2v = cell(g2, c2v, H2)

    # ---- FC head (output lane-padded to 128) ---------------------------------
    d = jnp.maximum(jnp.dot(h2v, fc1w_ref[...],
                            preferred_element_type=jnp.float32) + fc1b_ref[...],
                    0.0)
    o_ref[0] = jnp.dot(d, fc2w_ref[...],
                       preferred_element_type=jnp.float32) + fc2b_ref[...]


# -----------------------------------------------------------------------------
# Wrapper: one pallas_call for the whole model.
# -----------------------------------------------------------------------------
def lstm_model_forward(x, prep, *, n_future):
    """x: (B, T, H, W, 1) float32 -> (B, n_future) float32."""
    B, T, H, W, Cin = x.shape
    assert Cin == 1, "CNNFeatureExtractor expects a single input channel"
    assert H % 4 == 0 and W % 4 == 0

    xs = x[..., 0].reshape(B, T, H // 2, 2, W)
    x_even = xs[:, :, :, 0, :]                       # even image rows
    x_odd = xs[:, :, :, 1, :]                        # odd image rows

    w1big, b1big = prep["w1big"], prep["b1big"]
    w2big, b2big = prep["w2big"], prep["b2big"]
    wproj, bproj = prep["wproj"], prep["bproj"]
    whh1_t, wl2, bl2 = prep["whh1_t"], prep["wl2"], prep["bl2"]
    fc1_t, fc1_b = prep["fc1_t"], prep["fc1_b"]
    fc2_t, fc2_b = prep["fc2_t"], prep["fc2_b"]

    C1 = b1big.shape[1] // (2 * W)
    C2 = b2big.shape[1] // (W // 2)
    H1 = whh1_t.shape[0]
    H2 = wl2.shape[0] - H1
    NPAD = fc2_t.shape[1]
    Hh = H // 2
    P1L = (W - 1) * C1

    def full(a):
        n = len(a.shape)
        return pl.BlockSpec(a.shape, lambda b: (0,) * n)

    kernel = functools.partial(_lstm_model_kernel, T=T, H=H, W=W,
                               C1=C1, C2=C2, H1=H1, H2=H2)
    out = pl.pallas_call(
        kernel,
        out_shape=jax.ShapeDtypeStruct((B, 1, NPAD), jnp.float32),
        grid=(B,),
        in_specs=[
            pl.BlockSpec((1, T, Hh, W), lambda b: (b, 0, 0, 0)),
            pl.BlockSpec((1, T, Hh, W), lambda b: (b, 0, 0, 0)),
            full(w1big), full(b1big), full(w2big), full(b2big),
            full(wproj), full(bproj), full(whh1_t), full(wl2), full(bl2),
            full(fc1_t), full(fc1_b), full(fc2_t), full(fc2_b),
        ],
        out_specs=pl.BlockSpec((1, 1, NPAD), lambda b: (b, 0, 0)),
        scratch_shapes=[
            pltpu.VMEM((T * Hh, 4 * (W + 2)), jnp.float32),   # conv1 im2col
            pltpu.VMEM((T * Hh, 3 * P1L), jnp.float32),       # conv2 im2col
        ],
        compiler_params=pltpu.CompilerParams(
            dimension_semantics=("parallel",)),
    )(x_even, x_odd, w1big, b1big, w2big, b2big, wproj, bproj,
      whh1_t, wl2, bl2, fc1_t, fc1_b, fc2_t, fc2_b)
    return out.reshape(B, NPAD)[:, :n_future]


# -----------------------------------------------------------------------------
# One-time weight packing (outside jit): conv weights expanded into the
# row-wise-im2col matrices with padding / pool compaction / NCHW-flatten
# permutation folded in; big operands pre-cast to bf16; FC2 lane-padded.
# -----------------------------------------------------------------------------
def prepare_params(params, *, img_h, img_w):
    H, W = img_h, img_w
    C1 = params["conv1_w"].shape[0]
    C2 = params["conv2_w"].shape[0]
    H1 = params["w_hh1"].shape[1]
    DH = params["fc1_w"].shape[0]
    NF = params["fc2_w"].shape[0]
    Wp = W + 2
    Wh = W // 2
    Hq, Wq = H // 4, W // 4
    L1, P1L = W * C1, (W - 1) * C1
    L2, P2L = Wh * C2, (Wh - 1) * C2
    NPAD = ((max(NF, 1) + 127) // 128) * 128

    # conv1: (4*Wp, 2*L1); output lanes = (H-parity, x, c).
    w1 = np.asarray(params["conv1_w"], np.float32)            # (C1, 1, 3, 3)
    w1big = np.zeros((4 * Wp, 2 * L1), np.float32)
    for r1 in range(2):
        for ky in range(3):
            q = ky + r1
            for kx in range(3):
                col = w1[:, 0, ky, kx]
                for xc in range(W):
                    w1big[q * Wp + xc + kx,
                          r1 * L1 + xc * C1:r1 * L1 + (xc + 1) * C1] = col
    b1big = np.tile(np.asarray(params["conv1_b"], np.float32), 2 * W)[None, :]

    # conv2: (3*P1L, L2); pool1 compaction + 'same' column padding = zero rows.
    w2 = np.asarray(params["conv2_w"], np.float32)            # (C2, C1, 3, 3)
    w2big = np.zeros((3 * P1L, L2), np.float32)
    for ky in range(3):
        for kx in range(3):
            blk = w2[:, :, ky, kx].T                          # (C1, C2)
            for xc in range(Wh):
                xin = xc + kx - 1
                if 0 <= xin < Wh:
                    r0 = ky * P1L + 2 * xin * C1
                    w2big[r0:r0 + C1, xc * C2:(xc + 1) * C2] = blk
    b2big = np.tile(np.asarray(params["conv2_b"], np.float32), Wh)[None, :]

    # LSTM1 input projection: one (P2L, 4*H1) slab per pooled output row y4.
    wih1 = np.asarray(params["w_ih1"], np.float32)            # (4H1, C2*Hq*Wq)
    perm = np.transpose(wih1.reshape(4 * H1, C2, Hq, Wq), (2, 3, 1, 0))
    wproj = np.zeros((Hq, Wh - 1, C2, 4 * H1), np.float32)
    wproj[:, 0::2, :, :] = perm
    wproj = wproj.reshape(Hq, P2L, 4 * H1)

    wl2 = np.concatenate([np.asarray(params["w_ih2"], np.float32).T,
                          np.asarray(params["w_hh2"], np.float32).T], axis=0)

    fc2_t = np.zeros((DH, NPAD), np.float32)
    fc2_t[:, :NF] = np.asarray(params["fc2_w"], np.float32).T
    fc2_b = np.zeros((1, NPAD), np.float32)
    fc2_b[0, :NF] = np.asarray(params["fc2_b"], np.float32)

    return {
        "w1big": jnp.asarray(w1big, jnp.bfloat16),
        "b1big": jnp.asarray(b1big),
        "w2big": jnp.asarray(w2big, jnp.bfloat16),
        "b2big": jnp.asarray(b2big),
        "wproj": jnp.asarray(wproj, jnp.bfloat16),
        "bproj": jnp.asarray(np.asarray(params["b_ih1"], np.float32)[None, :]
                             + np.asarray(params["b_hh1"], np.float32)[None, :]),
        "whh1_t": jnp.asarray(np.asarray(params["w_hh1"], np.float32).T),
        "wl2": jnp.asarray(wl2),
        "bl2": jnp.asarray(np.asarray(params["b_ih2"], np.float32)[None, :]
                           + np.asarray(params["b_hh2"], np.float32)[None, :]),
        "fc1_t": jnp.asarray(np.asarray(params["fc1_w"], np.float32).T),
        "fc1_b": jnp.asarray(np.asarray(params["fc1_b"], np.float32)[None, :]),
        "fc2_t": jnp.asarray(fc2_t),
        "fc2_b": jnp.asarray(fc2_b),
    }


# -----------------------------------------------------------------------------
# Pure-JAX reference (same bf16 operand rounding as the kernel's big matmuls).
# -----------------------------------------------------------------------------
def reference_forward(x, params):
    B, T, H, W, Cin = x.shape
    bf = lambda a: a.astype(jnp.bfloat16).astype(jnp.float32)
    dn = ("NHWC", "HWIO", "NHWC")

    imgs = bf(x.reshape(B * T, H, W, Cin))
    w1 = bf(jnp.transpose(params["conv1_w"], (2, 3, 1, 0)))
    y = lax.conv_general_dilated(imgs, w1, (1, 1), "SAME", dimension_numbers=dn)
    y = jnp.maximum(y + params["conv1_b"], 0.0)
    y = lax.reduce_window(y, -jnp.inf, lax.max, (1, 2, 2, 1), (1, 2, 2, 1), "VALID")

    w2 = bf(jnp.transpose(params["conv2_w"], (2, 3, 1, 0)))
    y = lax.conv_general_dilated(bf(y), w2, (1, 1), "SAME", dimension_numbers=dn)
    y = jnp.maximum(y + params["conv2_b"], 0.0)
    y = lax.reduce_window(y, -jnp.inf, lax.max, (1, 2, 2, 1), (1, 2, 2, 1), "VALID")

    feats = bf(jnp.transpose(y, (0, 3, 1, 2)).reshape(B, T, -1))  # NCHW flatten

    def run_lstm(seq, w_ih, w_hh, b_ih, b_hh, cast_in):
        hs = w_hh.shape[1]
        wi = bf(w_ih) if cast_in else w_ih

        def step(carry, xt):
            h, c = carry
            g = xt @ wi.T + b_ih + h @ w_hh.T + b_hh
            i = jax.nn.sigmoid(g[:, 0 * hs:1 * hs])
            f = jax.nn.sigmoid(g[:, 1 * hs:2 * hs])
            gg = jnp.tanh(g[:, 2 * hs:3 * hs])
            o = jax.nn.sigmoid(g[:, 3 * hs:4 * hs])
            c = f * c + i * gg
            h = o * jnp.tanh(c)
            return (h, c), h

        init = (jnp.zeros((seq.shape[0], hs), jnp.float32),
                jnp.zeros((seq.shape[0], hs), jnp.float32))
        _, ys = lax.scan(step, init, jnp.swapaxes(seq, 0, 1))
        return jnp.swapaxes(ys, 0, 1)

    out1 = run_lstm(feats, params["w_ih1"], params["w_hh1"],
                    params["b_ih1"], params["b_hh1"], True)
    out2 = run_lstm(out1, params["w_ih2"], params["w_hh2"],
                    params["b_ih2"], params["b_hh2"], False)
    last = out2[:, -1, :]
    d = jnp.maximum(last @ params["fc1_w"].T + params["fc1_b"], 0.0)
    return d @ params["fc2_w"].T + params["fc2_b"]


# -----------------------------------------------------------------------------
# Deterministic synthetic parameters (same layout as the torch module).
# -----------------------------------------------------------------------------
def init_params(key, *, img_hw, lstm_hidden, dense_hidden, n_future):
    cnn_out = (img_hw // 4) * (img_hw // 4) * 64
    h1, h2 = lstm_hidden, lstm_hidden // 2
    keys = jax.random.split(key, 16)
    s = 0.05

    def rnd(k, shape):
        return s * jax.random.normal(k, shape, jnp.float32)

    return {
        "conv1_w": rnd(keys[0], (32, 1, 3, 3)),
        "conv1_b": rnd(keys[1], (32,)),
        "conv2_w": rnd(keys[2], (64, 32, 3, 3)),
        "conv2_b": rnd(keys[3], (64,)),
        "w_ih1": rnd(keys[4], (4 * h1, cnn_out)),
        "w_hh1": rnd(keys[5], (4 * h1, h1)),
        "b_ih1": rnd(keys[6], (4 * h1,)),
        "b_hh1": rnd(keys[7], (4 * h1,)),
        "w_ih2": rnd(keys[8], (4 * h2, h1)),
        "w_hh2": rnd(keys[9], (4 * h2, h2)),
        "b_ih2": rnd(keys[10], (4 * h2,)),
        "b_hh2": rnd(keys[11], (4 * h2,)),
        "fc1_w": rnd(keys[12], (dense_hidden, h2)),
        "fc1_b": rnd(keys[13], (dense_hidden,)),
        "fc2_w": rnd(keys[14], (n_future, dense_hidden)),
        "fc2_b": rnd(keys[15], (n_future,)),
    }


if __name__ == "__main__":
    B, T, HW, CIN = 2, 4, 16, 1
    LSTM_HIDDEN, DENSE_HIDDEN, N_FUTURE = 32, 32, 1

    key = jax.random.PRNGKey(0)
    pkey, xkey = jax.random.split(key)
    params = init_params(pkey, img_hw=HW, lstm_hidden=LSTM_HIDDEN,
                         dense_hidden=DENSE_HIDDEN, n_future=N_FUTURE)
    prep = prepare_params(params, img_h=HW, img_w=HW)   # one-time, outside jit
    x = jax.random.normal(xkey, (B, T, HW, HW, CIN), jnp.float32)

    fwd = jax.jit(functools.partial(lstm_model_forward, n_future=N_FUTURE))
    out = jax.block_until_ready(fwd(x, prep))
    assert out.shape == (B, N_FUTURE), out.shape
    assert bool(jnp.all(jnp.isfinite(out)))

    ref = jax.block_until_ready(jax.jit(reference_forward)(x, params))
    max_diff = float(jnp.max(jnp.abs(out - ref)))
    tol = 2e-3 + 5e-3 * float(jnp.max(jnp.abs(ref)))
    assert max_diff < tol, (max_diff, tol)

    print("KERNEL_OK")
</pallas_src>

<mosaic_0001>
module attributes {stable_mosaic.version = 11 : i64} {
  func.func @_lstm_model_kernel(%arg0: i32, %arg1: memref<1x4x8x16xf32, #tpu.memory_space<vmem>>, %arg2: memref<1x4x8x16xf32, #tpu.memory_space<vmem>>, %arg3: memref<72x1024xbf16, #tpu.memory_space<vmem>>, %arg4: memref<1x1024xf32, #tpu.memory_space<vmem>>, %arg5: memref<1440x512xbf16, #tpu.memory_space<vmem>>, %arg6: memref<1x512xf32, #tpu.memory_space<vmem>>, %arg7: memref<4x448x128xbf16, #tpu.memory_space<vmem>>, %arg8: memref<1x128xf32, #tpu.memory_space<vmem>>, %arg9: memref<32x128xf32, #tpu.memory_space<vmem>>, %arg10: memref<48x64xf32, #tpu.memory_space<vmem>>, %arg11: memref<1x64xf32, #tpu.memory_space<vmem>>, %arg12: memref<16x32xf32, #tpu.memory_space<vmem>>, %arg13: memref<1x32xf32, #tpu.memory_space<vmem>>, %arg14: memref<32x128xf32, #tpu.memory_space<vmem>>, %arg15: memref<1x128xf32, #tpu.memory_space<vmem>>, %arg16: memref<1x1x128xf32, #tpu.memory_space<vmem>>, %arg17: memref<32x72xf32, #tpu.memory_space<vmem>>, %arg18: memref<32x1440xf32, #tpu.memory_space<vmem>>) attributes {dimension_semantics = [#tpu.dimension_semantics<parallel>], iteration_bounds = array<i64: 2>, scalar_prefetch = 0 : i64, scratch_operands = 2 : i64, tpu.core_type = #tpu.core_type<tc>, window_params = [{transform_indices = @transform_0, window_bounds = array<i64: 1, 4, 8, 16>}, {transform_indices = @transform_1, window_bounds = array<i64: 1, 4, 8, 16>}, {pipeline_mode = #tpu.pipeline_mode<synchronous>, transform_indices = @transform_2, window_bounds = array<i64: 72, 1024>}, {pipeline_mode = #tpu.pipeline_mode<synchronous>, transform_indices = @transform_3, window_bounds = array<i64: 1, 1024>}, {pipeline_mode = #tpu.pipeline_mode<synchronous>, transform_indices = @transform_4, window_bounds = array<i64: 1440, 512>}, {pipeline_mode = #tpu.pipeline_mode<synchronous>, transform_indices = @transform_5, window_bounds = array<i64: 1, 512>}, {pipeline_mode = #tpu.pipeline_mode<synchronous>, transform_indices = @transform_6, window_bounds = array<i64: 4, 448, 128>}, {pipeline_mode = #tpu.pipeline_mode<synchronous>, transform_indices = @transform_7, window_bounds = array<i64: 1, 128>}, {pipeline_mode = #tpu.pipeline_mode<synchronous>, transform_indices = @transform_8, window_bounds = array<i64: 32, 128>}, {pipeline_mode = #tpu.pipeline_mode<synchronous>, transform_indices = @transform_9, window_bounds = array<i64: 48, 64>}, {pipeline_mode = #tpu.pipeline_mode<synchronous>, transform_indices = @transform_10, window_bounds = array<i64: 1, 64>}, {pipeline_mode = #tpu.pipeline_mode<synchronous>, transform_indices = @transform_11, window_bounds = array<i64: 16, 32>}, {pipeline_mode = #tpu.pipeline_mode<synchronous>, transform_indices = @transform_12, window_bounds = array<i64: 1, 32>}, {pipeline_mode = #tpu.pipeline_mode<synchronous>, transform_indices = @transform_13, window_bounds = array<i64: 32, 128>}, {pipeline_mode = #tpu.pipeline_mode<synchronous>, transform_indices = @transform_14, window_bounds = array<i64: 1, 128>}, {transform_indices = @transform_15, window_bounds = array<i64: 1, 1, 128>}]} {
    %c0 = arith.constant 0 : index
    %c0_0 = arith.constant 0 : index
    %c0_1 = arith.constant 0 : index
    %c0_2 = arith.constant 0 : index
    %0 = vector.load %arg1[%c0, %c0_0, %c0_1, %c0_2] : memref<1x4x8x16xf32, #tpu.memory_space<vmem>>, vector<1x4x8x16xf32>
    %1 = vector.shape_cast %0 : vector<1x4x8x16xf32> to vector<4x8x16xf32>
    %c0_3 = arith.constant 0 : index
    %c0_4 = arith.constant 0 : index
    %c0_5 = arith.constant 0 : index
    %c0_6 = arith.constant 0 : index
    %2 = vector.load %arg2[%c0_3, %c0_4, %c0_5, %c0_6] : memref<1x4x8x16xf32, #tpu.memory_space<vmem>>, vector<1x4x8x16xf32>
    %3 = vector.shape_cast %2 : vector<1x4x8x16xf32> to vector<4x8x16xf32>
    %cst = arith.constant 0.000000e+00 : f32
    %4 = vector.broadcast %cst : f32 to vector<32x72xf32>
    %c0_7 = arith.constant 0 : index
    %c0_8 = arith.constant 0 : index
    %5 = vector.load %arg17[%c0_7, %c0_8] : memref<32x72xf32, #tpu.memory_space<vmem>>, vector<32x72xf32>
    tpu.vector_store %arg17[%c0_7, %c0_8], %4 {strides = array<i32>} : memref<32x72xf32, #tpu.memory_space<vmem>>, vector<32x72xf32>,
    %6 = vector.extract_strided_slice %1 {offsets = [0, 0, 0], sizes = [1, 8, 16], strides = [1, 1, 1]} : vector<4x8x16xf32> to vector<1x8x16xf32>
    %7 = vector.shape_cast %6 : vector<1x8x16xf32> to vector<8x16xf32>
    %8 = vector.extract_strided_slice %3 {offsets = [0, 0, 0], sizes = [1, 8, 16], strides = [1, 1, 1]} : vector<4x8x16xf32> to vector<1x8x16xf32>
    %9 = vector.shape_cast %8 : vector<1x8x16xf32> to vector<8x16xf32>
    %10 = vector.extract_strided_slice %9 {offsets = [0, 0], sizes = [7, 16], strides = [1, 1]} : vector<8x16xf32> to vector<7x16xf32>
    %c1 = arith.constant 1 : index
    %c1_9 = arith.constant 1 : index
    %11 = vector.load %arg17[%c1, %c1_9] : memref<32x72xf32, #tpu.memory_space<vmem>>, vector<7x16xf32>
    tpu.vector_store %arg17[%c1, %c1_9], %10 {strides = array<i32>} : memref<32x72xf32, #tpu.memory_space<vmem>>, vector<7x16xf32>,
    %c0_10 = arith.constant 0 : index
    %c19 = arith.constant 19 : index
    %12 = vector.load %arg17[%c0_10, %c19] : memref<32x72xf32, #tpu.memory_space<vmem>>, vector<8x16xf32>
    tpu.vector_store %arg17[%c0_10, %c19], %7 {strides = array<i32>} : memref<32x72xf32, #tpu.memory_space<vmem>>, vector<8x16xf32>,
    %c0_11 = arith.constant 0 : index
    %c37 = arith.constant 37 : index
    %13 = vector.load %arg17[%c0_11, %c37] : memref<32x72xf32, #tpu.memory_space<vmem>>, vector<8x16xf32>
    tpu.vector_store %arg17[%c0_11, %c37], %9 {strides = array<i32>} : memref<32x72xf32, #tpu.memory_space<vmem>>, vector<8x16xf32>,
    %14 = vector.extract_strided_slice %7 {offsets = [1, 0], sizes = [7, 16], strides = [1, 1]} : vector<8x16xf32> to vector<7x16xf32>
    %c0_12 = arith.constant 0 : index
    %c55 = arith.constant 55 : index
    %15 = vector.load %arg17[%c0_12, %c55] : memref<32x72xf32, #tpu.memory_space<vmem>>, vector<7x16xf32>
    tpu.vector_store %arg17[%c0_12, %c55], %14 {strides = array<i32>} : memref<32x72xf32, #tpu.memory_space<vmem>>, vector<7x16xf32>,
    %16 = vector.extract_strided_slice %1 {offsets = [1, 0, 0], sizes = [1, 8, 16], strides = [1, 1, 1]} : vector<4x8x16xf32> to vector<1x8x16xf32>
    %17 = vector.shape_cast %16 : vector<1x8x16xf32> to vector<8x16xf32>
    %18 = vector.extract_strided_slice %3 {offsets = [1, 0, 0], sizes = [1, 8, 16], strides = [1, 1, 1]} : vector<4x8x16xf32> to vector<1x8x16xf32>
    %19 = vector.shape_cast %18 : vector<1x8x16xf32> to vector<8x16xf32>
    %20 = vector.extract_strided_slice %19 {offsets = [0, 0], sizes = [7, 16], strides = [1, 1]} : vector<8x16xf32> to vector<7x16xf32>
    %c9 = arith.constant 9 : index
    %c1_13 = arith.constant 1 : index
    %21 = vector.load %arg17[%c9, %c1_13] : memref<32x72xf32, #tpu.memory_space<vmem>>, vector<7x16xf32>
    tpu.vector_store %arg17[%c9, %c1_13], %20 {strides = array<i32>} : memref<32x72xf32, #tpu.memory_space<vmem>>, vector<7x16xf32>,
    %c8 = arith.constant 8 : index
    %c19_14 = arith.constant 19 : index
    %22 = vector.load %arg17[%c8, %c19_14] : memref<32x72xf32, #tpu.memory_space<vmem>>, vector<8x16xf32>
    tpu.vector_store %arg17[%c8, %c19_14], %17 {strides = array<i32>} : memref<32x72xf32, #tpu.memory_space<vmem>>, vector<8x16xf32>,
    %c8_15 = arith.constant 8 : index
    %c37_16 = arith.constant 37 : index
    %23 = vector.load %arg17[%c8_15, %c37_16] : memref<32x72xf32, #tpu.memory_space<vmem>>, vector<8x16xf32>
    tpu.vector_store %arg17[%c8_15, %c37_16], %19 {strides = array<i32>} : memref<32x72xf32, #tpu.memory_space<vmem>>, vector<8x16xf32>,
    %24 = vector.extract_strided_slice %17 {offsets = [1, 0], sizes = [7, 16], strides = [1, 1]} : vector<8x16xf32> to vector<7x16xf32>
    %c8_17 = arith.constant 8 : index
    %c55_18 = arith.constant 55 : index
    %25 = vector.load %arg17[%c8_17, %c55_18] : memref<32x72xf32, #tpu.memory_space<vmem>>, vector<7x16xf32>
    tpu.vector_store %arg17[%c8_17, %c55_18], %24 {strides = array<i32>} : memref<32x72xf32, #tpu.memory_space<vmem>>, vector<7x16xf32>,
    %26 = vector.extract_strided_slice %1 {offsets = [2, 0, 0], sizes = [1, 8, 16], strides = [1, 1, 1]} : vector<4x8x16xf32> to vector<1x8x16xf32>
    %27 = vector.shape_cast %26 : vector<1x8x16xf32> to vector<8x16xf32>
    %28 = vector.extract_strided_slice %3 {offsets = [2, 0, 0], sizes = [1, 8, 16], strides = [1, 1, 1]} : vector<4x8x16xf32> to vector<1x8x16xf32>
    %29 = vector.shape_cast %28 : vector<1x8x16xf32> to vector<8x16xf32>
    %30 = vector.extract_strided_slice %29 {offsets = [0, 0], sizes = [7, 16], strides = [1, 1]} : vector<8x16xf32> to vector<7x16xf32>
    %c17 = arith.constant 17 : index
    %c1_19 = arith.constant 1 : index
    %31 = vector.load %arg17[%c17, %c1_19] : memref<32x72xf32, #tpu.memory_space<vmem>>, vector<7x16xf32>
    tpu.vector_store %arg17[%c17, %c1_19], %30 {strides = array<i32>} : memref<32x72xf32, #tpu.memory_space<vmem>>, vector<7x16xf32>,
    %c16 = arith.constant 16 : index
    %c19_20 = arith.constant 19 : index
    %32 = vector.load %arg17[%c16, %c19_20] : memref<32x72xf32, #tpu.memory_space<vmem>>, vector<8x16xf32>
    tpu.vector_store %arg17[%c16, %c19_20], %27 {strides = array<i32>} : memref<32x72xf32, #tpu.memory_space<vmem>>, vector<8x16xf32>,
    %c16_21 = arith.constant 16 : index
    %c37_22 = arith.constant 37 : index
    %33 = vector.load %arg17[%c16_21, %c37_22] : memref<32x72xf32, #tpu.memory_space<vmem>>, vector<8x16xf32>
    tpu.vector_store %arg17[%c16_21, %c37_22], %29 {strides = array<i32>} : memref<32x72xf32, #tpu.memory_space<vmem>>, vector<8x16xf32>,
    %34 = vector.extract_strided_slice %27 {offsets = [1, 0], sizes = [7, 16], strides = [1, 1]} : vector<8x16xf32> to vector<7x16xf32>
    %c16_23 = arith.constant 16 : index
    %c55_24 = arith.constant 55 : index
    %35 = vector.load %arg17[%c16_23, %c55_24] : memref<32x72xf32, #tpu.memory_space<vmem>>, vector<7x16xf32>
    tpu.vector_store %arg17[%c16_23, %c55_24], %34 {strides = array<i32>} : memref<32x72xf32, #tpu.memory_space<vmem>>, vector<7x16xf32>,
    %36 = vector.extract_strided_slice %1 {offsets = [3, 0, 0], sizes = [1, 8, 16], strides = [1, 1, 1]} : vector<4x8x16xf32> to vector<1x8x16xf32>
    %37 = vector.shape_cast %36 : vector<1x8x16xf32> to vector<8x16xf32>
    %38 = vector.extract_strided_slice %3 {offsets = [3, 0, 0], sizes = [1, 8, 16], strides = [1, 1, 1]} : vector<4x8x16xf32> to vector<1x8x16xf32>
    %39 = vector.shape_cast %38 : vector<1x8x16xf32> to vector<8x16xf32>
    %40 = vector.extract_strided_slice %39 {offsets = [0, 0], sizes = [7, 16], strides = [1, 1]} : vector<8x16xf32> to vector<7x16xf32>
    %c25 = arith.constant 25 : index
    %c1_25 = arith.constant 1 : index
    %41 = vector.load %arg17[%c25, %c1_25] : memref<32x72xf32, #tpu.memory_space<vmem>>, vector<7x16xf32>
    tpu.vector_store %arg17[%c25, %c1_25], %40 {strides = array<i32>} : memref<32x72xf32, #tpu.memory_space<vmem>>, vector<7x16xf32>,
    %c24 = arith.constant 24 : index
    %c19_26 = arith.constant 19 : index
    %42 = vector.load %arg17[%c24, %c19_26] : memref<32x72xf32, #tpu.memory_space<vmem>>, vector<8x16xf32>
    tpu.vector_store %arg17[%c24, %c19_26], %37 {strides = array<i32>} : memref<32x72xf32, #tpu.memory_space<vmem>>, vector<8x16xf32>,
    %c24_27 = arith.constant 24 : index
    %c37_28 = arith.constant 37 : index
    %43 = vector.load %arg17[%c24_27, %c37_28] : memref<32x72xf32, #tpu.memory_space<vmem>>, vector<8x16xf32>
    tpu.vector_store %arg17[%c24_27, %c37_28], %39 {strides = array<i32>} : memref<32x72xf32, #tpu.memory_space<vmem>>, vector<8x16xf32>,
    %44 = vector.extract_strided_slice %37 {offsets = [1, 0], sizes = [7, 16], strides = [1, 1]} : vector<8x16xf32> to vector<7x16xf32>
    %c24_29 = arith.constant 24 : index
    %c55_30 = arith.constant 55 : index
    %45 = vector.load %arg17[%c24_29, %c55_30] : memref<32x72xf32, #tpu.memory_space<vmem>>, vector<7x16xf32>
    tpu.vector_store %arg17[%c24_29, %c55_30], %44 {strides = array<i32>} : memref<32x72xf32, #tpu.memory_space<vmem>>, vector<7x16xf32>,
    %c0_31 = arith.constant 0 : index
    %c0_32 = arith.constant 0 : index
    %46 = vector.load %arg17[%c0_31, %c0_32] : memref<32x72xf32, #tpu.memory_space<vmem>>, vector<32x72xf32>
    %47 = arith.truncf %46 : vector<32x72xf32> to vector<32x72xbf16>
    %c0_33 = arith.constant 0 : index
    %c0_34 = arith.constant 0 : index
    %48 = vector.load %arg3[%c0_33, %c0_34] : memref<72x1024xbf16, #tpu.memory_space<vmem>>, vector<72x1024xbf16>
    %cst_35 = arith.constant dense<0.000000e+00> : vector<32x1024xf32>
    %49 = tpu.matmul %47, %48, %cst_35 {dimension_numbers = #tpu.dot_dimension_numbers<[1], [0], [0], [1], [0, 0, 1, 1], [], []>} : vector<32x72xbf16>, vector<72x1024xbf16>, vector<32x1024xf32> -> vector<32x1024xf32>
    %c0_36 = arith.constant 0 : index
    %c0_37 = arith.constant 0 : index
    %50 = vector.load %arg4[%c0_36, %c0_37] : memref<1x1024xf32, #tpu.memory_space<vmem>>, vector<1x1024xf32>
    %51 = vector.broadcast %50 : vector<1x1024xf32> to vector<32x1024xf32>
    %52 = arith.addf %49, %51 : vector<32x1024xf32>
    %cst_38 = arith.constant 0.000000e+00 : f32
    %53 = vector.broadcast %cst_38 : f32 to vector<32x1024xf32>
    %54 = arith.maximumf %52, %53 : vector<32x1024xf32>
    %55 = vector.extract_strided_slice %54 {offsets = [0, 0], sizes = [32, 512], strides = [1, 1]} : vector<32x1024xf32> to vector<32x512xf32>
    %56 = vector.extract_strided_slice %54 {offsets = [0, 512], sizes = [32, 512], strides = [1, 1]} : vector<32x1024xf32> to vector<32x512xf32>
    %57 = arith.maximumf %55, %56 : vector<32x512xf32>
    %58 = vector.extract_strided_slice %57 {offsets = [0, 0], sizes = [32, 480], strides = [1, 1]} : vector<32x512xf32> to vector<32x480xf32>
    %59 = vector.extract_strided_slice %57 {offsets = [0, 32], sizes = [32, 480], strides = [1, 1]} : vector<32x512xf32> to vector<32x480xf32>
    %60 = arith.maximumf %58, %59 : vector<32x480xf32>
    %cst_39 = arith.constant 0.000000e+00 : f32
    %61 = vector.broadcast %cst_39 : f32 to vector<32x1440xf32>
    %c0_40 = arith.constant 0 : index
    %c0_41 = arith.constant 0 : index
    %62 = vector.load %arg18[%c0_40, %c0_41] : memref<32x1440xf32, #tpu.memory_space<vmem>>, vector<32x1440xf32>
    tpu.vector_store %arg18[%c0_40, %c0_41], %61 {strides = array<i32>} : memref<32x1440xf32, #tpu.memory_space<vmem>>, vector<32x1440xf32>,
    %63 = vector.extract_strided_slice %60 {offsets = [0, 0], sizes = [7, 480], strides = [1, 1]} : vector<32x480xf32> to vector<7x480xf32>
    %c1_42 = arith.constant 1 : index
    %c0_43 = arith.constant 0 : index
    %64 = vector.load %arg18[%c1_42, %c0_43] : memref<32x1440xf32, #tpu.memory_space<vmem>>, vector<7x480xf32>
    tpu.vector_store %arg18[%c1_42, %c0_43], %63 {strides = array<i32>} : memref<32x1440xf32, #tpu.memory_space<vmem>>, vector<7x480xf32>,
    %65 = vector.extract_strided_slice %60 {offsets = [0, 0], sizes = [8, 480], strides = [1, 1]} : vector<32x480xf32> to vector<8x480xf32>
    %c0_44 = arith.constant 0 : index
    %c480 = arith.constant 480 : index
    %66 = vector.load %arg18[%c0_44, %c480] : memref<32x1440xf32, #tpu.memory_space<vmem>>, vector<8x480xf32>
    tpu.vector_store %arg18[%c0_44, %c480], %65 {strides = array<i32>} : memref<32x1440xf32, #tpu.memory_space<vmem>>, vector<8x480xf32>,
    %67 = vector.extract_strided_slice %60 {offsets = [1, 0], sizes = [7, 480], strides = [1, 1]} : vector<32x480xf32> to vector<7x480xf32>
    %c0_45 = arith.constant 0 : index
    %c960 = arith.constant 960 : index
    %68 = vector.load %arg18[%c0_45, %c960] : memref<32x1440xf32, #tpu.memory_space<vmem>>, vector<7x480xf32>
    tpu.vector_store %arg18[%c0_45, %c960], %67 {strides = array<i32>} : memref<32x1440xf32, #tpu.memory_space<vmem>>, vector<7x480xf32>,
    %69 = vector.extract_strided_slice %60 {offsets = [8, 0], sizes = [7, 480], strides = [1, 1]} : vector<32x480xf32> to vector<7x480xf32>
    %c9_46 = arith.constant 9 : index
    %c0_47 = arith.constant 0 : index
    %70 = vector.load %arg18[%c9_46, %c0_47] : memref<32x1440xf32, #tpu.memory_space<vmem>>, vector<7x480xf32>
    tpu.vector_store %arg18[%c9_46, %c0_47], %69 {strides = array<i32>} : memref<32x1440xf32, #tpu.memory_space<vmem>>, vector<7x480xf32>,
    %71 = vector.extract_strided_slice %60 {offsets = [8, 0], sizes = [8, 480], strides = [1, 1]} : vector<32x480xf32> to vector<8x480xf32>
    %c8_48 = arith.constant 8 : index
    %c480_49 = arith.constant 480 : index
    %72 = vector.load %arg18[%c8_48, %c480_49] : memref<32x1440xf32, #tpu.memory_space<vmem>>, vector<8x480xf32>
    tpu.vector_store %arg18[%c8_48, %c480_49], %71 {strides = array<i32>} : memref<32x1440xf32, #tpu.memory_space<vmem>>, vector<8x480xf32>,
    %73 = vector.extract_strided_slice %60 {offsets = [9, 0], sizes = [7, 480], strides = [1, 1]} : vector<32x480xf32> to vector<7x480xf32>
    %c8_50 = arith.constant 8 : index
    %c960_51 = arith.constant 960 : index
    %74 = vector.load %arg18[%c8_50, %c960_51] : memref<32x1440xf32, #tpu.memory_space<vmem>>, vector<7x480xf32>
    tpu.vector_store %arg18[%c8_50, %c960_51], %73 {strides = array<i32>} : memref<32x1440xf32, #tpu.memory_space<vmem>>, vector<7x480xf32>,
    %75 = vector.extract_strided_slice %60 {offsets = [16, 0], sizes = [7, 480], strides = [1, 1]} : vector<32x480xf32> to vector<7x480xf32>
    %c17_52 = arith.constant 17 : index
    %c0_53 = arith.constant 0 : index
    %76 = vector.load %arg18[%c17_52, %c0_53] : memref<32x1440xf32, #tpu.memory_space<vmem>>, vector<7x480xf32>
    tpu.vector_store %arg18[%c17_52, %c0_53], %75 {strides = array<i32>} : memref<32x1440xf32, #tpu.memory_space<vmem>>, vector<7x480xf32>,
    %77 = vector.extract_strided_slice %60 {offsets = [16, 0], sizes = [8, 480], strides = [1, 1]} : vector<32x480xf32> to vector<8x480xf32>
    %c16_54 = arith.constant 16 : index
    %c480_55 = arith.constant 480 : index
    %78 = vector.load %arg18[%c16_54, %c480_55] : memref<32x1440xf32, #tpu.memory_space<vmem>>, vector<8x480xf32>
    tpu.vector_store %arg18[%c16_54, %c480_55], %77 {strides = array<i32>} : memref<32x1440xf32, #tpu.memory_space<vmem>>, vector<8x480xf32>,
    %79 = vector.extract_strided_slice %60 {offsets = [17, 0], sizes = [7, 480], strides = [1, 1]} : vector<32x480xf32> to vector<7x480xf32>
    %c16_56 = arith.constant 16 : index
    %c960_57 = arith.constant 960 : index
    %80 = vector.load %arg18[%c16_56, %c960_57] : memref<32x1440xf32, #tpu.memory_space<vmem>>, vector<7x480xf32>
    tpu.vector_store %arg18[%c16_56, %c960_57], %79 {strides = array<i32>} : memref<32x1440xf32, #tpu.memory_space<vmem>>, vector<7x480xf32>,
    %81 = vector.extract_strided_slice %60 {offsets = [24, 0], sizes = [7, 480], strides = [1, 1]} : vector<32x480xf32> to vector<7x480xf32>
    %c25_58 = arith.constant 25 : index
    %c0_59 = arith.constant 0 : index
    %82 = vector.load %arg18[%c25_58, %c0_59] : memref<32x1440xf32, #tpu.memory_space<vmem>>, vector<7x480xf32>
    tpu.vector_store %arg18[%c25_58, %c0_59], %81 {strides = array<i32>} : memref<32x1440xf32, #tpu.memory_space<vmem>>, vector<7x480xf32>,
    %83 = vector.extract_strided_slice %60 {offsets = [24, 0], sizes = [8, 480], strides = [1, 1]} : vector<32x480xf32> to vector<8x480xf32>
    %c24_60 = arith.constant 24 : index
    %c480_61 = arith.constant 480 : index
    %84 = vector.load %arg18[%c24_60, %c480_61] : memref<32x1440xf32, #tpu.memory_space<vmem>>, vector<8x480xf32>
    tpu.vector_store %arg18[%c24_60, %c480_61], %83 {strides = array<i32>} : memref<32x1440xf32, #tpu.memory_space<vmem>>, vector<8x480xf32>,
    %85 = vector.extract_strided_slice %60 {offsets = [25, 0], sizes = [7, 480], strides = [1, 1]} : vector<32x480xf32> to vector<7x480xf32>
    %c24_62 = arith.constant 24 : index
    %c960_63 = arith.constant 960 : index
    %86 = vector.load %arg18[%c24_62, %c960_63] : memref<32x1440xf32, #tpu.memory_space<vmem>>, vector<7x480xf32>
    tpu.vector_store %arg18[%c24_62, %c960_63], %85 {strides = array<i32>} : memref<32x1440xf32, #tpu.memory_space<vmem>>, vector<7x480xf32>,
    %c0_64 = arith.constant 0 : index
    %c0_65 = arith.constant 0 : index
    %87 = vector.load %arg18[%c0_64, %c0_65] : memref<32x1440xf32, #tpu.memory_space<vmem>>, vector<32x1440xf32>
    %88 = arith.truncf %87 : vector<32x1440xf32> to vector<32x1440xbf16>
    %c0_66 = arith.constant 0 : index
    %c0_67 = arith.constant 0 : index
    %89 = vector.load %arg5[%c0_66, %c0_67] : memref<1440x512xbf16, #tpu.memory_space<vmem>>, vector<1440x512xbf16>
    %cst_68 = arith.constant dense<0.000000e+00> : vector<32x512xf32>
    %90 = tpu.matmul %88, %89, %cst_68 {dimension_numbers = #tpu.dot_dimension_numbers<[1], [0], [0], [1], [0, 0, 1, 1], [], []>} : vector<32x1440xbf16>, vector<1440x512xbf16>, vector<32x512xf32> -> vector<32x512xf32>
    %c0_69 = arith.constant 0 : index
    %c0_70 = arith.constant 0 : index
    %91 = vector.load %arg6[%c0_69, %c0_70] : memref<1x512xf32, #tpu.memory_space<vmem>>, vector<1x512xf32>
    %92 = vector.broadcast %91 : vector<1x512xf32> to vector<32x512xf32>
    %93 = arith.addf %90, %92 : vector<32x512xf32>
    %cst_71 = arith.constant 0.000000e+00 : f32
    %94 = vector.broadcast %cst_71 : f32 to vector<32x512xf32>
    %95 = arith.maximumf %93, %94 : vector<32x512xf32>
    %96 = vector.extract_strided_slice %95 {offsets = [0, 0], sizes = [32, 448], strides = [1, 1]} : vector<32x512xf32> to vector<32x448xf32>
    %97 = vector.extract_strided_slice %95 {offsets = [0, 64], sizes = [32, 448], strides = [1, 1]} : vector<32x512xf32> to vector<32x448xf32>
    %98 = arith.maximumf %96, %97 : vector<32x448xf32>
    %c0_72 = arith.constant 0 : index
    %c0_73 = arith.constant 0 : index
    %99 = vector.load %arg8[%c0_72, %c0_73] : memref<1x128xf32, #tpu.memory_space<vmem>>, vector<1x128xf32>
    %c0_74 = arith.constant 0 : index
    %c0_75 = arith.constant 0 : index
    %c0_76 = arith.constant 0 : index
    %100 = vector.load %arg7[%c0_74, %c0_75, %c0_76] : memref<4x448x128xbf16, #tpu.memory_space<vmem>>, vector<1x448x128xbf16>
    %101 = vector.shape_cast %100 : vector<1x448x128xbf16> to vector<448x128xbf16>
    %102 = vector.extract_strided_slice %98 {offsets = [0, 0], sizes = [1, 448], strides = [1, 1]} : vector<32x448xf32> to vector<1x448xf32>
    %103 = vector.extract_strided_slice %98 {offsets = [1, 0], sizes = [1, 448], strides = [1, 1]} : vector<32x448xf32> to vector<1x448xf32>
    %104 = arith.maximumf %102, %103 : vector<1x448xf32>
    %105 = arith.truncf %104 : vector<1x448xf32> to vector<1x448xbf16>
    %cst_77 = arith.constant dense<0.000000e+00> : vector<1x128xf32>
    %106 = tpu.matmul %105, %101, %cst_77 {dimension_numbers = #tpu.dot_dimension_numbers<[1], [0], [0], [1], [0, 0, 1, 1], [], []>} : vector<1x448xbf16>, vector<448x128xbf16>, vector<1x128xf32> -> vector<1x128xf32>
    %107 = arith.addf %99, %106 : vector<1x128xf32>
    %108 = vector.extract_strided_slice %98 {offsets = [8, 0], sizes = [1, 448], strides = [1, 1]} : vector<32x448xf32> to vector<1x448xf32>
    %109 = vector.extract_strided_slice %98 {offsets = [9, 0], sizes = [1, 448], strides = [1, 1]} : vector<32x448xf32> to vector<1x448xf32>
    %110 = arith.maximumf %108, %109 : vector<1x448xf32>
    %111 = arith.truncf %110 : vector<1x448xf32> to vector<1x448xbf16>
    %cst_78 = arith.constant dense<0.000000e+00> : vector<1x128xf32>
    %112 = tpu.matmul %111, %101, %cst_78 {dimension_numbers = #tpu.dot_dimension_numbers<[1], [0], [0], [1], [0, 0, 1, 1], [], []>} : vector<1x448xbf16>, vector<448x128xbf16>, vector<1x128xf32> -> vector<1x128xf32>
    %113 = arith.addf %99, %112 : vector<1x128xf32>
    %114 = vector.extract_strided_slice %98 {offsets = [16, 0], sizes = [1, 448], strides = [1, 1]} : vector<32x448xf32> to vector<1x448xf32>
    %115 = vector.extract_strided_slice %98 {offsets = [17, 0], sizes = [1, 448], strides = [1, 1]} : vector<32x448xf32> to vector<1x448xf32>
    %116 = arith.maximumf %114, %115 : vector<1x448xf32>
    %117 = arith.truncf %116 : vector<1x448xf32> to vector<1x448xbf16>
    %cst_79 = arith.constant dense<0.000000e+00> : vector<1x128xf32>
    %118 = tpu.matmul %117, %101, %cst_79 {dimension_numbers = #tpu.dot_dimension_numbers<[1], [0], [0], [1], [0, 0, 1, 1], [], []>} : vector<1x448xbf16>, vector<448x128xbf16>, vector<1x128xf32> -> vector<1x128xf32>
    %119 = arith.addf %99, %118 : vector<1x128xf32>
    %120 = vector.extract_strided_slice %98 {offsets = [24, 0], sizes = [1, 448], strides = [1, 1]} : vector<32x448xf32> to vector<1x448xf32>
    %121 = vector.extract_strided_slice %98 {offsets = [25, 0], sizes = [1, 448], strides = [1, 1]} : vector<32x448xf32> to vector<1x448xf32>
    %122 = arith.maximumf %120, %121 : vector<1x448xf32>
    %123 = arith.truncf %122 : vector<1x448xf32> to vector<1x448xbf16>
    %cst_80 = arith.constant dense<0.000000e+00> : vector<1x128xf32>
    %124 = tpu.matmul %123, %101, %cst_80 {dimension_numbers = #tpu.dot_dimension_numbers<[1], [0], [0], [1], [0, 0, 1, 1], [], []>} : vector<1x448xbf16>, vector<448x128xbf16>, vector<1x128xf32> -> vector<1x128xf32>
    %125 = arith.addf %99, %124 : vector<1x128xf32>
    %c1_81 = arith.constant 1 : index
    %c0_82 = arith.constant 0 : index
    %c0_83 = arith.constant 0 : index
    %126 = vector.load %arg7[%c1_81, %c0_82, %c0_83] : memref<4x448x128xbf16, #tpu.memory_space<vmem>>, vector<1x448x128xbf16>
    %127 = vector.shape_cast %126 : vector<1x448x128xbf16> to vector<448x128xbf16>
    %128 = vector.extract_strided_slice %98 {offsets = [2, 0], sizes = [1, 448], strides = [1, 1]} : vector<32x448xf32> to vector<1x448xf32>
    %129 = vector.extract_strided_slice %98 {offsets = [3, 0], sizes = [1, 448], strides = [1, 1]} : vector<32x448xf32> to vector<1x448xf32>
    %130 = arith.maximumf %128, %129 : vector<1x448xf32>
    %131 = arith.truncf %130 : vector<1x448xf32> to vector<1x448xbf16>
    %cst_84 = arith.constant dense<0.000000e+00> : vector<1x128xf32>
    %132 = tpu.matmul %131, %127, %cst_84 {dimension_numbers = #tpu.dot_dimension_numbers<[1], [0], [0], [1], [0, 0, 1, 1], [], []>} : vector<1x448xbf16>, vector<448x128xbf16>, vector<1x128xf32> -> vector<1x128xf32>
    %133 = arith.addf %107, %132 : vector<1x128xf32>
    %134 = vector.extract_strided_slice %98 {offsets = [10, 0], sizes = [1, 448], strides = [1, 1]} : vector<32x448xf32> to vector<1x448xf32>
    %135 = vector.extract_strided_slice %98 {offsets = [11, 0], sizes = [1, 448], strides = [1, 1]} : vector<32x448xf32> to vector<1x448xf32>
    %136 = arith.maximumf %134, %135 : vector<1x448xf32>
    %137 = arith.truncf %136 : vector<1x448xf32> to vector<1x448xbf16>
    %cst_85 = arith.constant dense<0.000000e+00> : vector<1x128xf32>
    %138 = tpu.matmul %137, %127, %cst_85 {dimension_numbers = #tpu.dot_dimension_numbers<[1], [0], [0], [1], [0, 0, 1, 1], [], []>} : vector<1x448xbf16>, vector<448x128xbf16>, vector<1x128xf32> -> vector<1x128xf32>
    %139 = arith.addf %113, %138 : vector<1x128xf32>
    %140 = vector.extract_strided_slice %98 {offsets = [18, 0], sizes = [1, 448], strides = [1, 1]} : vector<32x448xf32> to vector<1x448xf32>
    %141 = vector.extract_strided_slice %98 {offsets = [19, 0], sizes = [1, 448], strides = [1, 1]} : vector<32x448xf32> to vector<1x448xf32>
    %142 = arith.maximumf %140, %141 : vector<1x448xf32>
    %143 = arith.truncf %142 : vector<1x448xf32> to vector<1x448xbf16>
    %cst_86 = arith.constant dense<0.000000e+00> : vector<1x128xf32>
    %144 = tpu.matmul %143, %127, %cst_86 {dimension_numbers = #tpu.dot_dimension_numbers<[1], [0], [0], [1], [0, 0, 1, 1], [], []>} : vector<1x448xbf16>, vector<448x128xbf16>, vector<1x128xf32> -> vector<1x128xf32>
    %145 = arith.addf %119, %144 : vector<1x128xf32>
    %146 = vector.extract_strided_slice %98 {offsets = [26, 0], sizes = [1, 448], strides = [1, 1]} : vector<32x448xf32> to vector<1x448xf32>
    %147 = vector.extract_strided_slice %98 {offsets = [27, 0], sizes = [1, 448], strides = [1, 1]} : vector<32x448xf32> to vector<1x448xf32>
    %148 = arith.maximumf %146, %147 : vector<1x448xf32>
    %149 = arith.truncf %148 : vector<1x448xf32> to vector<1x448xbf16>
    %cst_87 = arith.constant dense<0.000000e+00> : vector<1x128xf32>
    %150 = tpu.matmul %149, %127, %cst_87 {dimension_numbers = #tpu.dot_dimension_numbers<[1], [0], [0], [1], [0, 0, 1, 1], [], []>} : vector<1x448xbf16>, vector<448x128xbf16>, vector<1x128xf32> -> vector<1x128xf32>
    %151 = arith.addf %125, %150 : vector<1x128xf32>
    %c2 = arith.constant 2 : index
    %c0_88 = arith.constant 0 : index
    %c0_89 = arith.constant 0 : index
    %152 = vector.load %arg7[%c2, %c0_88, %c0_89] : memref<4x448x128xbf16, #tpu.memory_space<vmem>>, vector<1x448x128xbf16>
    %153 = vector.shape_cast %152 : vector<1x448x128xbf16> to vector<448x128xbf16>
    %154 = vector.extract_strided_slice %98 {offsets = [4, 0], sizes = [1, 448], strides = [1, 1]} : vector<32x448xf32> to vector<1x448xf32>
    %155 = vector.extract_strided_slice %98 {offsets = [5, 0], sizes = [1, 448], strides = [1, 1]} : vector<32x448xf32> to vector<1x448xf32>
    %156 = arith.maximumf %154, %155 : vector<1x448xf32>
    %157 = arith.truncf %156 : vector<1x448xf32> to vector<1x448xbf16>
    %cst_90 = arith.constant dense<0.000000e+00> : vector<1x128xf32>
    %158 = tpu.matmul %157, %153, %cst_90 {dimension_numbers = #tpu.dot_dimension_numbers<[1], [0], [0], [1], [0, 0, 1, 1], [], []>} : vector<1x448xbf16>, vector<448x128xbf16>, vector<1x128xf32> -> vector<1x128xf32>
    %159 = arith.addf %133, %158 : vector<1x128xf32>
    %160 = vector.extract_strided_slice %98 {offsets = [12, 0], sizes = [1, 448], strides = [1, 1]} : vector<32x448xf32> to vector<1x448xf32>
    %161 = vector.extract_strided_slice %98 {offsets = [13, 0], sizes = [1, 448], strides = [1, 1]} : vector<32x448xf32> to vector<1x448xf32>
    %162 = arith.maximumf %160, %161 : vector<1x448xf32>
    %163 = arith.truncf %162 : vector<1x448xf32> to vector<1x448xbf16>
    %cst_91 = arith.constant dense<0.000000e+00> : vector<1x128xf32>
    %164 = tpu.matmul %163, %153, %cst_91 {dimension_numbers = #tpu.dot_dimension_numbers<[1], [0], [0], [1], [0, 0, 1, 1], [], []>} : vector<1x448xbf16>, vector<448x128xbf16>, vector<1x128xf32> -> vector<1x128xf32>
    %165 = arith.addf %139, %164 : vector<1x128xf32>
    %166 = vector.extract_strided_slice %98 {offsets = [20, 0], sizes = [1, 448], strides = [1, 1]} : vector<32x448xf32> to vector<1x448xf32>
    %167 = vector.extract_strided_slice %98 {offsets = [21, 0], sizes = [1, 448], strides = [1, 1]} : vector<32x448xf32> to vector<1x448xf32>
    %168 = arith.maximumf %166, %167 : vector<1x448xf32>
    %169 = arith.truncf %168 : vector<1x448xf32> to vector<1x448xbf16>
    %cst_92 = arith.constant dense<0.000000e+00> : vector<1x128xf32>
    %170 = tpu.matmul %169, %153, %cst_92 {dimension_numbers = #tpu.dot_dimension_numbers<[1], [0], [0], [1], [0, 0, 1, 1], [], []>} : vector<1x448xbf16>, vector<448x128xbf16>, vector<1x128xf32> -> vector<1x128xf32>
    %171 = arith.addf %145, %170 : vector<1x128xf32>
    %172 = vector.extract_strided_slice %98 {offsets = [28, 0], sizes = [1, 448], strides = [1, 1]} : vector<32x448xf32> to vector<1x448xf32>
    %173 = vector.extract_strided_slice %98 {offsets = [29, 0], sizes = [1, 448], strides = [1, 1]} : vector<32x448xf32> to vector<1x448xf32>
    %174 = arith.maximumf %172, %173 : vector<1x448xf32>
    %175 = arith.truncf %174 : vector<1x448xf32> to vector<1x448xbf16>
    %cst_93 = arith.constant dense<0.000000e+00> : vector<1x128xf32>
    %176 = tpu.matmul %175, %153, %cst_93 {dimension_numbers = #tpu.dot_dimension_numbers<[1], [0], [0], [1], [0, 0, 1, 1], [], []>} : vector<1x448xbf16>, vector<448x128xbf16>, vector<1x128xf32> -> vector<1x128xf32>
    %177 = arith.addf %151, %176 : vector<1x128xf32>
    %c3 = arith.constant 3 : index
    %c0_94 = arith.constant 0 : index
    %c0_95 = arith.constant 0 : index
    %178 = vector.load %arg7[%c3, %c0_94, %c0_95] : memref<4x448x128xbf16, #tpu.memory_space<vmem>>, vector<1x448x128xbf16>
    %179 = vector.shape_cast %178 : vector<1x448x128xbf16> to vector<448x128xbf16>
    %180 = vector.extract_strided_slice %98 {offsets = [6, 0], sizes = [1, 448], strides = [1, 1]} : vector<32x448xf32> to vector<1x448xf32>
    %181 = vector.extract_strided_slice %98 {offsets = [7, 0], sizes = [1, 448], strides = [1, 1]} : vector<32x448xf32> to vector<1x448xf32>
    %182 = arith.maximumf %180, %181 : vector<1x448xf32>
    %183 = arith.truncf %182 : vector<1x448xf32> to vector<1x448xbf16>
    %cst_96 = arith.constant dense<0.000000e+00> : vector<1x128xf32>
    %184 = tpu.matmul %183, %179, %cst_96 {dimension_numbers = #tpu.dot_dimension_numbers<[1], [0], [0], [1], [0, 0, 1, 1], [], []>} : vector<1x448xbf16>, vector<448x128xbf16>, vector<1x128xf32> -> vector<1x128xf32>
    %185 = arith.addf %159, %184 : vector<1x128xf32>
    %186 = vector.extract_strided_slice %98 {offsets = [14, 0], sizes = [1, 448], strides = [1, 1]} : vector<32x448xf32> to vector<1x448xf32>
    %187 = vector.extract_strided_slice %98 {offsets = [15, 0], sizes = [1, 448], strides = [1, 1]} : vector<32x448xf32> to vector<1x448xf32>
    %188 = arith.maximumf %186, %187 : vector<1x448xf32>
    %189 = arith.truncf %188 : vector<1x448xf32> to vector<1x448xbf16>
    %cst_97 = arith.constant dense<0.000000e+00> : vector<1x128xf32>
    %190 = tpu.matmul %189, %179, %cst_97 {dimension_numbers = #tpu.dot_dimension_numbers<[1], [0], [0], [1], [0, 0, 1, 1], [], []>} : vector<1x448xbf16>, vector<448x128xbf16>, vector<1x128xf32> -> vector<1x128xf32>
    %191 = arith.addf %165, %190 : vector<1x128xf32>
    %192 = vector.extract_strided_slice %98 {offsets = [22, 0], sizes = [1, 448], strides = [1, 1]} : vector<32x448xf32> to vector<1x448xf32>
    %193 = vector.extract_strided_slice %98 {offsets = [23, 0], sizes = [1, 448], strides = [1, 1]} : vector<32x448xf32> to vector<1x448xf32>
    %194 = arith.maximumf %192, %193 : vector<1x448xf32>
    %195 = arith.truncf %194 : vector<1x448xf32> to vector<1x448xbf16>
    %cst_98 = arith.constant dense<0.000000e+00> : vector<1x128xf32>
    %196 = tpu.matmul %195, %179, %cst_98 {dimension_numbers = #tpu.dot_dimension_numbers<[1], [0], [0], [1], [0, 0, 1, 1], [], []>} : vector<1x448xbf16>, vector<448x128xbf16>, vector<1x128xf32> -> vector<1x128xf32>
    %197 = arith.addf %171, %196 : vector<1x128xf32>
    %198 = vector.extract_strided_slice %98 {offsets = [30, 0], sizes = [1, 448], strides = [1, 1]} : vector<32x448xf32> to vector<1x448xf32>
    %199 = vector.extract_strided_slice %98 {offsets = [31, 0], sizes = [1, 448], strides = [1, 1]} : vector<32x448xf32> to vector<1x448xf32>
    %200 = arith.maximumf %198, %199 : vector<1x448xf32>
    %201 = arith.truncf %200 : vector<1x448xf32> to vector<1x448xbf16>
    %cst_99 = arith.constant dense<0.000000e+00> : vector<1x128xf32>
    %202 = tpu.matmul %201, %179, %cst_99 {dimension_numbers = #tpu.dot_dimension_numbers<[1], [0], [0], [1], [0, 0, 1, 1], [], []>} : vector<1x448xbf16>, vector<448x128xbf16>, vector<1x128xf32> -> vector<1x128xf32>
    %203 = arith.addf %177, %202 : vector<1x128xf32>
    %c0_100 = arith.constant 0 : index
    %c0_101 = arith.constant 0 : index
    %204 = vector.load %arg9[%c0_100, %c0_101] : memref<32x128xf32, #tpu.memory_space<vmem>>, vector<32x128xf32>
    %c0_102 = arith.constant 0 : index
    %c0_103 = arith.constant 0 : index
    %205 = vector.load %arg10[%c0_102, %c0_103] : memref<48x64xf32, #tpu.memory_space<vmem>>, vector<48x64xf32>
    %c0_104 = arith.constant 0 : index
    %c0_105 = arith.constant 0 : index
    %206 = vector.load %arg11[%c0_104, %c0_105] : memref<1x64xf32, #tpu.memory_space<vmem>>, vector<1x64xf32>
    %cst_106 = arith.constant 0.000000e+00 : f32
    %207 = vector.broadcast %cst_106 : f32 to vector<1x32xf32>
    %cst_107 = arith.constant 0.000000e+00 : f32
    %208 = vector.broadcast %cst_107 : f32 to vector<1x32xf32>
    %cst_108 = arith.constant 0.000000e+00 : f32
    %209 = vector.broadcast %cst_108 : f32 to vector<1x16xf32>
    %cst_109 = arith.constant 0.000000e+00 : f32
    %210 = vector.broadcast %cst_109 : f32 to vector<1x16xf32>
    %cst_110 = arith.constant dense<0.000000e+00> : vector<1x128xf32>
    %211 = tpu.matmul %207, %204, %cst_110 {dimension_numbers = #tpu.dot_dimension_numbers<[1], [0], [0], [1], [0, 0, 1, 1], [], []>} : vector<1x32xf32>, vector<32x128xf32>, vector<1x128xf32> -> vector<1x128xf32>
    %212 = arith.addf %185, %211 : vector<1x128xf32>
    %213 = vector.extract_strided_slice %212 {offsets = [0, 0], sizes = [1, 32], strides = [1, 1]} : vector<1x128xf32> to vector<1x32xf32>
    %214 = arith.negf %213 : vector<1x32xf32>
    %215 = math.exp %214 : vector<1x32xf32>
    %cst_111 = arith.constant 1.000000e+00 : f32
    %216 = vector.broadcast %cst_111 : f32 to vector<1x32xf32>
    %217 = arith.addf %216, %215 : vector<1x32xf32>
    %218 = arith.divf %216, %217 : vector<1x32xf32>
    %219 = vector.extract_strided_slice %212 {offsets = [0, 32], sizes = [1, 32], strides = [1, 1]} : vector<1x128xf32> to vector<1x32xf32>
    %220 = arith.negf %219 : vector<1x32xf32>
    %221 = math.exp %220 : vector<1x32xf32>
    %cst_112 = arith.constant 1.000000e+00 : f32
    %222 = vector.broadcast %cst_112 : f32 to vector<1x32xf32>
    %223 = arith.addf %222, %221 : vector<1x32xf32>
    %224 = arith.divf %222, %223 : vector<1x32xf32>
    %225 = vector.extract_strided_slice %212 {offsets = [0, 64], sizes = [1, 32], strides = [1, 1]} : vector<1x128xf32> to vector<1x32xf32>
    %226 = math.tanh %225 : vector<1x32xf32>
    %227 = vector.extract_strided_slice %212 {offsets = [0, 96], sizes = [1, 32], strides = [1, 1]} : vector<1x128xf32> to vector<1x32xf32>
    %228 = arith.negf %227 : vector<1x32xf32>
    %229 = math.exp %228 : vector<1x32xf32>
    %cst_113 = arith.constant 1.000000e+00 : f32
    %230 = vector.broadcast %cst_113 : f32 to vector<1x32xf32>
    %231 = arith.addf %230, %229 : vector<1x32xf32>
    %232 = arith.divf %230, %231 : vector<1x32xf32>
    %233 = arith.mulf %224, %208 : vector<1x32xf32>
    %234 = arith.mulf %218, %226 : vector<1x32xf32>
    %235 = arith.addf %233, %234 : vector<1x32xf32>
    %236 = math.tanh %235 : vector<1x32xf32>
    %237 = arith.mulf %232, %236 : vector<1x32xf32>
    %238 = tpu.concatenate %237, %209 in 1 : vector<1x32xf32>, vector<1x16xf32> -> vector<1x48xf32>
    %cst_114 = arith.constant dense<0.000000e+00> : vector<1x64xf32>
    %239 = tpu.matmul %238, %205, %cst_114 {dimension_numbers = #tpu.dot_dimension_numbers<[1], [0], [0], [1], [0, 0, 1, 1], [], []>} : vector<1x48xf32>, vector<48x64xf32>, vector<1x64xf32> -> vector<1x64xf32>
    %240 = arith.addf %239, %206 : vector<1x64xf32>
    %241 = vector.extract_strided_slice %240 {offsets = [0, 0], sizes = [1, 16], strides = [1, 1]} : vector<1x64xf32> to vector<1x16xf32>
    %242 = arith.negf %241 : vector<1x16xf32>
    %243 = math.exp %242 : vector<1x16xf32>
    %cst_115 = arith.constant 1.000000e+00 : f32
    %244 = vector.broadcast %cst_115 : f32 to vector<1x16xf32>
    %245 = arith.addf %244, %243 : vector<1x16xf32>
    %246 = arith.divf %244, %245 : vector<1x16xf32>
    %247 = vector.extract_strided_slice %240 {offsets = [0, 16], sizes = [1, 16], strides = [1, 1]} : vector<1x64xf32> to vector<1x16xf32>
    %248 = arith.negf %247 : vector<1x16xf32>
    %249 = math.exp %248 : vector<1x16xf32>
    %cst_116 = arith.constant 1.000000e+00 : f32
    %250 = vector.broadcast %cst_116 : f32 to vector<1x16xf32>
    %251 = arith.addf %250, %249 : vector<1x16xf32>
    %252 = arith.divf %250, %251 : vector<1x16xf32>
    %253 = vector.extract_strided_slice %240 {offsets = [0, 32], sizes = [1, 16], strides = [1, 1]} : vector<1x64xf32> to vector<1x16xf32>
    %254 = math.tanh %253 : vector<1x16xf32>
    %255 = vector.extract_strided_slice %240 {offsets = [0, 48], sizes = [1, 16], strides = [1, 1]} : vector<1x64xf32> to vector<1x16xf32>
    %256 = arith.negf %255 : vector<1x16xf32>
    %257 = math.exp %256 : vector<1x16xf32>
    %cst_117 = arith.constant 1.000000e+00 : f32
    %258 = vector.broadcast %cst_117 : f32 to vector<1x16xf32>
    %259 = arith.addf %258, %257 : vector<1x16xf32>
    %260 = arith.divf %258, %259 : vector<1x16xf32>
    %261 = arith.mulf %252, %210 : vector<1x16xf32>
    %262 = arith.mulf %246, %254 : vector<1x16xf32>
    %263 = arith.addf %261, %262 : vector<1x16xf32>
    %264 = math.tanh %263 : vector<1x16xf32>
    %265 = arith.mulf %260, %264 : vector<1x16xf32>
    %cst_118 = arith.constant dense<0.000000e+00> : vector<1x128xf32>
    %266 = tpu.matmul %237, %204, %cst_118 {dimension_numbers = #tpu.dot_dimension_numbers<[1], [0], [0], [1], [0, 0, 1, 1], [], []>} : vector<1x32xf32>, vector<32x128xf32>, vector<1x128xf32> -> vector<1x128xf32>
    %267 = arith.addf %191, %266 : vector<1x128xf32>
    %268 = vector.extract_strided_slice %267 {offsets = [0, 0], sizes = [1, 32], strides = [1, 1]} : vector<1x128xf32> to vector<1x32xf32>
    %269 = arith.negf %268 : vector<1x32xf32>
    %270 = math.exp %269 : vector<1x32xf32>
    %cst_119 = arith.constant 1.000000e+00 : f32
    %271 = vector.broadcast %cst_119 : f32 to vector<1x32xf32>
    %272 = arith.addf %271, %270 : vector<1x32xf32>
    %273 = arith.divf %271, %272 : vector<1x32xf32>
    %274 = vector.extract_strided_slice %267 {offsets = [0, 32], sizes = [1, 32], strides = [1, 1]} : vector<1x128xf32> to vector<1x32xf32>
    %275 = arith.negf %274 : vector<1x32xf32>
    %276 = math.exp %275 : vector<1x32xf32>
    %cst_120 = arith.constant 1.000000e+00 : f32
    %277 = vector.broadcast %cst_120 : f32 to vector<1x32xf32>
    %278 = arith.addf %277, %276 : vector<1x32xf32>
    %279 = arith.divf %277, %278 : vector<1x32xf32>
    %280 = vector.extract_strided_slice %267 {offsets = [0, 64], sizes = [1, 32], strides = [1, 1]} : vector<1x128xf32> to vector<1x32xf32>
    %281 = math.tanh %280 : vector<1x32xf32>
    %282 = vector.extract_strided_slice %267 {offsets = [0, 96], sizes = [1, 32], strides = [1, 1]} : vector<1x128xf32> to vector<1x32xf32>
    %283 = arith.negf %282 : vector<1x32xf32>
    %284 = math.exp %283 : vector<1x32xf32>
    %cst_121 = arith.constant 1.000000e+00 : f32
    %285 = vector.broadcast %cst_121 : f32 to vector<1x32xf32>
    %286 = arith.addf %285, %284 : vector<1x32xf32>
    %287 = arith.divf %285, %286 : vector<1x32xf32>
    %288 = arith.mulf %279, %235 : vector<1x32xf32>
    %289 = arith.mulf %273, %281 : vector<1x32xf32>
    %290 = arith.addf %288, %289 : vector<1x32xf32>
    %291 = math.tanh %290 : vector<1x32xf32>
    %292 = arith.mulf %287, %291 : vector<1x32xf32>
    %293 = tpu.concatenate %292, %265 in 1 : vector<1x32xf32>, vector<1x16xf32> -> vector<1x48xf32>
    %cst_122 = arith.constant dense<0.000000e+00> : vector<1x64xf32>
    %294 = tpu.matmul %293, %205, %cst_122 {dimension_numbers = #tpu.dot_dimension_numbers<[1], [0], [0], [1], [0, 0, 1, 1], [], []>} : vector<1x48xf32>, vector<48x64xf32>, vector<1x64xf32> -> vector<1x64xf32>
    %295 = arith.addf %294, %206 : vector<1x64xf32>
    %296 = vector.extract_strided_slice %295 {offsets = [0, 0], sizes = [1, 16], strides = [1, 1]} : vector<1x64xf32> to vector<1x16xf32>
    %297 = arith.negf %296 : vector<1x16xf32>
    %298 = math.exp %297 : vector<1x16xf32>
    %cst_123 = arith.constant 1.000000e+00 : f32
    %299 = vector.broadcast %cst_123 : f32 to vector<1x16xf32>
    %300 = arith.addf %299, %298 : vector<1x16xf32>
    %301 = arith.divf %299, %300 : vector<1x16xf32>
    %302 = vector.extract_strided_slice %295 {offsets = [0, 16], sizes = [1, 16], strides = [1, 1]} : vector<1x64xf32> to vector<1x16xf32>
    %303 = arith.negf %302 : vector<1x16xf32>
    %304 = math.exp %303 : vector<1x16xf32>
    %cst_124 = arith.constant 1.000000e+00 : f32
    %305 = vector.broadcast %cst_124 : f32 to vector<1x16xf32>
    %306 = arith.addf %305, %304 : vector<1x16xf32>
    %307 = arith.divf %305, %306 : vector<1x16xf32>
    %308 = vector.extract_strided_slice %295 {offsets = [0, 32], sizes = [1, 16], strides = [1, 1]} : vector<1x64xf32> to vector<1x16xf32>
    %309 = math.tanh %308 : vector<1x16xf32>
    %310 = vector.extract_strided_slice %295 {offsets = [0, 48], sizes = [1, 16], strides = [1, 1]} : vector<1x64xf32> to vector<1x16xf32>
    %311 = arith.negf %310 : vector<1x16xf32>
    %312 = math.exp %311 : vector<1x16xf32>
    %cst_125 = arith.constant 1.000000e+00 : f32
    %313 = vector.broadcast %cst_125 : f32 to vector<1x16xf32>
    %314 = arith.addf %313, %312 : vector<1x16xf32>
    %315 = arith.divf %313, %314 : vector<1x16xf32>
    %316 = arith.mulf %307, %263 : vector<1x16xf32>
    %317 = arith.mulf %301, %309 : vector<1x16xf32>
    %318 = arith.addf %316, %317 : vector<1x16xf32>
    %319 = math.tanh %318 : vector<1x16xf32>
    %320 = arith.mulf %315, %319 : vector<1x16xf32>
    %cst_126 = arith.constant dense<0.000000e+00> : vector<1x128xf32>
    %321 = tpu.matmul %292, %204, %cst_126 {dimension_numbers = #tpu.dot_dimension_numbers<[1], [0], [0], [1], [0, 0, 1, 1], [], []>} : vector<1x32xf32>, vector<32x128xf32>, vector<1x128xf32> -> vector<1x128xf32>
    %322 = arith.addf %197, %321 : vector<1x128xf32>
    %323 = vector.extract_strided_slice %322 {offsets = [0, 0], sizes = [1, 32], strides = [1, 1]} : vector<1x128xf32> to vector<1x32xf32>
    %324 = arith.negf %323 : vector<1x32xf32>
    %325 = math.exp %324 : vector<1x32xf32>
    %cst_127 = arith.constant 1.000000e+00 : f32
    %326 = vector.broadcast %cst_127 : f32 to vector<1x32xf32>
    %327 = arith.addf %326, %325 : vector<1x32xf32>
    %328 = arith.divf %326, %327 : vector<1x32xf32>
    %329 = vector.extract_strided_slice %322 {offsets = [0, 32], sizes = [1, 32], strides = [1, 1]} : vector<1x128xf32> to vector<1x32xf32>
    %330 = arith.negf %329 : vector<1x32xf32>
    %331 = math.exp %330 : vector<1x32xf32>
    %cst_128 = arith.constant 1.000000e+00 : f32
    %332 = vector.broadcast %cst_128 : f32 to vector<1x32xf32>
    %333 = arith.addf %332, %331 : vector<1x32xf32>
    %334 = arith.divf %332, %333 : vector<1x32xf32>
    %335 = vector.extract_strided_slice %322 {offsets = [0, 64], sizes = [1, 32], strides = [1, 1]} : vector<1x128xf32> to vector<1x32xf32>
    %336 = math.tanh %335 : vector<1x32xf32>
    %337 = vector.extract_strided_slice %322 {offsets = [0, 96], sizes = [1, 32], strides = [1, 1]} : vector<1x128xf32> to vector<1x32xf32>
    %338 = arith.negf %337 : vector<1x32xf32>
    %339 = math.exp %338 : vector<1x32xf32>
    %cst_129 = arith.constant 1.000000e+00 : f32
    %340 = vector.broadcast %cst_129 : f32 to vector<1x32xf32>
    %341 = arith.addf %340, %339 : vector<1x32xf32>
    %342 = arith.divf %340, %341 : vector<1x32xf32>
    %343 = arith.mulf %334, %290 : vector<1x32xf32>
    %344 = arith.mulf %328, %336 : vector<1x32xf32>
    %345 = arith.addf %343, %344 : vector<1x32xf32>
    %346 = math.tanh %345 : vector<1x32xf32>
    %347 = arith.mulf %342, %346 : vector<1x32xf32>
    %348 = tpu.concatenate %347, %320 in 1 : vector<1x32xf32>, vector<1x16xf32> -> vector<1x48xf32>
    %cst_130 = arith.constant dense<0.000000e+00> : vector<1x64xf32>
    %349 = tpu.matmul %348, %205, %cst_130 {dimension_numbers = #tpu.dot_dimension_numbers<[1], [0], [0], [1], [0, 0, 1, 1], [], []>} : vector<1x48xf32>, vector<48x64xf32>, vector<1x64xf32> -> vector<1x64xf32>
    %350 = arith.addf %349, %206 : vector<1x64xf32>
    %351 = vector.extract_strided_slice %350 {offsets = [0, 0], sizes = [1, 16], strides = [1, 1]} : vector<1x64xf32> to vector<1x16xf32>
    %352 = arith.negf %351 : vector<1x16xf32>
    %353 = math.exp %352 : vector<1x16xf32>
    %cst_131 = arith.constant 1.000000e+00 : f32
    %354 = vector.broadcast %cst_131 : f32 to vector<1x16xf32>
    %355 = arith.addf %354, %353 : vector<1x16xf32>
    %356 = arith.divf %354, %355 : vector<1x16xf32>
    %357 = vector.extract_strided_slice %350 {offsets = [0, 16], sizes = [1, 16], strides = [1, 1]} : vector<1x64xf32> to vector<1x16xf32>
    %358 = arith.negf %357 : vector<1x16xf32>
    %359 = math.exp %358 : vector<1x16xf32>
    %cst_132 = arith.constant 1.000000e+00 : f32
    %360 = vector.broadcast %cst_132 : f32 to vector<1x16xf32>
    %361 = arith.addf %360, %359 : vector<1x16xf32>
    %362 = arith.divf %360, %361 : vector<1x16xf32>
    %363 = vector.extract_strided_slice %350 {offsets = [0, 32], sizes = [1, 16], strides = [1, 1]} : vector<1x64xf32> to vector<1x16xf32>
    %364 = math.tanh %363 : vector<1x16xf32>
    %365 = vector.extract_strided_slice %350 {offsets = [0, 48], sizes = [1, 16], strides = [1, 1]} : vector<1x64xf32> to vector<1x16xf32>
    %366 = arith.negf %365 : vector<1x16xf32>
    %367 = math.exp %366 : vector<1x16xf32>
    %cst_133 = arith.constant 1.000000e+00 : f32
    %368 = vector.broadcast %cst_133 : f32 to vector<1x16xf32>
    %369 = arith.addf %368, %367 : vector<1x16xf32>
    %370 = arith.divf %368, %369 : vector<1x16xf32>
    %371 = arith.mulf %362, %318 : vector<1x16xf32>
    %372 = arith.mulf %356, %364 : vector<1x16xf32>
    %373 = arith.addf %371, %372 : vector<1x16xf32>
    %374 = math.tanh %373 : vector<1x16xf32>
    %375 = arith.mulf %370, %374 : vector<1x16xf32>
    %cst_134 = arith.constant dense<0.000000e+00> : vector<1x128xf32>
    %376 = tpu.matmul %347, %204, %cst_134 {dimension_numbers = #tpu.dot_dimension_numbers<[1], [0], [0], [1], [0, 0, 1, 1], [], []>} : vector<1x32xf32>, vector<32x128xf32>, vector<1x128xf32> -> vector<1x128xf32>
    %377 = arith.addf %203, %376 : vector<1x128xf32>
    %378 = vector.extract_strided_slice %377 {offsets = [0, 0], sizes = [1, 32], strides = [1, 1]} : vector<1x128xf32> to vector<1x32xf32>
    %379 = arith.negf %378 : vector<1x32xf32>
    %380 = math.exp %379 : vector<1x32xf32>
    %cst_135 = arith.constant 1.000000e+00 : f32
    %381 = vector.broadcast %cst_135 : f32 to vector<1x32xf32>
    %382 = arith.addf %381, %380 : vector<1x32xf32>
    %383 = arith.divf %381, %382 : vector<1x32xf32>
    %384 = vector.extract_strided_slice %377 {offsets = [0, 32], sizes = [1, 32], strides = [1, 1]} : vector<1x128xf32> to vector<1x32xf32>
    %385 = arith.negf %384 : vector<1x32xf32>
    %386 = math.exp %385 : vector<1x32xf32>
    %cst_136 = arith.constant 1.000000e+00 : f32
    %387 = vector.broadcast %cst_136 : f32 to vector<1x32xf32>
    %388 = arith.addf %387, %386 : vector<1x32xf32>
    %389 = arith.divf %387, %388 : vector<1x32xf32>
    %390 = vector.extract_strided_slice %377 {offsets = [0, 64], sizes = [1, 32], strides = [1, 1]} : vector<1x128xf32> to vector<1x32xf32>
    %391 = math.tanh %390 : vector<1x32xf32>
    %392 = vector.extract_strided_slice %377 {offsets = [0, 96], sizes = [1, 32], strides = [1, 1]} : vector<1x128xf32> to vector<1x32xf32>
    %393 = arith.negf %392 : vector<1x32xf32>
    %394 = math.exp %393 : vector<1x32xf32>
    %cst_137 = arith.constant 1.000000e+00 : f32
    %395 = vector.broadcast %cst_137 : f32 to vector<1x32xf32>
    %396 = arith.addf %395, %394 : vector<1x32xf32>
    %397 = arith.divf %395, %396 : vector<1x32xf32>
    %398 = arith.mulf %389, %345 : vector<1x32xf32>
    %399 = arith.mulf %383, %391 : vector<1x32xf32>
    %400 = arith.addf %398, %399 : vector<1x32xf32>
    %401 = math.tanh %400 : vector<1x32xf32>
    %402 = arith.mulf %397, %401 : vector<1x32xf32>
    %403 = tpu.concatenate %402, %375 in 1 : vector<1x32xf32>, vector<1x16xf32> -> vector<1x48xf32>
    %cst_138 = arith.constant dense<0.000000e+00> : vector<1x64xf32>
    %404 = tpu.matmul %403, %205, %cst_138 {dimension_numbers = #tpu.dot_dimension_numbers<[1], [0], [0], [1], [0, 0, 1, 1], [], []>} : vector<1x48xf32>, vector<48x64xf32>, vector<1x64xf32> -> vector<1x64xf32>
    %405 = arith.addf %404, %206 : vector<1x64xf32>
    %406 = vector.extract_strided_slice %405 {offsets = [0, 0], sizes = [1, 16], strides = [1, 1]} : vector<1x64xf32> to vector<1x16xf32>
    %407 = arith.negf %406 : vector<1x16xf32>
    %408 = math.exp %407 : vector<1x16xf32>
    %cst_139 = arith.constant 1.000000e+00 : f32
    %409 = vector.broadcast %cst_139 : f32 to vector<1x16xf32>
    %410 = arith.addf %409, %408 : vector<1x16xf32>
    %411 = arith.divf %409, %410 : vector<1x16xf32>
    %412 = vector.extract_strided_slice %405 {offsets = [0, 16], sizes = [1, 16], strides = [1, 1]} : vector<1x64xf32> to vector<1x16xf32>
    %413 = arith.negf %412 : vector<1x16xf32>
    %414 = math.exp %413 : vector<1x16xf32>
    %cst_140 = arith.constant 1.000000e+00 : f32
    %415 = vector.broadcast %cst_140 : f32 to vector<1x16xf32>
    %416 = arith.addf %415, %414 : vector<1x16xf32>
    %417 = arith.divf %415, %416 : vector<1x16xf32>
    %418 = vector.extract_strided_slice %405 {offsets = [0, 32], sizes = [1, 16], strides = [1, 1]} : vector<1x64xf32> to vector<1x16xf32>
    %419 = math.tanh %418 : vector<1x16xf32>
    %420 = vector.extract_strided_slice %405 {offsets = [0, 48], sizes = [1, 16], strides = [1, 1]} : vector<1x64xf32> to vector<1x16xf32>
    %421 = arith.negf %420 : vector<1x16xf32>
    %422 = math.exp %421 : vector<1x16xf32>
    %cst_141 = arith.constant 1.000000e+00 : f32
    %423 = vector.broadcast %cst_141 : f32 to vector<1x16xf32>
    %424 = arith.addf %423, %422 : vector<1x16xf32>
    %425 = arith.divf %423, %424 : vector<1x16xf32>
    %426 = arith.mulf %417, %373 : vector<1x16xf32>
    %427 = arith.mulf %411, %419 : vector<1x16xf32>
    %428 = arith.addf %426, %427 : vector<1x16xf32>
    %429 = math.tanh %428 : vector<1x16xf32>
    %430 = arith.mulf %425, %429 : vector<1x16xf32>
    %c0_142 = arith.constant 0 : index
    %c0_143 = arith.constant 0 : index
    %431 = vector.load %arg12[%c0_142, %c0_143] : memref<16x32xf32, #tpu.memory_space<vmem>>, vector<16x32xf32>
    %cst_144 = arith.constant dense<0.000000e+00> : vector<1x32xf32>
    %432 = tpu.matmul %430, %431, %cst_144 {dimension_numbers = #tpu.dot_dimension_numbers<[1], [0], [0], [1], [0, 0, 1, 1], [], []>} : vector<1x16xf32>, vector<16x32xf32>, vector<1x32xf32> -> vector<1x32xf32>
    %c0_145 = arith.constant 0 : index
    %c0_146 = arith.constant 0 : index
    %433 = vector.load %arg13[%c0_145, %c0_146] : memref<1x32xf32, #tpu.memory_space<vmem>>, vector<1x32xf32>
    %434 = arith.addf %432, %433 : vector<1x32xf32>
    %cst_147 = arith.constant 0.000000e+00 : f32
    %435 = vector.broadcast %cst_147 : f32 to vector<1x32xf32>
    %436 = arith.maximumf %434, %435 : vector<1x32xf32>
    %c0_148 = arith.constant 0 : index
    %c0_149 = arith.constant 0 : index
    %437 = vector.load %arg14[%c0_148, %c0_149] : memref<32x128xf32, #tpu.memory_space<vmem>>, vector<32x128xf32>
    %cst_150 = arith.constant dense<0.000000e+00> : vector<1x128xf32>
    %438 = tpu.matmul %436, %437, %cst_150 {dimension_numbers = #tpu.dot_dimension_numbers<[1], [0], [0], [1], [0, 0, 1, 1], [], []>} : vector<1x32xf32>, vector<32x128xf32>, vector<1x128xf32> -> vector<1x128xf32>
    %c0_151 = arith.constant 0 : index
    %c0_152 = arith.constant 0 : index
    %439 = vector.load %arg15[%c0_151, %c0_152] : memref<1x128xf32, #tpu.memory_space<vmem>>, vector<1x128xf32>
    %440 = arith.addf %438, %439 : vector<1x128xf32>
    %c0_153 = arith.constant 0 : index
    %c0_154 = arith.constant 0 : index
    %c0_155 = arith.constant 0 : index
    %441 = vector.load %arg16[%c0_153, %c0_154, %c0_155] : memref<1x1x128xf32, #tpu.memory_space<vmem>>, vector<1x1x128xf32>
    %442 = vector.shape_cast %441 : vector<1x1x128xf32> to vector<1x128xf32>
    %443 = vector.shape_cast %440 : vector<1x128xf32> to vector<1x1x128xf32>
    tpu.vector_store %arg16[%c0_153, %c0_154, %c0_155], %443 {strides = array<i32>} : memref<1x1x128xf32, #tpu.memory_space<vmem>>, vector<1x1x128xf32>,
    return
  }
  func.func @transform_0(%arg0: i32) -> (i32, i32, i32, i32) {
    %c0_i32 = arith.constant 0 : i32
    %c0_i32_0 = arith.constant 0 : i32
    %c0_i32_1 = arith.constant 0 : i32
    %c0_i32_2 = arith.constant 0 : i32
    return %arg0, %c0_i32, %c0_i32_0, %c0_i32_1 : i32, i32, i32, i32
  }
  func.func @transform_1(%arg0: i32) -> (i32, i32, i32, i32) {
    %c0_i32 = arith.constant 0 : i32
    %c0_i32_0 = arith.constant 0 : i32
    %c0_i32_1 = arith.constant 0 : i32
    %c0_i32_2 = arith.constant 0 : i32
    return %arg0, %c0_i32, %c0_i32_0, %c0_i32_1 : i32, i32, i32, i32
  }
  func.func @transform_2(%arg0: i32) -> (i32, i32) {
    %c0_i32 = arith.constant 0 : i32
    %c0_i32_0 = arith.constant 0 : i32
    %c0_i32_1 = arith.constant 0 : i32
    return %c0_i32, %c0_i32_0 : i32, i32
  }
  func.func @transform_3(%arg0: i32) -> (i32, i32) {
    %c0_i32 = arith.constant 0 : i32
    %c0_i32_0 = arith.constant 0 : i32
    %c0_i32_1 = arith.constant 0 : i32
    return %c0_i32, %c0_i32_0 : i32, i32
  }
  func.func @transform_4(%arg0: i32) -> (i32, i32) {
    %c0_i32 = arith.constant 0 : i32
    %c0_i32_0 = arith.constant 0 : i32
    %c0_i32_1 = arith.constant 0 : i32
    return %c0_i32, %c0_i32_0 : i32, i32
  }
  func.func @transform_5(%arg0: i32) -> (i32, i32) {
    %c0_i32 = arith.constant 0 : i32
    %c0_i32_0 = arith.constant 0 : i32
    %c0_i32_1 = arith.constant 0 : i32
    return %c0_i32, %c0_i32_0 : i32, i32
  }
  func.func @transform_6(%arg0: i32) -> (i32, i32, i32) {
    %c0_i32 = arith.constant 0 : i32
    %c0_i32_0 = arith.constant 0 : i32
    %c0_i32_1 = arith.constant 0 : i32
    %c0_i32_2 = arith.constant 0 : i32
    return %c0_i32, %c0_i32_0, %c0_i32_1 : i32, i32, i32
  }
  func.func @transform_7(%arg0: i32) -> (i32, i32) {
    %c0_i32 = arith.constant 0 : i32
    %c0_i32_0 = arith.constant 0 : i32
    %c0_i32_1 = arith.constant 0 : i32
    return %c0_i32, %c0_i32_0 : i32, i32
  }
  func.func @transform_8(%arg0: i32) -> (i32, i32) {
    %c0_i32 = arith.constant 0 : i32
    %c0_i32_0 = arith.constant 0 : i32
    %c0_i32_1 = arith.constant 0 : i32
    return %c0_i32, %c0_i32_0 : i32, i32
  }
  func.func @transform_9(%arg0: i32) -> (i32, i32) {
    %c0_i32 = arith.constant 0 : i32
    %c0_i32_0 = arith.constant 0 : i32
    %c0_i32_1 = arith.constant 0 : i32
    return %c0_i32, %c0_i32_0 : i32, i32
  }
  func.func @transform_10(%arg0: i32) -> (i32, i32) {
    %c0_i32 = arith.constant 0 : i32
    %c0_i32_0 = arith.constant 0 : i32
    %c0_i32_1 = arith.constant 0 : i32
    return %c0_i32, %c0_i32_0 : i32, i32
  }
  func.func @transform_11(%arg0: i32) -> (i32, i32) {
    %c0_i32 = arith.constant 0 : i32
    %c0_i32_0 = arith.constant 0 : i32
    %c0_i32_1 = arith.constant 0 : i32
    return %c0_i32, %c0_i32_0 : i32, i32
  }
  func.func @transform_12(%arg0: i32) -> (i32, i32) {
    %c0_i32 = arith.constant 0 : i32
    %c0_i32_0 = arith.constant 0 : i32
    %c0_i32_1 = arith.constant 0 : i32
    return %c0_i32, %c0_i32_0 : i32, i32
  }
  func.func @transform_13(%arg0: i32) -> (i32, i32) {
    %c0_i32 = arith.constant 0 : i32
    %c0_i32_0 = arith.constant 0 : i32
    %c0_i32_1 = arith.constant 0 : i32
    return %c0_i32, %c0_i32_0 : i32, i32
  }
  func.func @transform_14(%arg0: i32) -> (i32, i32) {
    %c0_i32 = arith.constant 0 : i32
    %c0_i32_0 = arith.constant 0 : i32
    %c0_i32_1 = arith.constant 0 : i32
    return %c0_i32, %c0_i32_0 : i32, i32
  }
  func.func @transform_15(%arg0: i32) -> (i32, i32, i32) {
    %c0_i32 = arith.constant 0 : i32
    %c0_i32_0 = arith.constant 0 : i32
    %c0_i32_1 = arith.constant 0 : i32
    return %arg0, %c0_i32, %c0_i32_0 : i32, i32, i32
  }
}

</mosaic_0001>

<llo_original>
// kernel: lstm_model_forward.1
$region0: #{lstm_model_forward.1}
  #allocation0 [shape = 'u32[]', space=smem, size = 0x4, offset = 0x4, fixed_abs, tag = 'smem constant byte address 0x4 - core index']
  #allocation1 [shape = 'u32[144,128]{1,0:T(1,128)}', space=vmem, size = 0x12000, scoped, tag = 'internal scratch']
  #allocation2 [shape = 'f32[32,72]{1,0:T(8,128)}', space=vmem, size = 0x4000, scoped, tag = 'scratch operand']
  #allocation3 [shape = 'f32[32,1440]{1,0:T(8,128)}', space=vmem, size = 0x30000, scoped, tag = 'scratch operand']
  %s0 = inlined_call_operand.vmem [shape: f32[2,4,8,16], index: 0, kind: input, shape index: {}]
  %s1 = inlined_call_operand.vmem [shape: f32[2,4,8,16], index: 1, kind: input, shape index: {}]
  %s2 = inlined_call_operand.hbm [shape: bf16[72,1024], index: 2, kind: input, shape index: {}]
  %s3 = inlined_call_operand.hbm [shape: f32[1,1024], index: 3, kind: input, shape index: {}]
  %s4 = inlined_call_operand.hbm [shape: bf16[1440,512], index: 4, kind: input, shape index: {}]
  %s5 = inlined_call_operand.hbm [shape: f32[1,512], index: 5, kind: input, shape index: {}]
  %s6 = inlined_call_operand.hbm [shape: bf16[4,448,128], index: 6, kind: input, shape index: {}]
  %s7 = inlined_call_operand.hbm [shape: f32[1,128], index: 7, kind: input, shape index: {}]
  %s8 = inlined_call_operand.hbm [shape: f32[32,128], index: 8, kind: input, shape index: {}]
  %s9 = inlined_call_operand.hbm [shape: f32[48,64], index: 9, kind: input, shape index: {}]
  %s10 = inlined_call_operand.hbm [shape: f32[1,64], index: 10, kind: input, shape index: {}]
  %s11 = inlined_call_operand.hbm [shape: f32[16,32], index: 11, kind: input, shape index: {}]
  %s12 = inlined_call_operand.hbm [shape: f32[1,32], index: 12, kind: input, shape index: {}]
  %s13 = inlined_call_operand.hbm [shape: f32[32,128], index: 13, kind: input, shape index: {}]
  %s14 = inlined_call_operand.hbm [shape: f32[1,128], index: 14, kind: input, shape index: {}]
  %s15 = inlined_call_operand.vmem [shape: f32[2,1,128], index: 15, kind: output, shape index: {}]
  %s16 = sld [smem:[#allocation0]]
  $region145: #{lstm_model_forward.1} parent=0
    _
  %s18 = ssub.s32 1, %s16
  %s19 = scalar_select 0, %s18, %s16
  $region1: #{lstm_model_forward.1} parent=0
    #allocation4 [shape = 'u8[147456]{0}', space=vmem, size = 0x24000, scoped, tag = 'input window, operand 2, single buffered']
    #allocation5 [shape = 's32[2]{0}', space=sflag, size = 0x8, scoped, tag = 'scoped memory for lstm_model_forward.1']
    #allocation6 [shape = 'u8[4096]{0}', space=vmem, size = 0x1000, scoped, tag = 'input window, operand 3, single buffered']
    #allocation7 [shape = 's32[1]{0}', space=sflag, size = 0x4, scoped, tag = 'scoped memory for lstm_model_forward.1']
    #allocation8 [shape = 'u8[1474560]{0}', space=vmem, size = 0x168000, scoped, tag = 'input window, operand 4, single buffered']
    #allocation9 [shape = 'u8[2048]{0}', space=vmem, size = 0x800, scoped, tag = 'input window, operand 5, single buffered']
    #allocation10 [shape = 's32[1]{0}', space=sflag, size = 0x4, scoped, tag = 'scoped memory for lstm_model_forward.1']
    #allocation11 [shape = 'u8[458752]{0}', space=vmem, size = 0x70000, scoped, tag = 'input window, operand 6, single buffered']
    #allocation12 [shape = 'u8[512]{0}', space=vmem, size = 0x400, scoped, tag = 'input window, operand 7, single buffered']
    #allocation13 [shape = 's32[1]{0}', space=sflag, size = 0x4, scoped, tag = 'scoped memory for lstm_model_forward.1']
    #allocation14 [shape = 'u8[16384]{0}', space=vmem, size = 0x4000, scoped, tag = 'input window, operand 8, single buffered']
    #allocation15 [shape = 'u8[24576]{0}', space=vmem, size = 0x6000, scoped, tag = 'input window, operand 9, single buffered']
    #allocation16 [shape = 's32[1]{0}', space=sflag, size = 0x4, scoped, tag = 'scoped memory for lstm_model_forward.1']
    #allocation17 [shape = 'u8[512]{0}', space=vmem, size = 0x400, scoped, tag = 'input window, operand 10, single buffered']
    #allocation18 [shape = 'u8[8192]{0}', space=vmem, size = 0x2000, scoped, tag = 'input window, operand 11, single buffered']
    #allocation19 [shape = 's32[1]{0}', space=sflag, size = 0x4, scoped, tag = 'scoped memory for lstm_model_forward.1']
    #allocation20 [shape = 'u8[512]{0}', space=vmem, size = 0x400, scoped, tag = 'input window, operand 12, single buffered']
    #allocation21 [shape = 'u8[16384]{0}', space=vmem, size = 0x4000, scoped, tag = 'input window, operand 13, single buffered']
    #allocation22 [shape = 's32[1]{0}', space=sflag, size = 0x4, scoped, tag = 'scoped memory for lstm_model_forward.1']
    #allocation23 [shape = 'u8[512]{0}', space=vmem, size = 0x400, scoped, tag = 'input window, operand 14, single buffered']
    %20 = vsyncpa [#allocation5], 0
    %21 = vsyncpa [#allocation7], 0
    %22 = vsyncpa [#allocation10], 0
    %23 = vsyncpa [#allocation13], 0
    %24 = vsyncpa [#allocation16], 0
    %25 = vsyncpa [#allocation19], 0
    %26 = vsyncpa [#allocation22], 0
    loop: start=0, step=1, limit=4
    $region2: #{lstm_model_forward.1} parent=1 // loop_pre_header
      _
    $region3: #{lstm_model_forward.1} parent=1 // loop_header
      %s28 = sphi 0, %s32
      %p29 = scmp.ge.s32.totalorder %s28, 4
      %s38 = sphi 0, %s40
      %s41 = sphi 0, %s38
      %s42 = sphi 0, %s41
      %s58 = sphi 0, %s42
      %s64 = sphi 0, %s66
      %s67 = sphi 0, %s64
      %s68 = sphi 0, %s67
      %s84 = sphi 0, %s68
      %s88 = sphi 0, %s88
      %s90 = sphi 0, %s88
      %s91 = sphi 0, %s90
      %s105 = sphi 0, %s91
      %s109 = sphi 0, %s109
      %s111 = sphi 0, %s109
      %s112 = sphi 0, %s111
      %s126 = sphi 0, %s112
      %s130 = sphi 0, %s130
      %s132 = sphi 0, %s130
      %s133 = sphi 0, %s132
      %s147 = sphi 0, %s133
      %s151 = sphi 0, %s151
      %s153 = sphi 0, %s151
      %s154 = sphi 0, %s153
      %s168 = sphi 0, %s154
      %s172 = sphi 0, %s172
      %s174 = sphi 0, %s172
      %s175 = sphi 0, %s174
      %s189 = sphi 0, %s175
      %s193 = sphi 0, %s193
      %s195 = sphi 0, %s193
      %s196 = sphi 0, %s195
      %s210 = sphi 0, %s196
      %s214 = sphi 0, %s214
      %s216 = sphi 0, %s214
      %s217 = sphi 0, %s216
      %s231 = sphi 0, %s217
      %s235 = sphi 0, %s235
      %s237 = sphi 0, %s235
      %s238 = sphi 0, %s237
      %s252 = sphi 0, %s238
      %s256 = sphi 0, %s256
      %s258 = sphi 0, %s256
      %s259 = sphi 0, %s258
      %s273 = sphi 0, %s259
      %s277 = sphi 0, %s277
      %s279 = sphi 0, %s277
      %s280 = sphi 0, %s279
      %s294 = sphi 0, %s280
      %s298 = sphi 0, %s298
      %s300 = sphi 0, %s298
      %s301 = sphi 0, %s300
      %s315 = sphi 0, %s301
      %s319 = sphi 0, %s319
      %s321 = sphi 0, %s319
      %s322 = sphi 0, %s321
      %s336 = sphi 0, %s322
      %s340 = sphi 0, %s340
      %s342 = sphi 0, %s340
      %s343 = sphi 0, %s342
      %s357 = sphi 0, %s343
      %s363 = sphi 0, %s365
      %s366 = sphi 0, %s363
      %s367 = sphi 0, %s366
      %s383 = sphi 0, %s367
    $region4: #{lstm_model_forward.1} parent=1 // loop_header_branch
      %31 = sbr.rel (%p29) target = $region8
    $region5: #{lstm_model_forward.1} parent=1 // loop_body
      %s33 = ssub.s32 %s28, 1
      %s34 = ssub.s32 %s28, 2
      %s35 = sadd.s32 %s28, 1
      %s36 = ssub.s32 %s28, %s35
      %p37 = scmp.eq.s32.totalorder %s36, 0
      %s39 = sadd.s32 %s38, 1
      %s40 = scalar_select %p37, %s38, %s39
      %p43 = pneg %p37
      %p44 = scmp.eq.s32.totalorder %s28, 1
      %p45 = por %p43, %p44
      %p46 = scmp.ne.s32.totalorder %s38, %s41
      %p47 = scmp.eq.s32.totalorder %s28, 0
      %p48 = por %p46, %p47
      %p49 = scmp.ne.s32.totalorder %s38, %s41
      %p50 = scmp.eq.s32.totalorder %s33, 1
      %p51 = por %p49, %p50
      %p52 = scmp.ne.s32.totalorder %s41, %s42
      %p53 = scmp.eq.s32.totalorder %s33, 0
      %p54 = por %p52, %p53
      %p55 = scmp.ne.s32.totalorder %s41, %s42
      %p56 = scmp.eq.s32.totalorder %s34, 1
      %p57 = por %p55, %p56
      %p59 = scmp.ne.s32.totalorder %s42, %s58
      %p60 = scmp.eq.s32.totalorder %s34, 0
      %p61 = por %p59, %p60
      %s62 = ssub.s32 %s28, %s35
      %p63 = scmp.eq.s32.totalorder %s62, 0
      %s65 = sadd.s32 %s64, 1
      %s66 = scalar_select %p63, %s64, %s65
      %p69 = pneg %p63
      %p70 = scmp.eq.s32.totalorder %s28, 1
      %p71 = por %p69, %p70
      %p72 = scmp.ne.s32.totalorder %s64, %s67
      %p73 = scmp.eq.s32.totalorder %s28, 0
      %p74 = por %p72, %p73
      %p75 = scmp.ne.s32.totalorder %s64, %s67
      %p76 = scmp.eq.s32.totalorder %s33, 1
      %p77 = por %p75, %p76
      %p78 = scmp.ne.s32.totalorder %s67, %s68
      %p79 = scmp.eq.s32.totalorder %s33, 0
      %p80 = por %p78, %p79
      %p81 = scmp.ne.s32.totalorder %s67, %s68
      %p82 = scmp.eq.s32.totalorder %s34, 1
      %p83 = por %p81, %p82
      %p85 = scmp.ne.s32.totalorder %s68, %s84
      %p86 = scmp.eq.s32.totalorder %s34, 0
      %p87 = por %p85, %p86
      %s89 = sadd.s32 %s88, 1
      %p92 = scmp.eq.s32.totalorder %s28, 1
      %p93 = scmp.ne.s32.totalorder %s88, %s90
      %p94 = scmp.eq.s32.totalorder %s28, 0
      %p95 = por %p93, %p94
      %p96 = scmp.ne.s32.totalorder %s88, %s90
      %p97 = scmp.eq.s32.totalorder %s33, 1
      %p98 = por %p96, %p97
      %p99 = scmp.ne.s32.totalorder %s90, %s91
      %p100 = scmp.eq.s32.totalorder %s33, 0
      %p101 = por %p99, %p100
      %p102 = scmp.ne.s32.totalorder %s90, %s91
      %p103 = scmp.eq.s32.totalorder %s34, 1
      %p104 = por %p102, %p103
      %p106 = scmp.ne.s32.totalorder %s91, %s105
      %p107 = scmp.eq.s32.totalorder %s34, 0
      %p108 = por %p106, %p107
      %s110 = sadd.s32 %s109, 1
      %p113 = scmp.eq.s32.totalorder %s28, 1
      %p114 = scmp.ne.s32.totalorder %s109, %s111
      %p115 = scmp.eq.s32.totalorder %s28, 0
      %p116 = por %p114, %p115
      %p117 = scmp.ne.s32.totalorder %s109, %s111
      %p118 = scmp.eq.s32.totalorder %s33, 1
      %p119 = por %p117, %p118
      %p120 = scmp.ne.s32.totalorder %s111, %s112
      %p121 = scmp.eq.s32.totalorder %s33, 0
      %p122 = por %p120, %p121
      %p123 = scmp.ne.s32.totalorder %s111, %s112
      %p124 = scmp.eq.s32.totalorder %s34, 1
      %p125 = por %p123, %p124
      %p127 = scmp.ne.s32.totalorder %s112, %s126
      %p128 = scmp.eq.s32.totalorder %s34, 0
      %p129 = por %p127, %p128
      %s131 = sadd.s32 %s130, 1
      %p134 = scmp.eq.s32.totalorder %s28, 1
      %p135 = scmp.ne.s32.totalorder %s130, %s132
      %p136 = scmp.eq.s32.totalorder %s28, 0
      %p137 = por %p135, %p136
      %p138 = scmp.ne.s32.totalorder %s130, %s132
      %p139 = scmp.eq.s32.totalorder %s33, 1
      %p140 = por %p138, %p139
      %p141 = scmp.ne.s32.totalorder %s132, %s133
      %p142 = scmp.eq.s32.totalorder %s33, 0
      %p143 = por %p141, %p142
      %p144 = scmp.ne.s32.totalorder %s132, %s133
      %p145 = scmp.eq.s32.totalorder %s34, 1
      %p146 = por %p144, %p145
      %p148 = scmp.ne.s32.totalorder %s133, %s147
      %p149 = scmp.eq.s32.totalorder %s34, 0
      %p150 = por %p148, %p149
      %s152 = sadd.s32 %s151, 1
      %p155 = scmp.eq.s32.totalorder %s28, 1
      %p156 = scmp.ne.s32.totalorder %s151, %s153
      %p157 = scmp.eq.s32.totalorder %s28, 0
      %p158 = por %p156, %p157
      %p159 = scmp.ne.s32.totalorder %s151, %s153
      %p160 = scmp.eq.s32.totalorder %s33, 1
      %p161 = por %p159, %p160
      %p162 = scmp.ne.s32.totalorder %s153, %s154
      %p163 = scmp.eq.s32.totalorder %s33, 0
      %p164 = por %p162, %p163
      %p165 = scmp.ne.s32.totalorder %s153, %s154
      %p166 = scmp.eq.s32.totalorder %s34, 1
      %p167 = por %p165, %p166
      %p169 = scmp.ne.s32.totalorder %s154, %s168
      %p170 = scmp.eq.s32.totalorder %s34, 0
      %p171 = por %p169, %p170
      %s173 = sadd.s32 %s172, 1
      %p176 = scmp.eq.s32.totalorder %s28, 1
      %p177 = scmp.ne.s32.totalorder %s172, %s174
      %p178 = scmp.eq.s32.totalorder %s28, 0
      %p179 = por %p177, %p178
      %p180 = scmp.ne.s32.totalorder %s172, %s174
      %p181 = scmp.eq.s32.totalorder %s33, 1
      %p182 = por %p180, %p181
      %p183 = scmp.ne.s32.totalorder %s174, %s175
      %p184 = scmp.eq.s32.totalorder %s33, 0
      %p185 = por %p183, %p184
      %p186 = scmp.ne.s32.totalorder %s174, %s175
      %p187 = scmp.eq.s32.totalorder %s34, 1
      %p188 = por %p186, %p187
      %p190 = scmp.ne.s32.totalorder %s175, %s189
      %p191 = scmp.eq.s32.totalorder %s34, 0
      %p192 = por %p190, %p191
      %s194 = sadd.s32 %s193, 1
      %p197 = scmp.eq.s32.totalorder %s28, 1
      %p198 = scmp.ne.s32.totalorder %s193, %s195
      %p199 = scmp.eq.s32.totalorder %s28, 0
      %p200 = por %p198, %p199
      %p201 = scmp.ne.s32.totalorder %s193, %s195
      %p202 = scmp.eq.s32.totalorder %s33, 1
      %p203 = por %p201, %p202
      %p204 = scmp.ne.s32.totalorder %s195, %s196
      %p205 = scmp.eq.s32.totalorder %s33, 0
      %p206 = por %p204, %p205
      %p207 = scmp.ne.s32.totalorder %s195, %s196
      %p208 = scmp.eq.s32.totalorder %s34, 1
      %p209 = por %p207, %p208
      %p211 = scmp.ne.s32.totalorder %s196, %s210
      %p212 = scmp.eq.s32.totalorder %s34, 0
      %p213 = por %p211, %p212
      %s215 = sadd.s32 %s214, 1
      %p218 = scmp.eq.s32.totalorder %s28, 1
      %p219 = scmp.ne.s32.totalorder %s214, %s216
      %p220 = scmp.eq.s32.totalorder %s28, 0
      %p221 = por %p219, %p220
      %p222 = scmp.ne.s32.totalorder %s214, %s216
      %p223 = scmp.eq.s32.totalorder %s33, 1
      %p224 = por %p222, %p223
      %p225 = scmp.ne.s32.totalorder %s216, %s217
      %p226 = scmp.eq.s32.totalorder %s33, 0
      %p227 = por %p225, %p226
      %p228 = scmp.ne.s32.totalorder %s216, %s217
      %p229 = scmp.eq.s32.totalorder %s34, 1
      %p230 = por %p228, %p229
      %p232 = scmp.ne.s32.totalorder %s217, %s231
      %p233 = scmp.eq.s32.totalorder %s34, 0
      %p234 = por %p232, %p233
      %s236 = sadd.s32 %s235, 1
      %p239 = scmp.eq.s32.totalorder %s28, 1
      %p240 = scmp.ne.s32.totalorder %s235, %s237
      %p241 = scmp.eq.s32.totalorder %s28, 0
      %p242 = por %p240, %p241
      %p243 = scmp.ne.s32.totalorder %s235, %s237
      %p244 = scmp.eq.s32.totalorder %s33, 1
      %p245 = por %p243, %p244
      %p246 = scmp.ne.s32.totalorder %s237, %s238
      %p247 = scmp.eq.s32.totalorder %s33, 0
      %p248 = por %p246, %p247
      %p249 = scmp.ne.s32.totalorder %s237, %s238
      %p250 = scmp.eq.s32.totalorder %s34, 1
      %p251 = por %p249, %p250
      %p253 = scmp.ne.s32.totalorder %s238, %s252
      %p254 = scmp.eq.s32.totalorder %s34, 0
      %p255 = por %p253, %p254
      %s257 = sadd.s32 %s256, 1
      %p260 = scmp.eq.s32.totalorder %s28, 1
      %p261 = scmp.ne.s32.totalorder %s256, %s258
      %p262 = scmp.eq.s32.totalorder %s28, 0
      %p263 = por %p261, %p262
      %p264 = scmp.ne.s32.totalorder %s256, %s258
      %p265 = scmp.eq.s32.totalorder %s33, 1
      %p266 = por %p264, %p265
      %p267 = scmp.ne.s32.totalorder %s258, %s259
      %p268 = scmp.eq.s32.totalorder %s33, 0
      %p269 = por %p267, %p268
      %p270 = scmp.ne.s32.totalorder %s258, %s259
      %p271 = scmp.eq.s32.totalorder %s34, 1
      %p272 = por %p270, %p271
      %p274 = scmp.ne.s32.totalorder %s259, %s273
      %p275 = scmp.eq.s32.totalorder %s34, 0
      %p276 = por %p274, %p275
      %s278 = sadd.s32 %s277, 1
      %p281 = scmp.eq.s32.totalorder %s28, 1
      %p282 = scmp.ne.s32.totalorder %s277, %s279
      %p283 = scmp.eq.s32.totalorder %s28, 0
      %p284 = por %p282, %p283
      %p285 = scmp.ne.s32.totalorder %s277, %s279
      %p286 = scmp.eq.s32.totalorder %s33, 1
      %p287 = por %p285, %p286
      %p288 = scmp.ne.s32.totalorder %s279, %s280
      %p289 = scmp.eq.s32.totalorder %s33, 0
      %p290 = por %p288, %p289
      %p291 = scmp.ne.s32.totalorder %s279, %s280
      %p292 = scmp.eq.s32.totalorder %s34, 1
      %p293 = por %p291, %p292
      %p295 = scmp.ne.s32.totalorder %s280, %s294
      %p296 = scmp.eq.s32.totalorder %s34, 0
      %p297 = por %p295, %p296
      %s299 = sadd.s32 %s298, 1
      %p302 = scmp.eq.s32.totalorder %s28, 1
      %p303 = scmp.ne.s32.totalorder %s298, %s300
      %p304 = scmp.eq.s32.totalorder %s28, 0
      %p305 = por %p303, %p304
      %p306 = scmp.ne.s32.totalorder %s298, %s300
      %p307 = scmp.eq.s32.totalorder %s33, 1
      %p308 = por %p306, %p307
      %p309 = scmp.ne.s32.totalorder %s300, %s301
      %p310 = scmp.eq.s32.totalorder %s33, 0
      %p311 = por %p309, %p310
      %p312 = scmp.ne.s32.totalorder %s300, %s301
      %p313 = scmp.eq.s32.totalorder %s34, 1
      %p314 = por %p312, %p313
      %p316 = scmp.ne.s32.totalorder %s301, %s315
      %p317 = scmp.eq.s32.totalorder %s34, 0
      %p318 = por %p316, %p317
      %s320 = sadd.s32 %s319, 1
      %p323 = scmp.eq.s32.totalorder %s28, 1
      %p324 = scmp.ne.s32.totalorder %s319, %s321
      %p325 = scmp.eq.s32.totalorder %s28, 0
      %p326 = por %p324, %p325
      %p327 = scmp.ne.s32.totalorder %s319, %s321
      %p328 = scmp.eq.s32.totalorder %s33, 1
      %p329 = por %p327, %p328
      %p330 = scmp.ne.s32.totalorder %s321, %s322
      %p331 = scmp.eq.s32.totalorder %s33, 0
      %p332 = por %p330, %p331
      %p333 = scmp.ne.s32.totalorder %s321, %s322
      %p334 = scmp.eq.s32.totalorder %s34, 1
      %p335 = por %p333, %p334
      %p337 = scmp.ne.s32.totalorder %s322, %s336
      %p338 = scmp.eq.s32.totalorder %s34, 0
      %p339 = por %p337, %p338
      %s341 = sadd.s32 %s340, 1
      %p344 = scmp.eq.s32.totalorder %s28, 1
      %p345 = scmp.ne.s32.totalorder %s340, %s342
      %p346 = scmp.eq.s32.totalorder %s28, 0
      %p347 = por %p345, %p346
      %p348 = scmp.ne.s32.totalorder %s340, %s342
      %p349 = scmp.eq.s32.totalorder %s33, 1
      %p350 = por %p348, %p349
      %p351 = scmp.ne.s32.totalorder %s342, %s343
      %p352 = scmp.eq.s32.totalorder %s33, 0
      %p353 = por %p351, %p352
      %p354 = scmp.ne.s32.totalorder %s342, %s343
      %p355 = scmp.eq.s32.totalorder %s34, 1
      %p356 = por %p354, %p355
      %p358 = scmp.ne.s32.totalorder %s343, %s357
      %p359 = scmp.eq.s32.totalorder %s34, 0
      %p360 = por %p358, %p359
      %s361 = ssub.s32 %s28, %s35
      %p362 = scmp.eq.s32.totalorder %s361, 0
      %s364 = sadd.s32 %s363, 1
      %s365 = scalar_select %p362, %s363, %s364
      %p368 = pneg %p362
      %p369 = scmp.eq.s32.totalorder %s28, 1
      %p370 = por %p368, %p369
      %p371 = scmp.ne.s32.totalorder %s363, %s366
      %p372 = scmp.eq.s32.totalorder %s28, 0
      %p373 = por %p371, %p372
      %p374 = scmp.ne.s32.totalorder %s363, %s366
      %p375 = scmp.eq.s32.totalorder %s33, 1
      %p376 = por %p374, %p375
      %p377 = scmp.ne.s32.totalorder %s366, %s367
      %p378 = scmp.eq.s32.totalorder %s33, 0
      %p379 = por %p377, %p378
      %p380 = scmp.ne.s32.totalorder %s366, %s367
      %p381 = scmp.eq.s32.totalorder %s34, 1
      %p382 = por %p380, %p381
      %p384 = scmp.ne.s32.totalorder %s367, %s383
      %p385 = scmp.eq.s32.totalorder %s34, 0
      %p386 = por %p384, %p385
      %p387 = scmp.le.s32.totalorder 1, %s28
      %p388 = scmp.lt.s32.totalorder %s28, 3
      %p389 = pnand %p387, %p388
      %p390 = pneg %p389
      // Predicated region
      $region9: #{lstm_model_forward.1} parent=5 // pred_check
        _
      $region10: #{lstm_model_forward.1} parent=5 // pred_check_branch
        %392 = sbr.rel (%p389) target = $region12
      $region11: #{lstm_model_forward.1} parent=5 // pred_region
        %s393 = ssub.s32 %s28, 1
        // Predicated region
        $region13: #{lstm_model_forward.1} parent=11 // pred_check
          %p394 = pneg %p101
        $region14: #{lstm_model_forward.1} parent=11 // pred_check_branch
          %396 = sbr.rel (%p394) target = $region16
        $region15: #{lstm_model_forward.1} parent=11 // pred_region
          %s398 = ssub.s32 4608, 4608
          %399 = vsyncadd [#allocation5], %s398
          %s400 = sshll.u32 [#allocation4], 4
          %s401 = int_to_ptr.vmem [resolvable:$true] %s400
          %406 = dma.hbm_to_vmem [thread:$0]  %s2, 4608, %s401, [#allocation5], 512, 512, 32
        $region16: #{lstm_model_forward.1} parent=11 // pred_fallthru
          _
        // Predicated region
        $region17: #{lstm_model_forward.1} parent=11 // pred_check
          %p407 = pneg %p122
        $region18: #{lstm_model_forward.1} parent=11 // pred_check_branch
          %409 = sbr.rel (%p407) target = $region20
        $region19: #{lstm_model_forward.1} parent=11 // pred_region
          %s411 = ssub.s32 128, 128
          %412 = vsyncadd [#allocation7], %s411
          %s414 = sshll.u32 [#allocation6], 4
          %s415 = int_to_ptr.vmem [resolvable:$true] %s414
          %417 = dma.hbm_to_vmem [thread:$0]  %s3, 128, %s415, [#allocation7]
        $region20: #{lstm_model_forward.1} parent=11 // pred_fallthru
          _
        // Predicated region
        $region21: #{lstm_model_forward.1} parent=11 // pred_check
          %p418 = pneg %p143
        $region22: #{lstm_model_forward.1} parent=11 // pred_check_branch
          %420 = sbr.rel (%p418) target = $region24
        $region23: #{lstm_model_forward.1} parent=11 // pred_region
          %s422 = ssub.s32 46080, 46080
          %423 = vsyncadd [#allocation7], %s422
          %s424 = sshll.u32 [#allocation8], 4
          %s425 = int_to_ptr.vmem [resolvable:$true] %s424
          %430 = dma.hbm_to_vmem [thread:$0]  %s4, 46080, %s425, [#allocation7], 256, 256, 16
        $region24: #{lstm_model_forward.1} parent=11 // pred_fallthru
          _
        // Predicated region
        $region25: #{lstm_model_forward.1} parent=11 // pred_check
          %p431 = pneg %p164
        $region26: #{lstm_model_forward.1} parent=11 // pred_check_branch
          %433 = sbr.rel (%p431) target = $region28
        $region27: #{lstm_model_forward.1} parent=11 // pred_region
          %s435 = ssub.s32 64, 64
          %436 = vsyncadd [#allocation10], %s435
          %s438 = sshll.u32 [#allocation9], 4
          %s439 = int_to_ptr.vmem [resolvable:$true] %s438
          %441 = dma.hbm_to_vmem [thread:$0]  %s5, 64, %s439, [#allocation10]
        $region28: #{lstm_model_forward.1} parent=11 // pred_fallthru
          _
        // Predicated region
        $region29: #{lstm_model_forward.1} parent=11 // pred_check
          %p442 = pneg %p185
        $region30: #{lstm_model_forward.1} parent=11 // pred_check_branch
          %444 = sbr.rel (%p442) target = $region32
        $region31: #{lstm_model_forward.1} parent=11 // pred_region
          %s446 = ssub.s32 14336, 14336
          %447 = vsyncadd [#allocation10], %s446
          %s448 = sshll.u32 [#allocation11], 4
          %s449 = int_to_ptr.vmem [resolvable:$true] %s448
          %454 = dma.hbm_to_vmem [thread:$0]  %s6, 14336, %s449, [#allocation10], 64, 64, 4
        $region32: #{lstm_model_forward.1} parent=11 // pred_fallthru
          _
        // Predicated region
        $region33: #{lstm_model_forward.1} parent=11 // pred_check
          %p455 = pneg %p206
        $region34: #{lstm_model_forward.1} parent=11 // pred_check_branch
          %457 = sbr.rel (%p455) target = $region36
        $region35: #{lstm_model_forward.1} parent=11 // pred_region
          %s459 = ssub.s32 16, 16
          %460 = vsyncadd [#allocation13], %s459
          %s462 = sshll.u32 [#allocation12], 4
          %s463 = int_to_ptr.vmem [resolvable:$true] %s462
          %465 = dma.hbm_to_vmem [thread:$0]  %s7, 16, %s463, [#allocation13]
        $region36: #{lstm_model_forward.1} parent=11 // pred_fallthru
          _
        // Predicated region
        $region37: #{lstm_model_forward.1} parent=11 // pred_check
          %p466 = pneg %p227
        $region38: #{lstm_model_forward.1} parent=11 // pred_check_branch
          %468 = sbr.rel (%p466) target = $region40
        $region39: #{lstm_model_forward.1} parent=11 // pred_region
          %s470 = ssub.s32 512, 512
          %471 = vsyncadd [#allocation13], %s470
          %s472 = sshll.u32 [#allocation14], 4
          %s473 = int_to_ptr.vmem [resolvable:$true] %s472
          %478 = dma.hbm_to_vmem [thread:$0]  %s8, 512, %s473, [#allocation13], 128, 128, 8
        $region40: #{lstm_model_forward.1} parent=11 // pred_fallthru
          _
        // Predicated region
        $region41: #{lstm_model_forward.1} parent=11 // pred_check
          %p479 = pneg %p248
        $region42: #{lstm_model_forward.1} parent=11 // pred_check_branch
          %481 = sbr.rel (%p479) target = $region44
        $region43: #{lstm_model_forward.1} parent=11 // pred_region
          %s483 = ssub.s32 768, 768
          %484 = vsyncadd [#allocation16], %s483
          %s485 = sshll.u32 [#allocation15], 4
          %s486 = int_to_ptr.vmem [resolvable:$true] %s485
          %491 = dma.hbm_to_vmem [thread:$0]  %s9, 768, %s486, [#allocation16], 128, 128, 8
        $region44: #{lstm_model_forward.1} parent=11 // pred_fallthru
          _
        // Predicated region
        $region45: #{lstm_model_forward.1} parent=11 // pred_check
          %p492 = pneg %p269
        $region46: #{lstm_model_forward.1} parent=11 // pred_check_branch
          %494 = sbr.rel (%p492) target = $region48
        $region47: #{lstm_model_forward.1} parent=11 // pred_region
          %s496 = ssub.s32 16, 16
          %497 = vsyncadd [#allocation16], %s496
          %s499 = sshll.u32 [#allocation17], 4
          %s500 = int_to_ptr.vmem [resolvable:$true] %s499
          %502 = dma.hbm_to_vmem [thread:$0]  %s10, 16, %s500, [#allocation16]
        $region48: #{lstm_model_forward.1} parent=11 // pred_fallthru
          _
        // Predicated region
        $region49: #{lstm_model_forward.1} parent=11 // pred_check
          %p503 = pneg %p290
        $region50: #{lstm_model_forward.1} parent=11 // pred_check_branch
          %505 = sbr.rel (%p503) target = $region52
        $region51: #{lstm_model_forward.1} parent=11 // pred_region
          %s507 = ssub.s32 256, 256
          %508 = vsyncadd [#allocation19], %s507
          %s509 = sshll.u32 [#allocation18], 4
          %s510 = int_to_ptr.vmem [resolvable:$true] %s509
          %515 = dma.hbm_to_vmem [thread:$0]  %s11, 256, %s510, [#allocation19], 128, 128, 8
        $region52: #{lstm_model_forward.1} parent=11 // pred_fallthru
          _
        // Predicated region
        $region53: #{lstm_model_forward.1} parent=11 // pred_check
          %p516 = pneg %p311
        $region54: #{lstm_model_forward.1} parent=11 // pred_check_branch
          %518 = sbr.rel (%p516) target = $region56
        $region55: #{lstm_model_forward.1} parent=11 // pred_region
          %s520 = ssub.s32 16, 16
          %521 = vsyncadd [#allocation19], %s520
          %s523 = sshll.u32 [#allocation20], 4
          %s524 = int_to_ptr.vmem [resolvable:$true] %s523
          %526 = dma.hbm_to_vmem [thread:$0]  %s12, 16, %s524, [#allocation19]
        $region56: #{lstm_model_forward.1} parent=11 // pred_fallthru
          _
        // Predicated region
        $region57: #{lstm_model_forward.1} parent=11 // pred_check
          %p527 = pneg %p332
        $region58: #{lstm_model_forward.1} parent=11 // pred_check_branch
          %529 = sbr.rel (%p527) target = $region60
        $region59: #{lstm_model_forward.1} parent=11 // pred_region
          %s531 = ssub.s32 512, 512
          %532 = vsyncadd [#allocation22], %s531
          %s533 = sshll.u32 [#allocation21], 4
          %s534 = int_to_ptr.vmem [resolvable:$true] %s533
          %539 = dma.hbm_to_vmem [thread:$0]  %s13, 512, %s534, [#allocation22], 128, 128, 8
        $region60: #{lstm_model_forward.1} parent=11 // pred_fallthru
          _
        // Predicated region
        $region61: #{lstm_model_forward.1} parent=11 // pred_check
          %p540 = pneg %p353
        $region62: #{lstm_model_forward.1} parent=11 // pred_check_branch
          %542 = sbr.rel (%p540) target = $region64
        $region63: #{lstm_model_forward.1} parent=11 // pred_region
          %s544 = ssub.s32 16, 16
          %545 = vsyncadd [#allocation22], %s544
          %s547 = sshll.u32 [#allocation23], 4
          %s548 = int_to_ptr.vmem [resolvable:$true] %s547
          %550 = dma.hbm_to_vmem [thread:$0]  %s14, 16, %s548, [#allocation22]
        $region64: #{lstm_model_forward.1} parent=11 // pred_fallthru
          _
      $region12: #{lstm_model_forward.1} parent=5 // pred_fallthru
        _
      %p551 = scmp.lt.s32.totalorder %s28, 2
      // Predicated region
      $region65: #{lstm_model_forward.1} parent=5 // pred_check
        %p552 = pneg %p551
      $region66: #{lstm_model_forward.1} parent=5 // pred_check_branch
        %554 = sbr.rel (%p552) target = $region68
      $region67: #{lstm_model_forward.1} parent=5 // pred_region
        // Predicated region
        $region69: #{lstm_model_forward.1} parent=67 // pred_check
          %p555 = pneg %p48
        $region70: #{lstm_model_forward.1} parent=67 // pred_check_branch
          %557 = sbr.rel (%p555) target = $region72
        $region71: #{lstm_model_forward.1} parent=67 // pred_region
          %p558 = scmp.lt.s32.totalorder %s28, 1
          %s559 = scalar_select %p558, %s28, 1
          %s560 = smul.addr %s559, 4
          %s561 = smul.addr %s560, 8
          %s562 = scalar_lea.vmem %s0, %s561
        $region72: #{lstm_model_forward.1} parent=67 // pred_fallthru
          _
        // Predicated region
        $region73: #{lstm_model_forward.1} parent=67 // pred_check
          %p563 = pneg %p74
        $region74: #{lstm_model_forward.1} parent=67 // pred_check_branch
          %565 = sbr.rel (%p563) target = $region76
        $region75: #{lstm_model_forward.1} parent=67 // pred_region
          %p566 = scmp.lt.s32.totalorder %s28, 1
          %s567 = scalar_select %p566, %s28, 1
          %s568 = smul.addr %s567, 4
          %s569 = smul.addr %s568, 8
          %s570 = scalar_lea.vmem %s1, %s569
        $region76: #{lstm_model_forward.1} parent=67 // pred_fallthru
          _
      $region68: #{lstm_model_forward.1} parent=5 // pred_fallthru
        _
      %p571 = scmp.le.s32.totalorder 1, %s28
      %p572 = scmp.lt.s32.totalorder %s28, 3
      %p573 = pnand %p571, %p572
      %p574 = pneg %p573
      // Predicated region
      $region77: #{lstm_model_forward.1} parent=5 // pred_check
        _
      $region78: #{lstm_model_forward.1} parent=5 // pred_check_branch
        %576 = sbr.rel (%p573) target = $region80
      $region79: #{lstm_model_forward.1} parent=5 // pred_region
        %s577 = ssub.s32 %s28, 1
        // Predicated region
        $region81: #{lstm_model_forward.1} parent=79 // pred_check
          %p578 = pneg %p101
        $region82: #{lstm_model_forward.1} parent=79 // pred_check_branch
          %580 = sbr.rel (%p578) target = $region84
        $region83: #{lstm_model_forward.1} parent=79 // pred_region
          %581 = dma.done [#allocation5], 4608
        $region84: #{lstm_model_forward.1} parent=79 // pred_fallthru
          _
        // Predicated region
        $region85: #{lstm_model_forward.1} parent=79 // pred_check
          %p582 = pneg %p122
        $region86: #{lstm_model_forward.1} parent=79 // pred_check_branch
          %584 = sbr.rel (%p582) target = $region88
        $region87: #{lstm_model_forward.1} parent=79 // pred_region
          %585 = dma.done [#allocation7], 128
        $region88: #{lstm_model_forward.1} parent=79 // pred_fallthru
          _
        // Predicated region
        $region89: #{lstm_model_forward.1} parent=79 // pred_check
          %p586 = pneg %p143
        $region90: #{lstm_model_forward.1} parent=79 // pred_check_branch
          %588 = sbr.rel (%p586) target = $region92
        $region91: #{lstm_model_forward.1} parent=79 // pred_region
          %589 = dma.done [#allocation7], 46080
        $region92: #{lstm_model_forward.1} parent=79 // pred_fallthru
          _
        // Predicated region
        $region93: #{lstm_model_forward.1} parent=79 // pred_check
          %p590 = pneg %p164
        $region94: #{lstm_model_forward.1} parent=79 // pred_check_branch
          %592 = sbr.rel (%p590) target = $region96
        $region95: #{lstm_model_forward.1} parent=79 // pred_region
          %593 = dma.done [#allocation10], 64
        $region96: #{lstm_model_forward.1} parent=79 // pred_fallthru
          _
        // Predicated region
        $region97: #{lstm_model_forward.1} parent=79 // pred_check
          %p594 = pneg %p185
        $region98: #{lstm_model_forward.1} parent=79 // pred_check_branch
          %596 = sbr.rel (%p594) target = $region100
        $region99: #{lstm_model_forward.1} parent=79 // pred_region
          %597 = dma.done [#allocation10], 14336
        $region100: #{lstm_model_forward.1} parent=79 // pred_fallthru
          _
        // Predicated region
        $region101: #{lstm_model_forward.1} parent=79 // pred_check
          %p598 = pneg %p206
        $region102: #{lstm_model_forward.1} parent=79 // pred_check_branch
          %600 = sbr.rel (%p598) target = $region104
        $region103: #{lstm_model_forward.1} parent=79 // pred_region
          %601 = dma.done [#allocation13], 16
        $region104: #{lstm_model_forward.1} parent=79 // pred_fallthru
          _
        // Predicated region
        $region105: #{lstm_model_forward.1} parent=79 // pred_check
          %p602 = pneg %p227
        $region106: #{lstm_model_forward.1} parent=79 // pred_check_branch
          %604 = sbr.rel (%p602) target = $region108
        $region107: #{lstm_model_forward.1} parent=79 // pred_region
          %605 = dma.done [#allocation13], 512
        $region108: #{lstm_model_forward.1} parent=79 // pred_fallthru
          _
        // Predicated region
        $region109: #{lstm_model_forward.1} parent=79 // pred_check
          %p606 = pneg %p248
        $region110: #{lstm_model_forward.1} parent=79 // pred_check_branch
          %608 = sbr.rel (%p606) target = $region112
        $region111: #{lstm_model_forward.1} parent=79 // pred_region
          %609 = dma.done [#allocation16], 768
        $region112: #{lstm_model_forward.1} parent=79 // pred_fallthru
          _
        // Predicated region
        $region113: #{lstm_model_forward.1} parent=79 // pred_check
          %p610 = pneg %p269
        $region114: #{lstm_model_forward.1} parent=79 // pred_check_branch
          %612 = sbr.rel (%p610) target = $region116
        $region115: #{lstm_model_forward.1} parent=79 // pred_region
          %613 = dma.done [#allocation16], 16
        $region116: #{lstm_model_forward.1} parent=79 // pred_fallthru
          _
        // Predicated region
        $region117: #{lstm_model_forward.1} parent=79 // pred_check
          %p614 = pneg %p290
        $region118: #{lstm_model_forward.1} parent=79 // pred_check_branch
          %616 = sbr.rel (%p614) target = $region120
        $region119: #{lstm_model_forward.1} parent=79 // pred_region
          %617 = dma.done [#allocation19], 256
        $region120: #{lstm_model_forward.1} parent=79 // pred_fallthru
          _
        // Predicated region
        $region121: #{lstm_model_forward.1} parent=79 // pred_check
          %p618 = pneg %p311
        $region122: #{lstm_model_forward.1} parent=79 // pred_check_branch
          %620 = sbr.rel (%p618) target = $region124
        $region123: #{lstm_model_forward.1} parent=79 // pred_region
          %621 = dma.done [#allocation19], 16
        $region124: #{lstm_model_forward.1} parent=79 // pred_fallthru
          _
        // Predicated region
        $region125: #{lstm_model_forward.1} parent=79 // pred_check
          %p622 = pneg %p332
        $region126: #{lstm_model_forward.1} parent=79 // pred_check_branch
          %624 = sbr.rel (%p622) target = $region128
        $region127: #{lstm_model_forward.1} parent=79 // pred_region
          %625 = dma.done [#allocation22], 512
        $region128: #{lstm_model_forward.1} parent=79 // pred_fallthru
          _
        // Predicated region
        $region129: #{lstm_model_forward.1} parent=79 // pred_check
          %p626 = pneg %p353
        $region130: #{lstm_model_forward.1} parent=79 // pred_check_branch
          %628 = sbr.rel (%p626) target = $region132
        $region131: #{lstm_model_forward.1} parent=79 // pred_region
          %629 = dma.done [#allocation22], 16
        $region132: #{lstm_model_forward.1} parent=79 // pred_fallthru
          _
        %p630 = scmp.lt.s32.totalorder %s33, 1
        %s631 = scalar_select %p630, %s33, 1
        %s632 = smul.addr %s631, 4
        %s633 = smul.addr %s632, 8
        %s634 = scalar_lea.vmem %s0, %s633
        %p635 = pneg %p54
        %p636 = pneg %p51
        %p637 = scmp.lt.s32.totalorder %s33, 1
        %s638 = scalar_select %p637, %s33, 1
        %s639 = smul.addr %s638, 4
        %s640 = smul.addr %s639, 8
        %s641 = scalar_lea.vmem %s1, %s640
        %p642 = pneg %p80
        %p643 = pneg %p77
        %p644 = pneg %p101
        %p645 = pneg %p98
        %p646 = pneg %p122
        %p647 = pneg %p119
        %p648 = pneg %p143
        %p649 = pneg %p140
        %p650 = pneg %p164
        %p651 = pneg %p161
        %p652 = pneg %p185
        %p653 = pneg %p182
        %p654 = pneg %p206
        %p655 = pneg %p203
        %p656 = pneg %p227
        %p657 = pneg %p224
        %p658 = pneg %p248
        %p659 = pneg %p245
        %p660 = pneg %p269
        %p661 = pneg %p266
        %p662 = pneg %p290
        %p663 = pneg %p287
        %p664 = pneg %p311
        %p665 = pneg %p308
        %p666 = pneg %p332
        %p667 = pneg %p329
        %p668 = pneg %p353
        %p669 = pneg %p350
        %p670 = pneg %p379
        %p671 = pneg %p376
        %p672 = scmp.lt.s32.totalorder %s33, 1
        %s673 = scalar_select %p672, %s33, 1
        %s674 = scalar_lea.vmem %s15, %s673
        %p675 = scmp.lt.s32.totalorder %s33, 1
        %s676 = scalar_select %p675, %s33, 1
        %s677 = smul.addr %s676, 4
        %s678 = smul.addr %s677, 8
        %s679 = scalar_lea.vmem %s0, %s678
        %p680 = scmp.lt.s32.totalorder %s33, 1
        %s681 = scalar_select %p680, %s33, 1
        %s682 = smul.addr %s681, 4
        %s683 = smul.addr %s682, 8
        %s684 = scalar_lea.vmem %s1, %s683
        %p685 = scmp.lt.s32.totalorder %s33, 1
        %s686 = scalar_select %p685, %s33, 1
        %s687 = scalar_lea.vmem %s15, %s686
        %v689 = vld [vmem:[%s679] sm:$0xff]
        %v690 = vld [vmem:[%s679 + $0x8] sm:$0xff]
        %v691 = vld [vmem:[%s679 + $0x10] sm:$0xff]
        %v692 = vld [vmem:[%s679 + $0x18] sm:$0xff]
        %v693 = vld [vmem:[%s684] sm:$0xff]
        %v694 = vld [vmem:[%s684 + $0x8] sm:$0xff]
        %v695 = vld [vmem:[%s684 + $0x10] sm:$0xff]
        %v696 = vld [vmem:[%s684 + $0x18] sm:$0xff]
        %vm697 = vcmask 588800
        %698 = vst.msk [vmem:[#allocation2] sm:$0xff] %vm697, 0.0
        %699 = vst.msk [vmem:[#allocation2 + $0x8] sm:$0xff] %vm697, 0.0
        %700 = vst.msk [vmem:[#allocation2 + $0x10] sm:$0xff] %vm697, 0.0
        %701 = vst.msk [vmem:[#allocation2 + $0x18] sm:$0xff] %vm697, 0.0
        %703 = vrot.lane.b32.xlu0 %v693, 1
        %v704 = vpop.permute.xlu0 %703
        %vm706 = vcmask 137224
        %707 = vst.msk [vmem:[#allocation2 + $0x1] sm:$0x7f] %vm706, %v704
        %709 = vrot.lane.b32.xlu0 %v689, 19
        %v710 = vpop.permute.xlu0 %709
        %vm712 = vcmask 285848
        %713 = vst.msk [vmem:[#allocation2] sm:$0xff] %vm712, %v710
        %714 = vrot.lane.b32.xlu0 %v693, 37
        %v715 = vpop.permute.xlu0 %714
        %vm717 = vcmask 433448
        %718 = vst.msk [vmem:[#allocation2] sm:$0xff] %vm717, %v715
        %719 = vrot.lane.b32.xlu0 %v689, 55
        %v720 = vpop.permute.xlu0 %719
        %vm722 = vcmask 581049
        %723 = vst.msk [vmem:[#allocation2 - $0x1] sm:$0xfe] %vm722, %v720
        %725 = vrot.lane.b32.xlu0 %v694, 1
        %v726 = vpop.permute.xlu0 %725
        %728 = vst.msk [vmem:[#allocation2 + $0x9] sm:$0x7f] %vm706, %v726
        %730 = vrot.lane.b32.xlu0 %v690, 19
        %v731 = vpop.permute.xlu0 %730
        %733 = vst.msk [vmem:[#allocation2 + $0x8] sm:$0xff] %vm712, %v731
        %734 = vrot.lane.b32.xlu0 %v694, 37
        %v735 = vpop.permute.xlu0 %734
        %737 = vst.msk [vmem:[#allocation2 + $0x8] sm:$0xff] %vm717, %v735
        %738 = vrot.lane.b32.xlu0 %v690, 55
        %v739 = vpop.permute.xlu0 %738
        %741 = vst.msk [vmem:[#allocation2 + $0x7] sm:$0xfe] %vm722, %v739
        %743 = vrot.lane.b32.xlu0 %v695, 1
        %v744 = vpop.permute.xlu0 %743
        %746 = vst.msk [vmem:[#allocation2 + $0x11] sm:$0x7f] %vm706, %v744
        %748 = vrot.lane.b32.xlu0 %v691, 19
        %v749 = vpop.permute.xlu0 %748
        %751 = vst.msk [vmem:[#allocation2 + $0x10] sm:$0xff] %vm712, %v749
        %752 = vrot.lane.b32.xlu0 %v695, 37
        %v753 = vpop.permute.xlu0 %752
        %755 = vst.msk [vmem:[#allocation2 + $0x10] sm:$0xff] %vm717, %v753
        %756 = vrot.lane.b32.xlu0 %v691, 55
        %v757 = vpop.permute.xlu0 %756
        %759 = vst.msk [vmem:[#allocation2 + $0xf] sm:$0xfe] %vm722, %v757
        %761 = vrot.lane.b32.xlu0 %v696, 1
        %v762 = vpop.permute.xlu0 %761
        %764 = vst.msk [vmem:[#allocation2 + $0x19] sm:$0x7f] %vm706, %v762
        %766 = vrot.lane.b32.xlu0 %v692, 19
        %v767 = vpop.permute.xlu0 %766
        %769 = vst.msk [vmem:[#allocation2 + $0x18] sm:$0xff] %vm712, %v767
        %770 = vrot.lane.b32.xlu0 %v696, 37
        %v771 = vpop.permute.xlu0 %770
        %773 = vst.msk [vmem:[#allocation2 + $0x18] sm:$0xff] %vm717, %v771
        %774 = vrot.lane.b32.xlu0 %v692, 55
        %v775 = vpop.permute.xlu0 %774
        %777 = vst.msk [vmem:[#allocation2 + $0x17] sm:$0xfe] %vm722, %v775
        %v778 = vld [vmem:[#allocation2] sm:$0xff]
        %v779 = vld [vmem:[#allocation2 + $0x8] sm:$0xff]
        %v780 = vld [vmem:[#allocation2 + $0x10] sm:$0xff]
        %v781 = vld [vmem:[#allocation2 + $0x18] sm:$0xff]
        %v782 = vpack.c.bf16 %v779, %v778
        %v783 = vpack.c.bf16 %v781, %v780
        %v784 = vld [vmem:[#allocation4] sm:$0xff]
        %v785 = vld [vmem:[#allocation4 + $0x8] sm:$0xff]
        %v786 = vld [vmem:[#allocation4 + $0x10] sm:$0xff]
        %v787 = vld [vmem:[#allocation4 + $0x18] sm:$0xff]
        %v788 = vld [vmem:[#allocation4 + $0x20] sm:$0xff]
        %v789 = vld [vmem:[#allocation4 + $0x28] sm:$0xff]
        %v790 = vld [vmem:[#allocation4 + $0x30] sm:$0xff]
        %v791 = vld [vmem:[#allocation4 + $0x38] sm:$0xff]
        %v792 = vld [vmem:[#allocation4 + $0x40] sm:$0xff]
        %v793 = vld [vmem:[#allocation4 + $0x48] sm:$0xff]
        %v794 = vld [vmem:[#allocation4 + $0x50] sm:$0xff]
        %v795 = vld [vmem:[#allocation4 + $0x58] sm:$0xff]
        %v796 = vld [vmem:[#allocation4 + $0x60] sm:$0xff]
        %v797 = vld [vmem:[#allocation4 + $0x68] sm:$0xff]
        %v798 = vld [vmem:[#allocation4 + $0x70] sm:$0xff]
        %v799 = vld [vmem:[#allocation4 + $0x78] sm:$0xff]
        %v800 = vld [vmem:[#allocation4 + $0x80] sm:$0xff]
        %v801 = vld [vmem:[#allocation4 + $0x88] sm:$0xff]
        %v802 = vld [vmem:[#allocation4 + $0x90] sm:$0xff]
        %v803 = vld [vmem:[#allocation4 + $0x98] sm:$0xff]
        %v804 = vld [vmem:[#allocation4 + $0xa0] sm:$0xff]
        %v805 = vld [vmem:[#allocation4 + $0xa8] sm:$0xff]
        %v806 = vld [vmem:[#allocation4 + $0xb0] sm:$0xff]
        %v807 = vld [vmem:[#allocation4 + $0xb8] sm:$0xff]
        %v808 = vld [vmem:[#allocation4 + $0xc0] sm:$0xff]
        %v809 = vld [vmem:[#allocation4 + $0xc8] sm:$0xff]
        %v810 = vld [vmem:[#allocation4 + $0xd0] sm:$0xff]
        %v811 = vld [vmem:[#allocation4 + $0xd8] sm:$0xff]
        %v812 = vld [vmem:[#allocation4 + $0xe0] sm:$0xff]
        %v813 = vld [vmem:[#allocation4 + $0xe8] sm:$0xff]
        %v814 = vld [vmem:[#allocation4 + $0xf0] sm:$0xff]
        %v815 = vld [vmem:[#allocation4 + $0xf8] sm:$0xff]
        %v816 = vld [vmem:[#allocation4 + $0x100] sm:$0xff]
        %v817 = vld [vmem:[#allocation4 + $0x108] sm:$0xff]
        %v818 = vld [vmem:[#allocation4 + $0x110] sm:$0xff]
        %v819 = vld [vmem:[#allocation4 + $0x118] sm:$0xff]
        %v820 = vld [vmem:[#allocation6] sm:$0xff]
        %v822 = vlaneseq
        %v823 = vshrl.u32 %v822, 7
        %v824 = vsub.s32 0, %v823
        %v825 = vrot.slane %v820, %v824
        %v826 = vlaneseq
        %v827 = vshrl.u32 %v826, 7
        %v828 = vsub.s32 1, %v827
        %v829 = vrot.slane %v820, %v828
        %v830 = vlaneseq
        %v831 = vshrl.u32 %v830, 7
        %v832 = vsub.s32 2, %v831
        %v833 = vrot.slane %v820, %v832
        %v834 = vlaneseq
        %v835 = vshrl.u32 %v834, 7
        %v836 = vsub.s32 3, %v835
        %v837 = vrot.slane %v820, %v836
        %v838 = vlaneseq
        %v839 = vshrl.u32 %v838, 7
        %v840 = vsub.s32 4, %v839
        %v841 = vrot.slane %v820, %v840
        %v842 = vlaneseq
        %v843 = vshrl.u32 %v842, 7
        %v844 = vsub.s32 5, %v843
        %v845 = vrot.slane %v820, %v844
        %v846 = vlaneseq
        %v847 = vshrl.u32 %v846, 7
        %v848 = vsub.s32 6, %v847
        %v849 = vrot.slane %v820, %v848
        %v850 = vlaneseq
        %v851 = vshrl.u32 %v850, 7
        %v852 = vsub.s32 7, %v851
        %v853 = vrot.slane %v820, %v852
        %v898 = vunpack.c.l.b16 %v784
        %v899 = vunpack.c.h.b16 %v784
        %v900 = vunpack.c.l.b16 %v785
        %v901 = vunpack.c.h.b16 %v785
        %v902 = vunpack.c.l.b16 %v786
        %v903 = vunpack.c.h.b16 %v786
        %v904 = vunpack.c.l.b16 %v787
        %v905 = vunpack.c.h.b16 %v787
        %v906 = vunpack.c.l.b16 %v788
        %v907 = vunpack.c.h.b16 %v788
        %v908 = vunpack.c.l.b16 %v789
        %v909 = vunpack.c.h.b16 %v789
        %v910 = vunpack.c.l.b16 %v790
        %v911 = vunpack.c.h.b16 %v790
        %v912 = vunpack.c.l.b16 %v791
        %v913 = vunpack.c.h.b16 %v791
        %v914 = vunpack.c.l.b16 %v792
        %v915 = vunpack.c.h.b16 %v792
        %v916 = vunpack.c.l.b16 %v793
        %v917 = vunpack.c.h.b16 %v793
        %v918 = vunpack.c.l.b16 %v794
        %v919 = vunpack.c.h.b16 %v794
        %v920 = vunpack.c.l.b16 %v795
        %v921 = vunpack.c.h.b16 %v795
        %v922 = vunpack.c.l.b16 %v796
        %v923 = vunpack.c.h.b16 %v796
        %v924 = vunpack.c.l.b16 %v797
        %v925 = vunpack.c.h.b16 %v797
        %v926 = vunpack.c.l.b16 %v798
        %v927 = vunpack.c.h.b16 %v798
        %v928 = vunpack.c.l.b16 %v799
        %v929 = vunpack.c.h.b16 %v799
        %v930 = vunpack.c.l.b16 %v800
        %v931 = vunpack.c.h.b16 %v800
        %v932 = vunpack.c.l.b16 %v801
        %v933 = vunpack.c.h.b16 %v801
        %v934 = vunpack.c.l.b16 %v802
        %v935 = vunpack.c.h.b16 %v802
        %v936 = vunpack.c.l.b16 %v803
        %v937 = vunpack.c.h.b16 %v803
        %v938 = vunpack.c.l.b16 %v804
        %v939 = vunpack.c.h.b16 %v804
        %v940 = vunpack.c.l.b16 %v805
        %v941 = vunpack.c.h.b16 %v805
        %v942 = vunpack.c.l.b16 %v806
        %v943 = vunpack.c.h.b16 %v806
        %v944 = vunpack.c.l.b16 %v807
        %v945 = vunpack.c.h.b16 %v807
        %v946 = vunpack.c.l.b16 %v808
        %v947 = vunpack.c.h.b16 %v808
        %v948 = vunpack.c.l.b16 %v809
        %v949 = vunpack.c.h.b16 %v809
        %v950 = vunpack.c.l.b16 %v810
        %v951 = vunpack.c.h.b16 %v810
        %v952 = vunpack.c.l.b16 %v811
        %v953 = vunpack.c.h.b16 %v811
        %v954 = vunpack.c.l.b16 %v812
        %v955 = vunpack.c.h.b16 %v812
        %v956 = vunpack.c.l.b16 %v813
        %v957 = vunpack.c.h.b16 %v813
        %v958 = vunpack.c.l.b16 %v814
        %v959 = vunpack.c.h.b16 %v814
        %v960 = vunpack.c.l.b16 %v815
        %v961 = vunpack.c.h.b16 %v815
        %v962 = vunpack.c.l.b16 %v816
        %v963 = vunpack.c.h.b16 %v816
        %v964 = vunpack.c.l.b16 %v817
        %v965 = vunpack.c.h.b16 %v817
        %v966 = vunpack.c.l.b16 %v818
        %v967 = vunpack.c.h.b16 %v818
        %v968 = vunpack.c.l.b16 %v819
        %v969 = vunpack.c.h.b16 %v819
        %v970 = vpack.c.b16 %v906, %v898
        %v971 = vpack.c.b16 %v907, %v899
        %v972 = vpack.c.b16 %v908, %v900
        %v973 = vpack.c.b16 %v909, %v901
        %v974 = vpack.c.b16 %v910, %v902
        %v975 = vpack.c.b16 %v911, %v903
        %v976 = vpack.c.b16 %v912, %v904
        %v977 = vpack.c.b16 %v913, %v905
        %v978 = vpack.c.b16 %v922, %v914
        %v979 = vpack.c.b16 %v923, %v915
        %v980 = vpack.c.b16 %v924, %v916
        %v981 = vpack.c.b16 %v925, %v917
        %v982 = vpack.c.b16 %v926, %v918
        %v983 = vpack.c.b16 %v927, %v919
        %v984 = vpack.c.b16 %v928, %v920
        %v985 = vpack.c.b16 %v929, %v921
        %v986 = vpack.c.b16 %v938, %v930
        %v987 = vpack.c.b16 %v939, %v931
        %v988 = vpack.c.b16 %v940, %v932
        %v989 = vpack.c.b16 %v941, %v933
        %v990 = vpack.c.b16 %v942, %v934
        %v991 = vpack.c.b16 %v943, %v935
        %v992 = vpack.c.b16 %v944, %v936
        %v993 = vpack.c.b16 %v945, %v937
        %v994 = vpack.c.b16 %v954, %v946
        %v995 = vpack.c.b16 %v955, %v947
        %v996 = vpack.c.b16 %v956, %v948
        %v997 = vpack.c.b16 %v957, %v949
        %v998 = vpack.c.b16 %v958, %v950
        %v999 = vpack.c.b16 %v959, %v951
        %v1000 = vpack.c.b16 %v960, %v952
        %v1001 = vpack.c.b16 %v961, %v953
        %v1002 = vpack.c.b16 %v962, %v962
        %v1003 = vpack.c.b16 %v963, %v963
        %v1004 = vpack.c.b16 %v964, %v964
        %v1005 = vpack.c.b16 %v965, %v965
        %v1006 = vpack.c.b16 %v966, %v966
        %v1007 = vpack.c.b16 %v967, %v967
        %v1008 = vpack.c.b16 %v968, %v968
        %v1009 = vpack.c.b16 %v969, %v969
        %v1043 = vsel %vm697, %v782, 0
        %v1046 = vsel %vm697, %v783, 0
        %vm1048 = vcmask 1043456
        %v1050 = vsel %vm1048, %v1002, 0
        %v1053 = vsel %vm1048, %v1003, 0
        %v1056 = vsel %vm1048, %v1004, 0
        %v1059 = vsel %vm1048, %v1005, 0
        %v1062 = vsel %vm1048, %v1006, 0
        %v1065 = vsel %vm1048, %v1007, 0
        %v1068 = vsel %vm1048, %v1008, 0
        %v1071 = vsel %vm1048, %v1009, 0
        %1073 = vmatprep.subr.bf16.mxu0 0
        %1074 = vmatpush1.bf16.msra.mxu0 0
        %1075 = vmatprep.subr.bf16.mxu0 0
        %1076 = vmatpush1.bf16.msra.mxu0 0
        %1077 = vmatprep.subr.bf16.mxu0 0
        %1078 = vmatpush1.bf16.msra.mxu0 0
        %1079 = vmatprep.subr.bf16.mxu0 %v1053
        %1080 = vmatpush1.bf16.msra.mxu0 %v1050
        %1081 = vmatprep.subr.bf16.mxu0 %v995
        %1082 = vmatpush1.bf16.msra.mxu0 %v994
        %1083 = vmatprep.subr.bf16.mxu0 %v987
        %1084 = vmatpush1.bf16.msra.mxu0 %v986
        %1085 = vmatprep.subr.bf16.mxu0 %v979
        %1086 = vmatpush1.bf16.msra.mxu0 %v978
        %1087 = vmatprep.subr.bf16.mxu0 %v971
        %1088 = vmatpush1.bf16.msra.mxu0 %v970
        %1089 = vmatprep.subr.bf16.mxu0 0
        %1090 = vmatpush2.bf16.msra.mxu0 0
        %1091 = vmatprep.subr.bf16.mxu0 0
        %1092 = vmatpush2.bf16.msra.mxu0 0
        %1093 = vmatprep.subr.bf16.mxu0 0
        %1094 = vmatpush2.bf16.msra.mxu0 0
        %1095 = vmatprep.subr.bf16.mxu0 0
        %1096 = vmatpush2.bf16.msra.mxu0 0
        %1097 = vmatprep.subr.bf16.mxu0 0
        %1098 = vmatpush2.bf16.msra.mxu0 0
        %1099 = vmatprep.subr.bf16.mxu0 0
        %1100 = vmatpush2.bf16.msra.mxu0 0
        %1101 = vmatprep.subr.bf16.mxu0 0
        %1102 = vmatpush2.bf16.msra.mxu0 0
        %1103 = vmatprep.subr.bf16.mxu0 0
        %1104 = vmatpush2.bf16.msra.mxu0 0
        %1105 = vmatprep.mubr.bf16.mxu0 0
        %1106 = vmatmul.mubr.bf16.gmra.mxu0 %v1043
        %v1107 = vpop.f32.mrf.mxu0
        %v1108 = vadd.f32 %v825, %v1107
        %v1109 = vpop.f32.mrf.mxu0
        %v1110 = vadd.f32 %v829, %v1109
        %v1111 = vpop.f32.mrf.mxu0
        %v1112 = vadd.f32 %v825, %v1111
        %v1113 = vpop.f32.mrf.mxu0
        %v1114 = vadd.f32 %v829, %v1113
        %1115 = vmatprep.mubr.bf16.mxu0 0
        %1116 = vmatmul.mubr.bf16.gmra.mxu0 %v1046
        %v1117 = vpop.f32.mrf.mxu0
        %v1118 = vadd.f32 %v825, %v1117
        %v1119 = vpop.f32.mrf.mxu0
        %v1120 = vadd.f32 %v829, %v1119
        %v1121 = vpop.f32.mrf.mxu0
        %v1122 = vadd.f32 %v825, %v1121
        %v1123 = vpop.f32.mrf.mxu0
        %v1124 = vadd.f32 %v829, %v1123
        %1125 = vdwg.mxu0
        %1126 = vmatprep.subr.bf16.mxu0 0
        %1127 = vmatpush1.bf16.msra.mxu0 0
        %1128 = vmatprep.subr.bf16.mxu0 0
        %1129 = vmatpush1.bf16.msra.mxu0 0
        %1130 = vmatprep.subr.bf16.mxu0 0
        %1131 = vmatpush1.bf16.msra.mxu0 0
        %1132 = vmatprep.subr.bf16.mxu0 %v1059
        %1133 = vmatpush1.bf16.msra.mxu0 %v1056
        %1134 = vmatprep.subr.bf16.mxu0 %v997
        %1135 = vmatpush1.bf16.msra.mxu0 %v996
        %1136 = vmatprep.subr.bf16.mxu0 %v989
        %1137 = vmatpush1.bf16.msra.mxu0 %v988
        %1138 = vmatprep.subr.bf16.mxu0 %v981
        %1139 = vmatpush1.bf16.msra.mxu0 %v980
        %1140 = vmatprep.subr.bf16.mxu0 %v973
        %1141 = vmatpush1.bf16.msra.mxu0 %v972
        %1142 = vmatprep.subr.bf16.mxu0 0
        %1143 = vmatpush2.bf16.msra.mxu0 0
        %1144 = vmatprep.subr.bf16.mxu0 0
        %1145 = vmatpush2.bf16.msra.mxu0 0
        %1146 = vmatprep.subr.bf16.mxu0 0
        %1147 = vmatpush2.bf16.msra.mxu0 0
        %1148 = vmatprep.subr.bf16.mxu0 0
        %1149 = vmatpush2.bf16.msra.mxu0 0
        %1150 = vmatprep.subr.bf16.mxu0 0
        %1151 = vmatpush2.bf16.msra.mxu0 0
        %1152 = vmatprep.subr.bf16.mxu0 0
        %1153 = vmatpush2.bf16.msra.mxu0 0
        %1154 = vmatprep.subr.bf16.mxu0 0
        %1155 = vmatpush2.bf16.msra.mxu0 0
        %1156 = vmatprep.subr.bf16.mxu0 0
        %1157 = vmatpush2.bf16.msra.mxu0 0
        %1158 = vmatprep.mubr.bf16.mxu0 0
        %1159 = vmatmul.mubr.bf16.gmra.mxu0 %v1043
        %v1160 = vpop.f32.mrf.mxu0
        %v1161 = vadd.f32 %v833, %v1160
        %v1162 = vpop.f32.mrf.mxu0
        %v1163 = vadd.f32 %v837, %v1162
        %v1164 = vpop.f32.mrf.mxu0
        %v1165 = vadd.f32 %v833, %v1164
        %v1166 = vpop.f32.mrf.mxu0
        %v1167 = vadd.f32 %v837, %v1166
        %1168 = vmatprep.mubr.bf16.mxu0 0
        %1169 = vmatmul.mubr.bf16.gmra.mxu0 %v1046
        %v1170 = vpop.f32.mrf.mxu0
        %v1171 = vadd.f32 %v833, %v1170
        %v1172 = vpop.f32.mrf.mxu0
        %v1173 = vadd.f32 %v837, %v1172
        %v1174 = vpop.f32.mrf.mxu0
        %v1175 = vadd.f32 %v833, %v1174
        %v1176 = vpop.f32.mrf.mxu0
        %v1177 = vadd.f32 %v837, %v1176
        %1178 = vdwg.mxu0
        %1179 = vmatprep.subr.bf16.mxu0 0
        %1180 = vmatpush1.bf16.msra.mxu0 0
        %1181 = vmatprep.subr.bf16.mxu0 0
        %1182 = vmatpush1.bf16.msra.mxu0 0
        %1183 = vmatprep.subr.bf16.mxu0 0
        %1184 = vmatpush1.bf16.msra.mxu0 0
        %1185 = vmatprep.subr.bf16.mxu0 %v1065
        %1186 = vmatpush1.bf16.msra.mxu0 %v1062
        %1187 = vmatprep.subr.bf16.mxu0 %v999
        %1188 = vmatpush1.bf16.msra.mxu0 %v998
        %1189 = vmatprep.subr.bf16.mxu0 %v991
        %1190 = vmatpush1.bf16.msra.mxu0 %v990
        %1191 = vmatprep.subr.bf16.mxu0 %v983
        %1192 = vmatpush1.bf16.msra.mxu0 %v982
        %1193 = vmatprep.subr.bf16.mxu0 %v975
        %1194 = vmatpush1.bf16.msra.mxu0 %v974
        %1195 = vmatprep.subr.bf16.mxu0 0
        %1196 = vmatpush2.bf16.msra.mxu0 0
        %1197 = vmatprep.subr.bf16.mxu0 0
        %1198 = vmatpush2.bf16.msra.mxu0 0
        %1199 = vmatprep.subr.bf16.mxu0 0
        %1200 = vmatpush2.bf16.msra.mxu0 0
        %1201 = vmatprep.subr.bf16.mxu0 0
        %1202 = vmatpush2.bf16.msra.mxu0 0
        %1203 = vmatprep.subr.bf16.mxu0 0
        %1204 = vmatpush2.bf16.msra.mxu0 0
        %1205 = vmatprep.subr.bf16.mxu0 0
        %1206 = vmatpush2.bf16.msra.mxu0 0
        %1207 = vmatprep.subr.bf16.mxu0 0
        %1208 = vmatpush2.bf16.msra.mxu0 0
        %1209 = vmatprep.subr.bf16.mxu0 0
        %1210 = vmatpush2.bf16.msra.mxu0 0
        %1211 = vmatprep.mubr.bf16.mxu0 0
        %1212 = vmatmul.mubr.bf16.gmra.mxu0 %v1043
        %v1213 = vpop.f32.mrf.mxu0
        %v1214 = vadd.f32 %v841, %v1213
        %v1215 = vpop.f32.mrf.mxu0
        %v1216 = vadd.f32 %v845, %v1215
        %v1217 = vpop.f32.mrf.mxu0
        %v1218 = vadd.f32 %v841, %v1217
        %v1219 = vpop.f32.mrf.mxu0
        %v1220 = vadd.f32 %v845, %v1219
        %1221 = vmatprep.mubr.bf16.mxu0 0
        %1222 = vmatmul.mubr.bf16.gmra.mxu0 %v1046
        %v1223 = vpop.f32.mrf.mxu0
        %v1224 = vadd.f32 %v841, %v1223
        %v1225 = vpop.f32.mrf.mxu0
        %v1226 = vadd.f32 %v845, %v1225
        %v1227 = vpop.f32.mrf.mxu0
        %v1228 = vadd.f32 %v841, %v1227
        %v1229 = vpop.f32.mrf.mxu0
        %v1230 = vadd.f32 %v845, %v1229
        %1231 = vdwg.mxu0
        %1232 = vmatprep.subr.bf16.mxu0 0
        %1233 = vmatpush1.bf16.msra.mxu0 0
        %1234 = vmatprep.subr.bf16.mxu0 0
        %1235 = vmatpush1.bf16.msra.mxu0 0
        %1236 = vmatprep.subr.bf16.mxu0 0
        %1237 = vmatpush1.bf16.msra.mxu0 0
        %1238 = vmatprep.subr.bf16.mxu0 %v1071
        %1239 = vmatpush1.bf16.msra.mxu0 %v1068
        %1240 = vmatprep.subr.bf16.mxu0 %v1001
        %1241 = vmatpush1.bf16.msra.mxu0 %v1000
        %1242 = vmatprep.subr.bf16.mxu0 %v993
        %1243 = vmatpush1.bf16.msra.mxu0 %v992
        %1244 = vmatprep.subr.bf16.mxu0 %v985
        %1245 = vmatpush1.bf16.msra.mxu0 %v984
        %1246 = vmatprep.subr.bf16.mxu0 %v977
        %1247 = vmatpush1.bf16.msra.mxu0 %v976
        %1248 = vmatprep.subr.bf16.mxu0 0
        %1249 = vmatpush2.bf16.msra.mxu0 0
        %1250 = vmatprep.subr.bf16.mxu0 0
        %1251 = vmatpush2.bf16.msra.mxu0 0
        %1252 = vmatprep.subr.bf16.mxu0 0
        %1253 = vmatpush2.bf16.msra.mxu0 0
        %1254 = vmatprep.subr.bf16.mxu0 0
        %1255 = vmatpush2.bf16.msra.mxu0 0
        %1256 = vmatprep.subr.bf16.mxu0 0
        %1257 = vmatpush2.bf16.msra.mxu0 0
        %1258 = vmatprep.subr.bf16.mxu0 0
        %1259 = vmatpush2.bf16.msra.mxu0 0
        %1260 = vmatprep.subr.bf16.mxu0 0
        %1261 = vmatpush2.bf16.msra.mxu0 0
        %1262 = vmatprep.subr.bf16.mxu0 0
        %1263 = vmatpush2.bf16.msra.mxu0 0
        %1264 = vmatprep.mubr.bf16.mxu0 0
        %1265 = vmatmul.mubr.bf16.gmra.mxu0 %v1043
        %v1266 = vpop.f32.mrf.mxu0
        %v1267 = vadd.f32 %v849, %v1266
        %v1268 = vpop.f32.mrf.mxu0
        %v1269 = vadd.f32 %v853, %v1268
        %v1270 = vpop.f32.mrf.mxu0
        %v1271 = vadd.f32 %v849, %v1270
        %v1272 = vpop.f32.mrf.mxu0
        %v1273 = vadd.f32 %v853, %v1272
        %1274 = vmatprep.mubr.bf16.mxu0 0
        %1275 = vmatmul.mubr.bf16.gmra.mxu0 %v1046
        %v1276 = vpop.f32.mrf.mxu0
        %v1277 = vadd.f32 %v849, %v1276
        %v1278 = vpop.f32.mrf.mxu0
        %v1279 = vadd.f32 %v853, %v1278
        %v1280 = vpop.f32.mrf.mxu0
        %v1281 = vadd.f32 %v849, %v1280
        %v1282 = vpop.f32.mrf.mxu0
        %v1283 = vadd.f32 %v853, %v1282
        %1284 = vdwg.mxu0
        %v1285 = vmax.f32 %v1108, 0.0
        %v1286 = vmax.f32 %v1110, 0.0
        %v1287 = vmax.f32 %v1161, 0.0
        %v1288 = vmax.f32 %v1163, 0.0
        %v1289 = vmax.f32 %v1214, 0.0
        %v1290 = vmax.f32 %v1216, 0.0
        %v1291 = vmax.f32 %v1267, 0.0
        %v1292 = vmax.f32 %v1269, 0.0
        %v1293 = vmax.f32 %v1112, 0.0
        %v1294 = vmax.f32 %v1114, 0.0
        %v1295 = vmax.f32 %v1165, 0.0
        %v1296 = vmax.f32 %v1167, 0.0
        %v1297 = vmax.f32 %v1218, 0.0
        %v1298 = vmax.f32 %v1220, 0.0
        %v1299 = vmax.f32 %v1271, 0.0
        %v1300 = vmax.f32 %v1273, 0.0
        %v1301 = vmax.f32 %v1118, 0.0
        %v1302 = vmax.f32 %v1120, 0.0
        %v1303 = vmax.f32 %v1171, 0.0
        %v1304 = vmax.f32 %v1173, 0.0
        %v1305 = vmax.f32 %v1224, 0.0
        %v1306 = vmax.f32 %v1226, 0.0
        %v1307 = vmax.f32 %v1277, 0.0
        %v1308 = vmax.f32 %v1279, 0.0
        %v1309 = vmax.f32 %v1122, 0.0
        %v1310 = vmax.f32 %v1124, 0.0
        %v1311 = vmax.f32 %v1175, 0.0
        %v1312 = vmax.f32 %v1177, 0.0
        %v1313 = vmax.f32 %v1228, 0.0
        %v1314 = vmax.f32 %v1230, 0.0
        %v1315 = vmax.f32 %v1281, 0.0
        %v1316 = vmax.f32 %v1283, 0.0
        %v1317 = vmax.f32 %v1285, %v1289
        %v1318 = vmax.f32 %v1286, %v1290
        %v1319 = vmax.f32 %v1287, %v1291
        %v1320 = vmax.f32 %v1288, %v1292
        %v1321 = vmax.f32 %v1293, %v1297
        %v1322 = vmax.f32 %v1294, %v1298
        %v1323 = vmax.f32 %v1295, %v1299
        %v1324 = vmax.f32 %v1296, %v1300
        %v1325 = vmax.f32 %v1301, %v1305
        %v1326 = vmax.f32 %v1302, %v1306
        %v1327 = vmax.f32 %v1303, %v1307
        %v1328 = vmax.f32 %v1304, %v1308
        %v1329 = vmax.f32 %v1309, %v1313
        %v1330 = vmax.f32 %v1310, %v1314
        %v1331 = vmax.f32 %v1311, %v1315
        %v1332 = vmax.f32 %v1312, %v1316
        %1349 = vrot.lane.b32.xlu0 %v1317, 96
        %v1350 = vpop.permute.xlu0 %1349
        %1351 = vrot.lane.b32.xlu0 %v1318, 96
        %v1352 = vpop.permute.xlu0 %1351
        %1353 = vrot.lane.b32.xlu0 %v1319, 96
        %v1354 = vpop.permute.xlu0 %1353
        %1355 = vrot.lane.b32.xlu0 %v1320, 96
        %v1356 = vpop.permute.xlu0 %1355
        %1357 = vrot.lane.b32.xlu0 %v1321, 96
        %v1358 = vpop.permute.xlu0 %1357
        %1359 = vrot.lane.b32.xlu0 %v1322, 96
        %v1360 = vpop.permute.xlu0 %1359
        %1361 = vrot.lane.b32.xlu0 %v1323, 96
        %v1362 = vpop.permute.xlu0 %1361
        %1363 = vrot.lane.b32.xlu0 %v1324, 96
        %v1364 = vpop.permute.xlu0 %1363
        %1365 = vrot.lane.b32.xlu0 %v1325, 96
        %v1366 = vpop.permute.xlu0 %1365
        %1367 = vrot.lane.b32.xlu0 %v1326, 96
        %v1368 = vpop.permute.xlu0 %1367
        %1369 = vrot.lane.b32.xlu0 %v1327, 96
        %v1370 = vpop.permute.xlu0 %1369
        %1371 = vrot.lane.b32.xlu0 %v1328, 96
        %v1372 = vpop.permute.xlu0 %1371
        %1373 = vrot.lane.b32.xlu0 %v1329, 96
        %v1374 = vpop.permute.xlu0 %1373
        %1375 = vrot.lane.b32.xlu0 %v1330, 96
        %v1376 = vpop.permute.xlu0 %1375
        %1377 = vrot.lane.b32.xlu0 %v1331, 96
        %v1378 = vpop.permute.xlu0 %1377
        %1379 = vrot.lane.b32.xlu0 %v1332, 96
        %v1380 = vpop.permute.xlu0 %1379
        %vm1381 = vcmask 785408
        %v1382 = vsel %vm1381, %v1350, %v1352
        %v1383 = vsel %vm1381, %v1352, %v1354
        %v1384 = vsel %vm1381, %v1354, %v1356
        %v1385 = vsel %vm1381, %v1358, %v1360
        %v1386 = vsel %vm1381, %v1360, %v1362
        %v1387 = vsel %vm1381, %v1362, %v1364
        %v1388 = vsel %vm1381, %v1366, %v1368
        %v1389 = vsel %vm1381, %v1368, %v1370
        %v1390 = vsel %vm1381, %v1370, %v1372
        %v1391 = vsel %vm1381, %v1374, %v1376
        %v1392 = vsel %vm1381, %v1376, %v1378
        %v1393 = vsel %vm1381, %v1378, %v1380
        %v1410 = vmax.f32 %v1317, %v1382
        %v1411 = vmax.f32 %v1318, %v1383
        %v1412 = vmax.f32 %v1319, %v1384
        %v1413 = vmax.f32 %v1320, %v1356
        %v1414 = vmax.f32 %v1321, %v1385
        %v1415 = vmax.f32 %v1322, %v1386
        %v1416 = vmax.f32 %v1323, %v1387
        %v1417 = vmax.f32 %v1324, %v1364
        %v1418 = vmax.f32 %v1325, %v1388
        %v1419 = vmax.f32 %v1326, %v1389
        %v1420 = vmax.f32 %v1327, %v1390
        %v1421 = vmax.f32 %v1328, %v1372
        %v1422 = vmax.f32 %v1329, %v1391
        %v1423 = vmax.f32 %v1330, %v1392
        %v1424 = vmax.f32 %v1331, %v1393
        %v1425 = vmax.f32 %v1332, %v1380
        %1426 = vst [vmem:[#allocation3] sm:$0xff] 0.0
        %1427 = vst [vmem:[#allocation3 + $0x8] sm:$0xff] 0.0
        %1428 = vst [vmem:[#allocation3 + $0x10] sm:$0xff] 0.0
        %1429 = vst [vmem:[#allocation3 + $0x18] sm:$0xff] 0.0
        %1430 = vst [vmem:[#allocation3 + $0x20] sm:$0xff] 0.0
        %1431 = vst [vmem:[#allocation3 + $0x28] sm:$0xff] 0.0
        %1432 = vst [vmem:[#allocation3 + $0x30] sm:$0xff] 0.0
        %1433 = vst [vmem:[#allocation3 + $0x38] sm:$0xff] 0.0
        %1434 = vst [vmem:[#allocation3 + $0x40] sm:$0xff] 0.0
        %1435 = vst [vmem:[#allocation3 + $0x48] sm:$0xff] 0.0
        %1436 = vst [vmem:[#allocation3 + $0x50] sm:$0xff] 0.0
        %vm1437 = vcmask 261120
        %1438 = vst.msk [vmem:[#allocation3 + $0x58] sm:$0xff] %vm1437, 0.0
        %1439 = vst [vmem:[#allocation3 + $0x60] sm:$0xff] 0.0
        %1440 = vst [vmem:[#allocation3 + $0x68] sm:$0xff] 0.0
        %1441 = vst [vmem:[#allocation3 + $0x70] sm:$0xff] 0.0
        %1442 = vst [vmem:[#allocation3 + $0x78] sm:$0xff] 0.0
        %1443 = vst [vmem:[#allocation3 + $0x80] sm:$0xff] 0.0
        %1444 = vst [vmem:[#allocation3 + $0x88] sm:$0xff] 0.0
        %1445 = vst [vmem:[#allocation3 + $0x90] sm:$0xff] 0.0
        %1446 = vst [vmem:[#allocation3 + $0x98] sm:$0xff] 0.0
        %1447 = vst [vmem:[#allocation3 + $0xa0] sm:$0xff] 0.0
        %1448 = vst [vmem:[#allocation3 + $0xa8] sm:$0xff] 0.0
        %1449 = vst [vmem:[#allocation3 + $0xb0] sm:$0xff] 0.0
        %1450 = vst.msk [vmem:[#allocation3 + $0xb8] sm:$0xff] %vm1437, 0.0
        %1451 = vst [vmem:[#allocation3 + $0xc0] sm:$0xff] 0.0
        %1452 = vst [vmem:[#allocation3 + $0xc8] sm:$0xff] 0.0
        %1453 = vst [vmem:[#allocation3 + $0xd0] sm:$0xff] 0.0
        %1454 = vst [vmem:[#allocation3 + $0xd8] sm:$0xff] 0.0
        %1455 = vst [vmem:[#allocation3 + $0xe0] sm:$0xff] 0.0
        %1456 = vst [vmem:[#allocation3 + $0xe8] sm:$0xff] 0.0
        %1457 = vst [vmem:[#allocation3 + $0xf0] sm:$0xff] 0.0
        %1458 = vst [vmem:[#allocation3 + $0xf8] sm:$0xff] 0.0
        %1459 = vst [vmem:[#allocation3 + $0x100] sm:$0xff] 0.0
        %1460 = vst [vmem:[#allocation3 + $0x108] sm:$0xff] 0.0
        %1461 = vst [vmem:[#allocation3 + $0x110] sm:$0xff] 0.0
        %1462 = vst.msk [vmem:[#allocation3 + $0x118] sm:$0xff] %vm1437, 0.0
        %1463 = vst [vmem:[#allocation3 + $0x120] sm:$0xff] 0.0
        %1464 = vst [vmem:[#allocation3 + $0x128] sm:$0xff] 0.0
        %1465 = vst [vmem:[#allocation3 + $0x130] sm:$0xff] 0.0
        %1466 = vst [vmem:[#allocation3 + $0x138] sm:$0xff] 0.0
        %1467 = vst [vmem:[#allocation3 + $0x140] sm:$0xff] 0.0
        %1468 = vst [vmem:[#allocation3 + $0x148] sm:$0xff] 0.0
        %1469 = vst [vmem:[#allocation3 + $0x150] sm:$0xff] 0.0
        %1470 = vst [vmem:[#allocation3 + $0x158] sm:$0xff] 0.0
        %1471 = vst [vmem:[#allocation3 + $0x160] sm:$0xff] 0.0
        %1472 = vst [vmem:[#allocation3 + $0x168] sm:$0xff] 0.0
        %1473 = vst [vmem:[#allocation3 + $0x170] sm:$0xff] 0.0
        %1474 = vst.msk [vmem:[#allocation3 + $0x178] sm:$0xff] %vm1437, 0.0
        %v1479 = vrot.slane %v1410, 7
        %v1480 = vrot.slane %v1411, 7
        %v1481 = vrot.slane %v1412, 7
        %v1482 = vrot.slane %v1413, 7
        %1487 = vst [vmem:[#allocation3] sm:$0xfe] %v1479
        %1488 = vst [vmem:[#allocation3 + $0x8] sm:$0xfe] %v1480
        %1489 = vst [vmem:[#allocation3 + $0x10] sm:$0xfe] %v1481
        %vm1490 = vcmask 785409
        %1491 = vst.msk [vmem:[#allocation3 + $0x18] sm:$0xfe] %vm1490, %v1482
        %1492 = vrot.lane.b32.xlu0 %v1410, 96
        %v1493 = vpop.permute.xlu0 %1492
        %1494 = vrot.lane.b32.xlu0 %v1411, 96
        %v1495 = vpop.permute.xlu0 %1494
        %1496 = vrot.lane.b32.xlu0 %v1412, 96
        %v1497 = vpop.permute.xlu0 %1496
        %1498 = vrot.lane.b32.xlu0 %v1413, 96
        %v1499 = vpop.permute.xlu0 %1498
        %v1500 = vsel %vm1381, %v1493, %v1495
        %v1501 = vsel %vm1381, %v1495, %v1497
        %v1502 = vsel %vm1381, %v1497, %v1499
        %vm1508 = vcmask 1048320
        %1509 = vst.msk [vmem:[#allocation3 + $0x18] sm:$0xff] %vm1508, %v1493
        %1510 = vst [vmem:[#allocation3 + $0x20] sm:$0xff] %v1500
        %1511 = vst [vmem:[#allocation3 + $0x28] sm:$0xff] %v1501
        %1512 = vst [vmem:[#allocation3 + $0x30] sm:$0xff] %v1502
        %vm1513 = vcmask 523264
        %1514 = vst.msk [vmem:[#allocation3 + $0x38] sm:$0xff] %vm1513, %v1499
        %v1515 = vrot.slane %v1410, 1
        %v1516 = vrot.slane %v1411, 1
        %v1517 = vrot.slane %v1412, 1
        %v1518 = vrot.slane %v1413, 1
        %1519 = vrot.lane.b32.xlu0 %v1515, 64
        %v1520 = vpop.permute.xlu0 %1519
        %1521 = vrot.lane.b32.xlu0 %v1516, 64
        %v1522 = vpop.permute.xlu0 %1521
        %1523 = vrot.lane.b32.xlu0 %v1517, 64
        %v1524 = vpop.permute.xlu0 %1523
        %1525 = vrot.lane.b32.xlu0 %v1518, 64
        %v1526 = vpop.permute.xlu0 %1525
        %v1527 = vsel %vm1513, %v1520, %v1522
        %v1528 = vsel %vm1513, %v1522, %v1524
        %v1529 = vsel %vm1513, %v1524, %v1526
        %vm1535 = vcmask 1047040
        %1536 = vst.msk [vmem:[#allocation3 + $0x38] sm:$0x7f] %vm1535, %v1520
        %1537 = vst [vmem:[#allocation3 + $0x40] sm:$0x7f] %v1527
        %1538 = vst [vmem:[#allocation3 + $0x48] sm:$0x7f] %v1528
        %1539 = vst [vmem:[#allocation3 + $0x50] sm:$0x7f] %v1529
        %vm1540 = vcmask 260096
        %1541 = vst.msk [vmem:[#allocation3 + $0x58] sm:$0x7f] %vm1540, %v1526
        %v1546 = vrot.slane %v1414, 7
        %v1547 = vrot.slane %v1415, 7
        %v1548 = vrot.slane %v1416, 7
        %v1549 = vrot.slane %v1417, 7
        %1554 = vst [vmem:[#allocation3 + $0x60] sm:$0xfe] %v1546
        %1555 = vst [vmem:[#allocation3 + $0x68] sm:$0xfe] %v1547
        %1556 = vst [vmem:[#allocation3 + $0x70] sm:$0xfe] %v1548
        %1557 = vst.msk [vmem:[#allocation3 + $0x78] sm:$0xfe] %vm1490, %v1549
        %1558 = vrot.lane.b32.xlu0 %v1414, 96
        %v1559 = vpop.permute.xlu0 %1558
        %1560 = vrot.lane.b32.xlu0 %v1415, 96
        %v1561 = vpop.permute.xlu0 %1560
        %1562 = vrot.lane.b32.xlu0 %v1416, 96
        %v1563 = vpop.permute.xlu0 %1562
        %1564 = vrot.lane.b32.xlu0 %v1417, 96
        %v1565 = vpop.permute.xlu0 %1564
        %v1566 = vsel %vm1381, %v1559, %v1561
        %v1567 = vsel %vm1381, %v1561, %v1563
        %v1568 = vsel %vm1381, %v1563, %v1565
        %1574 = vst.msk [vmem:[#allocation3 + $0x78] sm:$0xff] %vm1508, %v1559
        %1575 = vst [vmem:[#allocation3 + $0x80] sm:$0xff] %v1566
        %1576 = vst [vmem:[#allocation3 + $0x88] sm:$0xff] %v1567
        %1577 = vst [vmem:[#allocation3 + $0x90] sm:$0xff] %v1568
        %1578 = vst.msk [vmem:[#allocation3 + $0x98] sm:$0xff] %vm1513, %v1565
        %v1579 = vrot.slane %v1414, 1
        %v1580 = vrot.slane %v1415, 1
        %v1581 = vrot.slane %v1416, 1
        %v1582 = vrot.slane %v1417, 1
        %1583 = vrot.lane.b32.xlu0 %v1579, 64
        %v1584 = vpop.permute.xlu0 %1583
        %1585 = vrot.lane.b32.xlu0 %v1580, 64
        %v1586 = vpop.permute.xlu0 %1585
        %1587 = vrot.lane.b32.xlu0 %v1581, 64
        %v1588 = vpop.permute.xlu0 %1587
        %1589 = vrot.lane.b32.xlu0 %v1582, 64
        %v1590 = vpop.permute.xlu0 %1589
        %v1591 = vsel %vm1513, %v1584, %v1586
        %v1592 = vsel %vm1513, %v1586, %v1588
        %v1593 = vsel %vm1513, %v1588, %v1590
        %1599 = vst.msk [vmem:[#allocation3 + $0x98] sm:$0x7f] %vm1535, %v1584
        %1600 = vst [vmem:[#allocation3 + $0xa0] sm:$0x7f] %v1591
        %1601 = vst [vmem:[#allocation3 + $0xa8] sm:$0x7f] %v1592
        %1602 = vst [vmem:[#allocation3 + $0xb0] sm:$0x7f] %v1593
        %1603 = vst.msk [vmem:[#allocation3 + $0xb8] sm:$0x7f] %vm1540, %v1590
        %v1608 = vrot.slane %v1418, 7
        %v1609 = vrot.slane %v1419, 7
        %v1610 = vrot.slane %v1420, 7
        %v1611 = vrot.slane %v1421, 7
        %1616 = vst [vmem:[#allocation3 + $0xc0] sm:$0xfe] %v1608
        %1617 = vst [vmem:[#allocation3 + $0xc8] sm:$0xfe] %v1609
        %1618 = vst [vmem:[#allocation3 + $0xd0] sm:$0xfe] %v1610
        %1619 = vst.msk [vmem:[#allocation3 + $0xd8] sm:$0xfe] %vm1490, %v1611
        %1620 = vrot.lane.b32.xlu0 %v1418, 96
        %v1621 = vpop.permute.xlu0 %1620
        %1622 = vrot.lane.b32.xlu0 %v1419, 96
        %v1623 = vpop.permute.xlu0 %1622
        %1624 = vrot.lane.b32.xlu0 %v1420, 96
        %v1625 = vpop.permute.xlu0 %1624
        %1626 = vrot.lane.b32.xlu0 %v1421, 96
        %v1627 = vpop.permute.xlu0 %1626
        %v1628 = vsel %vm1381, %v1621, %v1623
        %v1629 = vsel %vm1381, %v1623, %v1625
        %v1630 = vsel %vm1381, %v1625, %v1627
        %1636 = vst.msk [vmem:[#allocation3 + $0xd8] sm:$0xff] %vm1508, %v1621
        %1637 = vst [vmem:[#allocation3 + $0xe0] sm:$0xff] %v1628
        %1638 = vst [vmem:[#allocation3 + $0xe8] sm:$0xff] %v1629
        %1639 = vst [vmem:[#allocation3 + $0xf0] sm:$0xff] %v1630
        %1640 = vst.msk [vmem:[#allocation3 + $0xf8] sm:$0xff] %vm1513, %v1627
        %v1641 = vrot.slane %v1418, 1
        %v1642 = vrot.slane %v1419, 1
        %v1643 = vrot.slane %v1420, 1
        %v1644 = vrot.slane %v1421, 1
        %1645 = vrot.lane.b32.xlu0 %v1641, 64
        %v1646 = vpop.permute.xlu0 %1645
        %1647 = vrot.lane.b32.xlu0 %v1642, 64
        %v1648 = vpop.permute.xlu0 %1647
        %1649 = vrot.lane.b32.xlu0 %v1643, 64
        %v1650 = vpop.permute.xlu0 %1649
        %1651 = vrot.lane.b32.xlu0 %v1644, 64
        %v1652 = vpop.permute.xlu0 %1651
        %v1653 = vsel %vm1513, %v1646, %v1648
        %v1654 = vsel %vm1513, %v1648, %v1650
        %v1655 = vsel %vm1513, %v1650, %v1652
        %1661 = vst.msk [vmem:[#allocation3 + $0xf8] sm:$0x7f] %vm1535, %v1646
        %1662 = vst [vmem:[#allocation3 + $0x100] sm:$0x7f] %v1653
        %1663 = vst [vmem:[#allocation3 + $0x108] sm:$0x7f] %v1654
        %1664 = vst [vmem:[#allocation3 + $0x110] sm:$0x7f] %v1655
        %1665 = vst.msk [vmem:[#allocation3 + $0x118] sm:$0x7f] %vm1540, %v1652
        %v1670 = vrot.slane %v1422, 7
        %v1671 = vrot.slane %v1423, 7
        %v1672 = vrot.slane %v1424, 7
        %v1673 = vrot.slane %v1425, 7
        %1678 = vst [vmem:[#allocation3 + $0x120] sm:$0xfe] %v1670
        %1679 = vst [vmem:[#allocation3 + $0x128] sm:$0xfe] %v1671
        %1680 = vst [vmem:[#allocation3 + $0x130] sm:$0xfe] %v1672
        %1681 = vst.msk [vmem:[#allocation3 + $0x138] sm:$0xfe] %vm1490, %v1673
        %1682 = vrot.lane.b32.xlu0 %v1422, 96
        %v1683 = vpop.permute.xlu0 %1682
        %1684 = vrot.lane.b32.xlu0 %v1423, 96
        %v1685 = vpop.permute.xlu0 %1684
        %1686 = vrot.lane.b32.xlu0 %v1424, 96
        %v1687 = vpop.permute.xlu0 %1686
        %1688 = vrot.lane.b32.xlu0 %v1425, 96
        %v1689 = vpop.permute.xlu0 %1688
        %v1690 = vsel %vm1381, %v1683, %v1685
        %v1691 = vsel %vm1381, %v1685, %v1687
        %v1692 = vsel %vm1381, %v1687, %v1689
        %1698 = vst.msk [vmem:[#allocation3 + $0x138] sm:$0xff] %vm1508, %v1683
        %1699 = vst [vmem:[#allocation3 + $0x140] sm:$0xff] %v1690
        %1700 = vst [vmem:[#allocation3 + $0x148] sm:$0xff] %v1691
        %1701 = vst [vmem:[#allocation3 + $0x150] sm:$0xff] %v1692
        %1702 = vst.msk [vmem:[#allocation3 + $0x158] sm:$0xff] %vm1513, %v1689
        %v1703 = vrot.slane %v1422, 1
        %v1704 = vrot.slane %v1423, 1
        %v1705 = vrot.slane %v1424, 1
        %v1706 = vrot.slane %v1425, 1
        %1707 = vrot.lane.b32.xlu0 %v1703, 64
        %v1708 = vpop.permute.xlu0 %1707
        %1709 = vrot.lane.b32.xlu0 %v1704, 64
        %v1710 = vpop.permute.xlu0 %1709
        %1711 = vrot.lane.b32.xlu0 %v1705, 64
        %v1712 = vpop.permute.xlu0 %1711
        %1713 = vrot.lane.b32.xlu0 %v1706, 64
        %v1714 = vpop.permute.xlu0 %1713
        %v1715 = vsel %vm1513, %v1708, %v1710
        %v1716 = vsel %vm1513, %v1710, %v1712
        %v1717 = vsel %vm1513, %v1712, %v1714
        %1723 = vst.msk [vmem:[#allocation3 + $0x158] sm:$0x7f] %vm1535, %v1708
        %1724 = vst [vmem:[#allocation3 + $0x160] sm:$0x7f] %v1715
        %1725 = vst [vmem:[#allocation3 + $0x168] sm:$0x7f] %v1716
        %1726 = vst [vmem:[#allocation3 + $0x170] sm:$0x7f] %v1717
        %1727 = vst.msk [vmem:[#allocation3 + $0x178] sm:$0x7f] %vm1540, %v1714
        %v1728 = vld [vmem:[#allocation3] sm:$0xff]
        %v1729 = vld [vmem:[#allocation3 + $0x8] sm:$0xff]
        %v1730 = vld [vmem:[#allocation3 + $0x10] sm:$0xff]
        %v1731 = vld [vmem:[#allocation3 + $0x18] sm:$0xff]
        %v1732 = vld [vmem:[#allocation3 + $0x20] sm:$0xff]
        %v1733 = vld [vmem:[#allocation3 + $0x28] sm:$0xff]
        %v1734 = vld [vmem:[#allocation3 + $0x30] sm:$0xff]
        %v1735 = vld [vmem:[#allocation3 + $0x38] sm:$0xff]
        %v1736 = vld [vmem:[#allocation3 + $0x40] sm:$0xff]
        %v1737 = vld [vmem:[#allocation3 + $0x48] sm:$0xff]
        %v1738 = vld [vmem:[#allocation3 + $0x50] sm:$0xff]
        %v1739 = vld [vmem:[#allocation3 + $0x58] sm:$0xff]
        %v1740 = vld [vmem:[#allocation3 + $0x60] sm:$0xff]
        %v1741 = vld [vmem:[#allocation3 + $0x68] sm:$0xff]
        %v1742 = vld [vmem:[#allocation3 + $0x70] sm:$0xff]
        %v1743 = vld [vmem:[#allocation3 + $0x78] sm:$0xff]
        %v1744 = vld [vmem:[#allocation3 + $0x80] sm:$0xff]
        %v1745 = vld [vmem:[#allocation3 + $0x88] sm:$0xff]
        %v1746 = vld [vmem:[#allocation3 + $0x90] sm:$0xff]
        %v1747 = vld [vmem:[#allocation3 + $0x98] sm:$0xff]
        %v1748 = vld [vmem:[#allocation3 + $0xa0] sm:$0xff]
        %v1749 = vld [vmem:[#allocation3 + $0xa8] sm:$0xff]
        %v1750 = vld [vmem:[#allocation3 + $0xb0] sm:$0xff]
        %v1751 = vld [vmem:[#allocation3 + $0xb8] sm:$0xff]
        %v1752 = vld [vmem:[#allocation3 + $0xc0] sm:$0xff]
        %v1753 = vld [vmem:[#allocation3 + $0xc8] sm:$0xff]
        %v1754 = vld [vmem:[#allocation3 + $0xd0] sm:$0xff]
        %v1755 = vld [vmem:[#allocation3 + $0xd8] sm:$0xff]
        %v1756 = vld [vmem:[#allocation3 + $0xe0] sm:$0xff]
        %v1757 = vld [vmem:[#allocation3 + $0xe8] sm:$0xff]
        %v1758 = vld [vmem:[#allocation3 + $0xf0] sm:$0xff]
        %v1759 = vld [vmem:[#allocation3 + $0xf8] sm:$0xff]
        %v1760 = vld [vmem:[#allocation3 + $0x100] sm:$0xff]
        %v1761 = vld [vmem:[#allocation3 + $0x108] sm:$0xff]
        %v1762 = vld [vmem:[#allocation3 + $0x110] sm:$0xff]
        %v1763 = vld [vmem:[#allocation3 + $0x118] sm:$0xff]
        %v1764 = vld [vmem:[#allocation3 + $0x120] sm:$0xff]
        %v1765 = vld [vmem:[#allocation3 + $0x128] sm:$0xff]
        %v1766 = vld [vmem:[#allocation3 + $0x130] sm:$0xff]
        %v1767 = vld [vmem:[#allocation3 + $0x138] sm:$0xff]
        %v1768 = vld [vmem:[#allocation3 + $0x140] sm:$0xff]
        %v1769 = vld [vmem:[#allocation3 + $0x148] sm:$0xff]
        %v1770 = vld [vmem:[#allocation3 + $0x150] sm:$0xff]
        %v1771 = vld [vmem:[#allocation3 + $0x158] sm:$0xff]
        %v1772 = vld [vmem:[#allocation3 + $0x160] sm:$0xff]
        %v1773 = vld [vmem:[#allocation3 + $0x168] sm:$0xff]
        %v1774 = vld [vmem:[#allocation3 + $0x170] sm:$0xff]
        %v1775 = vld [vmem:[#allocation3 + $0x178] sm:$0xff]
        %v1776 = vpack.c.bf16 %v1740, %v1728
        %v1777 = vpack.c.bf16 %v1741, %v1729
        %v1778 = vpack.c.bf16 %v1742, %v1730
        %v1779 = vpack.c.bf16 %v1743, %v1731
        %v1780 = vpack.c.bf16 %v1744, %v1732
        %v1781 = vpack.c.bf16 %v1745, %v1733
        %v1782 = vpack.c.bf16 %v1746, %v1734
        %v1783 = vpack.c.bf16 %v1747, %v1735
        %v1784 = vpack.c.bf16 %v1748, %v1736
        %v1785 = vpack.c.bf16 %v1749, %v1737
        %v1786 = vpack.c.bf16 %v1750, %v1738
        %v1787 = vpack.c.bf16 %v1751, %v1739
        %v1788 = vpack.c.bf16 %v1764, %v1752
        %v1789 = vpack.c.bf16 %v1765, %v1753
        %v1790 = vpack.c.bf16 %v1766, %v1754
        %v1791 = vpack.c.bf16 %v1767, %v1755
        %v1792 = vpack.c.bf16 %v1768, %v1756
        %v1793 = vpack.c.bf16 %v1769, %v1757
        %v1794 = vpack.c.bf16 %v1770, %v1758
        %v1795 = vpack.c.bf16 %v1771, %v1759
        %v1796 = vpack.c.bf16 %v1772, %v1760
        %v1797 = vpack.c.bf16 %v1773, %v1761
        %v1798 = vpack.c.bf16 %v1774, %v1762
        %v1799 = vpack.c.bf16 %v1775, %v1763
        %v1800 = vld [vmem:[#allocation8] sm:$0xff]
        %v1801 = vld [vmem:[#allocation8 + $0x8] sm:$0xff]
        %v1802 = vld [vmem:[#allocation8 + $0x10] sm:$0xff]
        %v1803 = vld [vmem:[#allocation8 + $0x18] sm:$0xff]
        %v1804 = vld [vmem:[#allocation8 + $0x20] sm:$0xff]
        %v1805 = vld [vmem:[#allocation8 + $0x28] sm:$0xff]
        %v1806 = vld [vmem:[#allocation8 + $0x30] sm:$0xff]
        %v1807 = vld [vmem:[#allocation8 + $0x38] sm:$0xff]
        %v1808 = vld [vmem:[#allocation8 + $0x40] sm:$0xff]
        %v1809 = vld [vmem:[#allocation8 + $0x48] sm:$0xff]
        %v1810 = vld [vmem:[#allocation8 + $0x50] sm:$0xff]
        %v1811 = vld [vmem:[#allocation8 + $0x58] sm:$0xff]
        %v1812 = vld [vmem:[#allocation8 + $0x60] sm:$0xff]
        %v1813 = vld [vmem:[#allocation8 + $0x68] sm:$0xff]
        %v1814 = vld [vmem:[#allocation8 + $0x70] sm:$0xff]
        %v1815 = vld [vmem:[#allocation8 + $0x78] sm:$0xff]
        %v1816 = vld [vmem:[#allocation8 + $0x80] sm:$0xff]
        %v1817 = vld [vmem:[#allocation8 + $0x88] sm:$0xff]
        %v1818 = vld [vmem:[#allocation8 + $0x90] sm:$0xff]
        %v1819 = vld [vmem:[#allocation8 + $0x98] sm:$0xff]
        %v1820 = vld [vmem:[#allocation8 + $0xa0] sm:$0xff]
        %v1821 = vld [vmem:[#allocation8 + $0xa8] sm:$0xff]
        %v1822 = vld [vmem:[#allocation8 + $0xb0] sm:$0xff]
        %v1823 = vld [vmem:[#allocation8 + $0xb8] sm:$0xff]
        %v1824 = vld [vmem:[#allocation8 + $0xc0] sm:$0xff]
        %v1825 = vld [vmem:[#allocation8 + $0xc8] sm:$0xff]
        %v1826 = vld [vmem:[#allocation8 + $0xd0] sm:$0xff]
        %v1827 = vld [vmem:[#allocation8 + $0xd8] sm:$0xff]
        %v1828 = vld [vmem:[#allocation8 + $0xe0] sm:$0xff]
        %v1829 = vld [vmem:[#allocation8 + $0xe8] sm:$0xff]
        %v1830 = vld [vmem:[#allocation8 + $0xf0] sm:$0xff]
        %v1831 = vld [vmem:[#allocation8 + $0xf8] sm:$0xff]
        %v1832 = vld [vmem:[#allocation8 + $0x100] sm:$0xff]
        %v1833 = vld [vmem:[#allocation8 + $0x108] sm:$0xff]
        %v1834 = vld [vmem:[#allocation8 + $0x110] sm:$0xff]
        %v1835 = vld [vmem:[#allocation8 + $0x118] sm:$0xff]
        %v1836 = vld [vmem:[#allocation8 + $0x120] sm:$0xff]
        %v1837 = vld [vmem:[#allocation8 + $0x128] sm:$0xff]
        %v1838 = vld [vmem:[#allocation8 + $0x130] sm:$0xff]
        %v1839 = vld [vmem:[#allocation8 + $0x138] sm:$0xff]
        %v1840 = vld [vmem:[#allocation8 + $0x140] sm:$0xff]
        %v1841 = vld [vmem:[#allocation8 + $0x148] sm:$0xff]
        %v1842 = vld [vmem:[#allocation8 + $0x150] sm:$0xff]
        %v1843 = vld [vmem:[#allocation8 + $0x158] sm:$0xff]
        %v1844 = vld [vmem:[#allocation8 + $0x160] sm:$0xff]
        %v1845 = vld [vmem:[#allocation8 + $0x168] sm:$0xff]
        %v1846 = vld [vmem:[#allocation8 + $0x170] sm:$0xff]
        %v1847 = vld [vmem:[#allocation8 + $0x178] sm:$0xff]
        %v1848 = vld [vmem:[#allocation8 + $0x180] sm:$0xff]
        %v1849 = vld [vmem:[#allocation8 + $0x188] sm:$0xff]
        %v1850 = vld [vmem:[#allocation8 + $0x190] sm:$0xff]
        %v1851 = vld [vmem:[#allocation8 + $0x198] sm:$0xff]
        %v1852 = vld [vmem:[#allocation8 + $0x1a0] sm:$0xff]
        %v1853 = vld [vmem:[#allocation8 + $0x1a8] sm:$0xff]
        %v1854 = vld [vmem:[#allocation8 + $0x1b0] sm:$0xff]
        %v1855 = vld [vmem:[#allocation8 + $0x1b8] sm:$0xff]
        %v1856 = vld [vmem:[#allocation8 + $0x1c0] sm:$0xff]
        %v1857 = vld [vmem:[#allocation8 + $0x1c8] sm:$0xff]
        %v1858 = vld [vmem:[#allocation8 + $0x1d0] sm:$0xff]
        %v1859 = vld [vmem:[#allocation8 + $0x1d8] sm:$0xff]
        %v1860 = vld [vmem:[#allocation8 + $0x1e0] sm:$0xff]
        %v1861 = vld [vmem:[#allocation8 + $0x1e8] sm:$0xff]
        %v1862 = vld [vmem:[#allocation8 + $0x1f0] sm:$0xff]
        %v1863 = vld [vmem:[#allocation8 + $0x1f8] sm:$0xff]
        %v1864 = vld [vmem:[#allocation8 + $0x200] sm:$0xff]
        %v1865 = vld [vmem:[#allocation8 + $0x208] sm:$0xff]
        %v1866 = vld [vmem:[#allocation8 + $0x210] sm:$0xff]
        %v1867 = vld [vmem:[#allocation8 + $0x218] sm:$0xff]
        %v1868 = vld [vmem:[#allocation8 + $0x220] sm:$0xff]
        %v1869 = vld [vmem:[#allocation8 + $0x228] sm:$0xff]
        %v1870 = vld [vmem:[#allocation8 + $0x230] sm:$0xff]
        %v1871 = vld [vmem:[#allocation8 + $0x238] sm:$0xff]
        %v1872 = vld [vmem:[#allocation8 + $0x240] sm:$0xff]
        %v1873 = vld [vmem:[#allocation8 + $0x248] sm:$0xff]
        %v1874 = vld [vmem:[#allocation8 + $0x250] sm:$0xff]
        %v1875 = vld [vmem:[#allocation8 + $0x258] sm:$0xff]
        %v1876 = vld [vmem:[#allocation8 + $0x260] sm:$0xff]
        %v1877 = vld [vmem:[#allocation8 + $0x268] sm:$0xff]
        %v1878 = vld [vmem:[#allocation8 + $0x270] sm:$0xff]
        %v1879 = vld [vmem:[#allocation8 + $0x278] sm:$0xff]
        %v1880 = vld [vmem:[#allocation8 + $0x280] sm:$0xff]
        %v1881 = vld [vmem:[#allocation8 + $0x288] sm:$0xff]
        %v1882 = vld [vmem:[#allocation8 + $0x290] sm:$0xff]
        %v1883 = vld [vmem:[#allocation8 + $0x298] sm:$0xff]
        %v1884 = vld [vmem:[#allocation8 + $0x2a0] sm:$0xff]
        %v1885 = vld [vmem:[#allocation8 + $0x2a8] sm:$0xff]
        %v1886 = vld [vmem:[#allocation8 + $0x2b0] sm:$0xff]
        %v1887 = vld [vmem:[#allocation8 + $0x2b8] sm:$0xff]
        %v1888 = vld [vmem:[#allocation8 + $0x2c0] sm:$0xff]
        %v1889 = vld [vmem:[#allocation8 + $0x2c8] sm:$0xff]
        %v1890 = vld [vmem:[#allocation8 + $0x2d0] sm:$0xff]
        %v1891 = vld [vmem:[#allocation8 + $0x2d8] sm:$0xff]
        %v1892 = vld [vmem:[#allocation8 + $0x2e0] sm:$0xff]
        %v1893 = vld [vmem:[#allocation8 + $0x2e8] sm:$0xff]
        %v1894 = vld [vmem:[#allocation8 + $0x2f0] sm:$0xff]
        %v1895 = vld [vmem:[#allocation8 + $0x2f8] sm:$0xff]
        %v1896 = vld [vmem:[#allocation8 + $0x300] sm:$0xff]
        %v1897 = vld [vmem:[#allocation8 + $0x308] sm:$0xff]
        %v1898 = vld [vmem:[#allocation8 + $0x310] sm:$0xff]
        %v1899 = vld [vmem:[#allocation8 + $0x318] sm:$0xff]
        %v1900 = vld [vmem:[#allocation8 + $0x320] sm:$0xff]
        %v1901 = vld [vmem:[#allocation8 + $0x328] sm:$0xff]
        %v1902 = vld [vmem:[#allocation8 + $0x330] sm:$0xff]
        %v1903 = vld [vmem:[#allocation8 + $0x338] sm:$0xff]
        %v1904 = vld [vmem:[#allocation8 + $0x340] sm:$0xff]
        %v1905 = vld [vmem:[#allocation8 + $0x348] sm:$0xff]
        %v1906 = vld [vmem:[#allocation8 + $0x350] sm:$0xff]
        %v1907 = vld [vmem:[#allocation8 + $0x358] sm:$0xff]
        %v1908 = vld [vmem:[#allocation8 + $0x360] sm:$0xff]
        %v1909 = vld [vmem:[#allocation8 + $0x368] sm:$0xff]
        %v1910 = vld [vmem:[#allocation8 + $0x370] sm:$0xff]
        %v1911 = vld [vmem:[#allocation8 + $0x378] sm:$0xff]
        %v1912 = vld [vmem:[#allocation8 + $0x380] sm:$0xff]
        %v1913 = vld [vmem:[#allocation8 + $0x388] sm:$0xff]
        %v1914 = vld [vmem:[#allocation8 + $0x390] sm:$0xff]
        %v1915 = vld [vmem:[#allocation8 + $0x398] sm:$0xff]
        %v1916 = vld [vmem:[#allocation8 + $0x3a0] sm:$0xff]
        %v1917 = vld [vmem:[#allocation8 + $0x3a8] sm:$0xff]
        %v1918 = vld [vmem:[#allocation8 + $0x3b0] sm:$0xff]
        %v1919 = vld [vmem:[#allocation8 + $0x3b8] sm:$0xff]
        %v1920 = vld [vmem:[#allocation8 + $0x3c0] sm:$0xff]
        %v1921 = vld [vmem:[#allocation8 + $0x3c8] sm:$0xff]
        %v1922 = vld [vmem:[#allocation8 + $0x3d0] sm:$0xff]
        %v1923 = vld [vmem:[#allocation8 + $0x3d8] sm:$0xff]
        %v1924 = vld [vmem:[#allocation8 + $0x3e0] sm:$0xff]
        %v1925 = vld [vmem:[#allocation8 + $0x3e8] sm:$0xff]
        %v1926 = vld [vmem:[#allocation8 + $0x3f0] sm:$0xff]
        %v1927 = vld [vmem:[#allocation8 + $0x3f8] sm:$0xff]
        %v1928 = vld [vmem:[#allocation8 + $0x400] sm:$0xff]
        %v1929 = vld [vmem:[#allocation8 + $0x408] sm:$0xff]
        %v1930 = vld [vmem:[#allocation8 + $0x410] sm:$0xff]
        %v1931 = vld [vmem:[#allocation8 + $0x418] sm:$0xff]
        %v1932 = vld [vmem:[#allocation8 + $0x420] sm:$0xff]
        %v1933 = vld [vmem:[#allocation8 + $0x428] sm:$0xff]
        %v1934 = vld [vmem:[#allocation8 + $0x430] sm:$0xff]
        %v1935 = vld [vmem:[#allocation8 + $0x438] sm:$0xff]
        %v1936 = vld [vmem:[#allocation8 + $0x440] sm:$0xff]
        %v1937 = vld [vmem:[#allocation8 + $0x448] sm:$0xff]
        %v1938 = vld [vmem:[#allocation8 + $0x450] sm:$0xff]
        %v1939 = vld [vmem:[#allocation8 + $0x458] sm:$0xff]
        %v1940 = vld [vmem:[#allocation8 + $0x460] sm:$0xff]
        %v1941 = vld [vmem:[#allocation8 + $0x468] sm:$0xff]
        %v1942 = vld [vmem:[#allocation8 + $0x470] sm:$0xff]
        %v1943 = vld [vmem:[#allocation8 + $0x478] sm:$0xff]
        %v1944 = vld [vmem:[#allocation8 + $0x480] sm:$0xff]
        %v1945 = vld [vmem:[#allocation8 + $0x488] sm:$0xff]
        %v1946 = vld [vmem:[#allocation8 + $0x490] sm:$0xff]
        %v1947 = vld [vmem:[#allocation8 + $0x498] sm:$0xff]
        %v1948 = vld [vmem:[#allocation8 + $0x4a0] sm:$0xff]
        %v1949 = vld [vmem:[#allocation8 + $0x4a8] sm:$0xff]
        %v1950 = vld [vmem:[#allocation8 + $0x4b0] sm:$0xff]
        %v1951 = vld [vmem:[#allocation8 + $0x4b8] sm:$0xff]
        %v1952 = vld [vmem:[#allocation8 + $0x4c0] sm:$0xff]
        %v1953 = vld [vmem:[#allocation8 + $0x4c8] sm:$0xff]
        %v1954 = vld [vmem:[#allocation8 + $0x4d0] sm:$0xff]
        %v1955 = vld [vmem:[#allocation8 + $0x4d8] sm:$0xff]
        %v1956 = vld [vmem:[#allocation8 + $0x4e0] sm:$0xff]
        %v1957 = vld [vmem:[#allocation8 + $0x4e8] sm:$0xff]
        %v1958 = vld [vmem:[#allocation8 + $0x4f0] sm:$0xff]
        %v1959 = vld [vmem:[#allocation8 + $0x4f8] sm:$0xff]
        %v1960 = vld [vmem:[#allocation8 + $0x500] sm:$0xff]
        %v1961 = vld [vmem:[#allocation8 + $0x508] sm:$0xff]
        %v1962 = vld [vmem:[#allocation8 + $0x510] sm:$0xff]
        %v1963 = vld [vmem:[#allocation8 + $0x518] sm:$0xff]
        %v1964 = vld [vmem:[#allocation8 + $0x520] sm:$0xff]
        %v1965 = vld [vmem:[#allocation8 + $0x528] sm:$0xff]
        %v1966 = vld [vmem:[#allocation8 + $0x530] sm:$0xff]
        %v1967 = vld [vmem:[#allocation8 + $0x538] sm:$0xff]
        %v1968 = vld [vmem:[#allocation8 + $0x540] sm:$0xff]
        %v1969 = vld [vmem:[#allocation8 + $0x548] sm:$0xff]
        %v1970 = vld [vmem:[#allocation8 + $0x550] sm:$0xff]
        %v1971 = vld [vmem:[#allocation8 + $0x558] sm:$0xff]
        %v1972 = vld [vmem:[#allocation8 + $0x560] sm:$0xff]
        %v1973 = vld [vmem:[#allocation8 + $0x568] sm:$0xff]
        %v1974 = vld [vmem:[#allocation8 + $0x570] sm:$0xff]
        %v1975 = vld [vmem:[#allocation8 + $0x578] sm:$0xff]
        %v1976 = vld [vmem:[#allocation8 + $0x580] sm:$0xff]
        %v1977 = vld [vmem:[#allocation8 + $0x588] sm:$0xff]
        %v1978 = vld [vmem:[#allocation8 + $0x590] sm:$0xff]
        %v1979 = vld [vmem:[#allocation8 + $0x598] sm:$0xff]
        %v1980 = vld [vmem:[#allocation8 + $0x5a0] sm:$0xff]
        %v1981 = vld [vmem:[#allocation8 + $0x5a8] sm:$0xff]
        %v1982 = vld [vmem:[#allocation8 + $0x5b0] sm:$0xff]
        %v1983 = vld [vmem:[#allocation8 + $0x5b8] sm:$0xff]
        %v1984 = vld [vmem:[#allocation8 + $0x5c0] sm:$0xff]
        %v1985 = vld [vmem:[#allocation8 + $0x5c8] sm:$0xff]
        %v1986 = vld [vmem:[#allocation8 + $0x5d0] sm:$0xff]
        %v1987 = vld [vmem:[#allocation8 + $0x5d8] sm:$0xff]
        %v1988 = vld [vmem:[#allocation8 + $0x5e0] sm:$0xff]
        %v1989 = vld [vmem:[#allocation8 + $0x5e8] sm:$0xff]
        %v1990 = vld [vmem:[#allocation8 + $0x5f0] sm:$0xff]
        %v1991 = vld [vmem:[#allocation8 + $0x5f8] sm:$0xff]
        %v1992 = vld [vmem:[#allocation8 + $0x600] sm:$0xff]
        %v1993 = vld [vmem:[#allocation8 + $0x608] sm:$0xff]
        %v1994 = vld [vmem:[#allocation8 + $0x610] sm:$0xff]
        %v1995 = vld [vmem:[#allocation8 + $0x618] sm:$0xff]
        %v1996 = vld [vmem:[#allocation8 + $0x620] sm:$0xff]
        %v1997 = vld [vmem:[#allocation8 + $0x628] sm:$0xff]
        %v1998 = vld [vmem:[#allocation8 + $0x630] sm:$0xff]
        %v1999 = vld [vmem:[#allocation8 + $0x638] sm:$0xff]
        %v2000 = vld [vmem:[#allocation8 + $0x640] sm:$0xff]
        %v2001 = vld [vmem:[#allocation8 + $0x648] sm:$0xff]
        %v2002 = vld [vmem:[#allocation8 + $0x650] sm:$0xff]
        %v2003 = vld [vmem:[#allocation8 + $0x658] sm:$0xff]
        %v2004 = vld [vmem:[#allocation8 + $0x660] sm:$0xff]
        %v2005 = vld [vmem:[#allocation8 + $0x668] sm:$0xff]
        %v2006 = vld [vmem:[#allocation8 + $0x670] sm:$0xff]
        %v2007 = vld [vmem:[#allocation8 + $0x678] sm:$0xff]
        %v2008 = vld [vmem:[#allocation8 + $0x680] sm:$0xff]
        %v2009 = vld [vmem:[#allocation8 + $0x688] sm:$0xff]
        %v2010 = vld [vmem:[#allocation8 + $0x690] sm:$0xff]
        %v2011 = vld [vmem:[#allocation8 + $0x698] sm:$0xff]
        %v2012 = vld [vmem:[#allocation8 + $0x6a0] sm:$0xff]
        %v2013 = vld [vmem:[#allocation8 + $0x6a8] sm:$0xff]
        %v2014 = vld [vmem:[#allocation8 + $0x6b0] sm:$0xff]
        %v2015 = vld [vmem:[#allocation8 + $0x6b8] sm:$0xff]
        %v2016 = vld [vmem:[#allocation8 + $0x6c0] sm:$0xff]
        %v2017 = vld [vmem:[#allocation8 + $0x6c8] sm:$0xff]
        %v2018 = vld [vmem:[#allocation8 + $0x6d0] sm:$0xff]
        %v2019 = vld [vmem:[#allocation8 + $0x6d8] sm:$0xff]
        %v2020 = vld [vmem:[#allocation8 + $0x6e0] sm:$0xff]
        %v2021 = vld [vmem:[#allocation8 + $0x6e8] sm:$0xff]
        %v2022 = vld [vmem:[#allocation8 + $0x6f0] sm:$0xff]
        %v2023 = vld [vmem:[#allocation8 + $0x6f8] sm:$0xff]
        %v2024 = vld [vmem:[#allocation8 + $0x700] sm:$0xff]
        %v2025 = vld [vmem:[#allocation8 + $0x708] sm:$0xff]
        %v2026 = vld [vmem:[#allocation8 + $0x710] sm:$0xff]
        %v2027 = vld [vmem:[#allocation8 + $0x718] sm:$0xff]
        %v2028 = vld [vmem:[#allocation8 + $0x720] sm:$0xff]
        %v2029 = vld [vmem:[#allocation8 + $0x728] sm:$0xff]
        %v2030 = vld [vmem:[#allocation8 + $0x730] sm:$0xff]
        %v2031 = vld [vmem:[#allocation8 + $0x738] sm:$0xff]
        %v2032 = vld [vmem:[#allocation8 + $0x740] sm:$0xff]
        %v2033 = vld [vmem:[#allocation8 + $0x748] sm:$0xff]
        %v2034 = vld [vmem:[#allocation8 + $0x750] sm:$0xff]
        %v2035 = vld [vmem:[#allocation8 + $0x758] sm:$0xff]
        %v2036 = vld [vmem:[#allocation8 + $0x760] sm:$0xff]
        %v2037 = vld [vmem:[#allocation8 + $0x768] sm:$0xff]
        %v2038 = vld [vmem:[#allocation8 + $0x770] sm:$0xff]
        %v2039 = vld [vmem:[#allocation8 + $0x778] sm:$0xff]
        %v2040 = vld [vmem:[#allocation8 + $0x780] sm:$0xff]
        %v2041 = vld [vmem:[#allocation8 + $0x788] sm:$0xff]
        %v2042 = vld [vmem:[#allocation8 + $0x790] sm:$0xff]
        %v2043 = vld [vmem:[#allocation8 + $0x798] sm:$0xff]
        %v2044 = vld [vmem:[#allocation8 + $0x7a0] sm:$0xff]
        %v2045 = vld [vmem:[#allocation8 + $0x7a8] sm:$0xff]
        %v2046 = vld [vmem:[#allocation8 + $0x7b0] sm:$0xff]
        %v2047 = vld [vmem:[#allocation8 + $0x7b8] sm:$0xff]
        %v2048 = vld [vmem:[#allocation8 + $0x7c0] sm:$0xff]
        %v2049 = vld [vmem:[#allocation8 + $0x7c8] sm:$0xff]
        %v2050 = vld [vmem:[#allocation8 + $0x7d0] sm:$0xff]
        %v2051 = vld [vmem:[#allocation8 + $0x7d8] sm:$0xff]
        %v2052 = vld [vmem:[#allocation8 + $0x7e0] sm:$0xff]
        %v2053 = vld [vmem:[#allocation8 + $0x7e8] sm:$0xff]
        %v2054 = vld [vmem:[#allocation8 + $0x7f0] sm:$0xff]
        %v2055 = vld [vmem:[#allocation8 + $0x7f8] sm:$0xff]
        %v2056 = vld [vmem:[#allocation8 + $0x800] sm:$0xff]
        %v2057 = vld [vmem:[#allocation8 + $0x808] sm:$0xff]
        %v2058 = vld [vmem:[#allocation8 + $0x810] sm:$0xff]
        %v2059 = vld [vmem:[#allocation8 + $0x818] sm:$0xff]
        %v2060 = vld [vmem:[#allocation8 + $0x820] sm:$0xff]
        %v2061 = vld [vmem:[#allocation8 + $0x828] sm:$0xff]
        %v2062 = vld [vmem:[#allocation8 + $0x830] sm:$0xff]
        %v2063 = vld [vmem:[#allocation8 + $0x838] sm:$0xff]
        %v2064 = vld [vmem:[#allocation8 + $0x840] sm:$0xff]
        %v2065 = vld [vmem:[#allocation8 + $0x848] sm:$0xff]
        %v2066 = vld [vmem:[#allocation8 + $0x850] sm:$0xff]
        %v2067 = vld [vmem:[#allocation8 + $0x858] sm:$0xff]
        %v2068 = vld [vmem:[#allocation8 + $0x860] sm:$0xff]
        %v2069 = vld [vmem:[#allocation8 + $0x868] sm:$0xff]
        %v2070 = vld [vmem:[#allocation8 + $0x870] sm:$0xff]
        %v2071 = vld [vmem:[#allocation8 + $0x878] sm:$0xff]
        %v2072 = vld [vmem:[#allocation8 + $0x880] sm:$0xff]
        %v2073 = vld [vmem:[#allocation8 + $0x888] sm:$0xff]
        %v2074 = vld [vmem:[#allocation8 + $0x890] sm:$0xff]
        %v2075 = vld [vmem:[#allocation8 + $0x898] sm:$0xff]
        %v2076 = vld [vmem:[#allocation8 + $0x8a0] sm:$0xff]
        %v2077 = vld [vmem:[#allocation8 + $0x8a8] sm:$0xff]
        %v2078 = vld [vmem:[#allocation8 + $0x8b0] sm:$0xff]
        %v2079 = vld [vmem:[#allocation8 + $0x8b8] sm:$0xff]
        %v2080 = vld [vmem:[#allocation8 + $0x8c0] sm:$0xff]
        %v2081 = vld [vmem:[#allocation8 + $0x8c8] sm:$0xff]
        %v2082 = vld [vmem:[#allocation8 + $0x8d0] sm:$0xff]
        %v2083 = vld [vmem:[#allocation8 + $0x8d8] sm:$0xff]
        %v2084 = vld [vmem:[#allocation8 + $0x8e0] sm:$0xff]
        %v2085 = vld [vmem:[#allocation8 + $0x8e8] sm:$0xff]
        %v2086 = vld [vmem:[#allocation8 + $0x8f0] sm:$0xff]
        %v2087 = vld [vmem:[#allocation8 + $0x8f8] sm:$0xff]
        %v2088 = vld [vmem:[#allocation8 + $0x900] sm:$0xff]
        %v2089 = vld [vmem:[#allocation8 + $0x908] sm:$0xff]
        %v2090 = vld [vmem:[#allocation8 + $0x910] sm:$0xff]
        %v2091 = vld [vmem:[#allocation8 + $0x918] sm:$0xff]
        %v2092 = vld [vmem:[#allocation8 + $0x920] sm:$0xff]
        %v2093 = vld [vmem:[#allocation8 + $0x928] sm:$0xff]
        %v2094 = vld [vmem:[#allocation8 + $0x930] sm:$0xff]
        %v2095 = vld [vmem:[#allocation8 + $0x938] sm:$0xff]
        %v2096 = vld [vmem:[#allocation8 + $0x940] sm:$0xff]
        %v2097 = vld [vmem:[#allocation8 + $0x948] sm:$0xff]
        %v2098 = vld [vmem:[#allocation8 + $0x950] sm:$0xff]
        %v2099 = vld [vmem:[#allocation8 + $0x958] sm:$0xff]
        %v2100 = vld [vmem:[#allocation8 + $0x960] sm:$0xff]
        %v2101 = vld [vmem:[#allocation8 + $0x968] sm:$0xff]
        %v2102 = vld [vmem:[#allocation8 + $0x970] sm:$0xff]
        %v2103 = vld [vmem:[#allocation8 + $0x978] sm:$0xff]
        %v2104 = vld [vmem:[#allocation8 + $0x980] sm:$0xff]
        %v2105 = vld [vmem:[#allocation8 + $0x988] sm:$0xff]
        %v2106 = vld [vmem:[#allocation8 + $0x990] sm:$0xff]
        %v2107 = vld [vmem:[#allocation8 + $0x998] sm:$0xff]
        %v2108 = vld [vmem:[#allocation8 + $0x9a0] sm:$0xff]
        %v2109 = vld [vmem:[#allocation8 + $0x9a8] sm:$0xff]
        %v2110 = vld [vmem:[#allocation8 + $0x9b0] sm:$0xff]
        %v2111 = vld [vmem:[#allocation8 + $0x9b8] sm:$0xff]
        %v2112 = vld [vmem:[#allocation8 + $0x9c0] sm:$0xff]
        %v2113 = vld [vmem:[#allocation8 + $0x9c8] sm:$0xff]
        %v2114 = vld [vmem:[#allocation8 + $0x9d0] sm:$0xff]
        %v2115 = vld [vmem:[#allocation8 + $0x9d8] sm:$0xff]
        %v2116 = vld [vmem:[#allocation8 + $0x9e0] sm:$0xff]
        %v2117 = vld [vmem:[#allocation8 + $0x9e8] sm:$0xff]
        %v2118 = vld [vmem:[#allocation8 + $0x9f0] sm:$0xff]
        %v2119 = vld [vmem:[#allocation8 + $0x9f8] sm:$0xff]
        %v2120 = vld [vmem:[#allocation8 + $0xa00] sm:$0xff]
        %v2121 = vld [vmem:[#allocation8 + $0xa08] sm:$0xff]
        %v2122 = vld [vmem:[#allocation8 + $0xa10] sm:$0xff]
        %v2123 = vld [vmem:[#allocation8 + $0xa18] sm:$0xff]
        %v2124 = vld [vmem:[#allocation8 + $0xa20] sm:$0xff]
        %v2125 = vld [vmem:[#allocation8 + $0xa28] sm:$0xff]
        %v2126 = vld [vmem:[#allocation8 + $0xa30] sm:$0xff]
        %v2127 = vld [vmem:[#allocation8 + $0xa38] sm:$0xff]
        %v2128 = vld [vmem:[#allocation8 + $0xa40] sm:$0xff]
        %v2129 = vld [vmem:[#allocation8 + $0xa48] sm:$0xff]
        %v2130 = vld [vmem:[#allocation8 + $0xa50] sm:$0xff]
        %v2131 = vld [vmem:[#allocation8 + $0xa58] sm:$0xff]
        %v2132 = vld [vmem:[#allocation8 + $0xa60] sm:$0xff]
        %v2133 = vld [vmem:[#allocation8 + $0xa68] sm:$0xff]
        %v2134 = vld [vmem:[#allocation8 + $0xa70] sm:$0xff]
        %v2135 = vld [vmem:[#allocation8 + $0xa78] sm:$0xff]
        %v2136 = vld [vmem:[#allocation8 + $0xa80] sm:$0xff]
        %v2137 = vld [vmem:[#allocation8 + $0xa88] sm:$0xff]
        %v2138 = vld [vmem:[#allocation8 + $0xa90] sm:$0xff]
        %v2139 = vld [vmem:[#allocation8 + $0xa98] sm:$0xff]
        %v2140 = vld [vmem:[#allocation8 + $0xaa0] sm:$0xff]
        %v2141 = vld [vmem:[#allocation8 + $0xaa8] sm:$0xff]
        %v2142 = vld [vmem:[#allocation8 + $0xab0] sm:$0xff]
        %v2143 = vld [vmem:[#allocation8 + $0xab8] sm:$0xff]
        %v2144 = vld [vmem:[#allocation8 + $0xac0] sm:$0xff]
        %v2145 = vld [vmem:[#allocation8 + $0xac8] sm:$0xff]
        %v2146 = vld [vmem:[#allocation8 + $0xad0] sm:$0xff]
        %v2147 = vld [vmem:[#allocation8 + $0xad8] sm:$0xff]
        %v2148 = vld [vmem:[#allocation8 + $0xae0] sm:$0xff]
        %v2149 = vld [vmem:[#allocation8 + $0xae8] sm:$0xff]
        %v2150 = vld [vmem:[#allocation8 + $0xaf0] sm:$0xff]
        %v2151 = vld [vmem:[#allocation8 + $0xaf8] sm:$0xff]
        %v2152 = vld [vmem:[#allocation8 + $0xb00] sm:$0xff]
        %v2153 = vld [vmem:[#allocation8 + $0xb08] sm:$0xff]
        %v2154 = vld [vmem:[#allocation8 + $0xb10] sm:$0xff]
        %v2155 = vld [vmem:[#allocation8 + $0xb18] sm:$0xff]
        %v2156 = vld [vmem:[#allocation8 + $0xb20] sm:$0xff]
        %v2157 = vld [vmem:[#allocation8 + $0xb28] sm:$0xff]
        %v2158 = vld [vmem:[#allocation8 + $0xb30] sm:$0xff]
        %v2159 = vld [vmem:[#allocation8 + $0xb38] sm:$0xff]
        %v2160 = vld [vmem:[#allocation9] sm:$0xf]
        %v2162 = vlaneseq
        %v2163 = vshrl.u32 %v2162, 7
        %v2164 = vsub.s32 0, %v2163
        %v2165 = vrot.slane %v2160, %v2164
        %v2166 = vlaneseq
        %v2167 = vshrl.u32 %v2166, 7
        %v2168 = vsub.s32 1, %v2167
        %v2169 = vrot.slane %v2160, %v2168
        %v2170 = vlaneseq
        %v2171 = vshrl.u32 %v2170, 7
        %v2172 = vsub.s32 2, %v2171
        %v2173 = vrot.slane %v2160, %v2172
        %v2174 = vlaneseq
        %v2175 = vshrl.u32 %v2174, 7
        %v2176 = vsub.s32 3, %v2175
        %v2177 = vrot.slane %v2160, %v2176
        %v2542 = vunpack.c.l.b16 %v1800
        %v2543 = vunpack.c.h.b16 %v1800
        %v2544 = vunpack.c.l.b16 %v1801
        %v2545 = vunpack.c.h.b16 %v1801
        %v2546 = vunpack.c.l.b16 %v1802
        %v2547 = vunpack.c.h.b16 %v1802
        %v2548 = vunpack.c.l.b16 %v1803
        %v2549 = vunpack.c.h.b16 %v1803
        %v2550 = vunpack.c.l.b16 %v1804
        %v2551 = vunpack.c.h.b16 %v1804
        %v2552 = vunpack.c.l.b16 %v1805
        %v2553 = vunpack.c.h.b16 %v1805
        %v2554 = vunpack.c.l.b16 %v1806
        %v2555 = vunpack.c.h.b16 %v1806
        %v2556 = vunpack.c.l.b16 %v1807
        %v2557 = vunpack.c.h.b16 %v1807
        %v2558 = vunpack.c.l.b16 %v1808
        %v2559 = vunpack.c.h.b16 %v1808
        %v2560 = vunpack.c.l.b16 %v1809
        %v2561 = vunpack.c.h.b16 %v1809
        %v2562 = vunpack.c.l.b16 %v1810
        %v2563 = vunpack.c.h.b16 %v1810
        %v2564 = vunpack.c.l.b16 %v1811
        %v2565 = vunpack.c.h.b16 %v1811
        %v2566 = vunpack.c.l.b16 %v1812
        %v2567 = vunpack.c.h.b16 %v1812
        %v2568 = vunpack.c.l.b16 %v1813
        %v2569 = vunpack.c.h.b16 %v1813
        %v2570 = vunpack.c.l.b16 %v1814
        %v2571 = vunpack.c.h.b16 %v1814
        %v2572 = vunpack.c.l.b16 %v1815
        %v2573 = vunpack.c.h.b16 %v1815
        %v2574 = vunpack.c.l.b16 %v1816
        %v2575 = vunpack.c.h.b16 %v1816
        %v2576 = vunpack.c.l.b16 %v1817
        %v2577 = vunpack.c.h.b16 %v1817
        %v2578 = vunpack.c.l.b16 %v1818
        %v2579 = vunpack.c.h.b16 %v1818
        %v2580 = vunpack.c.l.b16 %v1819
        %v2581 = vunpack.c.h.b16 %v1819
        %v2582 = vunpack.c.l.b16 %v1820
        %v2583 = vunpack.c.h.b16 %v1820
        %v2584 = vunpack.c.l.b16 %v1821
        %v2585 = vunpack.c.h.b16 %v1821
        %v2586 = vunpack.c.l.b16 %v1822
        %v2587 = vunpack.c.h.b16 %v1822
        %v2588 = vunpack.c.l.b16 %v1823
        %v2589 = vunpack.c.h.b16 %v1823
        %v2590 = vunpack.c.l.b16 %v1824
        %v2591 = vunpack.c.h.b16 %v1824
        %v2592 = vunpack.c.l.b16 %v1825
        %v2593 = vunpack.c.h.b16 %v1825
        %v2594 = vunpack.c.l.b16 %v1826
        %v2595 = vunpack.c.h.b16 %v1826
        %v2596 = vunpack.c.l.b16 %v1827
        %v2597 = vunpack.c.h.b16 %v1827
        %v2598 = vunpack.c.l.b16 %v1828
        %v2599 = vunpack.c.h.b16 %v1828
        %v2600 = vunpack.c.l.b16 %v1829
        %v2601 = vunpack.c.h.b16 %v1829
        %v2602 = vunpack.c.l.b16 %v1830
        %v2603 = vunpack.c.h.b16 %v1830
        %v2604 = vunpack.c.l.b16 %v1831
        %v2605 = vunpack.c.h.b16 %v1831
        %v2606 = vunpack.c.l.b16 %v1832
        %v2607 = vunpack.c.h.b16 %v1832
        %v2608 = vunpack.c.l.b16 %v1833
        %v2609 = vunpack.c.h.b16 %v1833
        %v2610 = vunpack.c.l.b16 %v1834
        %v2611 = vunpack.c.h.b16 %v1834
        %v2612 = vunpack.c.l.b16 %v1835
        %v2613 = vunpack.c.h.b16 %v1835
        %v2614 = vunpack.c.l.b16 %v1836
        %v2615 = vunpack.c.h.b16 %v1836
        %v2616 = vunpack.c.l.b16 %v1837
        %v2617 = vunpack.c.h.b16 %v1837
        %v2618 = vunpack.c.l.b16 %v1838
        %v2619 = vunpack.c.h.b16 %v1838
        %v2620 = vunpack.c.l.b16 %v1839
        %v2621 = vunpack.c.h.b16 %v1839
        %v2622 = vunpack.c.l.b16 %v1840
        %v2623 = vunpack.c.h.b16 %v1840
        %v2624 = vunpack.c.l.b16 %v1841
        %v2625 = vunpack.c.h.b16 %v1841
        %v2626 = vunpack.c.l.b16 %v1842
        %v2627 = vunpack.c.h.b16 %v1842
        %v2628 = vunpack.c.l.b16 %v1843
        %v2629 = vunpack.c.h.b16 %v1843
        %v2630 = vunpack.c.l.b16 %v1844
        %v2631 = vunpack.c.h.b16 %v1844
        %v2632 = vunpack.c.l.b16 %v1845
        %v2633 = vunpack.c.h.b16 %v1845
        %v2634 = vunpack.c.l.b16 %v1846
        %v2635 = vunpack.c.h.b16 %v1846
        %v2636 = vunpack.c.l.b16 %v1847
        %v2637 = vunpack.c.h.b16 %v1847
        %v2638 = vunpack.c.l.b16 %v1848
        %v2639 = vunpack.c.h.b16 %v1848
        %v2640 = vunpack.c.l.b16 %v1849
        %v2641 = vunpack.c.h.b16 %v1849
        %v2642 = vunpack.c.l.b16 %v1850
        %v2643 = vunpack.c.h.b16 %v1850
        %v2644 = vunpack.c.l.b16 %v1851
        %v2645 = vunpack.c.h.b16 %v1851
        %v2646 = vunpack.c.l.b16 %v1852
        %v2647 = vunpack.c.h.b16 %v1852
        %v2648 = vunpack.c.l.b16 %v1853
        %v2649 = vunpack.c.h.b16 %v1853
        %v2650 = vunpack.c.l.b16 %v1854
        %v2651 = vunpack.c.h.b16 %v1854
        %v2652 = vunpack.c.l.b16 %v1855
        %v2653 = vunpack.c.h.b16 %v1855
        %v2654 = vunpack.c.l.b16 %v1856
        %v2655 = vunpack.c.h.b16 %v1856
        %v2656 = vunpack.c.l.b16 %v1857
        %v2657 = vunpack.c.h.b16 %v1857
        %v2658 = vunpack.c.l.b16 %v1858
        %v2659 = vunpack.c.h.b16 %v1858
        %v2660 = vunpack.c.l.b16 %v1859
        %v2661 = vunpack.c.h.b16 %v1859
        %v2662 = vunpack.c.l.b16 %v1860
        %v2663 = vunpack.c.h.b16 %v1860
        %v2664 = vunpack.c.l.b16 %v1861
        %v2665 = vunpack.c.h.b16 %v1861
        %v2666 = vunpack.c.l.b16 %v1862
        %v2667 = vunpack.c.h.b16 %v1862
        %v2668 = vunpack.c.l.b16 %v1863
        %v2669 = vunpack.c.h.b16 %v1863
        %v2670 = vunpack.c.l.b16 %v1864
        %v2671 = vunpack.c.h.b16 %v1864
        %v2672 = vunpack.c.l.b16 %v1865
        %v2673 = vunpack.c.h.b16 %v1865
        %v2674 = vunpack.c.l.b16 %v1866
        %v2675 = vunpack.c.h.b16 %v1866
        %v2676 = vunpack.c.l.b16 %v1867
        %v2677 = vunpack.c.h.b16 %v1867
        %v2678 = vunpack.c.l.b16 %v1868
        %v2679 = vunpack.c.h.b16 %v1868
        %v2680 = vunpack.c.l.b16 %v1869
        %v2681 = vunpack.c.h.b16 %v1869
        %v2682 = vunpack.c.l.b16 %v1870
        %v2683 = vunpack.c.h.b16 %v1870
        %v2684 = vunpack.c.l.b16 %v1871
        %v2685 = vunpack.c.h.b16 %v1871
        %v2686 = vunpack.c.l.b16 %v1872
        %v2687 = vunpack.c.h.b16 %v1872
        %v2688 = vunpack.c.l.b16 %v1873
        %v2689 = vunpack.c.h.b16 %v1873
        %v2690 = vunpack.c.l.b16 %v1874
        %v2691 = vunpack.c.h.b16 %v1874
        %v2692 = vunpack.c.l.b16 %v1875
        %v2693 = vunpack.c.h.b16 %v1875
        %v2694 = vunpack.c.l.b16 %v1876
        %v2695 = vunpack.c.h.b16 %v1876
        %v2696 = vunpack.c.l.b16 %v1877
        %v2697 = vunpack.c.h.b16 %v1877
        %v2698 = vunpack.c.l.b16 %v1878
        %v2699 = vunpack.c.h.b16 %v1878
        %v2700 = vunpack.c.l.b16 %v1879
        %v2701 = vunpack.c.h.b16 %v1879
        %v2702 = vunpack.c.l.b16 %v1880
        %v2703 = vunpack.c.h.b16 %v1880
        %v2704 = vunpack.c.l.b16 %v1881
        %v2705 = vunpack.c.h.b16 %v1881
        %v2706 = vunpack.c.l.b16 %v1882
        %v2707 = vunpack.c.h.b16 %v1882
        %v2708 = vunpack.c.l.b16 %v1883
        %v2709 = vunpack.c.h.b16 %v1883
        %v2710 = vunpack.c.l.b16 %v1884
        %v2711 = vunpack.c.h.b16 %v1884
        %v2712 = vunpack.c.l.b16 %v1885
        %v2713 = vunpack.c.h.b16 %v1885
        %v2714 = vunpack.c.l.b16 %v1886
        %v2715 = vunpack.c.h.b16 %v1886
        %v2716 = vunpack.c.l.b16 %v1887
        %v2717 = vunpack.c.h.b16 %v1887
        %v2718 = vunpack.c.l.b16 %v1888
        %v2719 = vunpack.c.h.b16 %v1888
        %v2720 = vunpack.c.l.b16 %v1889
        %v2721 = vunpack.c.h.b16 %v1889
        %v2722 = vunpack.c.l.b16 %v1890
        %v2723 = vunpack.c.h.b16 %v1890
        %v2724 = vunpack.c.l.b16 %v1891
        %v2725 = vunpack.c.h.b16 %v1891
        %v2726 = vunpack.c.l.b16 %v1892
        %v2727 = vunpack.c.h.b16 %v1892
        %v2728 = vunpack.c.l.b16 %v1893
        %v2729 = vunpack.c.h.b16 %v1893
        %v2730 = vunpack.c.l.b16 %v1894
        %v2731 = vunpack.c.h.b16 %v1894
        %v2732 = vunpack.c.l.b16 %v1895
        %v2733 = vunpack.c.h.b16 %v1895
        %v2734 = vunpack.c.l.b16 %v1896
        %v2735 = vunpack.c.h.b16 %v1896
        %v2736 = vunpack.c.l.b16 %v1897
        %v2737 = vunpack.c.h.b16 %v1897
        %v2738 = vunpack.c.l.b16 %v1898
        %v2739 = vunpack.c.h.b16 %v1898
        %v2740 = vunpack.c.l.b16 %v1899
        %v2741 = vunpack.c.h.b16 %v1899
        %v2742 = vunpack.c.l.b16 %v1900
        %v2743 = vunpack.c.h.b16 %v1900
        %v2744 = vunpack.c.l.b16 %v1901
        %v2745 = vunpack.c.h.b16 %v1901
        %v2746 = vunpack.c.l.b16 %v1902
        %v2747 = vunpack.c.h.b16 %v1902
        %v2748 = vunpack.c.l.b16 %v1903
        %v2749 = vunpack.c.h.b16 %v1903
        %v2750 = vunpack.c.l.b16 %v1904
        %v2751 = vunpack.c.h.b16 %v1904
        %v2752 = vunpack.c.l.b16 %v1905
        %v2753 = vunpack.c.h.b16 %v1905
        %v2754 = vunpack.c.l.b16 %v1906
        %v2755 = vunpack.c.h.b16 %v1906
        %v2756 = vunpack.c.l.b16 %v1907
        %v2757 = vunpack.c.h.b16 %v1907
        %v2758 = vunpack.c.l.b16 %v1908
        %v2759 = vunpack.c.h.b16 %v1908
        %v2760 = vunpack.c.l.b16 %v1909
        %v2761 = vunpack.c.h.b16 %v1909
        %v2762 = vunpack.c.l.b16 %v1910
        %v2763 = vunpack.c.h.b16 %v1910
        %v2764 = vunpack.c.l.b16 %v1911
        %v2765 = vunpack.c.h.b16 %v1911
        %v2766 = vunpack.c.l.b16 %v1912
        %v2767 = vunpack.c.h.b16 %v1912
        %v2768 = vunpack.c.l.b16 %v1913
        %v2769 = vunpack.c.h.b16 %v1913
        %v2770 = vunpack.c.l.b16 %v1914
        %v2771 = vunpack.c.h.b16 %v1914
        %v2772 = vunpack.c.l.b16 %v1915
        %v2773 = vunpack.c.h.b16 %v1915
        %v2774 = vunpack.c.l.b16 %v1916
        %v2775 = vunpack.c.h.b16 %v1916
        %v2776 = vunpack.c.l.b16 %v1917
        %v2777 = vunpack.c.h.b16 %v1917
        %v2778 = vunpack.c.l.b16 %v1918
        %v2779 = vunpack.c.h.b16 %v1918
        %v2780 = vunpack.c.l.b16 %v1919
        %v2781 = vunpack.c.h.b16 %v1919
        %v2782 = vunpack.c.l.b16 %v1920
        %v2783 = vunpack.c.h.b16 %v1920
        %v2784 = vunpack.c.l.b16 %v1921
        %v2785 = vunpack.c.h.b16 %v1921
        %v2786 = vunpack.c.l.b16 %v1922
        %v2787 = vunpack.c.h.b16 %v1922
        %v2788 = vunpack.c.l.b16 %v1923
        %v2789 = vunpack.c.h.b16 %v1923
        %v2790 = vunpack.c.l.b16 %v1924
        %v2791 = vunpack.c.h.b16 %v1924
        %v2792 = vunpack.c.l.b16 %v1925
        %v2793 = vunpack.c.h.b16 %v1925
        %v2794 = vunpack.c.l.b16 %v1926
        %v2795 = vunpack.c.h.b16 %v1926
        %v2796 = vunpack.c.l.b16 %v1927
        %v2797 = vunpack.c.h.b16 %v1927
        %v2798 = vunpack.c.l.b16 %v1928
        %v2799 = vunpack.c.h.b16 %v1928
        %v2800 = vunpack.c.l.b16 %v1929
        %v2801 = vunpack.c.h.b16 %v1929
        %v2802 = vunpack.c.l.b16 %v1930
        %v2803 = vunpack.c.h.b16 %v1930
        %v2804 = vunpack.c.l.b16 %v1931
        %v2805 = vunpack.c.h.b16 %v1931
        %v2806 = vunpack.c.l.b16 %v1932
        %v2807 = vunpack.c.h.b16 %v1932
        %v2808 = vunpack.c.l.b16 %v1933
        %v2809 = vunpack.c.h.b16 %v1933
        %v2810 = vunpack.c.l.b16 %v1934
        %v2811 = vunpack.c.h.b16 %v1934
        %v2812 = vunpack.c.l.b16 %v1935
        %v2813 = vunpack.c.h.b16 %v1935
        %v2814 = vunpack.c.l.b16 %v1936
        %v2815 = vunpack.c.h.b16 %v1936
        %v2816 = vunpack.c.l.b16 %v1937
        %v2817 = vunpack.c.h.b16 %v1937
        %v2818 = vunpack.c.l.b16 %v1938
        %v2819 = vunpack.c.h.b16 %v1938
        %v2820 = vunpack.c.l.b16 %v1939
        %v2821 = vunpack.c.h.b16 %v1939
        %v2822 = vunpack.c.l.b16 %v1940
        %v2823 = vunpack.c.h.b16 %v1940
        %v2824 = vunpack.c.l.b16 %v1941
        %v2825 = vunpack.c.h.b16 %v1941
        %v2826 = vunpack.c.l.b16 %v1942
        %v2827 = vunpack.c.h.b16 %v1942
        %v2828 = vunpack.c.l.b16 %v1943
        %v2829 = vunpack.c.h.b16 %v1943
        %v2830 = vunpack.c.l.b16 %v1944
        %v2831 = vunpack.c.h.b16 %v1944
        %v2832 = vunpack.c.l.b16 %v1945
        %v2833 = vunpack.c.h.b16 %v1945
        %v2834 = vunpack.c.l.b16 %v1946
        %v2835 = vunpack.c.h.b16 %v1946
        %v2836 = vunpack.c.l.b16 %v1947
        %v2837 = vunpack.c.h.b16 %v1947
        %v2838 = vunpack.c.l.b16 %v1948
        %v2839 = vunpack.c.h.b16 %v1948
        %v2840 = vunpack.c.l.b16 %v1949
        %v2841 = vunpack.c.h.b16 %v1949
        %v2842 = vunpack.c.l.b16 %v1950
        %v2843 = vunpack.c.h.b16 %v1950
        %v2844 = vunpack.c.l.b16 %v1951
        %v2845 = vunpack.c.h.b16 %v1951
        %v2846 = vunpack.c.l.b16 %v1952
        %v2847 = vunpack.c.h.b16 %v1952
        %v2848 = vunpack.c.l.b16 %v1953
        %v2849 = vunpack.c.h.b16 %v1953
        %v2850 = vunpack.c.l.b16 %v1954
        %v2851 = vunpack.c.h.b16 %v1954
        %v2852 = vunpack.c.l.b16 %v1955
        %v2853 = vunpack.c.h.b16 %v1955
        %v2854 = vunpack.c.l.b16 %v1956
        %v2855 = vunpack.c.h.b16 %v1956
        %v2856 = vunpack.c.l.b16 %v1957
        %v2857 = vunpack.c.h.b16 %v1957
        %v2858 = vunpack.c.l.b16 %v1958
        %v2859 = vunpack.c.h.b16 %v1958
        %v2860 = vunpack.c.l.b16 %v1959
        %v2861 = vunpack.c.h.b16 %v1959
        %v2862 = vunpack.c.l.b16 %v1960
        %v2863 = vunpack.c.h.b16 %v1960
        %v2864 = vunpack.c.l.b16 %v1961
        %v2865 = vunpack.c.h.b16 %v1961
        %v2866 = vunpack.c.l.b16 %v1962
        %v2867 = vunpack.c.h.b16 %v1962
        %v2868 = vunpack.c.l.b16 %v1963
        %v2869 = vunpack.c.h.b16 %v1963
        %v2870 = vunpack.c.l.b16 %v1964
        %v2871 = vunpack.c.h.b16 %v1964
        %v2872 = vunpack.c.l.b16 %v1965
        %v2873 = vunpack.c.h.b16 %v1965
        %v2874 = vunpack.c.l.b16 %v1966
        %v2875 = vunpack.c.h.b16 %v1966
        %v2876 = vunpack.c.l.b16 %v1967
        %v2877 = vunpack.c.h.b16 %v1967
        %v2878 = vunpack.c.l.b16 %v1968
        %v2879 = vunpack.c.h.b16 %v1968
        %v2880 = vunpack.c.l.b16 %v1969
        %v2881 = vunpack.c.h.b16 %v1969
        %v2882 = vunpack.c.l.b16 %v1970
        %v2883 = vunpack.c.h.b16 %v1970
        %v2884 = vunpack.c.l.b16 %v1971
        %v2885 = vunpack.c.h.b16 %v1971
        %v2886 = vunpack.c.l.b16 %v1972
        %v2887 = vunpack.c.h.b16 %v1972
        %v2888 = vunpack.c.l.b16 %v1973
        %v2889 = vunpack.c.h.b16 %v1973
        %v2890 = vunpack.c.l.b16 %v1974
        %v2891 = vunpack.c.h.b16 %v1974
        %v2892 = vunpack.c.l.b16 %v1975
        %v2893 = vunpack.c.h.b16 %v1975
        %v2894 = vunpack.c.l.b16 %v1976
        %v2895 = vunpack.c.h.b16 %v1976
        %v2896 = vunpack.c.l.b16 %v1977
        %v2897 = vunpack.c.h.b16 %v1977
        %v2898 = vunpack.c.l.b16 %v1978
        %v2899 = vunpack.c.h.b16 %v1978
        %v2900 = vunpack.c.l.b16 %v1979
        %v2901 = vunpack.c.h.b16 %v1979
        %v2902 = vunpack.c.l.b16 %v1980
        %v2903 = vunpack.c.h.b16 %v1980
        %v2904 = vunpack.c.l.b16 %v1981
        %v2905 = vunpack.c.h.b16 %v1981
        %v2906 = vunpack.c.l.b16 %v1982
        %v2907 = vunpack.c.h.b16 %v1982
        %v2908 = vunpack.c.l.b16 %v1983
        %v2909 = vunpack.c.h.b16 %v1983
        %v2910 = vunpack.c.l.b16 %v1984
        %v2911 = vunpack.c.h.b16 %v1984
        %v2912 = vunpack.c.l.b16 %v1985
        %v2913 = vunpack.c.h.b16 %v1985
        %v2914 = vunpack.c.l.b16 %v1986
        %v2915 = vunpack.c.h.b16 %v1986
        %v2916 = vunpack.c.l.b16 %v1987
        %v2917 = vunpack.c.h.b16 %v1987
        %v2918 = vunpack.c.l.b16 %v1988
        %v2919 = vunpack.c.h.b16 %v1988
        %v2920 = vunpack.c.l.b16 %v1989
        %v2921 = vunpack.c.h.b16 %v1989
        %v2922 = vunpack.c.l.b16 %v1990
        %v2923 = vunpack.c.h.b16 %v1990
        %v2924 = vunpack.c.l.b16 %v1991
        %v2925 = vunpack.c.h.b16 %v1991
        %v2926 = vunpack.c.l.b16 %v1992
        %v2927 = vunpack.c.h.b16 %v1992
        %v2928 = vunpack.c.l.b16 %v1993
        %v2929 = vunpack.c.h.b16 %v1993
        %v2930 = vunpack.c.l.b16 %v1994
        %v2931 = vunpack.c.h.b16 %v1994
        %v2932 = vunpack.c.l.b16 %v1995
        %v2933 = vunpack.c.h.b16 %v1995
        %v2934 = vunpack.c.l.b16 %v1996
        %v2935 = vunpack.c.h.b16 %v1996
        %v2936 = vunpack.c.l.b16 %v1997
        %v2937 = vunpack.c.h.b16 %v1997
        %v2938 = vunpack.c.l.b16 %v1998
        %v2939 = vunpack.c.h.b16 %v1998
        %v2940 = vunpack.c.l.b16 %v1999
        %v2941 = vunpack.c.h.b16 %v1999
        %v2942 = vunpack.c.l.b16 %v2000
        %v2943 = vunpack.c.h.b16 %v2000
        %v2944 = vunpack.c.l.b16 %v2001
        %v2945 = vunpack.c.h.b16 %v2001
        %v2946 = vunpack.c.l.b16 %v2002
        %v2947 = vunpack.c.h.b16 %v2002
        %v2948 = vunpack.c.l.b16 %v2003
        %v2949 = vunpack.c.h.b16 %v2003
        %v2950 = vunpack.c.l.b16 %v2004
        %v2951 = vunpack.c.h.b16 %v2004
        %v2952 = vunpack.c.l.b16 %v2005
        %v2953 = vunpack.c.h.b16 %v2005
        %v2954 = vunpack.c.l.b16 %v2006
        %v2955 = vunpack.c.h.b16 %v2006
        %v2956 = vunpack.c.l.b16 %v2007
        %v2957 = vunpack.c.h.b16 %v2007
        %v2958 = vunpack.c.l.b16 %v2008
        %v2959 = vunpack.c.h.b16 %v2008
        %v2960 = vunpack.c.l.b16 %v2009
        %v2961 = vunpack.c.h.b16 %v2009
        %v2962 = vunpack.c.l.b16 %v2010
        %v2963 = vunpack.c.h.b16 %v2010
        %v2964 = vunpack.c.l.b16 %v2011
        %v2965 = vunpack.c.h.b16 %v2011
        %v2966 = vunpack.c.l.b16 %v2012
        %v2967 = vunpack.c.h.b16 %v2012
        %v2968 = vunpack.c.l.b16 %v2013
        %v2969 = vunpack.c.h.b16 %v2013
        %v2970 = vunpack.c.l.b16 %v2014
        %v2971 = vunpack.c.h.b16 %v2014
        %v2972 = vunpack.c.l.b16 %v2015
        %v2973 = vunpack.c.h.b16 %v2015
        %v2974 = vunpack.c.l.b16 %v2016
        %v2975 = vunpack.c.h.b16 %v2016
        %v2976 = vunpack.c.l.b16 %v2017
        %v2977 = vunpack.c.h.b16 %v2017
        %v2978 = vunpack.c.l.b16 %v2018
        %v2979 = vunpack.c.h.b16 %v2018
        %v2980 = vunpack.c.l.b16 %v2019
        %v2981 = vunpack.c.h.b16 %v2019
        %v2982 = vunpack.c.l.b16 %v2020
        %v2983 = vunpack.c.h.b16 %v2020
        %v2984 = vunpack.c.l.b16 %v2021
        %v2985 = vunpack.c.h.b16 %v2021
        %v2986 = vunpack.c.l.b16 %v2022
        %v2987 = vunpack.c.h.b16 %v2022
        %v2988 = vunpack.c.l.b16 %v2023
        %v2989 = vunpack.c.h.b16 %v2023
        %v2990 = vunpack.c.l.b16 %v2024
        %v2991 = vunpack.c.h.b16 %v2024
        %v2992 = vunpack.c.l.b16 %v2025
        %v2993 = vunpack.c.h.b16 %v2025
        %v2994 = vunpack.c.l.b16 %v2026
        %v2995 = vunpack.c.h.b16 %v2026
        %v2996 = vunpack.c.l.b16 %v2027
        %v2997 = vunpack.c.h.b16 %v2027
        %v2998 = vunpack.c.l.b16 %v2028
        %v2999 = vunpack.c.h.b16 %v2028
        %v3000 = vunpack.c.l.b16 %v2029
        %v3001 = vunpack.c.h.b16 %v2029
        %v3002 = vunpack.c.l.b16 %v2030
        %v3003 = vunpack.c.h.b16 %v2030
        %v3004 = vunpack.c.l.b16 %v2031
        %v3005 = vunpack.c.h.b16 %v2031
        %v3006 = vunpack.c.l.b16 %v2032
        %v3007 = vunpack.c.h.b16 %v2032
        %v3008 = vunpack.c.l.b16 %v2033
        %v3009 = vunpack.c.h.b16 %v2033
        %v3010 = vunpack.c.l.b16 %v2034
        %v3011 = vunpack.c.h.b16 %v2034
        %v3012 = vunpack.c.l.b16 %v2035
        %v3013 = vunpack.c.h.b16 %v2035
        %v3014 = vunpack.c.l.b16 %v2036
        %v3015 = vunpack.c.h.b16 %v2036
        %v3016 = vunpack.c.l.b16 %v2037
        %v3017 = vunpack.c.h.b16 %v2037
        %v3018 = vunpack.c.l.b16 %v2038
        %v3019 = vunpack.c.h.b16 %v2038
        %v3020 = vunpack.c.l.b16 %v2039
        %v3021 = vunpack.c.h.b16 %v2039
        %v3022 = vunpack.c.l.b16 %v2040
        %v3023 = vunpack.c.h.b16 %v2040
        %v3024 = vunpack.c.l.b16 %v2041
        %v3025 = vunpack.c.h.b16 %v2041
        %v3026 = vunpack.c.l.b16 %v2042
        %v3027 = vunpack.c.h.b16 %v2042
        %v3028 = vunpack.c.l.b16 %v2043
        %v3029 = vunpack.c.h.b16 %v2043
        %v3030 = vunpack.c.l.b16 %v2044
        %v3031 = vunpack.c.h.b16 %v2044
        %v3032 = vunpack.c.l.b16 %v2045
        %v3033 = vunpack.c.h.b16 %v2045
        %v3034 = vunpack.c.l.b16 %v2046
        %v3035 = vunpack.c.h.b16 %v2046
        %v3036 = vunpack.c.l.b16 %v2047
        %v3037 = vunpack.c.h.b16 %v2047
        %v3038 = vunpack.c.l.b16 %v2048
        %v3039 = vunpack.c.h.b16 %v2048
        %v3040 = vunpack.c.l.b16 %v2049
        %v3041 = vunpack.c.h.b16 %v2049
        %v3042 = vunpack.c.l.b16 %v2050
        %v3043 = vunpack.c.h.b16 %v2050
        %v3044 = vunpack.c.l.b16 %v2051
        %v3045 = vunpack.c.h.b16 %v2051
        %v3046 = vunpack.c.l.b16 %v2052
        %v3047 = vunpack.c.h.b16 %v2052
        %v3048 = vunpack.c.l.b16 %v2053
        %v3049 = vunpack.c.h.b16 %v2053
        %v3050 = vunpack.c.l.b16 %v2054
        %v3051 = vunpack.c.h.b16 %v2054
        %v3052 = vunpack.c.l.b16 %v2055
        %v3053 = vunpack.c.h.b16 %v2055
        %v3054 = vunpack.c.l.b16 %v2056
        %v3055 = vunpack.c.h.b16 %v2056
        %v3056 = vunpack.c.l.b16 %v2057
        %v3057 = vunpack.c.h.b16 %v2057
        %v3058 = vunpack.c.l.b16 %v2058
        %v3059 = vunpack.c.h.b16 %v2058
        %v3060 = vunpack.c.l.b16 %v2059
        %v3061 = vunpack.c.h.b16 %v2059
        %v3062 = vunpack.c.l.b16 %v2060
        %v3063 = vunpack.c.h.b16 %v2060
        %v3064 = vunpack.c.l.b16 %v2061
        %v3065 = vunpack.c.h.b16 %v2061
        %v3066 = vunpack.c.l.b16 %v2062
        %v3067 = vunpack.c.h.b16 %v2062
        %v3068 = vunpack.c.l.b16 %v2063
        %v3069 = vunpack.c.h.b16 %v2063
        %v3070 = vunpack.c.l.b16 %v2064
        %v3071 = vunpack.c.h.b16 %v2064
        %v3072 = vunpack.c.l.b16 %v2065
        %v3073 = vunpack.c.h.b16 %v2065
        %v3074 = vunpack.c.l.b16 %v2066
        %v3075 = vunpack.c.h.b16 %v2066
        %v3076 = vunpack.c.l.b16 %v2067
        %v3077 = vunpack.c.h.b16 %v2067
        %v3078 = vunpack.c.l.b16 %v2068
        %v3079 = vunpack.c.h.b16 %v2068
        %v3080 = vunpack.c.l.b16 %v2069
        %v3081 = vunpack.c.h.b16 %v2069
        %v3082 = vunpack.c.l.b16 %v2070
        %v3083 = vunpack.c.h.b16 %v2070
        %v3084 = vunpack.c.l.b16 %v2071
        %v3085 = vunpack.c.h.b16 %v2071
        %v3086 = vunpack.c.l.b16 %v2072
        %v3087 = vunpack.c.h.b16 %v2072
        %v3088 = vunpack.c.l.b16 %v2073
        %v3089 = vunpack.c.h.b16 %v2073
        %v3090 = vunpack.c.l.b16 %v2074
        %v3091 = vunpack.c.h.b16 %v2074
        %v3092 = vunpack.c.l.b16 %v2075
        %v3093 = vunpack.c.h.b16 %v2075
        %v3094 = vunpack.c.l.b16 %v2076
        %v3095 = vunpack.c.h.b16 %v2076
        %v3096 = vunpack.c.l.b16 %v2077
        %v3097 = vunpack.c.h.b16 %v2077
        %v3098 = vunpack.c.l.b16 %v2078
        %v3099 = vunpack.c.h.b16 %v2078
        %v3100 = vunpack.c.l.b16 %v2079
        %v3101 = vunpack.c.h.b16 %v2079
        %v3102 = vunpack.c.l.b16 %v2080
        %v3103 = vunpack.c.h.b16 %v2080
        %v3104 = vunpack.c.l.b16 %v2081
        %v3105 = vunpack.c.h.b16 %v2081
        %v3106 = vunpack.c.l.b16 %v2082
        %v3107 = vunpack.c.h.b16 %v2082
        %v3108 = vunpack.c.l.b16 %v2083
        %v3109 = vunpack.c.h.b16 %v2083
        %v3110 = vunpack.c.l.b16 %v2084
        %v3111 = vunpack.c.h.b16 %v2084
        %v3112 = vunpack.c.l.b16 %v2085
        %v3113 = vunpack.c.h.b16 %v2085
        %v3114 = vunpack.c.l.b16 %v2086
        %v3115 = vunpack.c.h.b16 %v2086
        %v3116 = vunpack.c.l.b16 %v2087
        %v3117 = vunpack.c.h.b16 %v2087
        %v3118 = vunpack.c.l.b16 %v2088
        %v3119 = vunpack.c.h.b16 %v2088
        %v3120 = vunpack.c.l.b16 %v2089
        %v3121 = vunpack.c.h.b16 %v2089
        %v3122 = vunpack.c.l.b16 %v2090
        %v3123 = vunpack.c.h.b16 %v2090
        %v3124 = vunpack.c.l.b16 %v2091
        %v3125 = vunpack.c.h.b16 %v2091
        %v3126 = vunpack.c.l.b16 %v2092
        %v3127 = vunpack.c.h.b16 %v2092
        %v3128 = vunpack.c.l.b16 %v2093
        %v3129 = vunpack.c.h.b16 %v2093
        %v3130 = vunpack.c.l.b16 %v2094
        %v3131 = vunpack.c.h.b16 %v2094
        %v3132 = vunpack.c.l.b16 %v2095
        %v3133 = vunpack.c.h.b16 %v2095
        %v3134 = vunpack.c.l.b16 %v2096
        %v3135 = vunpack.c.h.b16 %v2096
        %v3136 = vunpack.c.l.b16 %v2097
        %v3137 = vunpack.c.h.b16 %v2097
        %v3138 = vunpack.c.l.b16 %v2098
        %v3139 = vunpack.c.h.b16 %v2098
        %v3140 = vunpack.c.l.b16 %v2099
        %v3141 = vunpack.c.h.b16 %v2099
        %v3142 = vunpack.c.l.b16 %v2100
        %v3143 = vunpack.c.h.b16 %v2100
        %v3144 = vunpack.c.l.b16 %v2101
        %v3145 = vunpack.c.h.b16 %v2101
        %v3146 = vunpack.c.l.b16 %v2102
        %v3147 = vunpack.c.h.b16 %v2102
        %v3148 = vunpack.c.l.b16 %v2103
        %v3149 = vunpack.c.h.b16 %v2103
        %v3150 = vunpack.c.l.b16 %v2104
        %v3151 = vunpack.c.h.b16 %v2104
        %v3152 = vunpack.c.l.b16 %v2105
        %v3153 = vunpack.c.h.b16 %v2105
        %v3154 = vunpack.c.l.b16 %v2106
        %v3155 = vunpack.c.h.b16 %v2106
        %v3156 = vunpack.c.l.b16 %v2107
        %v3157 = vunpack.c.h.b16 %v2107
        %v3158 = vunpack.c.l.b16 %v2108
        %v3159 = vunpack.c.h.b16 %v2108
        %v3160 = vunpack.c.l.b16 %v2109
        %v3161 = vunpack.c.h.b16 %v2109
        %v3162 = vunpack.c.l.b16 %v2110
        %v3163 = vunpack.c.h.b16 %v2110
        %v3164 = vunpack.c.l.b16 %v2111
        %v3165 = vunpack.c.h.b16 %v2111
        %v3166 = vunpack.c.l.b16 %v2112
        %v3167 = vunpack.c.h.b16 %v2112
        %v3168 = vunpack.c.l.b16 %v2113
        %v3169 = vunpack.c.h.b16 %v2113
        %v3170 = vunpack.c.l.b16 %v2114
        %v3171 = vunpack.c.h.b16 %v2114
        %v3172 = vunpack.c.l.b16 %v2115
        %v3173 = vunpack.c.h.b16 %v2115
        %v3174 = vunpack.c.l.b16 %v2116
        %v3175 = vunpack.c.h.b16 %v2116
        %v3176 = vunpack.c.l.b16 %v2117
        %v3177 = vunpack.c.h.b16 %v2117
        %v3178 = vunpack.c.l.b16 %v2118
        %v3179 = vunpack.c.h.b16 %v2118
        %v3180 = vunpack.c.l.b16 %v2119
        %v3181 = vunpack.c.h.b16 %v2119
        %v3182 = vunpack.c.l.b16 %v2120
        %v3183 = vunpack.c.h.b16 %v2120
        %v3184 = vunpack.c.l.b16 %v2121
        %v3185 = vunpack.c.h.b16 %v2121
        %v3186 = vunpack.c.l.b16 %v2122
        %v3187 = vunpack.c.h.b16 %v2122
        %v3188 = vunpack.c.l.b16 %v2123
        %v3189 = vunpack.c.h.b16 %v2123
        %v3190 = vunpack.c.l.b16 %v2124
        %v3191 = vunpack.c.h.b16 %v2124
        %v3192 = vunpack.c.l.b16 %v2125
        %v3193 = vunpack.c.h.b16 %v2125
        %v3194 = vunpack.c.l.b16 %v2126
        %v3195 = vunpack.c.h.b16 %v2126
        %v3196 = vunpack.c.l.b16 %v2127
        %v3197 = vunpack.c.h.b16 %v2127
        %v3198 = vunpack.c.l.b16 %v2128
        %v3199 = vunpack.c.h.b16 %v2128
        %v3200 = vunpack.c.l.b16 %v2129
        %v3201 = vunpack.c.h.b16 %v2129
        %v3202 = vunpack.c.l.b16 %v2130
        %v3203 = vunpack.c.h.b16 %v2130
        %v3204 = vunpack.c.l.b16 %v2131
        %v3205 = vunpack.c.h.b16 %v2131
        %v3206 = vunpack.c.l.b16 %v2132
        %v3207 = vunpack.c.h.b16 %v2132
        %v3208 = vunpack.c.l.b16 %v2133
        %v3209 = vunpack.c.h.b16 %v2133
        %v3210 = vunpack.c.l.b16 %v2134
        %v3211 = vunpack.c.h.b16 %v2134
        %v3212 = vunpack.c.l.b16 %v2135
        %v3213 = vunpack.c.h.b16 %v2135
        %v3214 = vunpack.c.l.b16 %v2136
        %v3215 = vunpack.c.h.b16 %v2136
        %v3216 = vunpack.c.l.b16 %v2137
        %v3217 = vunpack.c.h.b16 %v2137
        %v3218 = vunpack.c.l.b16 %v2138
        %v3219 = vunpack.c.h.b16 %v2138
        %v3220 = vunpack.c.l.b16 %v2139
        %v3221 = vunpack.c.h.b16 %v2139
        %v3222 = vunpack.c.l.b16 %v2140
        %v3223 = vunpack.c.h.b16 %v2140
        %v3224 = vunpack.c.l.b16 %v2141
        %v3225 = vunpack.c.h.b16 %v2141
        %v3226 = vunpack.c.l.b16 %v2142
        %v3227 = vunpack.c.h.b16 %v2142
        %v3228 = vunpack.c.l.b16 %v2143
        %v3229 = vunpack.c.h.b16 %v2143
        %v3230 = vunpack.c.l.b16 %v2144
        %v3231 = vunpack.c.h.b16 %v2144
        %v3232 = vunpack.c.l.b16 %v2145
        %v3233 = vunpack.c.h.b16 %v2145
        %v3234 = vunpack.c.l.b16 %v2146
        %v3235 = vunpack.c.h.b16 %v2146
        %v3236 = vunpack.c.l.b16 %v2147
        %v3237 = vunpack.c.h.b16 %v2147
        %v3238 = vunpack.c.l.b16 %v2148
        %v3239 = vunpack.c.h.b16 %v2148
        %v3240 = vunpack.c.l.b16 %v2149
        %v3241 = vunpack.c.h.b16 %v2149
        %v3242 = vunpack.c.l.b16 %v2150
        %v3243 = vunpack.c.h.b16 %v2150
        %v3244 = vunpack.c.l.b16 %v2151
        %v3245 = vunpack.c.h.b16 %v2151
        %v3246 = vunpack.c.l.b16 %v2152
        %v3247 = vunpack.c.h.b16 %v2152
        %v3248 = vunpack.c.l.b16 %v2153
        %v3249 = vunpack.c.h.b16 %v2153
        %v3250 = vunpack.c.l.b16 %v2154
        %v3251 = vunpack.c.h.b16 %v2154
        %v3252 = vunpack.c.l.b16 %v2155
        %v3253 = vunpack.c.h.b16 %v2155
        %v3254 = vunpack.c.l.b16 %v2156
        %v3255 = vunpack.c.h.b16 %v2156
        %v3256 = vunpack.c.l.b16 %v2157
        %v3257 = vunpack.c.h.b16 %v2157
        %v3258 = vunpack.c.l.b16 %v2158
        %v3259 = vunpack.c.h.b16 %v2158
        %v3260 = vunpack.c.l.b16 %v2159
        %v3261 = vunpack.c.h.b16 %v2159
        %v3262 = vpack.c.b16 %v2546, %v2542
        %v3263 = vpack.c.b16 %v2547, %v2543
        %v3264 = vpack.c.b16 %v2548, %v2544
        %v3265 = vpack.c.b16 %v2549, %v2545
        %v3266 = vpack.c.b16 %v2554, %v2550
        %v3267 = vpack.c.b16 %v2555, %v2551
        %v3268 = vpack.c.b16 %v2556, %v2552
        %v3269 = vpack.c.b16 %v2557, %v2553
        %v3270 = vpack.c.b16 %v2562, %v2558
        %v3271 = vpack.c.b16 %v2563, %v2559
        %v3272 = vpack.c.b16 %v2564, %v2560
        %v3273 = vpack.c.b16 %v2565, %v2561
        %v3274 = vpack.c.b16 %v2570, %v2566
        %v3275 = vpack.c.b16 %v2571, %v2567
        %v3276 = vpack.c.b16 %v2572, %v2568
        %v3277 = vpack.c.b16 %v2573, %v2569
        %v3278 = vpack.c.b16 %v2578, %v2574
        %v3279 = vpack.c.b16 %v2579, %v2575
        %v3280 = vpack.c.b16 %v2580, %v2576
        %v3281 = vpack.c.b16 %v2581, %v2577
        %v3282 = vpack.c.b16 %v2586, %v2582
        %v3283 = vpack.c.b16 %v2587, %v2583
        %v3284 = vpack.c.b16 %v2588, %v2584
        %v3285 = vpack.c.b16 %v2589, %v2585
        %v3286 = vpack.c.b16 %v2594, %v2590
        %v3287 = vpack.c.b16 %v2595, %v2591
        %v3288 = vpack.c.b16 %v2596, %v2592
        %v3289 = vpack.c.b16 %v2597, %v2593
        %v3290 = vpack.c.b16 %v2602, %v2598
        %v3291 = vpack.c.b16 %v2603, %v2599
        %v3292 = vpack.c.b16 %v2604, %v2600
        %v3293 = vpack.c.b16 %v2605, %v2601
        %v3294 = vpack.c.b16 %v2610, %v2606
        %v3295 = vpack.c.b16 %v2611, %v2607
        %v3296 = vpack.c.b16 %v2612, %v2608
        %v3297 = vpack.c.b16 %v2613, %v2609
        %v3298 = vpack.c.b16 %v2618, %v2614
        %v3299 = vpack.c.b16 %v2619, %v2615
        %v3300 = vpack.c.b16 %v2620, %v2616
        %v3301 = vpack.c.b16 %v2621, %v2617
        %v3302 = vpack.c.b16 %v2626, %v2622
        %v3303 = vpack.c.b16 %v2627, %v2623
        %v3304 = vpack.c.b16 %v2628, %v2624
        %v3305 = vpack.c.b16 %v2629, %v2625
        %v3306 = vpack.c.b16 %v2634, %v2630
        %v3307 = vpack.c.b16 %v2635, %v2631
        %v3308 = vpack.c.b16 %v2636, %v2632
        %v3309 = vpack.c.b16 %v2637, %v2633
        %v3310 = vpack.c.b16 %v2642, %v2638
        %v3311 = vpack.c.b16 %v2643, %v2639
        %v3312 = vpack.c.b16 %v2644, %v2640
        %v3313 = vpack.c.b16 %v2645, %v2641
        %v3314 = vpack.c.b16 %v2650, %v2646
        %v3315 = vpack.c.b16 %v2651, %v2647
        %v3316 = vpack.c.b16 %v2652, %v2648
        %v3317 = vpack.c.b16 %v2653, %v2649
        %v3318 = vpack.c.b16 %v2658, %v2654
        %v3319 = vpack.c.b16 %v2659, %v2655
        %v3320 = vpack.c.b16 %v2660, %v2656
        %v3321 = vpack.c.b16 %v2661, %v2657
        %v3322 = vpack.c.b16 %v2666, %v2662
        %v3323 = vpack.c.b16 %v2667, %v2663
        %v3324 = vpack.c.b16 %v2668, %v2664
        %v3325 = vpack.c.b16 %v2669, %v2665
        %v3326 = vpack.c.b16 %v2674, %v2670
        %v3327 = vpack.c.b16 %v2675, %v2671
        %v3328 = vpack.c.b16 %v2676, %v2672
        %v3329 = vpack.c.b16 %v2677, %v2673
        %v3330 = vpack.c.b16 %v2682, %v2678
        %v3331 = vpack.c.b16 %v2683, %v2679
        %v3332 = vpack.c.b16 %v2684, %v2680
        %v3333 = vpack.c.b16 %v2685, %v2681
        %v3334 = vpack.c.b16 %v2690, %v2686
        %v3335 = vpack.c.b16 %v2691, %v2687
        %v3336 = vpack.c.b16 %v2692, %v2688
        %v3337 = vpack.c.b16 %v2693, %v2689
        %v3338 = vpack.c.b16 %v2698, %v2694
        %v3339 = vpack.c.b16 %v2699, %v2695
        %v3340 = vpack.c.b16 %v2700, %v2696
        %v3341 = vpack.c.b16 %v2701, %v2697
        %v3342 = vpack.c.b16 %v2706, %v2702
        %v3343 = vpack.c.b16 %v2707, %v2703
        %v3344 = vpack.c.b16 %v2708, %v2704
        %v3345 = vpack.c.b16 %v2709, %v2705
        %v3346 = vpack.c.b16 %v2714, %v2710
        %v3347 = vpack.c.b16 %v2715, %v2711
        %v3348 = vpack.c.b16 %v2716, %v2712
        %v3349 = vpack.c.b16 %v2717, %v2713
        %v3350 = vpack.c.b16 %v2722, %v2718
        %v3351 = vpack.c.b16 %v2723, %v2719
        %v3352 = vpack.c.b16 %v2724, %v2720
        %v3353 = vpack.c.b16 %v2725, %v2721
        %v3354 = vpack.c.b16 %v2730, %v2726
        %v3355 = vpack.c.b16 %v2731, %v2727
        %v3356 = vpack.c.b16 %v2732, %v2728
        %v3357 = vpack.c.b16 %v2733, %v2729
        %v3358 = vpack.c.b16 %v2738, %v2734
        %v3359 = vpack.c.b16 %v2739, %v2735
        %v3360 = vpack.c.b16 %v2740, %v2736
        %v3361 = vpack.c.b16 %v2741, %v2737
        %v3362 = vpack.c.b16 %v2746, %v2742
        %v3363 = vpack.c.b16 %v2747, %v2743
        %v3364 = vpack.c.b16 %v2748, %v2744
        %v3365 = vpack.c.b16 %v2749, %v2745
        %v3366 = vpack.c.b16 %v2754, %v2750
        %v3367 = vpack.c.b16 %v2755, %v2751
        %v3368 = vpack.c.b16 %v2756, %v2752
        %v3369 = vpack.c.b16 %v2757, %v2753
        %v3370 = vpack.c.b16 %v2762, %v2758
        %v3371 = vpack.c.b16 %v2763, %v2759
        %v3372 = vpack.c.b16 %v2764, %v2760
        %v3373 = vpack.c.b16 %v2765, %v2761
        %v3374 = vpack.c.b16 %v2770, %v2766
        %v3375 = vpack.c.b16 %v2771, %v2767
        %v3376 = vpack.c.b16 %v2772, %v2768
        %v3377 = vpack.c.b16 %v2773, %v2769
        %v3378 = vpack.c.b16 %v2778, %v2774
        %v3379 = vpack.c.b16 %v2779, %v2775
        %v3380 = vpack.c.b16 %v2780, %v2776
        %v3381 = vpack.c.b16 %v2781, %v2777
        %v3382 = vpack.c.b16 %v2786, %v2782
        %v3383 = vpack.c.b16 %v2787, %v2783
        %v3384 = vpack.c.b16 %v2788, %v2784
        %v3385 = vpack.c.b16 %v2789, %v2785
        %v3386 = vpack.c.b16 %v2794, %v2790
        %v3387 = vpack.c.b16 %v2795, %v2791
        %v3388 = vpack.c.b16 %v2796, %v2792
        %v3389 = vpack.c.b16 %v2797, %v2793
        %v3390 = vpack.c.b16 %v2802, %v2798
        %v3391 = vpack.c.b16 %v2803, %v2799
        %v3392 = vpack.c.b16 %v2804, %v2800
        %v3393 = vpack.c.b16 %v2805, %v2801
        %v3394 = vpack.c.b16 %v2810, %v2806
        %v3395 = vpack.c.b16 %v2811, %v2807
        %v3396 = vpack.c.b16 %v2812, %v2808
        %v3397 = vpack.c.b16 %v2813, %v2809
        %v3398 = vpack.c.b16 %v2818, %v2814
        %v3399 = vpack.c.b16 %v2819, %v2815
        %v3400 = vpack.c.b16 %v2820, %v2816
        %v3401 = vpack.c.b16 %v2821, %v2817
        %v3402 = vpack.c.b16 %v2826, %v2822
        %v3403 = vpack.c.b16 %v2827, %v2823
        %v3404 = vpack.c.b16 %v2828, %v2824
        %v3405 = vpack.c.b16 %v2829, %v2825
        %v3406 = vpack.c.b16 %v2834, %v2830
        %v3407 = vpack.c.b16 %v2835, %v2831
        %v3408 = vpack.c.b16 %v2836, %v2832
        %v3409 = vpack.c.b16 %v2837, %v2833
        %v3410 = vpack.c.b16 %v2842, %v2838
        %v3411 = vpack.c.b16 %v2843, %v2839
        %v3412 = vpack.c.b16 %v2844, %v2840
        %v3413 = vpack.c.b16 %v2845, %v2841
        %v3414 = vpack.c.b16 %v2850, %v2846
        %v3415 = vpack.c.b16 %v2851, %v2847
        %v3416 = vpack.c.b16 %v2852, %v2848
        %v3417 = vpack.c.b16 %v2853, %v2849
        %v3418 = vpack.c.b16 %v2858, %v2854
        %v3419 = vpack.c.b16 %v2859, %v2855
        %v3420 = vpack.c.b16 %v2860, %v2856
        %v3421 = vpack.c.b16 %v2861, %v2857
        %v3422 = vpack.c.b16 %v2866, %v2862
        %v3423 = vpack.c.b16 %v2867, %v2863
        %v3424 = vpack.c.b16 %v2868, %v2864
        %v3425 = vpack.c.b16 %v2869, %v2865
        %v3426 = vpack.c.b16 %v2874, %v2870
        %v3427 = vpack.c.b16 %v2875, %v2871
        %v3428 = vpack.c.b16 %v2876, %v2872
        %v3429 = vpack.c.b16 %v2877, %v2873
        %v3430 = vpack.c.b16 %v2882, %v2878
        %v3431 = vpack.c.b16 %v2883, %v2879
        %v3432 = vpack.c.b16 %v2884, %v2880
        %v3433 = vpack.c.b16 %v2885, %v2881
        %v3434 = vpack.c.b16 %v2890, %v2886
        %v3435 = vpack.c.b16 %v2891, %v2887
        %v3436 = vpack.c.b16 %v2892, %v2888
        %v3437 = vpack.c.b16 %v2893, %v2889
        %v3438 = vpack.c.b16 %v2898, %v2894
        %v3439 = vpack.c.b16 %v2899, %v2895
        %v3440 = vpack.c.b16 %v2900, %v2896
        %v3441 = vpack.c.b16 %v2901, %v2897
        %v3442 = vpack.c.b16 %v2906, %v2902
        %v3443 = vpack.c.b16 %v2907, %v2903
        %v3444 = vpack.c.b16 %v2908, %v2904
        %v3445 = vpack.c.b16 %v2909, %v2905
        %v3446 = vpack.c.b16 %v2914, %v2910
        %v3447 = vpack.c.b16 %v2915, %v2911
        %v3448 = vpack.c.b16 %v2916, %v2912
        %v3449 = vpack.c.b16 %v2917, %v2913
        %v3450 = vpack.c.b16 %v2922, %v2918
        %v3451 = vpack.c.b16 %v2923, %v2919
        %v3452 = vpack.c.b16 %v2924, %v2920
        %v3453 = vpack.c.b16 %v2925, %v2921
        %v3454 = vpack.c.b16 %v2930, %v2926
        %v3455 = vpack.c.b16 %v2931, %v2927
        %v3456 = vpack.c.b16 %v2932, %v2928
        %v3457 = vpack.c.b16 %v2933, %v2929
        %v3458 = vpack.c.b16 %v2938, %v2934
        %v3459 = vpack.c.b16 %v2939, %v2935
        %v3460 = vpack.c.b16 %v2940, %v2936
        %v3461 = vpack.c.b16 %v2941, %v2937
        %v3462 = vpack.c.b16 %v2946, %v2942
        %v3463 = vpack.c.b16 %v2947, %v2943
        %v3464 = vpack.c.b16 %v2948, %v2944
        %v3465 = vpack.c.b16 %v2949, %v2945
        %v3466 = vpack.c.b16 %v2954, %v2950
        %v3467 = vpack.c.b16 %v2955, %v2951
        %v3468 = vpack.c.b16 %v2956, %v2952
        %v3469 = vpack.c.b16 %v2957, %v2953
        %v3470 = vpack.c.b16 %v2962, %v2958
        %v3471 = vpack.c.b16 %v2963, %v2959
        %v3472 = vpack.c.b16 %v2964, %v2960
        %v3473 = vpack.c.b16 %v2965, %v2961
        %v3474 = vpack.c.b16 %v2970, %v2966
        %v3475 = vpack.c.b16 %v2971, %v2967
        %v3476 = vpack.c.b16 %v2972, %v2968
        %v3477 = vpack.c.b16 %v2973, %v2969
        %v3478 = vpack.c.b16 %v2978, %v2974
        %v3479 = vpack.c.b16 %v2979, %v2975
        %v3480 = vpack.c.b16 %v2980, %v2976
        %v3481 = vpack.c.b16 %v2981, %v2977
        %v3482 = vpack.c.b16 %v2986, %v2982
        %v3483 = vpack.c.b16 %v2987, %v2983
        %v3484 = vpack.c.b16 %v2988, %v2984
        %v3485 = vpack.c.b16 %v2989, %v2985
        %v3486 = vpack.c.b16 %v2994, %v2990
        %v3487 = vpack.c.b16 %v2995, %v2991
        %v3488 = vpack.c.b16 %v2996, %v2992
        %v3489 = vpack.c.b16 %v2997, %v2993
        %v3490 = vpack.c.b16 %v3002, %v2998
        %v3491 = vpack.c.b16 %v3003, %v2999
        %v3492 = vpack.c.b16 %v3004, %v3000
        %v3493 = vpack.c.b16 %v3005, %v3001
        %v3494 = vpack.c.b16 %v3010, %v3006
        %v3495 = vpack.c.b16 %v3011, %v3007
        %v3496 = vpack.c.b16 %v3012, %v3008
        %v3497 = vpack.c.b16 %v3013, %v3009
        %v3498 = vpack.c.b16 %v3018, %v3014
        %v3499 = vpack.c.b16 %v3019, %v3015
        %v3500 = vpack.c.b16 %v3020, %v3016
        %v3501 = vpack.c.b16 %v3021, %v3017
        %v3502 = vpack.c.b16 %v3026, %v3022
        %v3503 = vpack.c.b16 %v3027, %v3023
        %v3504 = vpack.c.b16 %v3028, %v3024
        %v3505 = vpack.c.b16 %v3029, %v3025
        %v3506 = vpack.c.b16 %v3034, %v3030
        %v3507 = vpack.c.b16 %v3035, %v3031
        %v3508 = vpack.c.b16 %v3036, %v3032
        %v3509 = vpack.c.b16 %v3037, %v3033
        %v3510 = vpack.c.b16 %v3042, %v3038
        %v3511 = vpack.c.b16 %v3043, %v3039
        %v3512 = vpack.c.b16 %v3044, %v3040
        %v3513 = vpack.c.b16 %v3045, %v3041
        %v3514 = vpack.c.b16 %v3050, %v3046
        %v3515 = vpack.c.b16 %v3051, %v3047
        %v3516 = vpack.c.b16 %v3052, %v3048
        %v3517 = vpack.c.b16 %v3053, %v3049
        %v3518 = vpack.c.b16 %v3058, %v3054
        %v3519 = vpack.c.b16 %v3059, %v3055
        %v3520 = vpack.c.b16 %v3060, %v3056
        %v3521 = vpack.c.b16 %v3061, %v3057
        %v3522 = vpack.c.b16 %v3066, %v3062
        %v3523 = vpack.c.b16 %v3067, %v3063
        %v3524 = vpack.c.b16 %v3068, %v3064
        %v3525 = vpack.c.b16 %v3069, %v3065
        %v3526 = vpack.c.b16 %v3074, %v3070
        %v3527 = vpack.c.b16 %v3075, %v3071
        %v3528 = vpack.c.b16 %v3076, %v3072
        %v3529 = vpack.c.b16 %v3077, %v3073
        %v3530 = vpack.c.b16 %v3082, %v3078
        %v3531 = vpack.c.b16 %v3083, %v3079
        %v3532 = vpack.c.b16 %v3084, %v3080
        %v3533 = vpack.c.b16 %v3085, %v3081
        %v3534 = vpack.c.b16 %v3090, %v3086
        %v3535 = vpack.c.b16 %v3091, %v3087
        %v3536 = vpack.c.b16 %v3092, %v3088
        %v3537 = vpack.c.b16 %v3093, %v3089
        %v3538 = vpack.c.b16 %v3098, %v3094
        %v3539 = vpack.c.b16 %v3099, %v3095
        %v3540 = vpack.c.b16 %v3100, %v3096
        %v3541 = vpack.c.b16 %v3101, %v3097
        %v3542 = vpack.c.b16 %v3106, %v3102
        %v3543 = vpack.c.b16 %v3107, %v3103
        %v3544 = vpack.c.b16 %v3108, %v3104
        %v3545 = vpack.c.b16 %v3109, %v3105
        %v3546 = vpack.c.b16 %v3114, %v3110
        %v3547 = vpack.c.b16 %v3115, %v3111
        %v3548 = vpack.c.b16 %v3116, %v3112
        %v3549 = vpack.c.b16 %v3117, %v3113
        %v3550 = vpack.c.b16 %v3122, %v3118
        %v3551 = vpack.c.b16 %v3123, %v3119
        %v3552 = vpack.c.b16 %v3124, %v3120
        %v3553 = vpack.c.b16 %v3125, %v3121
        %v3554 = vpack.c.b16 %v3130, %v3126
        %v3555 = vpack.c.b16 %v3131, %v3127
        %v3556 = vpack.c.b16 %v3132, %v3128
        %v3557 = vpack.c.b16 %v3133, %v3129
        %v3558 = vpack.c.b16 %v3138, %v3134
        %v3559 = vpack.c.b16 %v3139, %v3135
        %v3560 = vpack.c.b16 %v3140, %v3136
        %v3561 = vpack.c.b16 %v3141, %v3137
        %v3562 = vpack.c.b16 %v3146, %v3142
        %v3563 = vpack.c.b16 %v3147, %v3143
        %v3564 = vpack.c.b16 %v3148, %v3144
        %v3565 = vpack.c.b16 %v3149, %v3145
        %v3566 = vpack.c.b16 %v3154, %v3150
        %v3567 = vpack.c.b16 %v3155, %v3151
        %v3568 = vpack.c.b16 %v3156, %v3152
        %v3569 = vpack.c.b16 %v3157, %v3153
        %v3570 = vpack.c.b16 %v3162, %v3158
        %v3571 = vpack.c.b16 %v3163, %v3159
        %v3572 = vpack.c.b16 %v3164, %v3160
        %v3573 = vpack.c.b16 %v3165, %v3161
        %v3574 = vpack.c.b16 %v3170, %v3166
        %v3575 = vpack.c.b16 %v3171, %v3167
        %v3576 = vpack.c.b16 %v3172, %v3168
        %v3577 = vpack.c.b16 %v3173, %v3169
        %v3578 = vpack.c.b16 %v3178, %v3174
        %v3579 = vpack.c.b16 %v3179, %v3175
        %v3580 = vpack.c.b16 %v3180, %v3176
        %v3581 = vpack.c.b16 %v3181, %v3177
        %v3582 = vpack.c.b16 %v3186, %v3182
        %v3583 = vpack.c.b16 %v3187, %v3183
        %v3584 = vpack.c.b16 %v3188, %v3184
        %v3585 = vpack.c.b16 %v3189, %v3185
        %v3586 = vpack.c.b16 %v3194, %v3190
        %v3587 = vpack.c.b16 %v3195, %v3191
        %v3588 = vpack.c.b16 %v3196, %v3192
        %v3589 = vpack.c.b16 %v3197, %v3193
        %v3590 = vpack.c.b16 %v3202, %v3198
        %v3591 = vpack.c.b16 %v3203, %v3199
        %v3592 = vpack.c.b16 %v3204, %v3200
        %v3593 = vpack.c.b16 %v3205, %v3201
        %v3594 = vpack.c.b16 %v3210, %v3206
        %v3595 = vpack.c.b16 %v3211, %v3207
        %v3596 = vpack.c.b16 %v3212, %v3208
        %v3597 = vpack.c.b16 %v3213, %v3209
        %v3598 = vpack.c.b16 %v3218, %v3214
        %v3599 = vpack.c.b16 %v3219, %v3215
        %v3600 = vpack.c.b16 %v3220, %v3216
        %v3601 = vpack.c.b16 %v3221, %v3217
        %v3602 = vpack.c.b16 %v3226, %v3222
        %v3603 = vpack.c.b16 %v3227, %v3223
        %v3604 = vpack.c.b16 %v3228, %v3224
        %v3605 = vpack.c.b16 %v3229, %v3225
        %v3606 = vpack.c.b16 %v3234, %v3230
        %v3607 = vpack.c.b16 %v3235, %v3231
        %v3608 = vpack.c.b16 %v3236, %v3232
        %v3609 = vpack.c.b16 %v3237, %v3233
        %v3610 = vpack.c.b16 %v3242, %v3238
        %v3611 = vpack.c.b16 %v3243, %v3239
        %v3612 = vpack.c.b16 %v3244, %v3240
        %v3613 = vpack.c.b16 %v3245, %v3241
        %v3614 = vpack.c.b16 %v3250, %v3246
        %v3615 = vpack.c.b16 %v3251, %v3247
        %v3616 = vpack.c.b16 %v3252, %v3248
        %v3617 = vpack.c.b16 %v3253, %v3249
        %v3618 = vpack.c.b16 %v3258, %v3254
        %v3619 = vpack.c.b16 %v3259, %v3255
        %v3620 = vpack.c.b16 %v3260, %v3256
        %v3621 = vpack.c.b16 %v3261, %v3257
        %v3983 = vsel %vm1437, %v1787, 0
        %v3986 = vsel %vm1437, %v1799, 0
        %3988 = vmatprep.subr.bf16.mxu0 %v3291
        %3989 = vmatpush1.bf16.msra.mxu0 %v3290
        %3990 = vmatprep.subr.bf16.mxu0 %v3287
        %3991 = vmatpush1.bf16.msra.mxu0 %v3286
        %3992 = vmatprep.subr.bf16.mxu0 %v3283
        %3993 = vmatpush1.bf16.msra.mxu0 %v3282
        %3994 = vmatprep.subr.bf16.mxu0 %v3279
        %3995 = vmatpush1.bf16.msra.mxu0 %v3278
        %3996 = vmatprep.subr.bf16.mxu0 %v3275
        %3997 = vmatpush1.bf16.msra.mxu0 %v3274
        %3998 = vmatprep.subr.bf16.mxu0 %v3271
        %3999 = vmatpush1.bf16.msra.mxu0 %v3270
        %4000 = vmatprep.subr.bf16.mxu0 %v3267
        %4001 = vmatpush1.bf16.msra.mxu0 %v3266
        %4002 = vmatprep.subr.bf16.mxu0 %v3263
        %4003 = vmatpush1.bf16.msra.mxu0 %v3262
        %4004 = vmatprep.subr.bf16.mxu0 %v3323
        %4005 = vmatpush2.bf16.msra.mxu0 %v3322
        %4006 = vmatprep.subr.bf16.mxu0 %v3319
        %4007 = vmatpush2.bf16.msra.mxu0 %v3318
        %4008 = vmatprep.subr.bf16.mxu0 %v3315
        %4009 = vmatpush2.bf16.msra.mxu0 %v3314
        %4010 = vmatprep.subr.bf16.mxu0 %v3311
        %4011 = vmatpush2.bf16.msra.mxu0 %v3310
        %4012 = vmatprep.subr.bf16.mxu0 %v3307
        %4013 = vmatpush2.bf16.msra.mxu0 %v3306
        %4014 = vmatprep.subr.bf16.mxu0 %v3303
        %4015 = vmatpush2.bf16.msra.mxu0 %v3302
        %4016 = vmatprep.subr.bf16.mxu0 %v3299
        %4017 = vmatpush2.bf16.msra.mxu0 %v3298
        %4018 = vmatprep.subr.bf16.mxu0 %v3295
        %4019 = vmatpush2.bf16.msra.mxu0 %v3294
        %4020 = vmatprep.mubr.bf16.mxu0 %v1777
        %4021 = vmatmul.mubr.bf16.gmra.mxu0 %v1776
        %v4022 = vpop.f32.mrf.mxu0
        %v4023 = vadd.f32 %v2165, %v4022
        %v4024 = vpop.f32.mrf.mxu0
        %v4025 = vadd.f32 %v2169, %v4024
        %v4026 = vpop.f32.mrf.mxu0
        %v4027 = vadd.f32 %v2165, %v4026
        %v4028 = vpop.f32.mrf.mxu0
        %v4029 = vadd.f32 %v2169, %v4028
        %4030 = vmatprep.mubr.bf16.mxu0 %v1789
        %4031 = vmatmul.mubr.bf16.gmra.mxu0 %v1788
        %v4032 = vpop.f32.mrf.mxu0
        %v4033 = vadd.f32 %v2165, %v4032
        %v4034 = vpop.f32.mrf.mxu0
        %v4035 = vadd.f32 %v2169, %v4034
        %v4036 = vpop.f32.mrf.mxu0
        %v4037 = vadd.f32 %v2165, %v4036
        %v4038 = vpop.f32.mrf.mxu0
        %v4039 = vadd.f32 %v2169, %v4038
        %4040 = vdwg.mxu0
        %4041 = vmatprep.subr.bf16.mxu0 %v3355
        %4042 = vmatpush1.bf16.msra.mxu0 %v3354
        %4043 = vmatprep.subr.bf16.mxu0 %v3351
        %4044 = vmatpush1.bf16.msra.mxu0 %v3350
        %4045 = vmatprep.subr.bf16.mxu0 %v3347
        %4046 = vmatpush1.bf16.msra.mxu0 %v3346
        %4047 = vmatprep.subr.bf16.mxu0 %v3343
        %4048 = vmatpush1.bf16.msra.mxu0 %v3342
        %4049 = vmatprep.subr.bf16.mxu0 %v3339
        %4050 = vmatpush1.bf16.msra.mxu0 %v3338
        %4051 = vmatprep.subr.bf16.mxu0 %v3335
        %4052 = vmatpush1.bf16.msra.mxu0 %v3334
        %4053 = vmatprep.subr.bf16.mxu0 %v3331
        %4054 = vmatpush1.bf16.msra.mxu0 %v3330
        %4055 = vmatprep.subr.bf16.mxu0 %v3327
        %4056 = vmatpush1.bf16.msra.mxu0 %v3326
        %4057 = vmatprep.subr.bf16.mxu0 %v3387
        %4058 = vmatpush2.bf16.msra.mxu0 %v3386
        %4059 = vmatprep.subr.bf16.mxu0 %v3383
        %4060 = vmatpush2.bf16.msra.mxu0 %v3382
        %4061 = vmatprep.subr.bf16.mxu0 %v3379
        %4062 = vmatpush2.bf16.msra.mxu0 %v3378
        %4063 = vmatprep.subr.bf16.mxu0 %v3375
        %4064 = vmatpush2.bf16.msra.mxu0 %v3374
        %4065 = vmatprep.subr.bf16.mxu0 %v3371
        %4066 = vmatpush2.bf16.msra.mxu0 %v3370
        %4067 = vmatprep.subr.bf16.mxu0 %v3367
        %4068 = vmatpush2.bf16.msra.mxu0 %v3366
        %4069 = vmatprep.subr.bf16.mxu0 %v3363
        %4070 = vmatpush2.bf16.msra.mxu0 %v3362
        %4071 = vmatprep.subr.bf16.mxu0 %v3359
        %4072 = vmatpush2.bf16.msra.mxu0 %v3358
        %4073 = vmatprep.mubr.bf16.mxu0 %v1779
        %4074 = vmatmul.mubr.bf16.gmra.mxu0 %v1778
        %v4075 = vpop.f32.mrf.mxu0
        %v4076 = vadd.f32 %v4023, %v4075
        %v4077 = vpop.f32.mrf.mxu0
        %v4078 = vadd.f32 %v4025, %v4077
        %v4079 = vpop.f32.mrf.mxu0
        %v4080 = vadd.f32 %v4027, %v4079
        %v4081 = vpop.f32.mrf.mxu0
        %v4082 = vadd.f32 %v4029, %v4081
        %4083 = vmatprep.mubr.bf16.mxu0 %v1791
        %4084 = vmatmul.mubr.bf16.gmra.mxu0 %v1790
        %v4085 = vpop.f32.mrf.mxu0
        %v4086 = vadd.f32 %v4033, %v4085
        %v4087 = vpop.f32.mrf.mxu0
        %v4088 = vadd.f32 %v4035, %v4087
        %v4089 = vpop.f32.mrf.mxu0
        %v4090 = vadd.f32 %v4037, %v4089
        %v4091 = vpop.f32.mrf.mxu0
        %v4092 = vadd.f32 %v4039, %v4091
        %4093 = vdwg.mxu0
        %4094 = vmatprep.subr.bf16.mxu0 %v3419
        %4095 = vmatpush1.bf16.msra.mxu0 %v3418
        %4096 = vmatprep.subr.bf16.mxu0 %v3415
        %4097 = vmatpush1.bf16.msra.mxu0 %v3414
        %4098 = vmatprep.subr.bf16.mxu0 %v3411
        %4099 = vmatpush1.bf16.msra.mxu0 %v3410
        %4100 = vmatprep.subr.bf16.mxu0 %v3407
        %4101 = vmatpush1.bf16.msra.mxu0 %v3406
        %4102 = vmatprep.subr.bf16.mxu0 %v3403
        %4103 = vmatpush1.bf16.msra.mxu0 %v3402
        %4104 = vmatprep.subr.bf16.mxu0 %v3399
        %4105 = vmatpush1.bf16.msra.mxu0 %v3398
        %4106 = vmatprep.subr.bf16.mxu0 %v3395
        %4107 = vmatpush1.bf16.msra.mxu0 %v3394
        %4108 = vmatprep.subr.bf16.mxu0 %v3391
        %4109 = vmatpush1.bf16.msra.mxu0 %v3390
        %4110 = vmatprep.subr.bf16.mxu0 %v3451
        %4111 = vmatpush2.bf16.msra.mxu0 %v3450
        %4112 = vmatprep.subr.bf16.mxu0 %v3447
        %4113 = vmatpush2.bf16.msra.mxu0 %v3446
        %4114 = vmatprep.subr.bf16.mxu0 %v3443
        %4115 = vmatpush2.bf16.msra.mxu0 %v3442
        %4116 = vmatprep.subr.bf16.mxu0 %v3439
        %4117 = vmatpush2.bf16.msra.mxu0 %v3438
        %4118 = vmatprep.subr.bf16.mxu0 %v3435
        %4119 = vmatpush2.bf16.msra.mxu0 %v3434
        %4120 = vmatprep.subr.bf16.mxu0 %v3431
        %4121 = vmatpush2.bf16.msra.mxu0 %v3430
        %4122 = vmatprep.subr.bf16.mxu0 %v3427
        %4123 = vmatpush2.bf16.msra.mxu0 %v3426
        %4124 = vmatprep.subr.bf16.mxu0 %v3423
        %4125 = vmatpush2.bf16.msra.mxu0 %v3422
        %4126 = vmatprep.mubr.bf16.mxu0 %v1781
        %4127 = vmatmul.mubr.bf16.gmra.mxu0 %v1780
        %v4128 = vpop.f32.mrf.mxu0
        %v4129 = vadd.f32 %v4076, %v4128
        %v4130 = vpop.f32.mrf.mxu0
        %v4131 = vadd.f32 %v4078, %v4130
        %v4132 = vpop.f32.mrf.mxu0
        %v4133 = vadd.f32 %v4080, %v4132
        %v4134 = vpop.f32.mrf.mxu0
        %v4135 = vadd.f32 %v4082, %v4134
        %4136 = vmatprep.mubr.bf16.mxu0 %v1793
        %4137 = vmatmul.mubr.bf16.gmra.mxu0 %v1792
        %v4138 = vpop.f32.mrf.mxu0
        %v4139 = vadd.f32 %v4086, %v4138
        %v4140 = vpop.f32.mrf.mxu0
        %v4141 = vadd.f32 %v4088, %v4140
        %v4142 = vpop.f32.mrf.mxu0
        %v4143 = vadd.f32 %v4090, %v4142
        %v4144 = vpop.f32.mrf.mxu0
        %v4145 = vadd.f32 %v4092, %v4144
        %4146 = vdwg.mxu0
        %4147 = vmatprep.subr.bf16.mxu0 %v3483
        %4148 = vmatpush1.bf16.msra.mxu0 %v3482
        %4149 = vmatprep.subr.bf16.mxu0 %v3479
        %4150 = vmatpush1.bf16.msra.mxu0 %v3478
        %4151 = vmatprep.subr.bf16.mxu0 %v3475
        %4152 = vmatpush1.bf16.msra.mxu0 %v3474
        %4153 = vmatprep.subr.bf16.mxu0 %v3471
        %4154 = vmatpush1.bf16.msra.mxu0 %v3470
        %4155 = vmatprep.subr.bf16.mxu0 %v3467
        %4156 = vmatpush1.bf16.msra.mxu0 %v3466
        %4157 = vmatprep.subr.bf16.mxu0 %v3463
        %4158 = vmatpush1.bf16.msra.mxu0 %v3462
        %4159 = vmatprep.subr.bf16.mxu0 %v3459
        %4160 = vmatpush1.bf16.msra.mxu0 %v3458
        %4161 = vmatprep.subr.bf16.mxu0 %v3455
        %4162 = vmatpush1.bf16.msra.mxu0 %v3454
        %4163 = vmatprep.subr.bf16.mxu0 %v3515
        %4164 = vmatpush2.bf16.msra.mxu0 %v3514
        %4165 = vmatprep.subr.bf16.mxu0 %v3511
        %4166 = vmatpush2.bf16.msra.mxu0 %v3510
        %4167 = vmatprep.subr.bf16.mxu0 %v3507
        %4168 = vmatpush2.bf16.msra.mxu0 %v3506
        %4169 = vmatprep.subr.bf16.mxu0 %v3503
        %4170 = vmatpush2.bf16.msra.mxu0 %v3502
        %4171 = vmatprep.subr.bf16.mxu0 %v3499
        %4172 = vmatpush2.bf16.msra.mxu0 %v3498
        %4173 = vmatprep.subr.bf16.mxu0 %v3495
        %4174 = vmatpush2.bf16.msra.mxu0 %v3494
        %4175 = vmatprep.subr.bf16.mxu0 %v3491
        %4176 = vmatpush2.bf16.msra.mxu0 %v3490
        %4177 = vmatprep.subr.bf16.mxu0 %v3487
        %4178 = vmatpush2.bf16.msra.mxu0 %v3486
        %4179 = vmatprep.mubr.bf16.mxu0 %v1783
        %4180 = vmatmul.mubr.bf16.gmra.mxu0 %v1782
        %v4181 = vpop.f32.mrf.mxu0
        %v4182 = vadd.f32 %v4129, %v4181
        %v4183 = vpop.f32.mrf.mxu0
        %v4184 = vadd.f32 %v4131, %v4183
        %v4185 = vpop.f32.mrf.mxu0
        %v4186 = vadd.f32 %v4133, %v4185
        %v4187 = vpop.f32.mrf.mxu0
        %v4188 = vadd.f32 %v4135, %v4187
        %4189 = vmatprep.mubr.bf16.mxu0 %v1795
        %4190 = vmatmul.mubr.bf16.gmra.mxu0 %v1794
        %v4191 = vpop.f32.mrf.mxu0
        %v4192 = vadd.f32 %v4139, %v4191
        %v4193 = vpop.f32.mrf.mxu0
        %v4194 = vadd.f32 %v4141, %v4193
        %v4195 = vpop.f32.mrf.mxu0
        %v4196 = vadd.f32 %v4143, %v4195
        %v4197 = vpop.f32.mrf.mxu0
        %v4198 = vadd.f32 %v4145, %v4197
        %4199 = vdwg.mxu0
        %4200 = vmatprep.subr.bf16.mxu0 %v3547
        %4201 = vmatpush1.bf16.msra.mxu0 %v3546
        %4202 = vmatprep.subr.bf16.mxu0 %v3543
        %4203 = vmatpush1.bf16.msra.mxu0 %v3542
        %4204 = vmatprep.subr.bf16.mxu0 %v3539
        %4205 = vmatpush1.bf16.msra.mxu0 %v3538
        %4206 = vmatprep.subr.bf16.mxu0 %v3535
        %4207 = vmatpush1.bf16.msra.mxu0 %v3534
        %4208 = vmatprep.subr.bf16.mxu0 %v3531
        %4209 = vmatpush1.bf16.msra.mxu0 %v3530
        %4210 = vmatprep.subr.bf16.mxu0 %v3527
        %4211 = vmatpush1.bf16.msra.mxu0 %v3526
        %4212 = vmatprep.subr.bf16.mxu0 %v3523
        %4213 = vmatpush1.bf16.msra.mxu0 %v3522
        %4214 = vmatprep.subr.bf16.mxu0 %v3519
        %4215 = vmatpush1.bf16.msra.mxu0 %v3518
        %4216 = vmatprep.subr.bf16.mxu0 %v3579
        %4217 = vmatpush2.bf16.msra.mxu0 %v3578
        %4218 = vmatprep.subr.bf16.mxu0 %v3575
        %4219 = vmatpush2.bf16.msra.mxu0 %v3574
        %4220 = vmatprep.subr.bf16.mxu0 %v3571
        %4221 = vmatpush2.bf16.msra.mxu0 %v3570
        %4222 = vmatprep.subr.bf16.mxu0 %v3567
        %4223 = vmatpush2.bf16.msra.mxu0 %v3566
        %4224 = vmatprep.subr.bf16.mxu0 %v3563
        %4225 = vmatpush2.bf16.msra.mxu0 %v3562
        %4226 = vmatprep.subr.bf16.mxu0 %v3559
        %4227 = vmatpush2.bf16.msra.mxu0 %v3558
        %4228 = vmatprep.subr.bf16.mxu0 %v3555
        %4229 = vmatpush2.bf16.msra.mxu0 %v3554
        %4230 = vmatprep.subr.bf16.mxu0 %v3551
        %4231 = vmatpush2.bf16.msra.mxu0 %v3550
        %4232 = vmatprep.mubr.bf16.mxu0 %v1785
        %4233 = vmatmul.mubr.bf16.gmra.mxu0 %v1784
        %v4234 = vpop.f32.mrf.mxu0
        %v4235 = vadd.f32 %v4182, %v4234
        %v4236 = vpop.f32.mrf.mxu0
        %v4237 = vadd.f32 %v4184, %v4236
        %v4238 = vpop.f32.mrf.mxu0
        %v4239 = vadd.f32 %v4186, %v4238
        %v4240 = vpop.f32.mrf.mxu0
        %v4241 = vadd.f32 %v4188, %v4240
        %4242 = vmatprep.mubr.bf16.mxu0 %v1797
        %4243 = vmatmul.mubr.bf16.gmra.mxu0 %v1796
        %v4244 = vpop.f32.mrf.mxu0
        %v4245 = vadd.f32 %v4192, %v4244
        %v4246 = vpop.f32.mrf.mxu0
        %v4247 = vadd.f32 %v4194, %v4246
        %v4248 = vpop.f32.mrf.mxu0
        %v4249 = vadd.f32 %v4196, %v4248
        %v4250 = vpop.f32.mrf.mxu0
        %v4251 = vadd.f32 %v4198, %v4250
        %4252 = vdwg.mxu0
        %4253 = vmatprep.subr.bf16.mxu0 %v3611
        %4254 = vmatpush1.bf16.msra.mxu0 %v3610
        %4255 = vmatprep.subr.bf16.mxu0 %v3607
        %4256 = vmatpush1.bf16.msra.mxu0 %v3606
        %4257 = vmatprep.subr.bf16.mxu0 %v3603
        %4258 = vmatpush1.bf16.msra.mxu0 %v3602
        %4259 = vmatprep.subr.bf16.mxu0 %v3599
        %4260 = vmatpush1.bf16.msra.mxu0 %v3598
        %4261 = vmatprep.subr.bf16.mxu0 %v3595
        %4262 = vmatpush1.bf16.msra.mxu0 %v3594
        %4263 = vmatprep.subr.bf16.mxu0 %v3591
        %4264 = vmatpush1.bf16.msra.mxu0 %v3590
        %4265 = vmatprep.subr.bf16.mxu0 %v3587
        %4266 = vmatpush1.bf16.msra.mxu0 %v3586
        %4267 = vmatprep.subr.bf16.mxu0 %v3583
        %4268 = vmatpush1.bf16.msra.mxu0 %v3582
        %4269 = vmatprep.subr.bf16.mxu0 0
        %4270 = vmatpush2.bf16.msra.mxu0 0
        %4271 = vmatprep.subr.bf16.mxu0 0
        %4272 = vmatpush2.bf16.msra.mxu0 0
        %4273 = vmatprep.subr.bf16.mxu0 0
        %4274 = vmatpush2.bf16.msra.mxu0 0
        %4275 = vmatprep.subr.bf16.mxu0 0
        %4276 = vmatpush2.bf16.msra.mxu0 0
        %4277 = vmatprep.subr.bf16.mxu0 0
        %4278 = vmatpush2.bf16.msra.mxu0 0
        %4279 = vmatprep.subr.bf16.mxu0 0
        %4280 = vmatpush2.bf16.msra.mxu0 0
        %4281 = vmatprep.subr.bf16.mxu0 %v3619
        %4282 = vmatpush2.bf16.msra.mxu0 %v3618
        %4283 = vmatprep.subr.bf16.mxu0 %v3615
        %4284 = vmatpush2.bf16.msra.mxu0 %v3614
        %4285 = vmatprep.mubr.bf16.mxu0 %v3983
        %4286 = vmatmul.mubr.bf16.gmra.mxu0 %v1786
        %v4287 = vpop.f32.mrf.mxu0
        %v4288 = vadd.f32 %v4235, %v4287
        %v4289 = vpop.f32.mrf.mxu0
        %v4290 = vadd.f32 %v4237, %v4289
        %v4291 = vpop.f32.mrf.mxu0
        %v4292 = vadd.f32 %v4239, %v4291
        %v4293 = vpop.f32.mrf.mxu0
        %v4294 = vadd.f32 %v4241, %v4293
        %4295 = vmatprep.mubr.bf16.mxu0 %v3986
        %4296 = vmatmul.mubr.bf16.gmra.mxu0 %v1798
        %v4297 = vpop.f32.mrf.mxu0
        %v4298 = vadd.f32 %v4245, %v4297
        %v4299 = vpop.f32.mrf.mxu0
        %v4300 = vadd.f32 %v4247, %v4299
        %v4301 = vpop.f32.mrf.mxu0
        %v4302 = vadd.f32 %v4249, %v4301
        %v4303 = vpop.f32.mrf.mxu0
        %v4304 = vadd.f32 %v4251, %v4303
        %4305 = vdwg.mxu0
        %4306 = vmatprep.subr.bf16.mxu0 %v3293
        %4307 = vmatpush1.bf16.msra.mxu0 %v3292
        %4308 = vmatprep.subr.bf16.mxu0 %v3289
        %4309 = vmatpush1.bf16.msra.mxu0 %v3288
        %4310 = vmatprep.subr.bf16.mxu0 %v3285
        %4311 = vmatpush1.bf16.msra.mxu0 %v3284
        %4312 = vmatprep.subr.bf16.mxu0 %v3281
        %4313 = vmatpush1.bf16.msra.mxu0 %v3280
        %4314 = vmatprep.subr.bf16.mxu0 %v3277
        %4315 = vmatpush1.bf16.msra.mxu0 %v3276
        %4316 = vmatprep.subr.bf16.mxu0 %v3273
        %4317 = vmatpush1.bf16.msra.mxu0 %v3272
        %4318 = vmatprep.subr.bf16.mxu0 %v3269
        %4319 = vmatpush1.bf16.msra.mxu0 %v3268
        %4320 = vmatprep.subr.bf16.mxu0 %v3265
        %4321 = vmatpush1.bf16.msra.mxu0 %v3264
        %4322 = vmatprep.subr.bf16.mxu0 %v3325
        %4323 = vmatpush2.bf16.msra.mxu0 %v3324
        %4324 = vmatprep.subr.bf16.mxu0 %v3321
        %4325 = vmatpush2.bf16.msra.mxu0 %v3320
        %4326 = vmatprep.subr.bf16.mxu0 %v3317
        %4327 = vmatpush2.bf16.msra.mxu0 %v3316
        %4328 = vmatprep.subr.bf16.mxu0 %v3313
        %4329 = vmatpush2.bf16.msra.mxu0 %v3312
        %4330 = vmatprep.subr.bf16.mxu0 %v3309
        %4331 = vmatpush2.bf16.msra.mxu0 %v3308
        %4332 = vmatprep.subr.bf16.mxu0 %v3305
        %4333 = vmatpush2.bf16.msra.mxu0 %v3304
        %4334 = vmatprep.subr.bf16.mxu0 %v3301
        %4335 = vmatpush2.bf16.msra.mxu0 %v3300
        %4336 = vmatprep.subr.bf16.mxu0 %v3297
        %4337 = vmatpush2.bf16.msra.mxu0 %v3296
        %4338 = vmatprep.mubr.bf16.mxu0 %v1777
        %4339 = vmatmul.mubr.bf16.gmra.mxu0 %v1776
        %v4340 = vpop.f32.mrf.mxu0
        %v4341 = vadd.f32 %v2173, %v4340
        %v4342 = vpop.f32.mrf.mxu0
        %v4343 = vadd.f32 %v2177, %v4342
        %v4344 = vpop.f32.mrf.mxu0
        %v4345 = vadd.f32 %v2173, %v4344
        %v4346 = vpop.f32.mrf.mxu0
        %v4347 = vadd.f32 %v2177, %v4346
        %4348 = vmatprep.mubr.bf16.mxu0 %v1789
        %4349 = vmatmul.mubr.bf16.gmra.mxu0 %v1788
        %v4350 = vpop.f32.mrf.mxu0
        %v4351 = vadd.f32 %v2173, %v4350
        %v4352 = vpop.f32.mrf.mxu0
        %v4353 = vadd.f32 %v2177, %v4352
        %v4354 = vpop.f32.mrf.mxu0
        %v4355 = vadd.f32 %v2173, %v4354
        %v4356 = vpop.f32.mrf.mxu0
        %v4357 = vadd.f32 %v2177, %v4356
        %4358 = vdwg.mxu0
        %4359 = vmatprep.subr.bf16.mxu0 %v3357
        %4360 = vmatpush1.bf16.msra.mxu0 %v3356
        %4361 = vmatprep.subr.bf16.mxu0 %v3353
        %4362 = vmatpush1.bf16.msra.mxu0 %v3352
        %4363 = vmatprep.subr.bf16.mxu0 %v3349
        %4364 = vmatpush1.bf16.msra.mxu0 %v3348
        %4365 = vmatprep.subr.bf16.mxu0 %v3345
        %4366 = vmatpush1.bf16.msra.mxu0 %v3344
        %4367 = vmatprep.subr.bf16.mxu0 %v3341
        %4368 = vmatpush1.bf16.msra.mxu0 %v3340
        %4369 = vmatprep.subr.bf16.mxu0 %v3337
        %4370 = vmatpush1.bf16.msra.mxu0 %v3336
        %4371 = vmatprep.subr.bf16.mxu0 %v3333
        %4372 = vmatpush1.bf16.msra.mxu0 %v3332
        %4373 = vmatprep.subr.bf16.mxu0 %v3329
        %4374 = vmatpush1.bf16.msra.mxu0 %v3328
        %4375 = vmatprep.subr.bf16.mxu0 %v3389
        %4376 = vmatpush2.bf16.msra.mxu0 %v3388
        %4377 = vmatprep.subr.bf16.mxu0 %v3385
        %4378 = vmatpush2.bf16.msra.mxu0 %v3384
        %4379 = vmatprep.subr.bf16.mxu0 %v3381
        %4380 = vmatpush2.bf16.msra.mxu0 %v3380
        %4381 = vmatprep.subr.bf16.mxu0 %v3377
        %4382 = vmatpush2.bf16.msra.mxu0 %v3376
        %4383 = vmatprep.subr.bf16.mxu0 %v3373
        %4384 = vmatpush2.bf16.msra.mxu0 %v3372
        %4385 = vmatprep.subr.bf16.mxu0 %v3369
        %4386 = vmatpush2.bf16.msra.mxu0 %v3368
        %4387 = vmatprep.subr.bf16.mxu0 %v3365
        %4388 = vmatpush2.bf16.msra.mxu0 %v3364
        %4389 = vmatprep.subr.bf16.mxu0 %v3361
        %4390 = vmatpush2.bf16.msra.mxu0 %v3360
        %4391 = vmatprep.mubr.bf16.mxu0 %v1779
        %4392 = vmatmul.mubr.bf16.gmra.mxu0 %v1778
        %v4393 = vpop.f32.mrf.mxu0
        %v4394 = vadd.f32 %v4341, %v4393
        %v4395 = vpop.f32.mrf.mxu0
        %v4396 = vadd.f32 %v4343, %v4395
        %v4397 = vpop.f32.mrf.mxu0
        %v4398 = vadd.f32 %v4345, %v4397
        %v4399 = vpop.f32.mrf.mxu0
        %v4400 = vadd.f32 %v4347, %v4399
        %4401 = vmatprep.mubr.bf16.mxu0 %v1791
        %4402 = vmatmul.mubr.bf16.gmra.mxu0 %v1790
        %v4403 = vpop.f32.mrf.mxu0
        %v4404 = vadd.f32 %v4351, %v4403
        %v4405 = vpop.f32.mrf.mxu0
        %v4406 = vadd.f32 %v4353, %v4405
        %v4407 = vpop.f32.mrf.mxu0
        %v4408 = vadd.f32 %v4355, %v4407
        %v4409 = vpop.f32.mrf.mxu0
        %v4410 = vadd.f32 %v4357, %v4409
        %4411 = vdwg.mxu0
        %4412 = vmatprep.subr.bf16.mxu0 %v3421
        %4413 = vmatpush1.bf16.msra.mxu0 %v3420
        %4414 = vmatprep.subr.bf16.mxu0 %v3417
        %4415 = vmatpush1.bf16.msra.mxu0 %v3416
        %4416 = vmatprep.subr.bf16.mxu0 %v3413
        %4417 = vmatpush1.bf16.msra.mxu0 %v3412
        %4418 = vmatprep.subr.bf16.mxu0 %v3409
        %4419 = vmatpush1.bf16.msra.mxu0 %v3408
        %4420 = vmatprep.subr.bf16.mxu0 %v3405
        %4421 = vmatpush1.bf16.msra.mxu0 %v3404
        %4422 = vmatprep.subr.bf16.mxu0 %v3401
        %4423 = vmatpush1.bf16.msra.mxu0 %v3400
        %4424 = vmatprep.subr.bf16.mxu0 %v3397
        %4425 = vmatpush1.bf16.msra.mxu0 %v3396
        %4426 = vmatprep.subr.bf16.mxu0 %v3393
        %4427 = vmatpush1.bf16.msra.mxu0 %v3392
        %4428 = vmatprep.subr.bf16.mxu0 %v3453
        %4429 = vmatpush2.bf16.msra.mxu0 %v3452
        %4430 = vmatprep.subr.bf16.mxu0 %v3449
        %4431 = vmatpush2.bf16.msra.mxu0 %v3448
        %4432 = vmatprep.subr.bf16.mxu0 %v3445
        %4433 = vmatpush2.bf16.msra.mxu0 %v3444
        %4434 = vmatprep.subr.bf16.mxu0 %v3441
        %4435 = vmatpush2.bf16.msra.mxu0 %v3440
        %4436 = vmatprep.subr.bf16.mxu0 %v3437
        %4437 = vmatpush2.bf16.msra.mxu0 %v3436
        %4438 = vmatprep.subr.bf16.mxu0 %v3433
        %4439 = vmatpush2.bf16.msra.mxu0 %v3432
        %4440 = vmatprep.subr.bf16.mxu0 %v3429
        %4441 = vmatpush2.bf16.msra.mxu0 %v3428
        %4442 = vmatprep.subr.bf16.mxu0 %v3425
        %4443 = vmatpush2.bf16.msra.mxu0 %v3424
        %4444 = vmatprep.mubr.bf16.mxu0 %v1781
        %4445 = vmatmul.mubr.bf16.gmra.mxu0 %v1780
        %v4446 = vpop.f32.mrf.mxu0
        %v4447 = vadd.f32 %v4394, %v4446
        %v4448 = vpop.f32.mrf.mxu0
        %v4449 = vadd.f32 %v4396, %v4448
        %v4450 = vpop.f32.mrf.mxu0
        %v4451 = vadd.f32 %v4398, %v4450
        %v4452 = vpop.f32.mrf.mxu0
        %v4453 = vadd.f32 %v4400, %v4452
        %4454 = vmatprep.mubr.bf16.mxu0 %v1793
        %4455 = vmatmul.mubr.bf16.gmra.mxu0 %v1792
        %v4456 = vpop.f32.mrf.mxu0
        %v4457 = vadd.f32 %v4404, %v4456
        %v4458 = vpop.f32.mrf.mxu0
        %v4459 = vadd.f32 %v4406, %v4458
        %v4460 = vpop.f32.mrf.mxu0
        %v4461 = vadd.f32 %v4408, %v4460
        %v4462 = vpop.f32.mrf.mxu0
        %v4463 = vadd.f32 %v4410, %v4462
        %4464 = vdwg.mxu0
        %4465 = vmatprep.subr.bf16.mxu0 %v3485
        %4466 = vmatpush1.bf16.msra.mxu0 %v3484
        %4467 = vmatprep.subr.bf16.mxu0 %v3481
        %4468 = vmatpush1.bf16.msra.mxu0 %v3480
        %4469 = vmatprep.subr.bf16.mxu0 %v3477
        %4470 = vmatpush1.bf16.msra.mxu0 %v3476
        %4471 = vmatprep.subr.bf16.mxu0 %v3473
        %4472 = vmatpush1.bf16.msra.mxu0 %v3472
        %4473 = vmatprep.subr.bf16.mxu0 %v3469
        %4474 = vmatpush1.bf16.msra.mxu0 %v3468
        %4475 = vmatprep.subr.bf16.mxu0 %v3465
        %4476 = vmatpush1.bf16.msra.mxu0 %v3464
        %4477 = vmatprep.subr.bf16.mxu0 %v3461
        %4478 = vmatpush1.bf16.msra.mxu0 %v3460
        %4479 = vmatprep.subr.bf16.mxu0 %v3457
        %4480 = vmatpush1.bf16.msra.mxu0 %v3456
        %4481 = vmatprep.subr.bf16.mxu0 %v3517
        %4482 = vmatpush2.bf16.msra.mxu0 %v3516
        %4483 = vmatprep.subr.bf16.mxu0 %v3513
        %4484 = vmatpush2.bf16.msra.mxu0 %v3512
        %4485 = vmatprep.subr.bf16.mxu0 %v3509
        %4486 = vmatpush2.bf16.msra.mxu0 %v3508
        %4487 = vmatprep.subr.bf16.mxu0 %v3505
        %4488 = vmatpush2.bf16.msra.mxu0 %v3504
        %4489 = vmatprep.subr.bf16.mxu0 %v3501
        %4490 = vmatpush2.bf16.msra.mxu0 %v3500
        %4491 = vmatprep.subr.bf16.mxu0 %v3497
        %4492 = vmatpush2.bf16.msra.mxu0 %v3496
        %4493 = vmatprep.subr.bf16.mxu0 %v3493
        %4494 = vmatpush2.bf16.msra.mxu0 %v3492
        %4495 = vmatprep.subr.bf16.mxu0 %v3489
        %4496 = vmatpush2.bf16.msra.mxu0 %v3488
        %4497 = vmatprep.mubr.bf16.mxu0 %v1783
        %4498 = vmatmul.mubr.bf16.gmra.mxu0 %v1782
        %v4499 = vpop.f32.mrf.mxu0
        %v4500 = vadd.f32 %v4447, %v4499
        %v4501 = vpop.f32.mrf.mxu0
        %v4502 = vadd.f32 %v4449, %v4501
        %v4503 = vpop.f32.mrf.mxu0
        %v4504 = vadd.f32 %v4451, %v4503
        %v4505 = vpop.f32.mrf.mxu0
        %v4506 = vadd.f32 %v4453, %v4505
        %4507 = vmatprep.mubr.bf16.mxu0 %v1795
        %4508 = vmatmul.mubr.bf16.gmra.mxu0 %v1794
        %v4509 = vpop.f32.mrf.mxu0
        %v4510 = vadd.f32 %v4457, %v4509
        %v4511 = vpop.f32.mrf.mxu0
        %v4512 = vadd.f32 %v4459, %v4511
        %v4513 = vpop.f32.mrf.mxu0
        %v4514 = vadd.f32 %v4461, %v4513
        %v4515 = vpop.f32.mrf.mxu0
        %v4516 = vadd.f32 %v4463, %v4515
        %4517 = vdwg.mxu0
        %4518 = vmatprep.subr.bf16.mxu0 %v3549
        %4519 = vmatpush1.bf16.msra.mxu0 %v3548
        %4520 = vmatprep.subr.bf16.mxu0 %v3545
        %4521 = vmatpush1.bf16.msra.mxu0 %v3544
        %4522 = vmatprep.subr.bf16.mxu0 %v3541
        %4523 = vmatpush1.bf16.msra.mxu0 %v3540
        %4524 = vmatprep.subr.bf16.mxu0 %v3537
        %4525 = vmatpush1.bf16.msra.mxu0 %v3536
        %4526 = vmatprep.subr.bf16.mxu0 %v3533
        %4527 = vmatpush1.bf16.msra.mxu0 %v3532
        %4528 = vmatprep.subr.bf16.mxu0 %v3529
        %4529 = vmatpush1.bf16.msra.mxu0 %v3528
        %4530 = vmatprep.subr.bf16.mxu0 %v3525
        %4531 = vmatpush1.bf16.msra.mxu0 %v3524
        %4532 = vmatprep.subr.bf16.mxu0 %v3521
        %4533 = vmatpush1.bf16.msra.mxu0 %v3520
        %4534 = vmatprep.subr.bf16.mxu0 %v3581
        %4535 = vmatpush2.bf16.msra.mxu0 %v3580
        %4536 = vmatprep.subr.bf16.mxu0 %v3577
        %4537 = vmatpush2.bf16.msra.mxu0 %v3576
        %4538 = vmatprep.subr.bf16.mxu0 %v3573
        %4539 = vmatpush2.bf16.msra.mxu0 %v3572
        %4540 = vmatprep.subr.bf16.mxu0 %v3569
        %4541 = vmatpush2.bf16.msra.mxu0 %v3568
        %4542 = vmatprep.subr.bf16.mxu0 %v3565
        %4543 = vmatpush2.bf16.msra.mxu0 %v3564
        %4544 = vmatprep.subr.bf16.mxu0 %v3561
        %4545 = vmatpush2.bf16.msra.mxu0 %v3560
        %4546 = vmatprep.subr.bf16.mxu0 %v3557
        %4547 = vmatpush2.bf16.msra.mxu0 %v3556
        %4548 = vmatprep.subr.bf16.mxu0 %v3553
        %4549 = vmatpush2.bf16.msra.mxu0 %v3552
        %4550 = vmatprep.mubr.bf16.mxu0 %v1785
        %4551 = vmatmul.mubr.bf16.gmra.mxu0 %v1784
        %v4552 = vpop.f32.mrf.mxu0
        %v4553 = vadd.f32 %v4500, %v4552
        %v4554 = vpop.f32.mrf.mxu0
        %v4555 = vadd.f32 %v4502, %v4554
        %v4556 = vpop.f32.mrf.mxu0
        %v4557 = vadd.f32 %v4504, %v4556
        %v4558 = vpop.f32.mrf.mxu0
        %v4559 = vadd.f32 %v4506, %v4558
        %4560 = vmatprep.mubr.bf16.mxu0 %v1797
        %4561 = vmatmul.mubr.bf16.gmra.mxu0 %v1796
        %v4562 = vpop.f32.mrf.mxu0
        %v4563 = vadd.f32 %v4510, %v4562
        %v4564 = vpop.f32.mrf.mxu0
        %v4565 = vadd.f32 %v4512, %v4564
        %v4566 = vpop.f32.mrf.mxu0
        %v4567 = vadd.f32 %v4514, %v4566
        %v4568 = vpop.f32.mrf.mxu0
        %v4569 = vadd.f32 %v4516, %v4568
        %4570 = vdwg.mxu0
        %4571 = vmatprep.subr.bf16.mxu0 %v3613
        %4572 = vmatpush1.bf16.msra.mxu0 %v3612
        %4573 = vmatprep.subr.bf16.mxu0 %v3609
        %4574 = vmatpush1.bf16.msra.mxu0 %v3608
        %4575 = vmatprep.subr.bf16.mxu0 %v3605
        %4576 = vmatpush1.bf16.msra.mxu0 %v3604
        %4577 = vmatprep.subr.bf16.mxu0 %v3601
        %4578 = vmatpush1.bf16.msra.mxu0 %v3600
        %4579 = vmatprep.subr.bf16.mxu0 %v3597
        %4580 = vmatpush1.bf16.msra.mxu0 %v3596
        %4581 = vmatprep.subr.bf16.mxu0 %v3593
        %4582 = vmatpush1.bf16.msra.mxu0 %v3592
        %4583 = vmatprep.subr.bf16.mxu0 %v3589
        %4584 = vmatpush1.bf16.msra.mxu0 %v3588
        %4585 = vmatprep.subr.bf16.mxu0 %v3585
        %4586 = vmatpush1.bf16.msra.mxu0 %v3584
        %4587 = vmatprep.subr.bf16.mxu0 0
        %4588 = vmatpush2.bf16.msra.mxu0 0
        %4589 = vmatprep.subr.bf16.mxu0 0
        %4590 = vmatpush2.bf16.msra.mxu0 0
        %4591 = vmatprep.subr.bf16.mxu0 0
        %4592 = vmatpush2.bf16.msra.mxu0 0
        %4593 = vmatprep.subr.bf16.mxu0 0
        %4594 = vmatpush2.bf16.msra.mxu0 0
        %4595 = vmatprep.subr.bf16.mxu0 0
        %4596 = vmatpush2.bf16.msra.mxu0 0
        %4597 = vmatprep.subr.bf16.mxu0 0
        %4598 = vmatpush2.bf16.msra.mxu0 0
        %4599 = vmatprep.subr.bf16.mxu0 %v3621
        %4600 = vmatpush2.bf16.msra.mxu0 %v3620
        %4601 = vmatprep.subr.bf16.mxu0 %v3617
        %4602 = vmatpush2.bf16.msra.mxu0 %v3616
        %4603 = vmatprep.mubr.bf16.mxu0 %v3983
        %4604 = vmatmul.mubr.bf16.gmra.mxu0 %v1786
        %v4605 = vpop.f32.mrf.mxu0
        %v4606 = vadd.f32 %v4553, %v4605
        %v4607 = vpop.f32.mrf.mxu0
        %v4608 = vadd.f32 %v4555, %v4607
        %v4609 = vpop.f32.mrf.mxu0
        %v4610 = vadd.f32 %v4557, %v4609
        %v4611 = vpop.f32.mrf.mxu0
        %v4612 = vadd.f32 %v4559, %v4611
        %4613 = vmatprep.mubr.bf16.mxu0 %v3986
        %4614 = vmatmul.mubr.bf16.gmra.mxu0 %v1798
        %v4615 = vpop.f32.mrf.mxu0
        %v4616 = vadd.f32 %v4563, %v4615
        %v4617 = vpop.f32.mrf.mxu0
        %v4618 = vadd.f32 %v4565, %v4617
        %v4619 = vpop.f32.mrf.mxu0
        %v4620 = vadd.f32 %v4567, %v4619
        %v4621 = vpop.f32.mrf.mxu0
        %v4622 = vadd.f32 %v4569, %v4621
        %4623 = vdwg.mxu0
        %v4624 = vmax.f32 %v4288, 0.0
        %v4625 = vmax.f32 %v4290, 0.0
        %v4626 = vmax.f32 %v4606, 0.0
        %v4627 = vmax.f32 %v4608, 0.0
        %v4628 = vmax.f32 %v4292, 0.0
        %v4629 = vmax.f32 %v4294, 0.0
        %v4630 = vmax.f32 %v4610, 0.0
        %v4631 = vmax.f32 %v4612, 0.0
        %v4632 = vmax.f32 %v4298, 0.0
        %v4633 = vmax.f32 %v4300, 0.0
        %v4634 = vmax.f32 %v4616, 0.0
        %v4635 = vmax.f32 %v4618, 0.0
        %v4636 = vmax.f32 %v4302, 0.0
        %v4637 = vmax.f32 %v4304, 0.0
        %v4638 = vmax.f32 %v4620, 0.0
        %v4639 = vmax.f32 %v4622, 0.0
        %4656 = vrot.lane.b32.xlu0 %v4624, 64
        %v4657 = vpop.permute.xlu0 %4656
        %4658 = vrot.lane.b32.xlu0 %v4625, 64
        %v4659 = vpop.permute.xlu0 %4658
        %4660 = vrot.lane.b32.xlu0 %v4626, 64
        %v4661 = vpop.permute.xlu0 %4660
        %4662 = vrot.lane.b32.xlu0 %v4627, 64
        %v4663 = vpop.permute.xlu0 %4662
        %4664 = vrot.lane.b32.xlu0 %v4628, 64
        %v4665 = vpop.permute.xlu0 %4664
        %4666 = vrot.lane.b32.xlu0 %v4629, 64
        %v4667 = vpop.permute.xlu0 %4666
        %4668 = vrot.lane.b32.xlu0 %v4630, 64
        %v4669 = vpop.permute.xlu0 %4668
        %4670 = vrot.lane.b32.xlu0 %v4631, 64
        %v4671 = vpop.permute.xlu0 %4670
        %4672 = vrot.lane.b32.xlu0 %v4632, 64
        %v4673 = vpop.permute.xlu0 %4672
        %4674 = vrot.lane.b32.xlu0 %v4633, 64
        %v4675 = vpop.permute.xlu0 %4674
        %4676 = vrot.lane.b32.xlu0 %v4634, 64
        %v4677 = vpop.permute.xlu0 %4676
        %4678 = vrot.lane.b32.xlu0 %v4635, 64
        %v4679 = vpop.permute.xlu0 %4678
        %4680 = vrot.lane.b32.xlu0 %v4636, 64
        %v4681 = vpop.permute.xlu0 %4680
        %4682 = vrot.lane.b32.xlu0 %v4637, 64
        %v4683 = vpop.permute.xlu0 %4682
        %4684 = vrot.lane.b32.xlu0 %v4638, 64
        %v4685 = vpop.permute.xlu0 %4684
        %4686 = vrot.lane.b32.xlu0 %v4639, 64
        %v4687 = vpop.permute.xlu0 %4686
        %v4688 = vsel %vm1513, %v4657, %v4659
        %v4689 = vsel %vm1513, %v4659, %v4661
        %v4690 = vsel %vm1513, %v4661, %v4663
        %v4691 = vsel %vm1513, %v4665, %v4667
        %v4692 = vsel %vm1513, %v4667, %v4669
        %v4693 = vsel %vm1513, %v4669, %v4671
        %v4694 = vsel %vm1513, %v4673, %v4675
        %v4695 = vsel %vm1513, %v4675, %v4677
        %v4696 = vsel %vm1513, %v4677, %v4679
        %v4697 = vsel %vm1513, %v4681, %v4683
        %v4698 = vsel %vm1513, %v4683, %v4685
        %v4699 = vsel %vm1513, %v4685, %v4687
        %v4716 = vmax.f32 %v4624, %v4688
        %v4717 = vmax.f32 %v4625, %v4689
        %v4718 = vmax.f32 %v4626, %v4690
        %v4719 = vmax.f32 %v4627, %v4663
        %v4720 = vmax.f32 %v4628, %v4691
        %v4721 = vmax.f32 %v4629, %v4692
        %v4722 = vmax.f32 %v4630, %v4693
        %v4723 = vmax.f32 %v4631, %v4671
        %v4724 = vmax.f32 %v4632, %v4694
        %v4725 = vmax.f32 %v4633, %v4695
        %v4726 = vmax.f32 %v4634, %v4696
        %v4727 = vmax.f32 %v4635, %v4679
        %v4728 = vmax.f32 %v4636, %v4697
        %v4729 = vmax.f32 %v4637, %v4698
        %v4730 = vmax.f32 %v4638, %v4699
        %v4731 = vmax.f32 %v4639, %v4687
        %v4732 = vld [vmem:[#allocation12] sm:$0x1]
        %v4733 = vld [vmem:[#allocation11] sm:$0xf]
        %v4734 = vld [vmem:[#allocation11 + $0x4] sm:$0xf]
        %v4735 = vld [vmem:[#allocation11 + $0x8] sm:$0xf]
        %v4736 = vld [vmem:[#allocation11 + $0xc] sm:$0xf]
        %v4737 = vld [vmem:[#allocation11 + $0x10] sm:$0xf]
        %v4738 = vld [vmem:[#allocation11 + $0x14] sm:$0xf]
        %v4739 = vld [vmem:[#allocation11 + $0x18] sm:$0xf]
        %v4740 = vld [vmem:[#allocation11 + $0x1c] sm:$0xf]
        %v4741 = vld [vmem:[#allocation11 + $0x20] sm:$0xf]
        %v4742 = vld [vmem:[#allocation11 + $0x24] sm:$0xf]
        %v4743 = vld [vmem:[#allocation11 + $0x28] sm:$0xf]
        %v4744 = vld [vmem:[#allocation11 + $0x2c] sm:$0xf]
        %v4745 = vld [vmem:[#allocation11 + $0x30] sm:$0xf]
        %v4746 = vld [vmem:[#allocation11 + $0x34] sm:$0xf]
        %v4747 = vld [vmem:[#allocation11 + $0x38] sm:$0xf]
        %v4748 = vld [vmem:[#allocation11 + $0x3c] sm:$0xf]
        %v4749 = vld [vmem:[#allocation11 + $0x40] sm:$0xf]
        %v4750 = vld [vmem:[#allocation11 + $0x44] sm:$0xf]
        %v4751 = vld [vmem:[#allocation11 + $0x48] sm:$0xf]
        %v4752 = vld [vmem:[#allocation11 + $0x4c] sm:$0xf]
        %v4753 = vld [vmem:[#allocation11 + $0x50] sm:$0xf]
        %v4754 = vld [vmem:[#allocation11 + $0x54] sm:$0xf]
        %v4755 = vld [vmem:[#allocation11 + $0x58] sm:$0xf]
        %v4756 = vld [vmem:[#allocation11 + $0x5c] sm:$0xf]
        %v4757 = vld [vmem:[#allocation11 + $0x60] sm:$0xf]
        %v4758 = vld [vmem:[#allocation11 + $0x64] sm:$0xf]
        %v4759 = vld [vmem:[#allocation11 + $0x68] sm:$0xf]
        %v4760 = vld [vmem:[#allocation11 + $0x6c] sm:$0xf]
        %v4761 = vld [vmem:[#allocation11 + $0x70] sm:$0xf]
        %v4762 = vld [vmem:[#allocation11 + $0x74] sm:$0xf]
        %v4763 = vld [vmem:[#allocation11 + $0x78] sm:$0xf]
        %v4764 = vld [vmem:[#allocation11 + $0x7c] sm:$0xf]
        %v4765 = vld [vmem:[#allocation11 + $0x80] sm:$0xf]
        %v4766 = vld [vmem:[#allocation11 + $0x84] sm:$0xf]
        %v4767 = vld [vmem:[#allocation11 + $0x88] sm:$0xf]
        %v4768 = vld [vmem:[#allocation11 + $0x8c] sm:$0xf]
        %v4769 = vld [vmem:[#allocation11 + $0x90] sm:$0xf]
        %v4770 = vld [vmem:[#allocation11 + $0x94] sm:$0xf]
        %v4771 = vld [vmem:[#allocation11 + $0x98] sm:$0xf]
        %v4772 = vld [vmem:[#allocation11 + $0x9c] sm:$0xf]
        %v4773 = vld [vmem:[#allocation11 + $0xa0] sm:$0xf]
        %v4774 = vld [vmem:[#allocation11 + $0xa4] sm:$0xf]
        %v4775 = vld [vmem:[#allocation11 + $0xa8] sm:$0xf]
        %v4776 = vld [vmem:[#allocation11 + $0xac] sm:$0xf]
        %v4777 = vld [vmem:[#allocation11 + $0xb0] sm:$0xf]
        %v4778 = vld [vmem:[#allocation11 + $0xb4] sm:$0xf]
        %v4779 = vld [vmem:[#allocation11 + $0xb8] sm:$0xf]
        %v4780 = vld [vmem:[#allocation11 + $0xbc] sm:$0xf]
        %v4781 = vld [vmem:[#allocation11 + $0xc0] sm:$0xf]
        %v4782 = vld [vmem:[#allocation11 + $0xc4] sm:$0xf]
        %v4783 = vld [vmem:[#allocation11 + $0xc8] sm:$0xf]
        %v4784 = vld [vmem:[#allocation11 + $0xcc] sm:$0xf]
        %v4785 = vld [vmem:[#allocation11 + $0xd0] sm:$0xf]
        %v4786 = vld [vmem:[#allocation11 + $0xd4] sm:$0xf]
        %v4787 = vld [vmem:[#allocation11 + $0xd8] sm:$0xf]
        %v4788 = vld [vmem:[#allocation11 + $0xdc] sm:$0xf]
        %v4793 = vrot.slane %v4716, 1
        %v4794 = vrot.slane %v4717, 1
        %v4795 = vrot.slane %v4718, 1
        %v4796 = vrot.slane %v4719, 1
        %v4801 = vmax.f32 %v4716, %v4793
        %v4802 = vmax.f32 %v4717, %v4794
        %v4803 = vmax.f32 %v4718, %v4795
        %v4804 = vmax.f32 %v4719, %v4796
        %v4805 = vpack.c.bf16 %v4801, %v4801
        %v4806 = vpack.c.bf16 %v4802, %v4802
        %v4807 = vpack.c.bf16 %v4803, %v4803
        %v4808 = vpack.c.bf16 %v4804, %v4804
        %v4865 = vunpack.c.l.b16 %v4733
        %v4866 = vunpack.c.l.b16 %v4734
        %v4867 = vunpack.c.l.b16 %v4735
        %v4868 = vunpack.c.l.b16 %v4736
        %v4869 = vunpack.c.l.b16 %v4737
        %v4870 = vunpack.c.l.b16 %v4738
        %v4871 = vunpack.c.l.b16 %v4739
        %v4872 = vunpack.c.l.b16 %v4740
        %v4873 = vunpack.c.l.b16 %v4741
        %v4874 = vunpack.c.l.b16 %v4742
        %v4875 = vunpack.c.l.b16 %v4743
        %v4876 = vunpack.c.l.b16 %v4744
        %v4877 = vunpack.c.l.b16 %v4745
        %v4878 = vunpack.c.l.b16 %v4746
        %v4879 = vunpack.c.l.b16 %v4747
        %v4880 = vunpack.c.l.b16 %v4748
        %v4881 = vunpack.c.l.b16 %v4749
        %v4882 = vunpack.c.l.b16 %v4750
        %v4883 = vunpack.c.l.b16 %v4751
        %v4884 = vunpack.c.l.b16 %v4752
        %v4885 = vunpack.c.l.b16 %v4753
        %v4886 = vunpack.c.l.b16 %v4754
        %v4887 = vunpack.c.l.b16 %v4755
        %v4888 = vunpack.c.l.b16 %v4756
        %v4889 = vunpack.c.l.b16 %v4757
        %v4890 = vunpack.c.l.b16 %v4758
        %v4891 = vunpack.c.l.b16 %v4759
        %v4892 = vunpack.c.l.b16 %v4760
        %v4893 = vunpack.c.l.b16 %v4761
        %v4894 = vunpack.c.l.b16 %v4762
        %v4895 = vunpack.c.l.b16 %v4763
        %v4896 = vunpack.c.l.b16 %v4764
        %v4897 = vunpack.c.l.b16 %v4765
        %v4898 = vunpack.c.l.b16 %v4766
        %v4899 = vunpack.c.l.b16 %v4767
        %v4900 = vunpack.c.l.b16 %v4768
        %v4901 = vunpack.c.l.b16 %v4769
        %v4902 = vunpack.c.l.b16 %v4770
        %v4903 = vunpack.c.l.b16 %v4771
        %v4904 = vunpack.c.l.b16 %v4772
        %v4905 = vunpack.c.l.b16 %v4773
        %v4906 = vunpack.c.l.b16 %v4774
        %v4907 = vunpack.c.l.b16 %v4775
        %v4908 = vunpack.c.l.b16 %v4776
        %v4909 = vunpack.c.l.b16 %v4777
        %v4910 = vunpack.c.l.b16 %v4778
        %v4911 = vunpack.c.l.b16 %v4779
        %v4912 = vunpack.c.l.b16 %v4780
        %v4913 = vunpack.c.l.b16 %v4781
        %v4914 = vunpack.c.l.b16 %v4782
        %v4915 = vunpack.c.l.b16 %v4783
        %v4916 = vunpack.c.l.b16 %v4784
        %v4917 = vunpack.c.l.b16 %v4785
        %v4918 = vunpack.c.l.b16 %v4786
        %v4919 = vunpack.c.l.b16 %v4787
        %v4920 = vunpack.c.l.b16 %v4788
        %v4921 = vpack.c.b16 %v4866, %v4865
        %v4922 = vpack.c.b16 %v4868, %v4867
        %v4923 = vpack.c.b16 %v4870, %v4869
        %v4924 = vpack.c.b16 %v4872, %v4871
        %v4925 = vpack.c.b16 %v4874, %v4873
        %v4926 = vpack.c.b16 %v4876, %v4875
        %v4927 = vpack.c.b16 %v4878, %v4877
        %v4928 = vpack.c.b16 %v4880, %v4879
        %v4929 = vpack.c.b16 %v4882, %v4881
        %v4930 = vpack.c.b16 %v4884, %v4883
        %v4931 = vpack.c.b16 %v4886, %v4885
        %v4932 = vpack.c.b16 %v4888, %v4887
        %v4933 = vpack.c.b16 %v4890, %v4889
        %v4934 = vpack.c.b16 %v4892, %v4891
        %v4935 = vpack.c.b16 %v4894, %v4893
        %v4936 = vpack.c.b16 %v4896, %v4895
        %v4937 = vpack.c.b16 %v4898, %v4897
        %v4938 = vpack.c.b16 %v4900, %v4899
        %v4939 = vpack.c.b16 %v4902, %v4901
        %v4940 = vpack.c.b16 %v4904, %v4903
        %v4941 = vpack.c.b16 %v4906, %v4905
        %v4942 = vpack.c.b16 %v4908, %v4907
        %v4943 = vpack.c.b16 %v4910, %v4909
        %v4944 = vpack.c.b16 %v4912, %v4911
        %v4945 = vpack.c.b16 %v4914, %v4913
        %v4946 = vpack.c.b16 %v4916, %v4915
        %v4947 = vpack.c.b16 %v4918, %v4917
        %v4948 = vpack.c.b16 %v4920, %v4919
        %v4978 = vsel %vm1513, %v4808, 0
        %4980 = vmatprep.subr.bf16.mxu0 0
        %4981 = vmatpush1.bf16.msra.mxu0 %v4928
        %4982 = vmatprep.subr.bf16.mxu0 0
        %4983 = vmatpush1.bf16.msra.mxu0 %v4927
        %4984 = vmatprep.subr.bf16.mxu0 0
        %4985 = vmatpush1.bf16.msra.mxu0 %v4926
        %4986 = vmatprep.subr.bf16.mxu0 0
        %4987 = vmatpush1.bf16.msra.mxu0 %v4925
        %4988 = vmatprep.subr.bf16.mxu0 0
        %4989 = vmatpush1.bf16.msra.mxu0 %v4924
        %4990 = vmatprep.subr.bf16.mxu0 0
        %4991 = vmatpush1.bf16.msra.mxu0 %v4923
        %4992 = vmatprep.subr.bf16.mxu0 0
        %4993 = vmatpush1.bf16.msra.mxu0 %v4922
        %4994 = vmatprep.subr.bf16.mxu0 0
        %4995 = vmatpush1.bf16.msra.mxu0 %v4921
        %4996 = vmatprep.subr.bf16.mxu0 0
        %4997 = vmatpush2.bf16.msra.mxu0 %v4936
        %4998 = vmatprep.subr.bf16.mxu0 0
        %4999 = vmatpush2.bf16.msra.mxu0 %v4935
        %5000 = vmatprep.subr.bf16.mxu0 0
        %5001 = vmatpush2.bf16.msra.mxu0 %v4934
        %5002 = vmatprep.subr.bf16.mxu0 0
        %5003 = vmatpush2.bf16.msra.mxu0 %v4933
        %5004 = vmatprep.subr.bf16.mxu0 0
        %5005 = vmatpush2.bf16.msra.mxu0 %v4932
        %5006 = vmatprep.subr.bf16.mxu0 0
        %5007 = vmatpush2.bf16.msra.mxu0 %v4931
        %5008 = vmatprep.subr.bf16.mxu0 0
        %5009 = vmatpush2.bf16.msra.mxu0 %v4930
        %5010 = vmatprep.subr.bf16.mxu0 0
        %5011 = vmatpush2.bf16.msra.mxu0 %v4929
        %5012 = vmatprep.mubr.bf16.mxu0 %v4806
        %5013 = vmatmul.mubr.bf16.gmra.mxu0 %v4805
        %v5014 = vpop.f32.mrf.mxu0
        %v5015 = vadd.f32 0.0, %v5014
        %v5016 = vpop.f32.mrf.mxu0
        %v5017 = vpop.f32.mrf.mxu0
        %v5018 = vpop.f32.mrf.mxu0
        %5019 = vdwg.mxu0
        %5020 = vmatprep.subr.bf16.mxu0 0
        %5021 = vmatpush1.bf16.msra.mxu0 %v4944
        %5022 = vmatprep.subr.bf16.mxu0 0
        %5023 = vmatpush1.bf16.msra.mxu0 %v4943
        %5024 = vmatprep.subr.bf16.mxu0 0
        %5025 = vmatpush1.bf16.msra.mxu0 %v4942
        %5026 = vmatprep.subr.bf16.mxu0 0
        %5027 = vmatpush1.bf16.msra.mxu0 %v4941
        %5028 = vmatprep.subr.bf16.mxu0 0
        %5029 = vmatpush1.bf16.msra.mxu0 %v4940
        %5030 = vmatprep.subr.bf16.mxu0 0
        %5031 = vmatpush1.bf16.msra.mxu0 %v4939
        %5032 = vmatprep.subr.bf16.mxu0 0
        %5033 = vmatpush1.bf16.msra.mxu0 %v4938
        %5034 = vmatprep.subr.bf16.mxu0 0
        %5035 = vmatpush1.bf16.msra.mxu0 %v4937
        %5036 = vmatprep.subr.bf16.mxu0 0
        %5037 = vmatpush2.bf16.msra.mxu0 0
        %5038 = vmatprep.subr.bf16.mxu0 0
        %5039 = vmatpush2.bf16.msra.mxu0 0
        %5040 = vmatprep.subr.bf16.mxu0 0
        %5041 = vmatpush2.bf16.msra.mxu0 0
        %5042 = vmatprep.subr.bf16.mxu0 0
        %5043 = vmatpush2.bf16.msra.mxu0 0
        %5044 = vmatprep.subr.bf16.mxu0 0
        %5045 = vmatpush2.bf16.msra.mxu0 %v4948
        %5046 = vmatprep.subr.bf16.mxu0 0
        %5047 = vmatpush2.bf16.msra.mxu0 %v4947
        %5048 = vmatprep.subr.bf16.mxu0 0
        %5049 = vmatpush2.bf16.msra.mxu0 %v4946
        %5050 = vmatprep.subr.bf16.mxu0 0
        %5051 = vmatpush2.bf16.msra.mxu0 %v4945
        %5052 = vmatprep.mubr.bf16.mxu0 %v4978
        %5053 = vmatmul.mubr.bf16.gmra.mxu0 %v4807
        %v5054 = vpop.f32.mrf.mxu0
        %v5055 = vadd.f32 %v5015, %v5054
        %v5056 = vpop.f32.mrf.mxu0
        %v5057 = vpop.f32.mrf.mxu0
        %v5058 = vpop.f32.mrf.mxu0
        %5059 = vdwg.mxu0
        %v5060 = vadd.f32 %v4732, %v5055
        %v5065 = vrot.slane %v4720, 1
        %v5066 = vrot.slane %v4721, 1
        %v5067 = vrot.slane %v4722, 1
        %v5068 = vrot.slane %v4723, 1
        %v5073 = vmax.f32 %v4720, %v5065
        %v5074 = vmax.f32 %v4721, %v5066
        %v5075 = vmax.f32 %v4722, %v5067
        %v5076 = vmax.f32 %v4723, %v5068
        %v5077 = vpack.c.bf16 %v5073, %v5073
        %v5078 = vpack.c.bf16 %v5074, %v5074
        %v5079 = vpack.c.bf16 %v5075, %v5075
        %v5080 = vpack.c.bf16 %v5076, %v5076
        %v5082 = vsel %vm1513, %v5080, 0
        %5084 = vmatprep.subr.bf16.mxu0 0
        %5085 = vmatpush1.bf16.msra.mxu0 %v4928
        %5086 = vmatprep.subr.bf16.mxu0 0
        %5087 = vmatpush1.bf16.msra.mxu0 %v4927
        %5088 = vmatprep.subr.bf16.mxu0 0
        %5089 = vmatpush1.bf16.msra.mxu0 %v4926
        %5090 = vmatprep.subr.bf16.mxu0 0
        %5091 = vmatpush1.bf16.msra.mxu0 %v4925
        %5092 = vmatprep.subr.bf16.mxu0 0
        %5093 = vmatpush1.bf16.msra.mxu0 %v4924
        %5094 = vmatprep.subr.bf16.mxu0 0
        %5095 = vmatpush1.bf16.msra.mxu0 %v4923
        %5096 = vmatprep.subr.bf16.mxu0 0
        %5097 = vmatpush1.bf16.msra.mxu0 %v4922
        %5098 = vmatprep.subr.bf16.mxu0 0
        %5099 = vmatpush1.bf16.msra.mxu0 %v4921
        %5100 = vmatprep.subr.bf16.mxu0 0
        %5101 = vmatpush2.bf16.msra.mxu0 %v4936
        %5102 = vmatprep.subr.bf16.mxu0 0
        %5103 = vmatpush2.bf16.msra.mxu0 %v4935
        %5104 = vmatprep.subr.bf16.mxu0 0
        %5105 = vmatpush2.bf16.msra.mxu0 %v4934
        %5106 = vmatprep.subr.bf16.mxu0 0
        %5107 = vmatpush2.bf16.msra.mxu0 %v4933
        %5108 = vmatprep.subr.bf16.mxu0 0
        %5109 = vmatpush2.bf16.msra.mxu0 %v4932
        %5110 = vmatprep.subr.bf16.mxu0 0
        %5111 = vmatpush2.bf16.msra.mxu0 %v4931
        %5112 = vmatprep.subr.bf16.mxu0 0
        %5113 = vmatpush2.bf16.msra.mxu0 %v4930
        %5114 = vmatprep.subr.bf16.mxu0 0
        %5115 = vmatpush2.bf16.msra.mxu0 %v4929
        %5116 = vmatprep.mubr.bf16.mxu0 %v5078
        %5117 = vmatmul.mubr.bf16.gmra.mxu0 %v5077
        %v5118 = vpop.f32.mrf.mxu0
        %v5119 = vadd.f32 0.0, %v5118
        %v5120 = vpop.f32.mrf.mxu0
        %v5121 = vpop.f32.mrf.mxu0
        %v5122 = vpop.f32.mrf.mxu0
        %5123 = vdwg.mxu0
        %5124 = vmatprep.subr.bf16.mxu0 0
        %5125 = vmatpush1.bf16.msra.mxu0 %v4944
        %5126 = vmatprep.subr.bf16.mxu0 0
        %5127 = vmatpush1.bf16.msra.mxu0 %v4943
        %5128 = vmatprep.subr.bf16.mxu0 0
        %5129 = vmatpush1.bf16.msra.mxu0 %v4942
        %5130 = vmatprep.subr.bf16.mxu0 0
        %5131 = vmatpush1.bf16.msra.mxu0 %v4941
        %5132 = vmatprep.subr.bf16.mxu0 0
        %5133 = vmatpush1.bf16.msra.mxu0 %v4940
        %5134 = vmatprep.subr.bf16.mxu0 0
        %5135 = vmatpush1.bf16.msra.mxu0 %v4939
        %5136 = vmatprep.subr.bf16.mxu0 0
        %5137 = vmatpush1.bf16.msra.mxu0 %v4938
        %5138 = vmatprep.subr.bf16.mxu0 0
        %5139 = vmatpush1.bf16.msra.mxu0 %v4937
        %5140 = vmatprep.subr.bf16.mxu0 0
        %5141 = vmatpush2.bf16.msra.mxu0 0
        %5142 = vmatprep.subr.bf16.mxu0 0
        %5143 = vmatpush2.bf16.msra.mxu0 0
        %5144 = vmatprep.subr.bf16.mxu0 0
        %5145 = vmatpush2.bf16.msra.mxu0 0
        %5146 = vmatprep.subr.bf16.mxu0 0
        %5147 = vmatpush2.bf16.msra.mxu0 0
        %5148 = vmatprep.subr.bf16.mxu0 0
        %5149 = vmatpush2.bf16.msra.mxu0 %v4948
        %5150 = vmatprep.subr.bf16.mxu0 0
        %5151 = vmatpush2.bf16.msra.mxu0 %v4947
        %5152 = vmatprep.subr.bf16.mxu0 0
        %5153 = vmatpush2.bf16.msra.mxu0 %v4946
        %5154 = vmatprep.subr.bf16.mxu0 0
        %5155 = vmatpush2.bf16.msra.mxu0 %v4945
        %5156 = vmatprep.mubr.bf16.mxu0 %v5082
        %5157 = vmatmul.mubr.bf16.gmra.mxu0 %v5079
        %v5158 = vpop.f32.mrf.mxu0
        %v5159 = vadd.f32 %v5119, %v5158
        %v5160 = vpop.f32.mrf.mxu0
        %v5161 = vpop.f32.mrf.mxu0
        %v5162 = vpop.f32.mrf.mxu0
        %5163 = vdwg.mxu0
        %v5164 = vadd.f32 %v4732, %v5159
        %v5169 = vrot.slane %v4724, 1
        %v5170 = vrot.slane %v4725, 1
        %v5171 = vrot.slane %v4726, 1
        %v5172 = vrot.slane %v4727, 1
        %v5177 = vmax.f32 %v4724, %v5169
        %v5178 = vmax.f32 %v4725, %v5170
        %v5179 = vmax.f32 %v4726, %v5171
        %v5180 = vmax.f32 %v4727, %v5172
        %v5181 = vpack.c.bf16 %v5177, %v5177
        %v5182 = vpack.c.bf16 %v5178, %v5178
        %v5183 = vpack.c.bf16 %v5179, %v5179
        %v5184 = vpack.c.bf16 %v5180, %v5180
        %v5186 = vsel %vm1513, %v5184, 0
        %5188 = vmatprep.subr.bf16.mxu0 0
        %5189 = vmatpush1.bf16.msra.mxu0 %v4928
        %5190 = vmatprep.subr.bf16.mxu0 0
        %5191 = vmatpush1.bf16.msra.mxu0 %v4927
        %5192 = vmatprep.subr.bf16.mxu0 0
        %5193 = vmatpush1.bf16.msra.mxu0 %v4926
        %5194 = vmatprep.subr.bf16.mxu0 0
        %5195 = vmatpush1.bf16.msra.mxu0 %v4925
        %5196 = vmatprep.subr.bf16.mxu0 0
        %5197 = vmatpush1.bf16.msra.mxu0 %v4924
        %5198 = vmatprep.subr.bf16.mxu0 0
        %5199 = vmatpush1.bf16.msra.mxu0 %v4923
        %5200 = vmatprep.subr.bf16.mxu0 0
        %5201 = vmatpush1.bf16.msra.mxu0 %v4922
        %5202 = vmatprep.subr.bf16.mxu0 0
        %5203 = vmatpush1.bf16.msra.mxu0 %v4921
        %5204 = vmatprep.subr.bf16.mxu0 0
        %5205 = vmatpush2.bf16.msra.mxu0 %v4936
        %5206 = vmatprep.subr.bf16.mxu0 0
        %5207 = vmatpush2.bf16.msra.mxu0 %v4935
        %5208 = vmatprep.subr.bf16.mxu0 0
        %5209 = vmatpush2.bf16.msra.mxu0 %v4934
        %5210 = vmatprep.subr.bf16.mxu0 0
        %5211 = vmatpush2.bf16.msra.mxu0 %v4933
        %5212 = vmatprep.subr.bf16.mxu0 0
        %5213 = vmatpush2.bf16.msra.mxu0 %v4932
        %5214 = vmatprep.subr.bf16.mxu0 0
        %5215 = vmatpush2.bf16.msra.mxu0 %v4931
        %5216 = vmatprep.subr.bf16.mxu0 0
        %5217 = vmatpush2.bf16.msra.mxu0 %v4930
        %5218 = vmatprep.subr.bf16.mxu0 0
        %5219 = vmatpush2.bf16.msra.mxu0 %v4929
        %5220 = vmatprep.mubr.bf16.mxu0 %v5182
        %5221 = vmatmul.mubr.bf16.gmra.mxu0 %v5181
        %v5222 = vpop.f32.mrf.mxu0
        %v5223 = vadd.f32 0.0, %v5222
        %v5224 = vpop.f32.mrf.mxu0
        %v5225 = vpop.f32.mrf.mxu0
        %v5226 = vpop.f32.mrf.mxu0
        %5227 = vdwg.mxu0
        %5228 = vmatprep.subr.bf16.mxu0 0
        %5229 = vmatpush1.bf16.msra.mxu0 %v4944
        %5230 = vmatprep.subr.bf16.mxu0 0
        %5231 = vmatpush1.bf16.msra.mxu0 %v4943
        %5232 = vmatprep.subr.bf16.mxu0 0
        %5233 = vmatpush1.bf16.msra.mxu0 %v4942
        %5234 = vmatprep.subr.bf16.mxu0 0
        %5235 = vmatpush1.bf16.msra.mxu0 %v4941
        %5236 = vmatprep.subr.bf16.mxu0 0
        %5237 = vmatpush1.bf16.msra.mxu0 %v4940
        %5238 = vmatprep.subr.bf16.mxu0 0
        %5239 = vmatpush1.bf16.msra.mxu0 %v4939
        %5240 = vmatprep.subr.bf16.mxu0 0
        %5241 = vmatpush1.bf16.msra.mxu0 %v4938
        %5242 = vmatprep.subr.bf16.mxu0 0
        %5243 = vmatpush1.bf16.msra.mxu0 %v4937
        %5244 = vmatprep.subr.bf16.mxu0 0
        %5245 = vmatpush2.bf16.msra.mxu0 0
        %5246 = vmatprep.subr.bf16.mxu0 0
        %5247 = vmatpush2.bf16.msra.mxu0 0
        %5248 = vmatprep.subr.bf16.mxu0 0
        %5249 = vmatpush2.bf16.msra.mxu0 0
        %5250 = vmatprep.subr.bf16.mxu0 0
        %5251 = vmatpush2.bf16.msra.mxu0 0
        %5252 = vmatprep.subr.bf16.mxu0 0
        %5253 = vmatpush2.bf16.msra.mxu0 %v4948
        %5254 = vmatprep.subr.bf16.mxu0 0
        %5255 = vmatpush2.bf16.msra.mxu0 %v4947
        %5256 = vmatprep.subr.bf16.mxu0 0
        %5257 = vmatpush2.bf16.msra.mxu0 %v4946
        %5258 = vmatprep.subr.bf16.mxu0 0
        %5259 = vmatpush2.bf16.msra.mxu0 %v4945
        %5260 = vmatprep.mubr.bf16.mxu0 %v5186
        %5261 = vmatmul.mubr.bf16.gmra.mxu0 %v5183
        %v5262 = vpop.f32.mrf.mxu0
        %v5263 = vadd.f32 %v5223, %v5262
        %v5264 = vpop.f32.mrf.mxu0
        %v5265 = vpop.f32.mrf.mxu0
        %v5266 = vpop.f32.mrf.mxu0
        %5267 = vdwg.mxu0
        %v5268 = vadd.f32 %v4732, %v5263
        %v5273 = vrot.slane %v4728, 1
        %v5274 = vrot.slane %v4729, 1
        %v5275 = vrot.slane %v4730, 1
        %v5276 = vrot.slane %v4731, 1
        %v5281 = vmax.f32 %v4728, %v5273
        %v5282 = vmax.f32 %v4729, %v5274
        %v5283 = vmax.f32 %v4730, %v5275
        %v5284 = vmax.f32 %v4731, %v5276
        %v5285 = vpack.c.bf16 %v5281, %v5281
        %v5286 = vpack.c.bf16 %v5282, %v5282
        %v5287 = vpack.c.bf16 %v5283, %v5283
        %v5288 = vpack.c.bf16 %v5284, %v5284
        %v5290 = vsel %vm1513, %v5288, 0
        %5292 = vmatprep.subr.bf16.mxu0 0
        %5293 = vmatpush1.bf16.msra.mxu0 %v4928
        %5294 = vmatprep.subr.bf16.mxu0 0
        %5295 = vmatpush1.bf16.msra.mxu0 %v4927
        %5296 = vmatprep.subr.bf16.mxu0 0
        %5297 = vmatpush1.bf16.msra.mxu0 %v4926
        %5298 = vmatprep.subr.bf16.mxu0 0
        %5299 = vmatpush1.bf16.msra.mxu0 %v4925
        %5300 = vmatprep.subr.bf16.mxu0 0
        %5301 = vmatpush1.bf16.msra.mxu0 %v4924
        %5302 = vmatprep.subr.bf16.mxu0 0
        %5303 = vmatpush1.bf16.msra.mxu0 %v4923
        %5304 = vmatprep.subr.bf16.mxu0 0
        %5305 = vmatpush1.bf16.msra.mxu0 %v4922
        %5306 = vmatprep.subr.bf16.mxu0 0
        %5307 = vmatpush1.bf16.msra.mxu0 %v4921
        %5308 = vmatprep.subr.bf16.mxu0 0
        %5309 = vmatpush2.bf16.msra.mxu0 %v4936
        %5310 = vmatprep.subr.bf16.mxu0 0
        %5311 = vmatpush2.bf16.msra.mxu0 %v4935
        %5312 = vmatprep.subr.bf16.mxu0 0
        %5313 = vmatpush2.bf16.msra.mxu0 %v4934
        %5314 = vmatprep.subr.bf16.mxu0 0
        %5315 = vmatpush2.bf16.msra.mxu0 %v4933
        %5316 = vmatprep.subr.bf16.mxu0 0
        %5317 = vmatpush2.bf16.msra.mxu0 %v4932
        %5318 = vmatprep.subr.bf16.mxu0 0
        %5319 = vmatpush2.bf16.msra.mxu0 %v4931
        %5320 = vmatprep.subr.bf16.mxu0 0
        %5321 = vmatpush2.bf16.msra.mxu0 %v4930
        %5322 = vmatprep.subr.bf16.mxu0 0
        %5323 = vmatpush2.bf16.msra.mxu0 %v4929
        %5324 = vmatprep.mubr.bf16.mxu0 %v5286
        %5325 = vmatmul.mubr.bf16.gmra.mxu0 %v5285
        %v5326 = vpop.f32.mrf.mxu0
        %v5327 = vadd.f32 0.0, %v5326
        %v5328 = vpop.f32.mrf.mxu0
        %v5329 = vpop.f32.mrf.mxu0
        %v5330 = vpop.f32.mrf.mxu0
        %5331 = vdwg.mxu0
        %5332 = vmatprep.subr.bf16.mxu0 0
        %5333 = vmatpush1.bf16.msra.mxu0 %v4944
        %5334 = vmatprep.subr.bf16.mxu0 0
        %5335 = vmatpush1.bf16.msra.mxu0 %v4943
        %5336 = vmatprep.subr.bf16.mxu0 0
        %5337 = vmatpush1.bf16.msra.mxu0 %v4942
        %5338 = vmatprep.subr.bf16.mxu0 0
        %5339 = vmatpush1.bf16.msra.mxu0 %v4941
        %5340 = vmatprep.subr.bf16.mxu0 0
        %5341 = vmatpush1.bf16.msra.mxu0 %v4940
        %5342 = vmatprep.subr.bf16.mxu0 0
        %5343 = vmatpush1.bf16.msra.mxu0 %v4939
        %5344 = vmatprep.subr.bf16.mxu0 0
        %5345 = vmatpush1.bf16.msra.mxu0 %v4938
        %5346 = vmatprep.subr.bf16.mxu0 0
        %5347 = vmatpush1.bf16.msra.mxu0 %v4937
        %5348 = vmatprep.subr.bf16.mxu0 0
        %5349 = vmatpush2.bf16.msra.mxu0 0
        %5350 = vmatprep.subr.bf16.mxu0 0
        %5351 = vmatpush2.bf16.msra.mxu0 0
        %5352 = vmatprep.subr.bf16.mxu0 0
        %5353 = vmatpush2.bf16.msra.mxu0 0
        %5354 = vmatprep.subr.bf16.mxu0 0
        %5355 = vmatpush2.bf16.msra.mxu0 0
        %5356 = vmatprep.subr.bf16.mxu0 0
        %5357 = vmatpush2.bf16.msra.mxu0 %v4948
        %5358 = vmatprep.subr.bf16.mxu0 0
        %5359 = vmatpush2.bf16.msra.mxu0 %v4947
        %5360 = vmatprep.subr.bf16.mxu0 0
        %5361 = vmatpush2.bf16.msra.mxu0 %v4946
        %5362 = vmatprep.subr.bf16.mxu0 0
        %5363 = vmatpush2.bf16.msra.mxu0 %v4945
        %5364 = vmatprep.mubr.bf16.mxu0 %v5290
        %5365 = vmatmul.mubr.bf16.gmra.mxu0 %v5287
        %v5366 = vpop.f32.mrf.mxu0
        %v5367 = vadd.f32 %v5327, %v5366
        %v5368 = vpop.f32.mrf.mxu0
        %v5369 = vpop.f32.mrf.mxu0
        %v5370 = vpop.f32.mrf.mxu0
        %5371 = vdwg.mxu0
        %v5372 = vadd.f32 %v4732, %v5367
        %s5373 = scalar_lea.vmem [#allocation11], 224
        %v5374 = vld [vmem:[%s5373] sm:$0xf]
        %v5375 = vld [vmem:[%s5373 + $0x4] sm:$0xf]
        %v5376 = vld [vmem:[%s5373 + $0x8] sm:$0xf]
        %v5377 = vld [vmem:[%s5373 + $0xc] sm:$0xf]
        %v5378 = vld [vmem:[%s5373 + $0x10] sm:$0xf]
        %v5379 = vld [vmem:[%s5373 + $0x14] sm:$0xf]
        %v5380 = vld [vmem:[%s5373 + $0x18] sm:$0xf]
        %v5381 = vld [vmem:[%s5373 + $0x1c] sm:$0xf]
        %v5382 = vld [vmem:[%s5373 + $0x20] sm:$0xf]
        %v5383 = vld [vmem:[%s5373 + $0x24] sm:$0xf]
        %v5384 = vld [vmem:[%s5373 + $0x28] sm:$0xf]
        %v5385 = vld [vmem:[%s5373 + $0x2c] sm:$0xf]
        %v5386 = vld [vmem:[%s5373 + $0x30] sm:$0xf]
        %v5387 = vld [vmem:[%s5373 + $0x34] sm:$0xf]
        %v5388 = vld [vmem:[%s5373 + $0x38] sm:$0xf]
        %v5389 = vld [vmem:[%s5373 + $0x3c] sm:$0xf]
        %v5390 = vld [vmem:[%s5373 + $0x40] sm:$0xf]
        %v5391 = vld [vmem:[%s5373 + $0x44] sm:$0xf]
        %v5392 = vld [vmem:[%s5373 + $0x48] sm:$0xf]
        %v5393 = vld [vmem:[%s5373 + $0x4c] sm:$0xf]
        %v5394 = vld [vmem:[%s5373 + $0x50] sm:$0xf]
        %v5395 = vld [vmem:[%s5373 + $0x54] sm:$0xf]
        %v5396 = vld [vmem:[%s5373 + $0x58] sm:$0xf]
        %v5397 = vld [vmem:[%s5373 + $0x5c] sm:$0xf]
        %v5398 = vld [vmem:[%s5373 + $0x60] sm:$0xf]
        %v5399 = vld [vmem:[%s5373 + $0x64] sm:$0xf]
        %v5400 = vld [vmem:[%s5373 + $0x68] sm:$0xf]
        %v5401 = vld [vmem:[%s5373 + $0x6c] sm:$0xf]
        %v5402 = vld [vmem:[%s5373 + $0x70] sm:$0xf]
        %v5403 = vld [vmem:[%s5373 + $0x74] sm:$0xf]
        %v5404 = vld [vmem:[%s5373 + $0x78] sm:$0xf]
        %v5405 = vld [vmem:[%s5373 + $0x7c] sm:$0xf]
        %v5406 = vld [vmem:[%s5373 + $0x80] sm:$0xf]
        %v5407 = vld [vmem:[%s5373 + $0x84] sm:$0xf]
        %v5408 = vld [vmem:[%s5373 + $0x88] sm:$0xf]
        %v5409 = vld [vmem:[%s5373 + $0x8c] sm:$0xf]
        %v5410 = vld [vmem:[%s5373 + $0x90] sm:$0xf]
        %v5411 = vld [vmem:[%s5373 + $0x94] sm:$0xf]
        %v5412 = vld [vmem:[%s5373 + $0x98] sm:$0xf]
        %v5413 = vld [vmem:[%s5373 + $0x9c] sm:$0xf]
        %v5414 = vld [vmem:[%s5373 + $0xa0] sm:$0xf]
        %v5415 = vld [vmem:[%s5373 + $0xa4] sm:$0xf]
        %v5416 = vld [vmem:[%s5373 + $0xa8] sm:$0xf]
        %v5417 = vld [vmem:[%s5373 + $0xac] sm:$0xf]
        %v5418 = vld [vmem:[%s5373 + $0xb0] sm:$0xf]
        %v5419 = vld [vmem:[%s5373 + $0xb4] sm:$0xf]
        %v5420 = vld [vmem:[%s5373 + $0xb8] sm:$0xf]
        %v5421 = vld [vmem:[%s5373 + $0xbc] sm:$0xf]
        %v5422 = vld [vmem:[%s5373 + $0xc0] sm:$0xf]
        %v5423 = vld [vmem:[%s5373 + $0xc4] sm:$0xf]
        %v5424 = vld [vmem:[%s5373 + $0xc8] sm:$0xf]
        %v5425 = vld [vmem:[%s5373 + $0xcc] sm:$0xf]
        %v5426 = vld [vmem:[%s5373 + $0xd0] sm:$0xf]
        %v5427 = vld [vmem:[%s5373 + $0xd4] sm:$0xf]
        %v5428 = vld [vmem:[%s5373 + $0xd8] sm:$0xf]
        %v5429 = vld [vmem:[%s5373 + $0xdc] sm:$0xf]
        %v5434 = vrot.slane %v4805, 1
        %v5435 = vrot.slane %v4806, 1
        %v5436 = vrot.slane %v4807, 1
        %v5437 = vrot.slane %v4808, 1
        %v5497 = vunpack.c.l.b16 %v5374
        %v5498 = vunpack.c.l.b16 %v5375
        %v5499 = vunpack.c.l.b16 %v5376
        %v5500 = vunpack.c.l.b16 %v5377
        %v5501 = vunpack.c.l.b16 %v5378
        %v5502 = vunpack.c.l.b16 %v5379
        %v5503 = vunpack.c.l.b16 %v5380
        %v5504 = vunpack.c.l.b16 %v5381
        %v5505 = vunpack.c.l.b16 %v5382
        %v5506 = vunpack.c.l.b16 %v5383
        %v5507 = vunpack.c.l.b16 %v5384
        %v5508 = vunpack.c.l.b16 %v5385
        %v5509 = vunpack.c.l.b16 %v5386
        %v5510 = vunpack.c.l.b16 %v5387
        %v5511 = vunpack.c.l.b16 %v5388
        %v5512 = vunpack.c.l.b16 %v5389
        %v5513 = vunpack.c.l.b16 %v5390
        %v5514 = vunpack.c.l.b16 %v5391
        %v5515 = vunpack.c.l.b16 %v5392
        %v5516 = vunpack.c.l.b16 %v5393
        %v5517 = vunpack.c.l.b16 %v5394
        %v5518 = vunpack.c.l.b16 %v5395
        %v5519 = vunpack.c.l.b16 %v5396
        %v5520 = vunpack.c.l.b16 %v5397
        %v5521 = vunpack.c.l.b16 %v5398
        %v5522 = vunpack.c.l.b16 %v5399
        %v5523 = vunpack.c.l.b16 %v5400
        %v5524 = vunpack.c.l.b16 %v5401
        %v5525 = vunpack.c.l.b16 %v5402
        %v5526 = vunpack.c.l.b16 %v5403
        %v5527 = vunpack.c.l.b16 %v5404
        %v5528 = vunpack.c.l.b16 %v5405
        %v5529 = vunpack.c.l.b16 %v5406
        %v5530 = vunpack.c.l.b16 %v5407
        %v5531 = vunpack.c.l.b16 %v5408
        %v5532 = vunpack.c.l.b16 %v5409
        %v5533 = vunpack.c.l.b16 %v5410
        %v5534 = vunpack.c.l.b16 %v5411
        %v5535 = vunpack.c.l.b16 %v5412
        %v5536 = vunpack.c.l.b16 %v5413
        %v5537 = vunpack.c.l.b16 %v5414
        %v5538 = vunpack.c.l.b16 %v5415
        %v5539 = vunpack.c.l.b16 %v5416
        %v5540 = vunpack.c.l.b16 %v5417
        %v5541 = vunpack.c.l.b16 %v5418
        %v5542 = vunpack.c.l.b16 %v5419
        %v5543 = vunpack.c.l.b16 %v5420
        %v5544 = vunpack.c.l.b16 %v5421
        %v5545 = vunpack.c.l.b16 %v5422
        %v5546 = vunpack.c.l.b16 %v5423
        %v5547 = vunpack.c.l.b16 %v5424
        %v5548 = vunpack.c.l.b16 %v5425
        %v5549 = vunpack.c.l.b16 %v5426
        %v5550 = vunpack.c.l.b16 %v5427
        %v5551 = vunpack.c.l.b16 %v5428
        %v5552 = vunpack.c.l.b16 %v5429
        %v5553 = vpack.c.b16 %v5498, %v5497
        %v5554 = vpack.c.b16 %v5500, %v5499
        %v5555 = vpack.c.b16 %v5502, %v5501
        %v5556 = vpack.c.b16 %v5504, %v5503
        %v5557 = vpack.c.b16 %v5506, %v5505
        %v5558 = vpack.c.b16 %v5508, %v5507
        %v5559 = vpack.c.b16 %v5510, %v5509
        %v5560 = vpack.c.b16 %v5512, %v5511
        %v5561 = vpack.c.b16 %v5514, %v5513
        %v5562 = vpack.c.b16 %v5516, %v5515
        %v5563 = vpack.c.b16 %v5518, %v5517
        %v5564 = vpack.c.b16 %v5520, %v5519
        %v5565 = vpack.c.b16 %v5522, %v5521
        %v5566 = vpack.c.b16 %v5524, %v5523
        %v5567 = vpack.c.b16 %v5526, %v5525
        %v5568 = vpack.c.b16 %v5528, %v5527
        %v5569 = vpack.c.b16 %v5530, %v5529
        %v5570 = vpack.c.b16 %v5532, %v5531
        %v5571 = vpack.c.b16 %v5534, %v5533
        %v5572 = vpack.c.b16 %v5536, %v5535
        %v5573 = vpack.c.b16 %v5538, %v5537
        %v5574 = vpack.c.b16 %v5540, %v5539
        %v5575 = vpack.c.b16 %v5542, %v5541
        %v5576 = vpack.c.b16 %v5544, %v5543
        %v5577 = vpack.c.b16 %v5546, %v5545
        %v5578 = vpack.c.b16 %v5548, %v5547
        %v5579 = vpack.c.b16 %v5550, %v5549
        %v5580 = vpack.c.b16 %v5552, %v5551
        %v5610 = vsel %vm1513, %v5437, 0
        %5612 = vmatprep.subr.bf16.mxu0 0
        %5613 = vmatpush1.bf16.msra.mxu0 %v5560
        %5614 = vmatprep.subr.bf16.mxu0 0
        %5615 = vmatpush1.bf16.msra.mxu0 %v5559
        %5616 = vmatprep.subr.bf16.mxu0 0
        %5617 = vmatpush1.bf16.msra.mxu0 %v5558
        %5618 = vmatprep.subr.bf16.mxu0 0
        %5619 = vmatpush1.bf16.msra.mxu0 %v5557
        %5620 = vmatprep.subr.bf16.mxu0 0
        %5621 = vmatpush1.bf16.msra.mxu0 %v5556
        %5622 = vmatprep.subr.bf16.mxu0 0
        %5623 = vmatpush1.bf16.msra.mxu0 %v5555
        %5624 = vmatprep.subr.bf16.mxu0 0
        %5625 = vmatpush1.bf16.msra.mxu0 %v5554
        %5626 = vmatprep.subr.bf16.mxu0 0
        %5627 = vmatpush1.bf16.msra.mxu0 %v5553
        %5628 = vmatprep.subr.bf16.mxu0 0
        %5629 = vmatpush2.bf16.msra.mxu0 %v5568
        %5630 = vmatprep.subr.bf16.mxu0 0
        %5631 = vmatpush2.bf16.msra.mxu0 %v5567
        %5632 = vmatprep.subr.bf16.mxu0 0
        %5633 = vmatpush2.bf16.msra.mxu0 %v5566
        %5634 = vmatprep.subr.bf16.mxu0 0
        %5635 = vmatpush2.bf16.msra.mxu0 %v5565
        %5636 = vmatprep.subr.bf16.mxu0 0
        %5637 = vmatpush2.bf16.msra.mxu0 %v5564
        %5638 = vmatprep.subr.bf16.mxu0 0
        %5639 = vmatpush2.bf16.msra.mxu0 %v5563
        %5640 = vmatprep.subr.bf16.mxu0 0
        %5641 = vmatpush2.bf16.msra.mxu0 %v5562
        %5642 = vmatprep.subr.bf16.mxu0 0
        %5643 = vmatpush2.bf16.msra.mxu0 %v5561
        %5644 = vmatprep.mubr.bf16.mxu0 %v5435
        %5645 = vmatmul.mubr.bf16.gmra.mxu0 %v5434
        %v5646 = vpop.f32.mrf.mxu0
        %v5647 = vadd.f32 0.0, %v5646
        %v5648 = vpop.f32.mrf.mxu0
        %v5649 = vpop.f32.mrf.mxu0
        %v5650 = vpop.f32.mrf.mxu0
        %5651 = vdwg.mxu0
        %5652 = vmatprep.subr.bf16.mxu0 0
        %5653 = vmatpush1.bf16.msra.mxu0 %v5576
        %5654 = vmatprep.subr.bf16.mxu0 0
        %5655 = vmatpush1.bf16.msra.mxu0 %v5575
        %5656 = vmatprep.subr.bf16.mxu0 0
        %5657 = vmatpush1.bf16.msra.mxu0 %v5574
        %5658 = vmatprep.subr.bf16.mxu0 0
        %5659 = vmatpush1.bf16.msra.mxu0 %v5573
        %5660 = vmatprep.subr.bf16.mxu0 0
        %5661 = vmatpush1.bf16.msra.mxu0 %v5572
        %5662 = vmatprep.subr.bf16.mxu0 0
        %5663 = vmatpush1.bf16.msra.mxu0 %v5571
        %5664 = vmatprep.subr.bf16.mxu0 0
        %5665 = vmatpush1.bf16.msra.mxu0 %v5570
        %5666 = vmatprep.subr.bf16.mxu0 0
        %5667 = vmatpush1.bf16.msra.mxu0 %v5569
        %5668 = vmatprep.subr.bf16.mxu0 0
        %5669 = vmatpush2.bf16.msra.mxu0 0
        %5670 = vmatprep.subr.bf16.mxu0 0
        %5671 = vmatpush2.bf16.msra.mxu0 0
        %5672 = vmatprep.subr.bf16.mxu0 0
        %5673 = vmatpush2.bf16.msra.mxu0 0
        %5674 = vmatprep.subr.bf16.mxu0 0
        %5675 = vmatpush2.bf16.msra.mxu0 0
        %5676 = vmatprep.subr.bf16.mxu0 0
        %5677 = vmatpush2.bf16.msra.mxu0 %v5580
        %5678 = vmatprep.subr.bf16.mxu0 0
        %5679 = vmatpush2.bf16.msra.mxu0 %v5579
        %5680 = vmatprep.subr.bf16.mxu0 0
        %5681 = vmatpush2.bf16.msra.mxu0 %v5578
        %5682 = vmatprep.subr.bf16.mxu0 0
        %5683 = vmatpush2.bf16.msra.mxu0 %v5577
        %5684 = vmatprep.mubr.bf16.mxu0 %v5610
        %5685 = vmatmul.mubr.bf16.gmra.mxu0 %v5436
        %v5686 = vpop.f32.mrf.mxu0
        %v5687 = vadd.f32 %v5647, %v5686
        %v5688 = vpop.f32.mrf.mxu0
        %v5689 = vpop.f32.mrf.mxu0
        %v5690 = vpop.f32.mrf.mxu0
        %5691 = vdwg.mxu0
        %v5692 = vadd.f32 %v5060, %v5687
        %v5697 = vrot.slane %v5077, 1
        %v5698 = vrot.slane %v5078, 1
        %v5699 = vrot.slane %v5079, 1
        %v5700 = vrot.slane %v5080, 1
        %v5705 = vsel %vm1513, %v5700, 0
        %5707 = vmatprep.subr.bf16.mxu0 0
        %5708 = vmatpush1.bf16.msra.mxu0 %v5560
        %5709 = vmatprep.subr.bf16.mxu0 0
        %5710 = vmatpush1.bf16.msra.mxu0 %v5559
        %5711 = vmatprep.subr.bf16.mxu0 0
        %5712 = vmatpush1.bf16.msra.mxu0 %v5558
        %5713 = vmatprep.subr.bf16.mxu0 0
        %5714 = vmatpush1.bf16.msra.mxu0 %v5557
        %5715 = vmatprep.subr.bf16.mxu0 0
        %5716 = vmatpush1.bf16.msra.mxu0 %v5556
        %5717 = vmatprep.subr.bf16.mxu0 0
        %5718 = vmatpush1.bf16.msra.mxu0 %v5555
        %5719 = vmatprep.subr.bf16.mxu0 0
        %5720 = vmatpush1.bf16.msra.mxu0 %v5554
        %5721 = vmatprep.subr.bf16.mxu0 0
        %5722 = vmatpush1.bf16.msra.mxu0 %v5553
        %5723 = vmatprep.subr.bf16.mxu0 0
        %5724 = vmatpush2.bf16.msra.mxu0 %v5568
        %5725 = vmatprep.subr.bf16.mxu0 0
        %5726 = vmatpush2.bf16.msra.mxu0 %v5567
        %5727 = vmatprep.subr.bf16.mxu0 0
        %5728 = vmatpush2.bf16.msra.mxu0 %v5566
        %5729 = vmatprep.subr.bf16.mxu0 0
        %5730 = vmatpush2.bf16.msra.mxu0 %v5565
        %5731 = vmatprep.subr.bf16.mxu0 0
        %5732 = vmatpush2.bf16.msra.mxu0 %v5564
        %5733 = vmatprep.subr.bf16.mxu0 0
        %5734 = vmatpush2.bf16.msra.mxu0 %v5563
        %5735 = vmatprep.subr.bf16.mxu0 0
        %5736 = vmatpush2.bf16.msra.mxu0 %v5562
        %5737 = vmatprep.subr.bf16.mxu0 0
        %5738 = vmatpush2.bf16.msra.mxu0 %v5561
        %5739 = vmatprep.mubr.bf16.mxu0 %v5698
        %5740 = vmatmul.mubr.bf16.gmra.mxu0 %v5697
        %v5741 = vpop.f32.mrf.mxu0
        %v5742 = vadd.f32 0.0, %v5741
        %v5743 = vpop.f32.mrf.mxu0
        %v5744 = vpop.f32.mrf.mxu0
        %v5745 = vpop.f32.mrf.mxu0
        %5746 = vdwg.mxu0
        %5747 = vmatprep.subr.bf16.mxu0 0
        %5748 = vmatpush1.bf16.msra.mxu0 %v5576
        %5749 = vmatprep.subr.bf16.mxu0 0
        %5750 = vmatpush1.bf16.msra.mxu0 %v5575
        %5751 = vmatprep.subr.bf16.mxu0 0
        %5752 = vmatpush1.bf16.msra.mxu0 %v5574
        %5753 = vmatprep.subr.bf16.mxu0 0
        %5754 = vmatpush1.bf16.msra.mxu0 %v5573
        %5755 = vmatprep.subr.bf16.mxu0 0
        %5756 = vmatpush1.bf16.msra.mxu0 %v5572
        %5757 = vmatprep.subr.bf16.mxu0 0
        %5758 = vmatpush1.bf16.msra.mxu0 %v5571
        %5759 = vmatprep.subr.bf16.mxu0 0
        %5760 = vmatpush1.bf16.msra.mxu0 %v5570
        %5761 = vmatprep.subr.bf16.mxu0 0
        %5762 = vmatpush1.bf16.msra.mxu0 %v5569
        %5763 = vmatprep.subr.bf16.mxu0 0
        %5764 = vmatpush2.bf16.msra.mxu0 0
        %5765 = vmatprep.subr.bf16.mxu0 0
        %5766 = vmatpush2.bf16.msra.mxu0 0
        %5767 = vmatprep.subr.bf16.mxu0 0
        %5768 = vmatpush2.bf16.msra.mxu0 0
        %5769 = vmatprep.subr.bf16.mxu0 0
        %5770 = vmatpush2.bf16.msra.mxu0 0
        %5771 = vmatprep.subr.bf16.mxu0 0
        %5772 = vmatpush2.bf16.msra.mxu0 %v5580
        %5773 = vmatprep.subr.bf16.mxu0 0
        %5774 = vmatpush2.bf16.msra.mxu0 %v5579
        %5775 = vmatprep.subr.bf16.mxu0 0
        %5776 = vmatpush2.bf16.msra.mxu0 %v5578
        %5777 = vmatprep.subr.bf16.mxu0 0
        %5778 = vmatpush2.bf16.msra.mxu0 %v5577
        %5779 = vmatprep.mubr.bf16.mxu0 %v5705
        %5780 = vmatmul.mubr.bf16.gmra.mxu0 %v5699
        %v5781 = vpop.f32.mrf.mxu0
        %v5782 = vadd.f32 %v5742, %v5781
        %v5783 = vpop.f32.mrf.mxu0
        %v5784 = vpop.f32.mrf.mxu0
        %v5785 = vpop.f32.mrf.mxu0
        %5786 = vdwg.mxu0
        %v5787 = vadd.f32 %v5164, %v5782
        %v5792 = vrot.slane %v5181, 1
        %v5793 = vrot.slane %v5182, 1
        %v5794 = vrot.slane %v5183, 1
        %v5795 = vrot.slane %v5184, 1
        %v5800 = vsel %vm1513, %v5795, 0
        %5802 = vmatprep.subr.bf16.mxu0 0
        %5803 = vmatpush1.bf16.msra.mxu0 %v5560
        %5804 = vmatprep.subr.bf16.mxu0 0
        %5805 = vmatpush1.bf16.msra.mxu0 %v5559
        %5806 = vmatprep.subr.bf16.mxu0 0
        %5807 = vmatpush1.bf16.msra.mxu0 %v5558
        %5808 = vmatprep.subr.bf16.mxu0 0
        %5809 = vmatpush1.bf16.msra.mxu0 %v5557
        %5810 = vmatprep.subr.bf16.mxu0 0
        %5811 = vmatpush1.bf16.msra.mxu0 %v5556
        %5812 = vmatprep.subr.bf16.mxu0 0
        %5813 = vmatpush1.bf16.msra.mxu0 %v5555
        %5814 = vmatprep.subr.bf16.mxu0 0
        %5815 = vmatpush1.bf16.msra.mxu0 %v5554
        %5816 = vmatprep.subr.bf16.mxu0 0
        %5817 = vmatpush1.bf16.msra.mxu0 %v5553
        %5818 = vmatprep.subr.bf16.mxu0 0
        %5819 = vmatpush2.bf16.msra.mxu0 %v5568
        %5820 = vmatprep.subr.bf16.mxu0 0
        %5821 = vmatpush2.bf16.msra.mxu0 %v5567
        %5822 = vmatprep.subr.bf16.mxu0 0
        %5823 = vmatpush2.bf16.msra.mxu0 %v5566
        %5824 = vmatprep.subr.bf16.mxu0 0
        %5825 = vmatpush2.bf16.msra.mxu0 %v5565
        %5826 = vmatprep.subr.bf16.mxu0 0
        %5827 = vmatpush2.bf16.msra.mxu0 %v5564
        %5828 = vmatprep.subr.bf16.mxu0 0
        %5829 = vmatpush2.bf16.msra.mxu0 %v5563
        %5830 = vmatprep.subr.bf16.mxu0 0
        %5831 = vmatpush2.bf16.msra.mxu0 %v5562
        %5832 = vmatprep.subr.bf16.mxu0 0
        %5833 = vmatpush2.bf16.msra.mxu0 %v5561
        %5834 = vmatprep.mubr.bf16.mxu0 %v5793
        %5835 = vmatmul.mubr.bf16.gmra.mxu0 %v5792
        %v5836 = vpop.f32.mrf.mxu0
        %v5837 = vadd.f32 0.0, %v5836
        %v5838 = vpop.f32.mrf.mxu0
        %v5839 = vpop.f32.mrf.mxu0
        %v5840 = vpop.f32.mrf.mxu0
        %5841 = vdwg.mxu0
        %5842 = vmatprep.subr.bf16.mxu0 0
        %5843 = vmatpush1.bf16.msra.mxu0 %v5576
        %5844 = vmatprep.subr.bf16.mxu0 0
        %5845 = vmatpush1.bf16.msra.mxu0 %v5575
        %5846 = vmatprep.subr.bf16.mxu0 0
        %5847 = vmatpush1.bf16.msra.mxu0 %v5574
        %5848 = vmatprep.subr.bf16.mxu0 0
        %5849 = vmatpush1.bf16.msra.mxu0 %v5573
        %5850 = vmatprep.subr.bf16.mxu0 0
        %5851 = vmatpush1.bf16.msra.mxu0 %v5572
        %5852 = vmatprep.subr.bf16.mxu0 0
        %5853 = vmatpush1.bf16.msra.mxu0 %v5571
        %5854 = vmatprep.subr.bf16.mxu0 0
        %5855 = vmatpush1.bf16.msra.mxu0 %v5570
        %5856 = vmatprep.subr.bf16.mxu0 0
        %5857 = vmatpush1.bf16.msra.mxu0 %v5569
        %5858 = vmatprep.subr.bf16.mxu0 0
        %5859 = vmatpush2.bf16.msra.mxu0 0
        %5860 = vmatprep.subr.bf16.mxu0 0
        %5861 = vmatpush2.bf16.msra.mxu0 0
        %5862 = vmatprep.subr.bf16.mxu0 0
        %5863 = vmatpush2.bf16.msra.mxu0 0
        %5864 = vmatprep.subr.bf16.mxu0 0
        %5865 = vmatpush2.bf16.msra.mxu0 0
        %5866 = vmatprep.subr.bf16.mxu0 0
        %5867 = vmatpush2.bf16.msra.mxu0 %v5580
        %5868 = vmatprep.subr.bf16.mxu0 0
        %5869 = vmatpush2.bf16.msra.mxu0 %v5579
        %5870 = vmatprep.subr.bf16.mxu0 0
        %5871 = vmatpush2.bf16.msra.mxu0 %v5578
        %5872 = vmatprep.subr.bf16.mxu0 0
        %5873 = vmatpush2.bf16.msra.mxu0 %v5577
        %5874 = vmatprep.mubr.bf16.mxu0 %v5800
        %5875 = vmatmul.mubr.bf16.gmra.mxu0 %v5794
        %v5876 = vpop.f32.mrf.mxu0
        %v5877 = vadd.f32 %v5837, %v5876
        %v5878 = vpop.f32.mrf.mxu0
        %v5879 = vpop.f32.mrf.mxu0
        %v5880 = vpop.f32.mrf.mxu0
        %5881 = vdwg.mxu0
        %v5882 = vadd.f32 %v5268, %v5877
        %v5887 = vrot.slane %v5285, 1
        %v5888 = vrot.slane %v5286, 1
        %v5889 = vrot.slane %v5287, 1
        %v5890 = vrot.slane %v5288, 1
        %v5895 = vsel %vm1513, %v5890, 0
        %5897 = vmatprep.subr.bf16.mxu0 0
        %5898 = vmatpush1.bf16.msra.mxu0 %v5560
        %5899 = vmatprep.subr.bf16.mxu0 0
        %5900 = vmatpush1.bf16.msra.mxu0 %v5559
        %5901 = vmatprep.subr.bf16.mxu0 0
        %5902 = vmatpush1.bf16.msra.mxu0 %v5558
        %5903 = vmatprep.subr.bf16.mxu0 0
        %5904 = vmatpush1.bf16.msra.mxu0 %v5557
        %5905 = vmatprep.subr.bf16.mxu0 0
        %5906 = vmatpush1.bf16.msra.mxu0 %v5556
        %5907 = vmatprep.subr.bf16.mxu0 0
        %5908 = vmatpush1.bf16.msra.mxu0 %v5555
        %5909 = vmatprep.subr.bf16.mxu0 0
        %5910 = vmatpush1.bf16.msra.mxu0 %v5554
        %5911 = vmatprep.subr.bf16.mxu0 0
        %5912 = vmatpush1.bf16.msra.mxu0 %v5553
        %5913 = vmatprep.subr.bf16.mxu0 0
        %5914 = vmatpush2.bf16.msra.mxu0 %v5568
        %5915 = vmatprep.subr.bf16.mxu0 0
        %5916 = vmatpush2.bf16.msra.mxu0 %v5567
        %5917 = vmatprep.subr.bf16.mxu0 0
        %5918 = vmatpush2.bf16.msra.mxu0 %v5566
        %5919 = vmatprep.subr.bf16.mxu0 0
        %5920 = vmatpush2.bf16.msra.mxu0 %v5565
        %5921 = vmatprep.subr.bf16.mxu0 0
        %5922 = vmatpush2.bf16.msra.mxu0 %v5564
        %5923 = vmatprep.subr.bf16.mxu0 0
        %5924 = vmatpush2.bf16.msra.mxu0 %v5563
        %5925 = vmatprep.subr.bf16.mxu0 0
        %5926 = vmatpush2.bf16.msra.mxu0 %v5562
        %5927 = vmatprep.subr.bf16.mxu0 0
        %5928 = vmatpush2.bf16.msra.mxu0 %v5561
        %5929 = vmatprep.mubr.bf16.mxu0 %v5888
        %5930 = vmatmul.mubr.bf16.gmra.mxu0 %v5887
        %v5931 = vpop.f32.mrf.mxu0
        %v5932 = vadd.f32 0.0, %v5931
        %v5933 = vpop.f32.mrf.mxu0
        %v5934 = vpop.f32.mrf.mxu0
        %v5935 = vpop.f32.mrf.mxu0
        %5936 = vdwg.mxu0
        %5937 = vmatprep.subr.bf16.mxu0 0
        %5938 = vmatpush1.bf16.msra.mxu0 %v5576
        %5939 = vmatprep.subr.bf16.mxu0 0
        %5940 = vmatpush1.bf16.msra.mxu0 %v5575
        %5941 = vmatprep.subr.bf16.mxu0 0
        %5942 = vmatpush1.bf16.msra.mxu0 %v5574
        %5943 = vmatprep.subr.bf16.mxu0 0
        %5944 = vmatpush1.bf16.msra.mxu0 %v5573
        %5945 = vmatprep.subr.bf16.mxu0 0
        %5946 = vmatpush1.bf16.msra.mxu0 %v5572
        %5947 = vmatprep.subr.bf16.mxu0 0
        %5948 = vmatpush1.bf16.msra.mxu0 %v5571
        %5949 = vmatprep.subr.bf16.mxu0 0
        %5950 = vmatpush1.bf16.msra.mxu0 %v5570
        %5951 = vmatprep.subr.bf16.mxu0 0
        %5952 = vmatpush1.bf16.msra.mxu0 %v5569
        %5953 = vmatprep.subr.bf16.mxu0 0
        %5954 = vmatpush2.bf16.msra.mxu0 0
        %5955 = vmatprep.subr.bf16.mxu0 0
        %5956 = vmatpush2.bf16.msra.mxu0 0
        %5957 = vmatprep.subr.bf16.mxu0 0
        %5958 = vmatpush2.bf16.msra.mxu0 0
        %5959 = vmatprep.subr.bf16.mxu0 0
        %5960 = vmatpush2.bf16.msra.mxu0 0
        %5961 = vmatprep.subr.bf16.mxu0 0
        %5962 = vmatpush2.bf16.msra.mxu0 %v5580
        %5963 = vmatprep.subr.bf16.mxu0 0
        %5964 = vmatpush2.bf16.msra.mxu0 %v5579
        %5965 = vmatprep.subr.bf16.mxu0 0
        %5966 = vmatpush2.bf16.msra.mxu0 %v5578
        %5967 = vmatprep.subr.bf16.mxu0 0
        %5968 = vmatpush2.bf16.msra.mxu0 %v5577
        %5969 = vmatprep.mubr.bf16.mxu0 %v5895
        %5970 = vmatmul.mubr.bf16.gmra.mxu0 %v5889
        %v5971 = vpop.f32.mrf.mxu0
        %v5972 = vadd.f32 %v5932, %v5971
        %v5973 = vpop.f32.mrf.mxu0
        %v5974 = vpop.f32.mrf.mxu0
        %v5975 = vpop.f32.mrf.mxu0
        %5976 = vdwg.mxu0
        %v5977 = vadd.f32 %v5372, %v5972
        %s5978 = scalar_lea.vmem [#allocation11], 448
        %v5979 = vld [vmem:[%s5978] sm:$0xf]
        %v5980 = vld [vmem:[%s5978 + $0x4] sm:$0xf]
        %v5981 = vld [vmem:[%s5978 + $0x8] sm:$0xf]
        %v5982 = vld [vmem:[%s5978 + $0xc] sm:$0xf]
        %v5983 = vld [vmem:[%s5978 + $0x10] sm:$0xf]
        %v5984 = vld [vmem:[%s5978 + $0x14] sm:$0xf]
        %v5985 = vld [vmem:[%s5978 + $0x18] sm:$0xf]
        %v5986 = vld [vmem:[%s5978 + $0x1c] sm:$0xf]
        %v5987 = vld [vmem:[%s5978 + $0x20] sm:$0xf]
        %v5988 = vld [vmem:[%s5978 + $0x24] sm:$0xf]
        %v5989 = vld [vmem:[%s5978 + $0x28] sm:$0xf]
        %v5990 = vld [vmem:[%s5978 + $0x2c] sm:$0xf]
        %v5991 = vld [vmem:[%s5978 + $0x30] sm:$0xf]
        %v5992 = vld [vmem:[%s5978 + $0x34] sm:$0xf]
        %v5993 = vld [vmem:[%s5978 + $0x38] sm:$0xf]
        %v5994 = vld [vmem:[%s5978 + $0x3c] sm:$0xf]
        %v5995 = vld [vmem:[%s5978 + $0x40] sm:$0xf]
        %v5996 = vld [vmem:[%s5978 + $0x44] sm:$0xf]
        %v5997 = vld [vmem:[%s5978 + $0x48] sm:$0xf]
        %v5998 = vld [vmem:[%s5978 + $0x4c] sm:$0xf]
        %v5999 = vld [vmem:[%s5978 + $0x50] sm:$0xf]
        %v6000 = vld [vmem:[%s5978 + $0x54] sm:$0xf]
        %v6001 = vld [vmem:[%s5978 + $0x58] sm:$0xf]
        %v6002 = vld [vmem:[%s5978 + $0x5c] sm:$0xf]
        %v6003 = vld [vmem:[%s5978 + $0x60] sm:$0xf]
        %v6004 = vld [vmem:[%s5978 + $0x64] sm:$0xf]
        %v6005 = vld [vmem:[%s5978 + $0x68] sm:$0xf]
        %v6006 = vld [vmem:[%s5978 + $0x6c] sm:$0xf]
        %v6007 = vld [vmem:[%s5978 + $0x70] sm:$0xf]
        %v6008 = vld [vmem:[%s5978 + $0x74] sm:$0xf]
        %v6009 = vld [vmem:[%s5978 + $0x78] sm:$0xf]
        %v6010 = vld [vmem:[%s5978 + $0x7c] sm:$0xf]
        %v6011 = vld [vmem:[%s5978 + $0x80] sm:$0xf]
        %v6012 = vld [vmem:[%s5978 + $0x84] sm:$0xf]
        %v6013 = vld [vmem:[%s5978 + $0x88] sm:$0xf]
        %v6014 = vld [vmem:[%s5978 + $0x8c] sm:$0xf]
        %v6015 = vld [vmem:[%s5978 + $0x90] sm:$0xf]
        %v6016 = vld [vmem:[%s5978 + $0x94] sm:$0xf]
        %v6017 = vld [vmem:[%s5978 + $0x98] sm:$0xf]
        %v6018 = vld [vmem:[%s5978 + $0x9c] sm:$0xf]
        %v6019 = vld [vmem:[%s5978 + $0xa0] sm:$0xf]
        %v6020 = vld [vmem:[%s5978 + $0xa4] sm:$0xf]
        %v6021 = vld [vmem:[%s5978 + $0xa8] sm:$0xf]
        %v6022 = vld [vmem:[%s5978 + $0xac] sm:$0xf]
        %v6023 = vld [vmem:[%s5978 + $0xb0] sm:$0xf]
        %v6024 = vld [vmem:[%s5978 + $0xb4] sm:$0xf]
        %v6025 = vld [vmem:[%s5978 + $0xb8] sm:$0xf]
        %v6026 = vld [vmem:[%s5978 + $0xbc] sm:$0xf]
        %v6027 = vld [vmem:[%s5978 + $0xc0] sm:$0xf]
        %v6028 = vld [vmem:[%s5978 + $0xc4] sm:$0xf]
        %v6029 = vld [vmem:[%s5978 + $0xc8] sm:$0xf]
        %v6030 = vld [vmem:[%s5978 + $0xcc] sm:$0xf]
        %v6031 = vld [vmem:[%s5978 + $0xd0] sm:$0xf]
        %v6032 = vld [vmem:[%s5978 + $0xd4] sm:$0xf]
        %v6033 = vld [vmem:[%s5978 + $0xd8] sm:$0xf]
        %v6034 = vld [vmem:[%s5978 + $0xdc] sm:$0xf]
        %v6035 = vrot.slane %v4805, 2
        %v6036 = vrot.slane %v4806, 2
        %v6037 = vrot.slane %v4807, 2
        %v6038 = vrot.slane %v4808, 2
        %v6098 = vunpack.c.l.b16 %v5979
        %v6099 = vunpack.c.l.b16 %v5980
        %v6100 = vunpack.c.l.b16 %v5981
        %v6101 = vunpack.c.l.b16 %v5982
        %v6102 = vunpack.c.l.b16 %v5983
        %v6103 = vunpack.c.l.b16 %v5984
        %v6104 = vunpack.c.l.b16 %v5985
        %v6105 = vunpack.c.l.b16 %v5986
        %v6106 = vunpack.c.l.b16 %v5987
        %v6107 = vunpack.c.l.b16 %v5988
        %v6108 = vunpack.c.l.b16 %v5989
        %v6109 = vunpack.c.l.b16 %v5990
        %v6110 = vunpack.c.l.b16 %v5991
        %v6111 = vunpack.c.l.b16 %v5992
        %v6112 = vunpack.c.l.b16 %v5993
        %v6113 = vunpack.c.l.b16 %v5994
        %v6114 = vunpack.c.l.b16 %v5995
        %v6115 = vunpack.c.l.b16 %v5996
        %v6116 = vunpack.c.l.b16 %v5997
        %v6117 = vunpack.c.l.b16 %v5998
        %v6118 = vunpack.c.l.b16 %v5999
        %v6119 = vunpack.c.l.b16 %v6000
        %v6120 = vunpack.c.l.b16 %v6001
        %v6121 = vunpack.c.l.b16 %v6002
        %v6122 = vunpack.c.l.b16 %v6003
        %v6123 = vunpack.c.l.b16 %v6004
        %v6124 = vunpack.c.l.b16 %v6005
        %v6125 = vunpack.c.l.b16 %v6006
        %v6126 = vunpack.c.l.b16 %v6007
        %v6127 = vunpack.c.l.b16 %v6008
        %v6128 = vunpack.c.l.b16 %v6009
        %v6129 = vunpack.c.l.b16 %v6010
        %v6130 = vunpack.c.l.b16 %v6011
        %v6131 = vunpack.c.l.b16 %v6012
        %v6132 = vunpack.c.l.b16 %v6013
        %v6133 = vunpack.c.l.b16 %v6014
        %v6134 = vunpack.c.l.b16 %v6015
        %v6135 = vunpack.c.l.b16 %v6016
        %v6136 = vunpack.c.l.b16 %v6017
        %v6137 = vunpack.c.l.b16 %v6018
        %v6138 = vunpack.c.l.b16 %v6019
        %v6139 = vunpack.c.l.b16 %v6020
        %v6140 = vunpack.c.l.b16 %v6021
        %v6141 = vunpack.c.l.b16 %v6022
        %v6142 = vunpack.c.l.b16 %v6023
        %v6143 = vunpack.c.l.b16 %v6024
        %v6144 = vunpack.c.l.b16 %v6025
        %v6145 = vunpack.c.l.b16 %v6026
        %v6146 = vunpack.c.l.b16 %v6027
        %v6147 = vunpack.c.l.b16 %v6028
        %v6148 = vunpack.c.l.b16 %v6029
        %v6149 = vunpack.c.l.b16 %v6030
        %v6150 = vunpack.c.l.b16 %v6031
        %v6151 = vunpack.c.l.b16 %v6032
        %v6152 = vunpack.c.l.b16 %v6033
        %v6153 = vunpack.c.l.b16 %v6034
        %v6154 = vpack.c.b16 %v6099, %v6098
        %v6155 = vpack.c.b16 %v6101, %v6100
        %v6156 = vpack.c.b16 %v6103, %v6102
        %v6157 = vpack.c.b16 %v6105, %v6104
        %v6158 = vpack.c.b16 %v6107, %v6106
        %v6159 = vpack.c.b16 %v6109, %v6108
        %v6160 = vpack.c.b16 %v6111, %v6110
        %v6161 = vpack.c.b16 %v6113, %v6112
        %v6162 = vpack.c.b16 %v6115, %v6114
        %v6163 = vpack.c.b16 %v6117, %v6116
        %v6164 = vpack.c.b16 %v6119, %v6118
        %v6165 = vpack.c.b16 %v6121, %v6120
        %v6166 = vpack.c.b16 %v6123, %v6122
        %v6167 = vpack.c.b16 %v6125, %v6124
        %v6168 = vpack.c.b16 %v6127, %v6126
        %v6169 = vpack.c.b16 %v6129, %v6128
        %v6170 = vpack.c.b16 %v6131, %v6130
        %v6171 = vpack.c.b16 %v6133, %v6132
        %v6172 = vpack.c.b16 %v6135, %v6134
        %v6173 = vpack.c.b16 %v6137, %v6136
        %v6174 = vpack.c.b16 %v6139, %v6138
        %v6175 = vpack.c.b16 %v6141, %v6140
        %v6176 = vpack.c.b16 %v6143, %v6142
        %v6177 = vpack.c.b16 %v6145, %v6144
        %v6178 = vpack.c.b16 %v6147, %v6146
        %v6179 = vpack.c.b16 %v6149, %v6148
        %v6180 = vpack.c.b16 %v6151, %v6150
        %v6181 = vpack.c.b16 %v6153, %v6152
        %v6211 = vsel %vm1513, %v6038, 0
        %6213 = vmatprep.subr.bf16.mxu0 0
        %6214 = vmatpush1.bf16.msra.mxu0 %v6161
        %6215 = vmatprep.subr.bf16.mxu0 0
        %6216 = vmatpush1.bf16.msra.mxu0 %v6160
        %6217 = vmatprep.subr.bf16.mxu0 0
        %6218 = vmatpush1.bf16.msra.mxu0 %v6159
        %6219 = vmatprep.subr.bf16.mxu0 0
        %6220 = vmatpush1.bf16.msra.mxu0 %v6158
        %6221 = vmatprep.subr.bf16.mxu0 0
        %6222 = vmatpush1.bf16.msra.mxu0 %v6157
        %6223 = vmatprep.subr.bf16.mxu0 0
        %6224 = vmatpush1.bf16.msra.mxu0 %v6156
        %6225 = vmatprep.subr.bf16.mxu0 0
        %6226 = vmatpush1.bf16.msra.mxu0 %v6155
        %6227 = vmatprep.subr.bf16.mxu0 0
        %6228 = vmatpush1.bf16.msra.mxu0 %v6154
        %6229 = vmatprep.subr.bf16.mxu0 0
        %6230 = vmatpush2.bf16.msra.mxu0 %v6169
        %6231 = vmatprep.subr.bf16.mxu0 0
        %6232 = vmatpush2.bf16.msra.mxu0 %v6168
        %6233 = vmatprep.subr.bf16.mxu0 0
        %6234 = vmatpush2.bf16.msra.mxu0 %v6167
        %6235 = vmatprep.subr.bf16.mxu0 0
        %6236 = vmatpush2.bf16.msra.mxu0 %v6166
        %6237 = vmatprep.subr.bf16.mxu0 0
        %6238 = vmatpush2.bf16.msra.mxu0 %v6165
        %6239 = vmatprep.subr.bf16.mxu0 0
        %6240 = vmatpush2.bf16.msra.mxu0 %v6164
        %6241 = vmatprep.subr.bf16.mxu0 0
        %6242 = vmatpush2.bf16.msra.mxu0 %v6163
        %6243 = vmatprep.subr.bf16.mxu0 0
        %6244 = vmatpush2.bf16.msra.mxu0 %v6162
        %6245 = vmatprep.mubr.bf16.mxu0 %v6036
        %6246 = vmatmul.mubr.bf16.gmra.mxu0 %v6035
        %v6247 = vpop.f32.mrf.mxu0
        %v6248 = vadd.f32 0.0, %v6247
        %v6249 = vpop.f32.mrf.mxu0
        %v6250 = vpop.f32.mrf.mxu0
        %v6251 = vpop.f32.mrf.mxu0
        %6252 = vdwg.mxu0
        %6253 = vmatprep.subr.bf16.mxu0 0
        %6254 = vmatpush1.bf16.msra.mxu0 %v6177
        %6255 = vmatprep.subr.bf16.mxu0 0
        %6256 = vmatpush1.bf16.msra.mxu0 %v6176
        %6257 = vmatprep.subr.bf16.mxu0 0
        %6258 = vmatpush1.bf16.msra.mxu0 %v6175
        %6259 = vmatprep.subr.bf16.mxu0 0
        %6260 = vmatpush1.bf16.msra.mxu0 %v6174
        %6261 = vmatprep.subr.bf16.mxu0 0
        %6262 = vmatpush1.bf16.msra.mxu0 %v6173
        %6263 = vmatprep.subr.bf16.mxu0 0
        %6264 = vmatpush1.bf16.msra.mxu0 %v6172
        %6265 = vmatprep.subr.bf16.mxu0 0
        %6266 = vmatpush1.bf16.msra.mxu0 %v6171
        %6267 = vmatprep.subr.bf16.mxu0 0
        %6268 = vmatpush1.bf16.msra.mxu0 %v6170
        %6269 = vmatprep.subr.bf16.mxu0 0
        %6270 = vmatpush2.bf16.msra.mxu0 0
        %6271 = vmatprep.subr.bf16.mxu0 0
        %6272 = vmatpush2.bf16.msra.mxu0 0
        %6273 = vmatprep.subr.bf16.mxu0 0
        %6274 = vmatpush2.bf16.msra.mxu0 0
        %6275 = vmatprep.subr.bf16.mxu0 0
        %6276 = vmatpush2.bf16.msra.mxu0 0
        %6277 = vmatprep.subr.bf16.mxu0 0
        %6278 = vmatpush2.bf16.msra.mxu0 %v6181
        %6279 = vmatprep.subr.bf16.mxu0 0
        %6280 = vmatpush2.bf16.msra.mxu0 %v6180
        %6281 = vmatprep.subr.bf16.mxu0 0
        %6282 = vmatpush2.bf16.msra.mxu0 %v6179
        %6283 = vmatprep.subr.bf16.mxu0 0
        %6284 = vmatpush2.bf16.msra.mxu0 %v6178
        %6285 = vmatprep.mubr.bf16.mxu0 %v6211
        %6286 = vmatmul.mubr.bf16.gmra.mxu0 %v6037
        %v6287 = vpop.f32.mrf.mxu0
        %v6288 = vadd.f32 %v6248, %v6287
        %v6289 = vpop.f32.mrf.mxu0
        %v6290 = vpop.f32.mrf.mxu0
        %v6291 = vpop.f32.mrf.mxu0
        %6292 = vdwg.mxu0
        %v6293 = vadd.f32 %v5692, %v6288
        %v6294 = vrot.slane %v5077, 2
        %v6295 = vrot.slane %v5078, 2
        %v6296 = vrot.slane %v5079, 2
        %v6297 = vrot.slane %v5080, 2
        %v6302 = vsel %vm1513, %v6297, 0
        %6304 = vmatprep.subr.bf16.mxu0 0
        %6305 = vmatpush1.bf16.msra.mxu0 %v6161
        %6306 = vmatprep.subr.bf16.mxu0 0
        %6307 = vmatpush1.bf16.msra.mxu0 %v6160
        %6308 = vmatprep.subr.bf16.mxu0 0
        %6309 = vmatpush1.bf16.msra.mxu0 %v6159
        %6310 = vmatprep.subr.bf16.mxu0 0
        %6311 = vmatpush1.bf16.msra.mxu0 %v6158
        %6312 = vmatprep.subr.bf16.mxu0 0
        %6313 = vmatpush1.bf16.msra.mxu0 %v6157
        %6314 = vmatprep.subr.bf16.mxu0 0
        %6315 = vmatpush1.bf16.msra.mxu0 %v6156
        %6316 = vmatprep.subr.bf16.mxu0 0
        %6317 = vmatpush1.bf16.msra.mxu0 %v6155
        %6318 = vmatprep.subr.bf16.mxu0 0
        %6319 = vmatpush1.bf16.msra.mxu0 %v6154
        %6320 = vmatprep.subr.bf16.mxu0 0
        %6321 = vmatpush2.bf16.msra.mxu0 %v6169
        %6322 = vmatprep.subr.bf16.mxu0 0
        %6323 = vmatpush2.bf16.msra.mxu0 %v6168
        %6324 = vmatprep.subr.bf16.mxu0 0
        %6325 = vmatpush2.bf16.msra.mxu0 %v6167
        %6326 = vmatprep.subr.bf16.mxu0 0
        %6327 = vmatpush2.bf16.msra.mxu0 %v6166
        %6328 = vmatprep.subr.bf16.mxu0 0
        %6329 = vmatpush2.bf16.msra.mxu0 %v6165
        %6330 = vmatprep.subr.bf16.mxu0 0
        %6331 = vmatpush2.bf16.msra.mxu0 %v6164
        %6332 = vmatprep.subr.bf16.mxu0 0
        %6333 = vmatpush2.bf16.msra.mxu0 %v6163
        %6334 = vmatprep.subr.bf16.mxu0 0
        %6335 = vmatpush2.bf16.msra.mxu0 %v6162
        %6336 = vmatprep.mubr.bf16.mxu0 %v6295
        %6337 = vmatmul.mubr.bf16.gmra.mxu0 %v6294
        %v6338 = vpop.f32.mrf.mxu0
        %v6339 = vadd.f32 0.0, %v6338
        %v6340 = vpop.f32.mrf.mxu0
        %v6341 = vpop.f32.mrf.mxu0
        %v6342 = vpop.f32.mrf.mxu0
        %6343 = vdwg.mxu0
        %6344 = vmatprep.subr.bf16.mxu0 0
        %6345 = vmatpush1.bf16.msra.mxu0 %v6177
        %6346 = vmatprep.subr.bf16.mxu0 0
        %6347 = vmatpush1.bf16.msra.mxu0 %v6176
        %6348 = vmatprep.subr.bf16.mxu0 0
        %6349 = vmatpush1.bf16.msra.mxu0 %v6175
        %6350 = vmatprep.subr.bf16.mxu0 0
        %6351 = vmatpush1.bf16.msra.mxu0 %v6174
        %6352 = vmatprep.subr.bf16.mxu0 0
        %6353 = vmatpush1.bf16.msra.mxu0 %v6173
        %6354 = vmatprep.subr.bf16.mxu0 0
        %6355 = vmatpush1.bf16.msra.mxu0 %v6172
        %6356 = vmatprep.subr.bf16.mxu0 0
        %6357 = vmatpush1.bf16.msra.mxu0 %v6171
        %6358 = vmatprep.subr.bf16.mxu0 0
        %6359 = vmatpush1.bf16.msra.mxu0 %v6170
        %6360 = vmatprep.subr.bf16.mxu0 0
        %6361 = vmatpush2.bf16.msra.mxu0 0
        %6362 = vmatprep.subr.bf16.mxu0 0
        %6363 = vmatpush2.bf16.msra.mxu0 0
        %6364 = vmatprep.subr.bf16.mxu0 0
        %6365 = vmatpush2.bf16.msra.mxu0 0
        %6366 = vmatprep.subr.bf16.mxu0 0
        %6367 = vmatpush2.bf16.msra.mxu0 0
        %6368 = vmatprep.subr.bf16.mxu0 0
        %6369 = vmatpush2.bf16.msra.mxu0 %v6181
        %6370 = vmatprep.subr.bf16.mxu0 0
        %6371 = vmatpush2.bf16.msra.mxu0 %v6180
        %6372 = vmatprep.subr.bf16.mxu0 0
        %6373 = vmatpush2.bf16.msra.mxu0 %v6179
        %6374 = vmatprep.subr.bf16.mxu0 0
        %6375 = vmatpush2.bf16.msra.mxu0 %v6178
        %6376 = vmatprep.mubr.bf16.mxu0 %v6302
        %6377 = vmatmul.mubr.bf16.gmra.mxu0 %v6296
        %v6378 = vpop.f32.mrf.mxu0
        %v6379 = vadd.f32 %v6339, %v6378
        %v6380 = vpop.f32.mrf.mxu0
        %v6381 = vpop.f32.mrf.mxu0
        %v6382 = vpop.f32.mrf.mxu0
        %6383 = vdwg.mxu0
        %v6384 = vadd.f32 %v5787, %v6379
        %v6385 = vrot.slane %v5181, 2
        %v6386 = vrot.slane %v5182, 2
        %v6387 = vrot.slane %v5183, 2
        %v6388 = vrot.slane %v5184, 2
        %v6393 = vsel %vm1513, %v6388, 0
        %6395 = vmatprep.subr.bf16.mxu0 0
        %6396 = vmatpush1.bf16.msra.mxu0 %v6161
        %6397 = vmatprep.subr.bf16.mxu0 0
        %6398 = vmatpush1.bf16.msra.mxu0 %v6160
        %6399 = vmatprep.subr.bf16.mxu0 0
        %6400 = vmatpush1.bf16.msra.mxu0 %v6159
        %6401 = vmatprep.subr.bf16.mxu0 0
        %6402 = vmatpush1.bf16.msra.mxu0 %v6158
        %6403 = vmatprep.subr.bf16.mxu0 0
        %6404 = vmatpush1.bf16.msra.mxu0 %v6157
        %6405 = vmatprep.subr.bf16.mxu0 0
        %6406 = vmatpush1.bf16.msra.mxu0 %v6156
        %6407 = vmatprep.subr.bf16.mxu0 0
        %6408 = vmatpush1.bf16.msra.mxu0 %v6155
        %6409 = vmatprep.subr.bf16.mxu0 0
        %6410 = vmatpush1.bf16.msra.mxu0 %v6154
        %6411 = vmatprep.subr.bf16.mxu0 0
        %6412 = vmatpush2.bf16.msra.mxu0 %v6169
        %6413 = vmatprep.subr.bf16.mxu0 0
        %6414 = vmatpush2.bf16.msra.mxu0 %v6168
        %6415 = vmatprep.subr.bf16.mxu0 0
        %6416 = vmatpush2.bf16.msra.mxu0 %v6167
        %6417 = vmatprep.subr.bf16.mxu0 0
        %6418 = vmatpush2.bf16.msra.mxu0 %v6166
        %6419 = vmatprep.subr.bf16.mxu0 0
        %6420 = vmatpush2.bf16.msra.mxu0 %v6165
        %6421 = vmatprep.subr.bf16.mxu0 0
        %6422 = vmatpush2.bf16.msra.mxu0 %v6164
        %6423 = vmatprep.subr.bf16.mxu0 0
        %6424 = vmatpush2.bf16.msra.mxu0 %v6163
        %6425 = vmatprep.subr.bf16.mxu0 0
        %6426 = vmatpush2.bf16.msra.mxu0 %v6162
        %6427 = vmatprep.mubr.bf16.mxu0 %v6386
        %6428 = vmatmul.mubr.bf16.gmra.mxu0 %v6385
        %v6429 = vpop.f32.mrf.mxu0
        %v6430 = vadd.f32 0.0, %v6429
        %v6431 = vpop.f32.mrf.mxu0
        %v6432 = vpop.f32.mrf.mxu0
        %v6433 = vpop.f32.mrf.mxu0
        %6434 = vdwg.mxu0
        %6435 = vmatprep.subr.bf16.mxu0 0
        %6436 = vmatpush1.bf16.msra.mxu0 %v6177
        %6437 = vmatprep.subr.bf16.mxu0 0
        %6438 = vmatpush1.bf16.msra.mxu0 %v6176
        %6439 = vmatprep.subr.bf16.mxu0 0
        %6440 = vmatpush1.bf16.msra.mxu0 %v6175
        %6441 = vmatprep.subr.bf16.mxu0 0
        %6442 = vmatpush1.bf16.msra.mxu0 %v6174
        %6443 = vmatprep.subr.bf16.mxu0 0
        %6444 = vmatpush1.bf16.msra.mxu0 %v6173
        %6445 = vmatprep.subr.bf16.mxu0 0
        %6446 = vmatpush1.bf16.msra.mxu0 %v6172
        %6447 = vmatprep.subr.bf16.mxu0 0
        %6448 = vmatpush1.bf16.msra.mxu0 %v6171
        %6449 = vmatprep.subr.bf16.mxu0 0
        %6450 = vmatpush1.bf16.msra.mxu0 %v6170
        %6451 = vmatprep.subr.bf16.mxu0 0
        %6452 = vmatpush2.bf16.msra.mxu0 0
        %6453 = vmatprep.subr.bf16.mxu0 0
        %6454 = vmatpush2.bf16.msra.mxu0 0
        %6455 = vmatprep.subr.bf16.mxu0 0
        %6456 = vmatpush2.bf16.msra.mxu0 0
        %6457 = vmatprep.subr.bf16.mxu0 0
        %6458 = vmatpush2.bf16.msra.mxu0 0
        %6459 = vmatprep.subr.bf16.mxu0 0
        %6460 = vmatpush2.bf16.msra.mxu0 %v6181
        %6461 = vmatprep.subr.bf16.mxu0 0
        %6462 = vmatpush2.bf16.msra.mxu0 %v6180
        %6463 = vmatprep.subr.bf16.mxu0 0
        %6464 = vmatpush2.bf16.msra.mxu0 %v6179
        %6465 = vmatprep.subr.bf16.mxu0 0
        %6466 = vmatpush2.bf16.msra.mxu0 %v6178
        %6467 = vmatprep.mubr.bf16.mxu0 %v6393
        %6468 = vmatmul.mubr.bf16.gmra.mxu0 %v6387
        %v6469 = vpop.f32.mrf.mxu0
        %v6470 = vadd.f32 %v6430, %v6469
        %v6471 = vpop.f32.mrf.mxu0
        %v6472 = vpop.f32.mrf.mxu0
        %v6473 = vpop.f32.mrf.mxu0
        %6474 = vdwg.mxu0
        %v6475 = vadd.f32 %v5882, %v6470
        %v6476 = vrot.slane %v5285, 2
        %v6477 = vrot.slane %v5286, 2
        %v6478 = vrot.slane %v5287, 2
        %v6479 = vrot.slane %v5288, 2
        %v6484 = vsel %vm1513, %v6479, 0
        %6486 = vmatprep.subr.bf16.mxu0 0
        %6487 = vmatpush1.bf16.msra.mxu0 %v6161
        %6488 = vmatprep.subr.bf16.mxu0 0
        %6489 = vmatpush1.bf16.msra.mxu0 %v6160
        %6490 = vmatprep.subr.bf16.mxu0 0
        %6491 = vmatpush1.bf16.msra.mxu0 %v6159
        %6492 = vmatprep.subr.bf16.mxu0 0
        %6493 = vmatpush1.bf16.msra.mxu0 %v6158
        %6494 = vmatprep.subr.bf16.mxu0 0
        %6495 = vmatpush1.bf16.msra.mxu0 %v6157
        %6496 = vmatprep.subr.bf16.mxu0 0
        %6497 = vmatpush1.bf16.msra.mxu0 %v6156
        %6498 = vmatprep.subr.bf16.mxu0 0
        %6499 = vmatpush1.bf16.msra.mxu0 %v6155
        %6500 = vmatprep.subr.bf16.mxu0 0
        %6501 = vmatpush1.bf16.msra.mxu0 %v6154
        %6502 = vmatprep.subr.bf16.mxu0 0
        %6503 = vmatpush2.bf16.msra.mxu0 %v6169
        %6504 = vmatprep.subr.bf16.mxu0 0
        %6505 = vmatpush2.bf16.msra.mxu0 %v6168
        %6506 = vmatprep.subr.bf16.mxu0 0
        %6507 = vmatpush2.bf16.msra.mxu0 %v6167
        %6508 = vmatprep.subr.bf16.mxu0 0
        %6509 = vmatpush2.bf16.msra.mxu0 %v6166
        %6510 = vmatprep.subr.bf16.mxu0 0
        %6511 = vmatpush2.bf16.msra.mxu0 %v6165
        %6512 = vmatprep.subr.bf16.mxu0 0
        %6513 = vmatpush2.bf16.msra.mxu0 %v6164
        %6514 = vmatprep.subr.bf16.mxu0 0
        %6515 = vmatpush2.bf16.msra.mxu0 %v6163
        %6516 = vmatprep.subr.bf16.mxu0 0
        %6517 = vmatpush2.bf16.msra.mxu0 %v6162
        %6518 = vmatprep.mubr.bf16.mxu0 %v6477
        %6519 = vmatmul.mubr.bf16.gmra.mxu0 %v6476
        %v6520 = vpop.f32.mrf.mxu0
        %v6521 = vadd.f32 0.0, %v6520
        %v6522 = vpop.f32.mrf.mxu0
        %v6523 = vpop.f32.mrf.mxu0
        %v6524 = vpop.f32.mrf.mxu0
        %6525 = vdwg.mxu0
        %6526 = vmatprep.subr.bf16.mxu0 0
        %6527 = vmatpush1.bf16.msra.mxu0 %v6177
        %6528 = vmatprep.subr.bf16.mxu0 0
        %6529 = vmatpush1.bf16.msra.mxu0 %v6176
        %6530 = vmatprep.subr.bf16.mxu0 0
        %6531 = vmatpush1.bf16.msra.mxu0 %v6175
        %6532 = vmatprep.subr.bf16.mxu0 0
        %6533 = vmatpush1.bf16.msra.mxu0 %v6174
        %6534 = vmatprep.subr.bf16.mxu0 0
        %6535 = vmatpush1.bf16.msra.mxu0 %v6173
        %6536 = vmatprep.subr.bf16.mxu0 0
        %6537 = vmatpush1.bf16.msra.mxu0 %v6172
        %6538 = vmatprep.subr.bf16.mxu0 0
        %6539 = vmatpush1.bf16.msra.mxu0 %v6171
        %6540 = vmatprep.subr.bf16.mxu0 0
        %6541 = vmatpush1.bf16.msra.mxu0 %v6170
        %6542 = vmatprep.subr.bf16.mxu0 0
        %6543 = vmatpush2.bf16.msra.mxu0 0
        %6544 = vmatprep.subr.bf16.mxu0 0
        %6545 = vmatpush2.bf16.msra.mxu0 0
        %6546 = vmatprep.subr.bf16.mxu0 0
        %6547 = vmatpush2.bf16.msra.mxu0 0
        %6548 = vmatprep.subr.bf16.mxu0 0
        %6549 = vmatpush2.bf16.msra.mxu0 0
        %6550 = vmatprep.subr.bf16.mxu0 0
        %6551 = vmatpush2.bf16.msra.mxu0 %v6181
        %6552 = vmatprep.subr.bf16.mxu0 0
        %6553 = vmatpush2.bf16.msra.mxu0 %v6180
        %6554 = vmatprep.subr.bf16.mxu0 0
        %6555 = vmatpush2.bf16.msra.mxu0 %v6179
        %6556 = vmatprep.subr.bf16.mxu0 0
        %6557 = vmatpush2.bf16.msra.mxu0 %v6178
        %6558 = vmatprep.mubr.bf16.mxu0 %v6484
        %6559 = vmatmul.mubr.bf16.gmra.mxu0 %v6478
        %v6560 = vpop.f32.mrf.mxu0
        %v6561 = vadd.f32 %v6521, %v6560
        %v6562 = vpop.f32.mrf.mxu0
        %v6563 = vpop.f32.mrf.mxu0
        %v6564 = vpop.f32.mrf.mxu0
        %6565 = vdwg.mxu0
        %v6566 = vadd.f32 %v5977, %v6561
        %s6567 = scalar_lea.vmem [#allocation11], 672
        %v6568 = vld [vmem:[%s6567] sm:$0xf]
        %v6569 = vld [vmem:[%s6567 + $0x4] sm:$0xf]
        %v6570 = vld [vmem:[%s6567 + $0x8] sm:$0xf]
        %v6571 = vld [vmem:[%s6567 + $0xc] sm:$0xf]
        %v6572 = vld [vmem:[%s6567 + $0x10] sm:$0xf]
        %v6573 = vld [vmem:[%s6567 + $0x14] sm:$0xf]
        %v6574 = vld [vmem:[%s6567 + $0x18] sm:$0xf]
        %v6575 = vld [vmem:[%s6567 + $0x1c] sm:$0xf]
        %v6576 = vld [vmem:[%s6567 + $0x20] sm:$0xf]
        %v6577 = vld [vmem:[%s6567 + $0x24] sm:$0xf]
        %v6578 = vld [vmem:[%s6567 + $0x28] sm:$0xf]
        %v6579 = vld [vmem:[%s6567 + $0x2c] sm:$0xf]
        %v6580 = vld [vmem:[%s6567 + $0x30] sm:$0xf]
        %v6581 = vld [vmem:[%s6567 + $0x34] sm:$0xf]
        %v6582 = vld [vmem:[%s6567 + $0x38] sm:$0xf]
        %v6583 = vld [vmem:[%s6567 + $0x3c] sm:$0xf]
        %v6584 = vld [vmem:[%s6567 + $0x40] sm:$0xf]
        %v6585 = vld [vmem:[%s6567 + $0x44] sm:$0xf]
        %v6586 = vld [vmem:[%s6567 + $0x48] sm:$0xf]
        %v6587 = vld [vmem:[%s6567 + $0x4c] sm:$0xf]
        %v6588 = vld [vmem:[%s6567 + $0x50] sm:$0xf]
        %v6589 = vld [vmem:[%s6567 + $0x54] sm:$0xf]
        %v6590 = vld [vmem:[%s6567 + $0x58] sm:$0xf]
        %v6591 = vld [vmem:[%s6567 + $0x5c] sm:$0xf]
        %v6592 = vld [vmem:[%s6567 + $0x60] sm:$0xf]
        %v6593 = vld [vmem:[%s6567 + $0x64] sm:$0xf]
        %v6594 = vld [vmem:[%s6567 + $0x68] sm:$0xf]
        %v6595 = vld [vmem:[%s6567 + $0x6c] sm:$0xf]
        %v6596 = vld [vmem:[%s6567 + $0x70] sm:$0xf]
        %v6597 = vld [vmem:[%s6567 + $0x74] sm:$0xf]
        %v6598 = vld [vmem:[%s6567 + $0x78] sm:$0xf]
        %v6599 = vld [vmem:[%s6567 + $0x7c] sm:$0xf]
        %v6600 = vld [vmem:[%s6567 + $0x80] sm:$0xf]
        %v6601 = vld [vmem:[%s6567 + $0x84] sm:$0xf]
        %v6602 = vld [vmem:[%s6567 + $0x88] sm:$0xf]
        %v6603 = vld [vmem:[%s6567 + $0x8c] sm:$0xf]
        %v6604 = vld [vmem:[%s6567 + $0x90] sm:$0xf]
        %v6605 = vld [vmem:[%s6567 + $0x94] sm:$0xf]
        %v6606 = vld [vmem:[%s6567 + $0x98] sm:$0xf]
        %v6607 = vld [vmem:[%s6567 + $0x9c] sm:$0xf]
        %v6608 = vld [vmem:[%s6567 + $0xa0] sm:$0xf]
        %v6609 = vld [vmem:[%s6567 + $0xa4] sm:$0xf]
        %v6610 = vld [vmem:[%s6567 + $0xa8] sm:$0xf]
        %v6611 = vld [vmem:[%s6567 + $0xac] sm:$0xf]
        %v6612 = vld [vmem:[%s6567 + $0xb0] sm:$0xf]
        %v6613 = vld [vmem:[%s6567 + $0xb4] sm:$0xf]
        %v6614 = vld [vmem:[%s6567 + $0xb8] sm:$0xf]
        %v6615 = vld [vmem:[%s6567 + $0xbc] sm:$0xf]
        %v6616 = vld [vmem:[%s6567 + $0xc0] sm:$0xf]
        %v6617 = vld [vmem:[%s6567 + $0xc4] sm:$0xf]
        %v6618 = vld [vmem:[%s6567 + $0xc8] sm:$0xf]
        %v6619 = vld [vmem:[%s6567 + $0xcc] sm:$0xf]
        %v6620 = vld [vmem:[%s6567 + $0xd0] sm:$0xf]
        %v6621 = vld [vmem:[%s6567 + $0xd4] sm:$0xf]
        %v6622 = vld [vmem:[%s6567 + $0xd8] sm:$0xf]
        %v6623 = vld [vmem:[%s6567 + $0xdc] sm:$0xf]
        %v6624 = vrot.slane %v4805, 3
        %v6625 = vrot.slane %v4806, 3
        %v6626 = vrot.slane %v4807, 3
        %v6627 = vrot.slane %v4808, 3
        %v6687 = vunpack.c.l.b16 %v6568
        %v6688 = vunpack.c.l.b16 %v6569
        %v6689 = vunpack.c.l.b16 %v6570
        %v6690 = vunpack.c.l.b16 %v6571
        %v6691 = vunpack.c.l.b16 %v6572
        %v6692 = vunpack.c.l.b16 %v6573
        %v6693 = vunpack.c.l.b16 %v6574
        %v6694 = vunpack.c.l.b16 %v6575
        %v6695 = vunpack.c.l.b16 %v6576
        %v6696 = vunpack.c.l.b16 %v6577
        %v6697 = vunpack.c.l.b16 %v6578
        %v6698 = vunpack.c.l.b16 %v6579
        %v6699 = vunpack.c.l.b16 %v6580
        %v6700 = vunpack.c.l.b16 %v6581
        %v6701 = vunpack.c.l.b16 %v6582
        %v6702 = vunpack.c.l.b16 %v6583
        %v6703 = vunpack.c.l.b16 %v6584
        %v6704 = vunpack.c.l.b16 %v6585
        %v6705 = vunpack.c.l.b16 %v6586
        %v6706 = vunpack.c.l.b16 %v6587
        %v6707 = vunpack.c.l.b16 %v6588
        %v6708 = vunpack.c.l.b16 %v6589
        %v6709 = vunpack.c.l.b16 %v6590
        %v6710 = vunpack.c.l.b16 %v6591
        %v6711 = vunpack.c.l.b16 %v6592
        %v6712 = vunpack.c.l.b16 %v6593
        %v6713 = vunpack.c.l.b16 %v6594
        %v6714 = vunpack.c.l.b16 %v6595
        %v6715 = vunpack.c.l.b16 %v6596
        %v6716 = vunpack.c.l.b16 %v6597
        %v6717 = vunpack.c.l.b16 %v6598
        %v6718 = vunpack.c.l.b16 %v6599
        %v6719 = vunpack.c.l.b16 %v6600
        %v6720 = vunpack.c.l.b16 %v6601
        %v6721 = vunpack.c.l.b16 %v6602
        %v6722 = vunpack.c.l.b16 %v6603
        %v6723 = vunpack.c.l.b16 %v6604
        %v6724 = vunpack.c.l.b16 %v6605
        %v6725 = vunpack.c.l.b16 %v6606
        %v6726 = vunpack.c.l.b16 %v6607
        %v6727 = vunpack.c.l.b16 %v6608
        %v6728 = vunpack.c.l.b16 %v6609
        %v6729 = vunpack.c.l.b16 %v6610
        %v6730 = vunpack.c.l.b16 %v6611
        %v6731 = vunpack.c.l.b16 %v6612
        %v6732 = vunpack.c.l.b16 %v6613
        %v6733 = vunpack.c.l.b16 %v6614
        %v6734 = vunpack.c.l.b16 %v6615
        %v6735 = vunpack.c.l.b16 %v6616
        %v6736 = vunpack.c.l.b16 %v6617
        %v6737 = vunpack.c.l.b16 %v6618
        %v6738 = vunpack.c.l.b16 %v6619
        %v6739 = vunpack.c.l.b16 %v6620
        %v6740 = vunpack.c.l.b16 %v6621
        %v6741 = vunpack.c.l.b16 %v6622
        %v6742 = vunpack.c.l.b16 %v6623
        %v6743 = vpack.c.b16 %v6688, %v6687
        %v6744 = vpack.c.b16 %v6690, %v6689
        %v6745 = vpack.c.b16 %v6692, %v6691
        %v6746 = vpack.c.b16 %v6694, %v6693
        %v6747 = vpack.c.b16 %v6696, %v6695
        %v6748 = vpack.c.b16 %v6698, %v6697
        %v6749 = vpack.c.b16 %v6700, %v6699
        %v6750 = vpack.c.b16 %v6702, %v6701
        %v6751 = vpack.c.b16 %v6704, %v6703
        %v6752 = vpack.c.b16 %v6706, %v6705
        %v6753 = vpack.c.b16 %v6708, %v6707
        %v6754 = vpack.c.b16 %v6710, %v6709
        %v6755 = vpack.c.b16 %v6712, %v6711
        %v6756 = vpack.c.b16 %v6714, %v6713
        %v6757 = vpack.c.b16 %v6716, %v6715
        %v6758 = vpack.c.b16 %v6718, %v6717
        %v6759 = vpack.c.b16 %v6720, %v6719
        %v6760 = vpack.c.b16 %v6722, %v6721
        %v6761 = vpack.c.b16 %v6724, %v6723
        %v6762 = vpack.c.b16 %v6726, %v6725
        %v6763 = vpack.c.b16 %v6728, %v6727
        %v6764 = vpack.c.b16 %v6730, %v6729
        %v6765 = vpack.c.b16 %v6732, %v6731
        %v6766 = vpack.c.b16 %v6734, %v6733
        %v6767 = vpack.c.b16 %v6736, %v6735
        %v6768 = vpack.c.b16 %v6738, %v6737
        %v6769 = vpack.c.b16 %v6740, %v6739
        %v6770 = vpack.c.b16 %v6742, %v6741
        %v6800 = vsel %vm1513, %v6627, 0
        %6802 = vmatprep.subr.bf16.mxu0 0
        %6803 = vmatpush1.bf16.msra.mxu0 %v6750
        %6804 = vmatprep.subr.bf16.mxu0 0
        %6805 = vmatpush1.bf16.msra.mxu0 %v6749
        %6806 = vmatprep.subr.bf16.mxu0 0
        %6807 = vmatpush1.bf16.msra.mxu0 %v6748
        %6808 = vmatprep.subr.bf16.mxu0 0
        %6809 = vmatpush1.bf16.msra.mxu0 %v6747
        %6810 = vmatprep.subr.bf16.mxu0 0
        %6811 = vmatpush1.bf16.msra.mxu0 %v6746
        %6812 = vmatprep.subr.bf16.mxu0 0
        %6813 = vmatpush1.bf16.msra.mxu0 %v6745
        %6814 = vmatprep.subr.bf16.mxu0 0
        %6815 = vmatpush1.bf16.msra.mxu0 %v6744
        %6816 = vmatprep.subr.bf16.mxu0 0
        %6817 = vmatpush1.bf16.msra.mxu0 %v6743
        %6818 = vmatprep.subr.bf16.mxu0 0
        %6819 = vmatpush2.bf16.msra.mxu0 %v6758
        %6820 = vmatprep.subr.bf16.mxu0 0
        %6821 = vmatpush2.bf16.msra.mxu0 %v6757
        %6822 = vmatprep.subr.bf16.mxu0 0
        %6823 = vmatpush2.bf16.msra.mxu0 %v6756
        %6824 = vmatprep.subr.bf16.mxu0 0
        %6825 = vmatpush2.bf16.msra.mxu0 %v6755
        %6826 = vmatprep.subr.bf16.mxu0 0
        %6827 = vmatpush2.bf16.msra.mxu0 %v6754
        %6828 = vmatprep.subr.bf16.mxu0 0
        %6829 = vmatpush2.bf16.msra.mxu0 %v6753
        %6830 = vmatprep.subr.bf16.mxu0 0
        %6831 = vmatpush2.bf16.msra.mxu0 %v6752
        %6832 = vmatprep.subr.bf16.mxu0 0
        %6833 = vmatpush2.bf16.msra.mxu0 %v6751
        %6834 = vmatprep.mubr.bf16.mxu0 %v6625
        %6835 = vmatmul.mubr.bf16.gmra.mxu0 %v6624
        %v6836 = vpop.f32.mrf.mxu0
        %v6837 = vadd.f32 0.0, %v6836
        %v6838 = vpop.f32.mrf.mxu0
        %v6839 = vpop.f32.mrf.mxu0
        %v6840 = vpop.f32.mrf.mxu0
        %6841 = vdwg.mxu0
        %6842 = vmatprep.subr.bf16.mxu0 0
        %6843 = vmatpush1.bf16.msra.mxu0 %v6766
        %6844 = vmatprep.subr.bf16.mxu0 0
        %6845 = vmatpush1.bf16.msra.mxu0 %v6765
        %6846 = vmatprep.subr.bf16.mxu0 0
        %6847 = vmatpush1.bf16.msra.mxu0 %v6764
        %6848 = vmatprep.subr.bf16.mxu0 0
        %6849 = vmatpush1.bf16.msra.mxu0 %v6763
        %6850 = vmatprep.subr.bf16.mxu0 0
        %6851 = vmatpush1.bf16.msra.mxu0 %v6762
        %6852 = vmatprep.subr.bf16.mxu0 0
        %6853 = vmatpush1.bf16.msra.mxu0 %v6761
        %6854 = vmatprep.subr.bf16.mxu0 0
        %6855 = vmatpush1.bf16.msra.mxu0 %v6760
        %6856 = vmatprep.subr.bf16.mxu0 0
        %6857 = vmatpush1.bf16.msra.mxu0 %v6759
        %6858 = vmatprep.subr.bf16.mxu0 0
        %6859 = vmatpush2.bf16.msra.mxu0 0
        %6860 = vmatprep.subr.bf16.mxu0 0
        %6861 = vmatpush2.bf16.msra.mxu0 0
        %6862 = vmatprep.subr.bf16.mxu0 0
        %6863 = vmatpush2.bf16.msra.mxu0 0
        %6864 = vmatprep.subr.bf16.mxu0 0
        %6865 = vmatpush2.bf16.msra.mxu0 0
        %6866 = vmatprep.subr.bf16.mxu0 0
        %6867 = vmatpush2.bf16.msra.mxu0 %v6770
        %6868 = vmatprep.subr.bf16.mxu0 0
        %6869 = vmatpush2.bf16.msra.mxu0 %v6769
        %6870 = vmatprep.subr.bf16.mxu0 0
        %6871 = vmatpush2.bf16.msra.mxu0 %v6768
        %6872 = vmatprep.subr.bf16.mxu0 0
        %6873 = vmatpush2.bf16.msra.mxu0 %v6767
        %6874 = vmatprep.mubr.bf16.mxu0 %v6800
        %6875 = vmatmul.mubr.bf16.gmra.mxu0 %v6626
        %v6876 = vpop.f32.mrf.mxu0
        %v6877 = vadd.f32 %v6837, %v6876
        %v6878 = vpop.f32.mrf.mxu0
        %v6879 = vpop.f32.mrf.mxu0
        %v6880 = vpop.f32.mrf.mxu0
        %6881 = vdwg.mxu0
        %v6882 = vadd.f32 %v6293, %v6877
        %v6883 = vrot.slane %v5077, 3
        %v6884 = vrot.slane %v5078, 3
        %v6885 = vrot.slane %v5079, 3
        %v6886 = vrot.slane %v5080, 3
        %v6891 = vsel %vm1513, %v6886, 0
        %6893 = vmatprep.subr.bf16.mxu0 0
        %6894 = vmatpush1.bf16.msra.mxu0 %v6750
        %6895 = vmatprep.subr.bf16.mxu0 0
        %6896 = vmatpush1.bf16.msra.mxu0 %v6749
        %6897 = vmatprep.subr.bf16.mxu0 0
        %6898 = vmatpush1.bf16.msra.mxu0 %v6748
        %6899 = vmatprep.subr.bf16.mxu0 0
        %6900 = vmatpush1.bf16.msra.mxu0 %v6747
        %6901 = vmatprep.subr.bf16.mxu0 0
        %6902 = vmatpush1.bf16.msra.mxu0 %v6746
        %6903 = vmatprep.subr.bf16.mxu0 0
        %6904 = vmatpush1.bf16.msra.mxu0 %v6745
        %6905 = vmatprep.subr.bf16.mxu0 0
        %6906 = vmatpush1.bf16.msra.mxu0 %v6744
        %6907 = vmatprep.subr.bf16.mxu0 0
        %6908 = vmatpush1.bf16.msra.mxu0 %v6743
        %6909 = vmatprep.subr.bf16.mxu0 0
        %6910 = vmatpush2.bf16.msra.mxu0 %v6758
        %6911 = vmatprep.subr.bf16.mxu0 0
        %6912 = vmatpush2.bf16.msra.mxu0 %v6757
        %6913 = vmatprep.subr.bf16.mxu0 0
        %6914 = vmatpush2.bf16.msra.mxu0 %v6756
        %6915 = vmatprep.subr.bf16.mxu0 0
        %6916 = vmatpush2.bf16.msra.mxu0 %v6755
        %6917 = vmatprep.subr.bf16.mxu0 0
        %6918 = vmatpush2.bf16.msra.mxu0 %v6754
        %6919 = vmatprep.subr.bf16.mxu0 0
        %6920 = vmatpush2.bf16.msra.mxu0 %v6753
        %6921 = vmatprep.subr.bf16.mxu0 0
        %6922 = vmatpush2.bf16.msra.mxu0 %v6752
        %6923 = vmatprep.subr.bf16.mxu0 0
        %6924 = vmatpush2.bf16.msra.mxu0 %v6751
        %6925 = vmatprep.mubr.bf16.mxu0 %v6884
        %6926 = vmatmul.mubr.bf16.gmra.mxu0 %v6883
        %v6927 = vpop.f32.mrf.mxu0
        %v6928 = vadd.f32 0.0, %v6927
        %v6929 = vpop.f32.mrf.mxu0
        %v6930 = vpop.f32.mrf.mxu0
        %v6931 = vpop.f32.mrf.mxu0
        %6932 = vdwg.mxu0
        %6933 = vmatprep.subr.bf16.mxu0 0
        %6934 = vmatpush1.bf16.msra.mxu0 %v6766
        %6935 = vmatprep.subr.bf16.mxu0 0
        %6936 = vmatpush1.bf16.msra.mxu0 %v6765
        %6937 = vmatprep.subr.bf16.mxu0 0
        %6938 = vmatpush1.bf16.msra.mxu0 %v6764
        %6939 = vmatprep.subr.bf16.mxu0 0
        %6940 = vmatpush1.bf16.msra.mxu0 %v6763
        %6941 = vmatprep.subr.bf16.mxu0 0
        %6942 = vmatpush1.bf16.msra.mxu0 %v6762
        %6943 = vmatprep.subr.bf16.mxu0 0
        %6944 = vmatpush1.bf16.msra.mxu0 %v6761
        %6945 = vmatprep.subr.bf16.mxu0 0
        %6946 = vmatpush1.bf16.msra.mxu0 %v6760
        %6947 = vmatprep.subr.bf16.mxu0 0
        %6948 = vmatpush1.bf16.msra.mxu0 %v6759
        %6949 = vmatprep.subr.bf16.mxu0 0
        %6950 = vmatpush2.bf16.msra.mxu0 0
        %6951 = vmatprep.subr.bf16.mxu0 0
        %6952 = vmatpush2.bf16.msra.mxu0 0
        %6953 = vmatprep.subr.bf16.mxu0 0
        %6954 = vmatpush2.bf16.msra.mxu0 0
        %6955 = vmatprep.subr.bf16.mxu0 0
        %6956 = vmatpush2.bf16.msra.mxu0 0
        %6957 = vmatprep.subr.bf16.mxu0 0
        %6958 = vmatpush2.bf16.msra.mxu0 %v6770
        %6959 = vmatprep.subr.bf16.mxu0 0
        %6960 = vmatpush2.bf16.msra.mxu0 %v6769
        %6961 = vmatprep.subr.bf16.mxu0 0
        %6962 = vmatpush2.bf16.msra.mxu0 %v6768
        %6963 = vmatprep.subr.bf16.mxu0 0
        %6964 = vmatpush2.bf16.msra.mxu0 %v6767
        %6965 = vmatprep.mubr.bf16.mxu0 %v6891
        %6966 = vmatmul.mubr.bf16.gmra.mxu0 %v6885
        %v6967 = vpop.f32.mrf.mxu0
        %v6968 = vadd.f32 %v6928, %v6967
        %v6969 = vpop.f32.mrf.mxu0
        %v6970 = vpop.f32.mrf.mxu0
        %v6971 = vpop.f32.mrf.mxu0
        %6972 = vdwg.mxu0
        %v6973 = vadd.f32 %v6384, %v6968
        %v6974 = vrot.slane %v5181, 3
        %v6975 = vrot.slane %v5182, 3
        %v6976 = vrot.slane %v5183, 3
        %v6977 = vrot.slane %v5184, 3
        %v6982 = vsel %vm1513, %v6977, 0
        %6984 = vmatprep.subr.bf16.mxu0 0
        %6985 = vmatpush1.bf16.msra.mxu0 %v6750
        %6986 = vmatprep.subr.bf16.mxu0 0
        %6987 = vmatpush1.bf16.msra.mxu0 %v6749
        %6988 = vmatprep.subr.bf16.mxu0 0
        %6989 = vmatpush1.bf16.msra.mxu0 %v6748
        %6990 = vmatprep.subr.bf16.mxu0 0
        %6991 = vmatpush1.bf16.msra.mxu0 %v6747
        %6992 = vmatprep.subr.bf16.mxu0 0
        %6993 = vmatpush1.bf16.msra.mxu0 %v6746
        %6994 = vmatprep.subr.bf16.mxu0 0
        %6995 = vmatpush1.bf16.msra.mxu0 %v6745
        %6996 = vmatprep.subr.bf16.mxu0 0
        %6997 = vmatpush1.bf16.msra.mxu0 %v6744
        %6998 = vmatprep.subr.bf16.mxu0 0
        %6999 = vmatpush1.bf16.msra.mxu0 %v6743
        %7000 = vmatprep.subr.bf16.mxu0 0
        %7001 = vmatpush2.bf16.msra.mxu0 %v6758
        %7002 = vmatprep.subr.bf16.mxu0 0
        %7003 = vmatpush2.bf16.msra.mxu0 %v6757
        %7004 = vmatprep.subr.bf16.mxu0 0
        %7005 = vmatpush2.bf16.msra.mxu0 %v6756
        %7006 = vmatprep.subr.bf16.mxu0 0
        %7007 = vmatpush2.bf16.msra.mxu0 %v6755
        %7008 = vmatprep.subr.bf16.mxu0 0
        %7009 = vmatpush2.bf16.msra.mxu0 %v6754
        %7010 = vmatprep.subr.bf16.mxu0 0
        %7011 = vmatpush2.bf16.msra.mxu0 %v6753
        %7012 = vmatprep.subr.bf16.mxu0 0
        %7013 = vmatpush2.bf16.msra.mxu0 %v6752
        %7014 = vmatprep.subr.bf16.mxu0 0
        %7015 = vmatpush2.bf16.msra.mxu0 %v6751
        %7016 = vmatprep.mubr.bf16.mxu0 %v6975
        %7017 = vmatmul.mubr.bf16.gmra.mxu0 %v6974
        %v7018 = vpop.f32.mrf.mxu0
        %v7019 = vadd.f32 0.0, %v7018
        %v7020 = vpop.f32.mrf.mxu0
        %v7021 = vpop.f32.mrf.mxu0
        %v7022 = vpop.f32.mrf.mxu0
        %7023 = vdwg.mxu0
        %7024 = vmatprep.subr.bf16.mxu0 0
        %7025 = vmatpush1.bf16.msra.mxu0 %v6766
        %7026 = vmatprep.subr.bf16.mxu0 0
        %7027 = vmatpush1.bf16.msra.mxu0 %v6765
        %7028 = vmatprep.subr.bf16.mxu0 0
        %7029 = vmatpush1.bf16.msra.mxu0 %v6764
        %7030 = vmatprep.subr.bf16.mxu0 0
        %7031 = vmatpush1.bf16.msra.mxu0 %v6763
        %7032 = vmatprep.subr.bf16.mxu0 0
        %7033 = vmatpush1.bf16.msra.mxu0 %v6762
        %7034 = vmatprep.subr.bf16.mxu0 0
        %7035 = vmatpush1.bf16.msra.mxu0 %v6761
        %7036 = vmatprep.subr.bf16.mxu0 0
        %7037 = vmatpush1.bf16.msra.mxu0 %v6760
        %7038 = vmatprep.subr.bf16.mxu0 0
        %7039 = vmatpush1.bf16.msra.mxu0 %v6759
        %7040 = vmatprep.subr.bf16.mxu0 0
        %7041 = vmatpush2.bf16.msra.mxu0 0
        %7042 = vmatprep.subr.bf16.mxu0 0
        %7043 = vmatpush2.bf16.msra.mxu0 0
        %7044 = vmatprep.subr.bf16.mxu0 0
        %7045 = vmatpush2.bf16.msra.mxu0 0
        %7046 = vmatprep.subr.bf16.mxu0 0
        %7047 = vmatpush2.bf16.msra.mxu0 0
        %7048 = vmatprep.subr.bf16.mxu0 0
        %7049 = vmatpush2.bf16.msra.mxu0 %v6770
        %7050 = vmatprep.subr.bf16.mxu0 0
        %7051 = vmatpush2.bf16.msra.mxu0 %v6769
        %7052 = vmatprep.subr.bf16.mxu0 0
        %7053 = vmatpush2.bf16.msra.mxu0 %v6768
        %7054 = vmatprep.subr.bf16.mxu0 0
        %7055 = vmatpush2.bf16.msra.mxu0 %v6767
        %7056 = vmatprep.mubr.bf16.mxu0 %v6982
        %7057 = vmatmul.mubr.bf16.gmra.mxu0 %v6976
        %v7058 = vpop.f32.mrf.mxu0
        %v7059 = vadd.f32 %v7019, %v7058
        %v7060 = vpop.f32.mrf.mxu0
        %v7061 = vpop.f32.mrf.mxu0
        %v7062 = vpop.f32.mrf.mxu0
        %7063 = vdwg.mxu0
        %v7064 = vadd.f32 %v6475, %v7059
        %v7065 = vrot.slane %v5285, 3
        %v7066 = vrot.slane %v5286, 3
        %v7067 = vrot.slane %v5287, 3
        %v7068 = vrot.slane %v5288, 3
        %v7073 = vsel %vm1513, %v7068, 0
        %7075 = vmatprep.subr.bf16.mxu0 0
        %7076 = vmatpush1.bf16.msra.mxu0 %v6750
        %7077 = vmatprep.subr.bf16.mxu0 0
        %7078 = vmatpush1.bf16.msra.mxu0 %v6749
        %7079 = vmatprep.subr.bf16.mxu0 0
        %7080 = vmatpush1.bf16.msra.mxu0 %v6748
        %7081 = vmatprep.subr.bf16.mxu0 0
        %7082 = vmatpush1.bf16.msra.mxu0 %v6747
        %7083 = vmatprep.subr.bf16.mxu0 0
        %7084 = vmatpush1.bf16.msra.mxu0 %v6746
        %7085 = vmatprep.subr.bf16.mxu0 0
        %7086 = vmatpush1.bf16.msra.mxu0 %v6745
        %7087 = vmatprep.subr.bf16.mxu0 0
        %7088 = vmatpush1.bf16.msra.mxu0 %v6744
        %7089 = vmatprep.subr.bf16.mxu0 0
        %7090 = vmatpush1.bf16.msra.mxu0 %v6743
        %7091 = vmatprep.subr.bf16.mxu0 0
        %7092 = vmatpush2.bf16.msra.mxu0 %v6758
        %7093 = vmatprep.subr.bf16.mxu0 0
        %7094 = vmatpush2.bf16.msra.mxu0 %v6757
        %7095 = vmatprep.subr.bf16.mxu0 0
        %7096 = vmatpush2.bf16.msra.mxu0 %v6756
        %7097 = vmatprep.subr.bf16.mxu0 0
        %7098 = vmatpush2.bf16.msra.mxu0 %v6755
        %7099 = vmatprep.subr.bf16.mxu0 0
        %7100 = vmatpush2.bf16.msra.mxu0 %v6754
        %7101 = vmatprep.subr.bf16.mxu0 0
        %7102 = vmatpush2.bf16.msra.mxu0 %v6753
        %7103 = vmatprep.subr.bf16.mxu0 0
        %7104 = vmatpush2.bf16.msra.mxu0 %v6752
        %7105 = vmatprep.subr.bf16.mxu0 0
        %7106 = vmatpush2.bf16.msra.mxu0 %v6751
        %7107 = vmatprep.mubr.bf16.mxu0 %v7066
        %7108 = vmatmul.mubr.bf16.gmra.mxu0 %v7065
        %v7109 = vpop.f32.mrf.mxu0
        %v7110 = vadd.f32 0.0, %v7109
        %v7111 = vpop.f32.mrf.mxu0
        %v7112 = vpop.f32.mrf.mxu0
        %v7113 = vpop.f32.mrf.mxu0
        %7114 = vdwg.mxu0
        %7115 = vmatprep.subr.bf16.mxu0 0
        %7116 = vmatpush1.bf16.msra.mxu0 %v6766
        %7117 = vmatprep.subr.bf16.mxu0 0
        %7118 = vmatpush1.bf16.msra.mxu0 %v6765
        %7119 = vmatprep.subr.bf16.mxu0 0
        %7120 = vmatpush1.bf16.msra.mxu0 %v6764
        %7121 = vmatprep.subr.bf16.mxu0 0
        %7122 = vmatpush1.bf16.msra.mxu0 %v6763
        %7123 = vmatprep.subr.bf16.mxu0 0
        %7124 = vmatpush1.bf16.msra.mxu0 %v6762
        %7125 = vmatprep.subr.bf16.mxu0 0
        %7126 = vmatpush1.bf16.msra.mxu0 %v6761
        %7127 = vmatprep.subr.bf16.mxu0 0
        %7128 = vmatpush1.bf16.msra.mxu0 %v6760
        %7129 = vmatprep.subr.bf16.mxu0 0
        %7130 = vmatpush1.bf16.msra.mxu0 %v6759
        %7131 = vmatprep.subr.bf16.mxu0 0
        %7132 = vmatpush2.bf16.msra.mxu0 0
        %7133 = vmatprep.subr.bf16.mxu0 0
        %7134 = vmatpush2.bf16.msra.mxu0 0
        %7135 = vmatprep.subr.bf16.mxu0 0
        %7136 = vmatpush2.bf16.msra.mxu0 0
        %7137 = vmatprep.subr.bf16.mxu0 0
        %7138 = vmatpush2.bf16.msra.mxu0 0
        %7139 = vmatprep.subr.bf16.mxu0 0
        %7140 = vmatpush2.bf16.msra.mxu0 %v6770
        %7141 = vmatprep.subr.bf16.mxu0 0
        %7142 = vmatpush2.bf16.msra.mxu0 %v6769
        %7143 = vmatprep.subr.bf16.mxu0 0
        %7144 = vmatpush2.bf16.msra.mxu0 %v6768
        %7145 = vmatprep.subr.bf16.mxu0 0
        %7146 = vmatpush2.bf16.msra.mxu0 %v6767
        %7147 = vmatprep.mubr.bf16.mxu0 %v7073
        %7148 = vmatmul.mubr.bf16.gmra.mxu0 %v7067
        %v7149 = vpop.f32.mrf.mxu0
        %v7150 = vadd.f32 %v7110, %v7149
        %v7151 = vpop.f32.mrf.mxu0
        %v7152 = vpop.f32.mrf.mxu0
        %v7153 = vpop.f32.mrf.mxu0
        %7154 = vdwg.mxu0
        %v7155 = vadd.f32 %v6566, %v7150
        %v7156 = vld [vmem:[#allocation14] sm:$0xff]
        %v7157 = vld [vmem:[#allocation14 + $0x8] sm:$0xff]
        %v7158 = vld [vmem:[#allocation14 + $0x10] sm:$0xff]
        %v7159 = vld [vmem:[#allocation14 + $0x18] sm:$0xff]
        %v7160 = vld [vmem:[#allocation15] sm:$0xff]
        %v7161 = vld [vmem:[#allocation15 + $0x8] sm:$0xff]
        %v7162 = vld [vmem:[#allocation15 + $0x10] sm:$0xff]
        %v7163 = vld [vmem:[#allocation15 + $0x18] sm:$0xff]
        %v7164 = vld [vmem:[#allocation15 + $0x20] sm:$0xff]
        %v7165 = vld [vmem:[#allocation15 + $0x28] sm:$0xff]
        %v7166 = vld [vmem:[#allocation17] sm:$0x1]
        %v7168 = vsel %vm1437, 0.0, 0
        %7170 = vmatprep.subr.mxu0 0.0
        %7171 = vmatpush1.msra.mxu0 0.0
        %7172 = vmatprep.subr.mxu0 0.0
        %7173 = vmatpush1.msra.mxu0 0.0
        %7174 = vmatprep.subr.mxu0 0.0
        %7175 = vmatpush1.msra.mxu0 0.0
        %7176 = vmatprep.subr.mxu0 0.0
        %7177 = vmatpush1.msra.mxu0 0.0
        %7178 = vmatprep.subr.mxu0 0.0
        %7179 = vmatpush1.msra.mxu0 0.0
        %7180 = vmatprep.subr.mxu0 0.0
        %7181 = vmatpush1.msra.mxu0 0.0
        %7182 = vmatprep.subr.mxu0 0.0
        %7183 = vmatpush1.msra.mxu0 0.0
        %7184 = vmatprep.subr.mxu0 0.0
        %7185 = vmatpush1.msra.mxu0 0.0
        %7186 = vmatprep.subr.mxu0 0.0
        %7187 = vmatpush1.msra.mxu0 0.0
        %7188 = vmatprep.subr.mxu0 0.0
        %7189 = vmatpush1.msra.mxu0 0.0
        %7190 = vmatprep.subr.mxu0 0.0
        %7191 = vmatpush1.msra.mxu0 0.0
        %7192 = vmatprep.subr.mxu0 0.0
        %7193 = vmatpush1.msra.mxu0 0.0
        %7194 = vmatprep.subr.mxu0 0.0
        %7195 = vmatpush1.msra.mxu0 %v7159
        %7196 = vmatprep.subr.mxu0 0.0
        %7197 = vmatpush1.msra.mxu0 %v7158
        %7198 = vmatprep.subr.mxu0 0.0
        %7199 = vmatpush1.msra.mxu0 %v7157
        %7200 = vmatprep.subr.mxu0 0.0
        %7201 = vmatpush1.msra.mxu0 %v7156
        %7202 = vmatprep.subr.mxu0 0.0
        %7203 = vmatpush2.msra.mxu0 0.0
        %7204 = vmatprep.subr.mxu0 0.0
        %7205 = vmatpush2.msra.mxu0 0.0
        %7206 = vmatprep.subr.mxu0 0.0
        %7207 = vmatpush2.msra.mxu0 0.0
        %7208 = vmatprep.subr.mxu0 0.0
        %7209 = vmatpush2.msra.mxu0 0.0
        %7210 = vmatprep.subr.mxu0 0.0
        %7211 = vmatpush2.msra.mxu0 0.0
        %7212 = vmatprep.subr.mxu0 0.0
        %7213 = vmatpush2.msra.mxu0 0.0
        %7214 = vmatprep.subr.mxu0 0.0
        %7215 = vmatpush2.msra.mxu0 0.0
        %7216 = vmatprep.subr.mxu0 0.0
        %7217 = vmatpush2.msra.mxu0 0.0
        %7218 = vmatprep.subr.mxu0 0.0
        %7219 = vmatpush2.msra.mxu0 0.0
        %7220 = vmatprep.subr.mxu0 0.0
        %7221 = vmatpush2.msra.mxu0 0.0
        %7222 = vmatprep.subr.mxu0 0.0
        %7223 = vmatpush2.msra.mxu0 0.0
        %7224 = vmatprep.subr.mxu0 0.0
        %7225 = vmatpush2.msra.mxu0 0.0
        %7226 = vmatprep.subr.mxu0 0.0
        %7227 = vmatpush2.msra.mxu0 0.0
        %7228 = vmatprep.subr.mxu0 0.0
        %7229 = vmatpush2.msra.mxu0 0.0
        %7230 = vmatprep.subr.mxu0 0.0
        %7231 = vmatpush2.msra.mxu0 0.0
        %7232 = vmatprep.subr.mxu0 0.0
        %7233 = vmatpush2.msra.mxu0 0.0
        %7234 = vmatprep.mubr.f32.mxu0 0.0
        %7235 = vmatmul.mubr.f32.gmra.mxu0 %v7168
        %v7236 = vpop.f32.mrf.mxu0
        %v7237 = vadd.f32 0.0, %v7236
        %v7238 = vpop.f32.mrf.mxu0
        %7239 = vdwg.mxu0
        %v7240 = vadd.f32 %v6882, %v7237
        %v7241 = vxor.u32 %v7240, 2147483648
        %v7242 = vmul.f32 %v7241, 1.442695
        %v7243 = vpow.pop %v7242
        %v7244 = vadd.f32 %v7243, 1.0
        %v7245 = vrcp.pop %v7244
        %v7246 = vmul.f32 1.0, %v7245
        %v7247 = vtanh.pop %v7240
        %v7248 = vmul.f32 %v7246, 0.0
        %7250 = vrot.lane.b32.xlu0 %v7247, 64
        %v7251 = vpop.permute.xlu0 %7250
        %v7253 = vmul.f32 %v7246, %v7251
        %7255 = vrot.lane.b32.xlu0 %v7253, 32
        %v7256 = vpop.permute.xlu0 %7255
        %v7258 = vadd.f32 %v7248, %v7256
        %v7259 = vtanh.pop %v7258
        %7261 = vrot.lane.b32.xlu0 %v7259, 64
        %v7262 = vpop.permute.xlu0 %7261
        %v7264 = vmul.f32 %v7246, %v7262
        %v7266 = vlaneseq
        %v7267 = vshrl.u32 %v7266, 7
        %v7268 = vsub.s32 0, %v7267
        %v7269 = vrot.slane %v7264, %v7268
        %7270 = vrot.lane.b32.xlu0 %v7269, 32
        %v7271 = vpop.permute.xlu0 %7270
        %v7273 = vsel %vm1437, %v7271, 0.0
        %vm7274 = vcmask 392192
        %v7276 = vsel %vm7274, %v7273, 0
        %7278 = vmatprep.subr.mxu0 0.0
        %7279 = vmatpush1.msra.mxu0 0.0
        %7280 = vmatprep.subr.mxu0 0.0
        %7281 = vmatpush1.msra.mxu0 0.0
        %7282 = vmatprep.subr.mxu0 0.0
        %7283 = vmatpush1.msra.mxu0 0.0
        %7284 = vmatprep.subr.mxu0 0.0
        %7285 = vmatpush1.msra.mxu0 0.0
        %7286 = vmatprep.subr.mxu0 0.0
        %7287 = vmatpush1.msra.mxu0 0.0
        %7288 = vmatprep.subr.mxu0 0.0
        %7289 = vmatpush1.msra.mxu0 0.0
        %7290 = vmatprep.subr.mxu0 0.0
        %7291 = vmatpush1.msra.mxu0 0.0
        %7292 = vmatprep.subr.mxu0 0.0
        %7293 = vmatpush1.msra.mxu0 0.0
        %7294 = vmatprep.subr.mxu0 0.0
        %7295 = vmatpush1.msra.mxu0 0.0
        %7296 = vmatprep.subr.mxu0 0.0
        %7297 = vmatpush1.msra.mxu0 0.0
        %7298 = vmatprep.subr.mxu0 0.0
        %7299 = vmatpush1.msra.mxu0 %v7165
        %7300 = vmatprep.subr.mxu0 0.0
        %7301 = vmatpush1.msra.mxu0 %v7164
        %7302 = vmatprep.subr.mxu0 0.0
        %7303 = vmatpush1.msra.mxu0 %v7163
        %7304 = vmatprep.subr.mxu0 0.0
        %7305 = vmatpush1.msra.mxu0 %v7162
        %7306 = vmatprep.subr.mxu0 0.0
        %7307 = vmatpush1.msra.mxu0 %v7161
        %7308 = vmatprep.subr.mxu0 0.0
        %7309 = vmatpush1.msra.mxu0 %v7160
        %7310 = vmatprep.subr.mxu0 0.0
        %7311 = vmatpush2.msra.mxu0 0.0
        %7312 = vmatprep.subr.mxu0 0.0
        %7313 = vmatpush2.msra.mxu0 0.0
        %7314 = vmatprep.subr.mxu0 0.0
        %7315 = vmatpush2.msra.mxu0 0.0
        %7316 = vmatprep.subr.mxu0 0.0
        %7317 = vmatpush2.msra.mxu0 0.0
        %7318 = vmatprep.subr.mxu0 0.0
        %7319 = vmatpush2.msra.mxu0 0.0
        %7320 = vmatprep.subr.mxu0 0.0
        %7321 = vmatpush2.msra.mxu0 0.0
        %7322 = vmatprep.subr.mxu0 0.0
        %7323 = vmatpush2.msra.mxu0 0.0
        %7324 = vmatprep.subr.mxu0 0.0
        %7325 = vmatpush2.msra.mxu0 0.0
        %7326 = vmatprep.subr.mxu0 0.0
        %7327 = vmatpush2.msra.mxu0 0.0
        %7328 = vmatprep.subr.mxu0 0.0
        %7329 = vmatpush2.msra.mxu0 0.0
        %7330 = vmatprep.subr.mxu0 0.0
        %7331 = vmatpush2.msra.mxu0 0.0
        %7332 = vmatprep.subr.mxu0 0.0
        %7333 = vmatpush2.msra.mxu0 0.0
        %7334 = vmatprep.subr.mxu0 0.0
        %7335 = vmatpush2.msra.mxu0 0.0
        %7336 = vmatprep.subr.mxu0 0.0
        %7337 = vmatpush2.msra.mxu0 0.0
        %7338 = vmatprep.subr.mxu0 0.0
        %7339 = vmatpush2.msra.mxu0 0.0
        %7340 = vmatprep.subr.mxu0 0.0
        %7341 = vmatpush2.msra.mxu0 0.0
        %7342 = vmatprep.mubr.f32.mxu0 0.0
        %7343 = vmatmul.mubr.f32.gmra.mxu0 %v7276
        %v7344 = vpop.f32.mrf.mxu0
        %v7345 = vadd.f32 %v7166, %v7344
        %v7346 = vpop.f32.mrf.mxu0
        %7347 = vdwg.mxu0
        %v7348 = vxor.u32 %v7345, 2147483648
        %v7349 = vmul.f32 %v7348, 1.442695
        %v7350 = vpow.pop %v7349
        %v7351 = vadd.f32 %v7350, 1.0
        %v7352 = vrcp.pop %v7351
        %v7353 = vmul.f32 1.0, %v7352
        %v7354 = vtanh.pop %v7345
        %v7355 = vmul.f32 %v7353, 0.0
        %7357 = vrot.lane.b32.xlu0 %v7354, 96
        %v7358 = vpop.permute.xlu0 %7357
        %v7360 = vmul.f32 %v7353, %v7358
        %7362 = vrot.lane.b32.xlu0 %v7360, 16
        %v7363 = vpop.permute.xlu0 %7362
        %v7365 = vadd.f32 %v7355, %v7363
        %v7366 = vtanh.pop %v7365
        %7368 = vrot.lane.b32.xlu0 %v7366, 32
        %v7369 = vpop.permute.xlu0 %7368
        %v7371 = vmul.f32 %v7353, %v7369
        %v7372 = vsel %vm1437, %v7271, 0
        %7374 = vmatprep.subr.mxu0 0.0
        %7375 = vmatpush1.msra.mxu0 0.0
        %7376 = vmatprep.subr.mxu0 0.0
        %7377 = vmatpush1.msra.mxu0 0.0
        %7378 = vmatprep.subr.mxu0 0.0
        %7379 = vmatpush1.msra.mxu0 0.0
        %7380 = vmatprep.subr.mxu0 0.0
        %7381 = vmatpush1.msra.mxu0 0.0
        %7382 = vmatprep.subr.mxu0 0.0
        %7383 = vmatpush1.msra.mxu0 0.0
        %7384 = vmatprep.subr.mxu0 0.0
        %7385 = vmatpush1.msra.mxu0 0.0
        %7386 = vmatprep.subr.mxu0 0.0
        %7387 = vmatpush1.msra.mxu0 0.0
        %7388 = vmatprep.subr.mxu0 0.0
        %7389 = vmatpush1.msra.mxu0 0.0
        %7390 = vmatprep.subr.mxu0 0.0
        %7391 = vmatpush1.msra.mxu0 0.0
        %7392 = vmatprep.subr.mxu0 0.0
        %7393 = vmatpush1.msra.mxu0 0.0
        %7394 = vmatprep.subr.mxu0 0.0
        %7395 = vmatpush1.msra.mxu0 0.0
        %7396 = vmatprep.subr.mxu0 0.0
        %7397 = vmatpush1.msra.mxu0 0.0
        %7398 = vmatprep.subr.mxu0 0.0
        %7399 = vmatpush1.msra.mxu0 %v7159
        %7400 = vmatprep.subr.mxu0 0.0
        %7401 = vmatpush1.msra.mxu0 %v7158
        %7402 = vmatprep.subr.mxu0 0.0
        %7403 = vmatpush1.msra.mxu0 %v7157
        %7404 = vmatprep.subr.mxu0 0.0
        %7405 = vmatpush1.msra.mxu0 %v7156
        %7406 = vmatprep.subr.mxu0 0.0
        %7407 = vmatpush2.msra.mxu0 0.0
        %7408 = vmatprep.subr.mxu0 0.0
        %7409 = vmatpush2.msra.mxu0 0.0
        %7410 = vmatprep.subr.mxu0 0.0
        %7411 = vmatpush2.msra.mxu0 0.0
        %7412 = vmatprep.subr.mxu0 0.0
        %7413 = vmatpush2.msra.mxu0 0.0
        %7414 = vmatprep.subr.mxu0 0.0
        %7415 = vmatpush2.msra.mxu0 0.0
        %7416 = vmatprep.subr.mxu0 0.0
        %7417 = vmatpush2.msra.mxu0 0.0
        %7418 = vmatprep.subr.mxu0 0.0
        %7419 = vmatpush2.msra.mxu0 0.0
        %7420 = vmatprep.subr.mxu0 0.0
        %7421 = vmatpush2.msra.mxu0 0.0
        %7422 = vmatprep.subr.mxu0 0.0
        %7423 = vmatpush2.msra.mxu0 0.0
        %7424 = vmatprep.subr.mxu0 0.0
        %7425 = vmatpush2.msra.mxu0 0.0
        %7426 = vmatprep.subr.mxu0 0.0
        %7427 = vmatpush2.msra.mxu0 0.0
        %7428 = vmatprep.subr.mxu0 0.0
        %7429 = vmatpush2.msra.mxu0 0.0
        %7430 = vmatprep.subr.mxu0 0.0
        %7431 = vmatpush2.msra.mxu0 0.0
        %7432 = vmatprep.subr.mxu0 0.0
        %7433 = vmatpush2.msra.mxu0 0.0
        %7434 = vmatprep.subr.mxu0 0.0
        %7435 = vmatpush2.msra.mxu0 0.0
        %7436 = vmatprep.subr.mxu0 0.0
        %7437 = vmatpush2.msra.mxu0 0.0
        %7438 = vmatprep.mubr.f32.mxu0 0.0
        %7439 = vmatmul.mubr.f32.gmra.mxu0 %v7372
        %v7440 = vpop.f32.mrf.mxu0
        %v7441 = vadd.f32 0.0, %v7440
        %v7442 = vpop.f32.mrf.mxu0
        %7443 = vdwg.mxu0
        %v7444 = vadd.f32 %v6973, %v7441
        %v7445 = vxor.u32 %v7444, 2147483648
        %v7446 = vmul.f32 %v7445, 1.442695
        %v7447 = vpow.pop %v7446
        %v7448 = vadd.f32 %v7447, 1.0
        %v7449 = vrcp.pop %v7448
        %v7450 = vmul.f32 1.0, %v7449
        %v7451 = vtanh.pop %v7444
        %v7452 = vmul.f32 %v7450, %v7258
        %7454 = vrot.lane.b32.xlu0 %v7451, 64
        %v7455 = vpop.permute.xlu0 %7454
        %v7457 = vmul.f32 %v7450, %v7455
        %7459 = vrot.lane.b32.xlu0 %v7457, 32
        %v7460 = vpop.permute.xlu0 %7459
        %v7462 = vadd.f32 %v7452, %v7460
        %v7463 = vtanh.pop %v7462
        %7465 = vrot.lane.b32.xlu0 %v7463, 64
        %v7466 = vpop.permute.xlu0 %7465
        %v7468 = vmul.f32 %v7450, %v7466
        %v7470 = vlaneseq
        %v7471 = vshrl.u32 %v7470, 7
        %v7472 = vsub.s32 0, %v7471
        %v7473 = vrot.slane %v7468, %v7472
        %7474 = vrot.lane.b32.xlu0 %v7473, 32
        %v7475 = vpop.permute.xlu0 %7474
        %7478 = vrot.lane.b32.xlu0 %v7371, 112
        %v7479 = vpop.permute.xlu0 %7478
        %v7481 = vsel %vm1437, %v7475, %v7479
        %v7483 = vsel %vm7274, %v7481, 0
        %7485 = vmatprep.subr.mxu0 0.0
        %7486 = vmatpush1.msra.mxu0 0.0
        %7487 = vmatprep.subr.mxu0 0.0
        %7488 = vmatpush1.msra.mxu0 0.0
        %7489 = vmatprep.subr.mxu0 0.0
        %7490 = vmatpush1.msra.mxu0 0.0
        %7491 = vmatprep.subr.mxu0 0.0
        %7492 = vmatpush1.msra.mxu0 0.0
        %7493 = vmatprep.subr.mxu0 0.0
        %7494 = vmatpush1.msra.mxu0 0.0
        %7495 = vmatprep.subr.mxu0 0.0
        %7496 = vmatpush1.msra.mxu0 0.0
        %7497 = vmatprep.subr.mxu0 0.0
        %7498 = vmatpush1.msra.mxu0 0.0
        %7499 = vmatprep.subr.mxu0 0.0
        %7500 = vmatpush1.msra.mxu0 0.0
        %7501 = vmatprep.subr.mxu0 0.0
        %7502 = vmatpush1.msra.mxu0 0.0
        %7503 = vmatprep.subr.mxu0 0.0
        %7504 = vmatpush1.msra.mxu0 0.0
        %7505 = vmatprep.subr.mxu0 0.0
        %7506 = vmatpush1.msra.mxu0 %v7165
        %7507 = vmatprep.subr.mxu0 0.0
        %7508 = vmatpush1.msra.mxu0 %v7164
        %7509 = vmatprep.subr.mxu0 0.0
        %7510 = vmatpush1.msra.mxu0 %v7163
        %7511 = vmatprep.subr.mxu0 0.0
        %7512 = vmatpush1.msra.mxu0 %v7162
        %7513 = vmatprep.subr.mxu0 0.0
        %7514 = vmatpush1.msra.mxu0 %v7161
        %7515 = vmatprep.subr.mxu0 0.0
        %7516 = vmatpush1.msra.mxu0 %v7160
        %7517 = vmatprep.subr.mxu0 0.0
        %7518 = vmatpush2.msra.mxu0 0.0
        %7519 = vmatprep.subr.mxu0 0.0
        %7520 = vmatpush2.msra.mxu0 0.0
        %7521 = vmatprep.subr.mxu0 0.0
        %7522 = vmatpush2.msra.mxu0 0.0
        %7523 = vmatprep.subr.mxu0 0.0
        %7524 = vmatpush2.msra.mxu0 0.0
        %7525 = vmatprep.subr.mxu0 0.0
        %7526 = vmatpush2.msra.mxu0 0.0
        %7527 = vmatprep.subr.mxu0 0.0
        %7528 = vmatpush2.msra.mxu0 0.0
        %7529 = vmatprep.subr.mxu0 0.0
        %7530 = vmatpush2.msra.mxu0 0.0
        %7531 = vmatprep.subr.mxu0 0.0
        %7532 = vmatpush2.msra.mxu0 0.0
        %7533 = vmatprep.subr.mxu0 0.0
        %7534 = vmatpush2.msra.mxu0 0.0
        %7535 = vmatprep.subr.mxu0 0.0
        %7536 = vmatpush2.msra.mxu0 0.0
        %7537 = vmatprep.subr.mxu0 0.0
        %7538 = vmatpush2.msra.mxu0 0.0
        %7539 = vmatprep.subr.mxu0 0.0
        %7540 = vmatpush2.msra.mxu0 0.0
        %7541 = vmatprep.subr.mxu0 0.0
        %7542 = vmatpush2.msra.mxu0 0.0
        %7543 = vmatprep.subr.mxu0 0.0
        %7544 = vmatpush2.msra.mxu0 0.0
        %7545 = vmatprep.subr.mxu0 0.0
        %7546 = vmatpush2.msra.mxu0 0.0
        %7547 = vmatprep.subr.mxu0 0.0
        %7548 = vmatpush2.msra.mxu0 0.0
        %7549 = vmatprep.mubr.f32.mxu0 0.0
        %7550 = vmatmul.mubr.f32.gmra.mxu0 %v7483
        %v7551 = vpop.f32.mrf.mxu0
        %v7552 = vadd.f32 %v7166, %v7551
        %v7553 = vpop.f32.mrf.mxu0
        %7554 = vdwg.mxu0
        %v7555 = vxor.u32 %v7552, 2147483648
        %v7556 = vmul.f32 %v7555, 1.442695
        %v7557 = vpow.pop %v7556
        %v7558 = vadd.f32 %v7557, 1.0
        %v7559 = vrcp.pop %v7558
        %v7560 = vmul.f32 1.0, %v7559
        %v7561 = vtanh.pop %v7552
        %v7562 = vmul.f32 %v7560, %v7365
        %7564 = vrot.lane.b32.xlu0 %v7561, 96
        %v7565 = vpop.permute.xlu0 %7564
        %v7567 = vmul.f32 %v7560, %v7565
        %7569 = vrot.lane.b32.xlu0 %v7567, 16
        %v7570 = vpop.permute.xlu0 %7569
        %v7572 = vadd.f32 %v7562, %v7570
        %v7573 = vtanh.pop %v7572
        %7575 = vrot.lane.b32.xlu0 %v7573, 32
        %v7576 = vpop.permute.xlu0 %7575
        %v7578 = vmul.f32 %v7560, %v7576
        %v7579 = vsel %vm1437, %v7475, 0
        %7581 = vmatprep.subr.mxu0 0.0
        %7582 = vmatpush1.msra.mxu0 0.0
        %7583 = vmatprep.subr.mxu0 0.0
        %7584 = vmatpush1.msra.mxu0 0.0
        %7585 = vmatprep.subr.mxu0 0.0
        %7586 = vmatpush1.msra.mxu0 0.0
        %7587 = vmatprep.subr.mxu0 0.0
        %7588 = vmatpush1.msra.mxu0 0.0
        %7589 = vmatprep.subr.mxu0 0.0
        %7590 = vmatpush1.msra.mxu0 0.0
        %7591 = vmatprep.subr.mxu0 0.0
        %7592 = vmatpush1.msra.mxu0 0.0
        %7593 = vmatprep.subr.mxu0 0.0
        %7594 = vmatpush1.msra.mxu0 0.0
        %7595 = vmatprep.subr.mxu0 0.0
        %7596 = vmatpush1.msra.mxu0 0.0
        %7597 = vmatprep.subr.mxu0 0.0
        %7598 = vmatpush1.msra.mxu0 0.0
        %7599 = vmatprep.subr.mxu0 0.0
        %7600 = vmatpush1.msra.mxu0 0.0
        %7601 = vmatprep.subr.mxu0 0.0
        %7602 = vmatpush1.msra.mxu0 0.0
        %7603 = vmatprep.subr.mxu0 0.0
        %7604 = vmatpush1.msra.mxu0 0.0
        %7605 = vmatprep.subr.mxu0 0.0
        %7606 = vmatpush1.msra.mxu0 %v7159
        %7607 = vmatprep.subr.mxu0 0.0
        %7608 = vmatpush1.msra.mxu0 %v7158
        %7609 = vmatprep.subr.mxu0 0.0
        %7610 = vmatpush1.msra.mxu0 %v7157
        %7611 = vmatprep.subr.mxu0 0.0
        %7612 = vmatpush1.msra.mxu0 %v7156
        %7613 = vmatprep.subr.mxu0 0.0
        %7614 = vmatpush2.msra.mxu0 0.0
        %7615 = vmatprep.subr.mxu0 0.0
        %7616 = vmatpush2.msra.mxu0 0.0
        %7617 = vmatprep.subr.mxu0 0.0
        %7618 = vmatpush2.msra.mxu0 0.0
        %7619 = vmatprep.subr.mxu0 0.0
        %7620 = vmatpush2.msra.mxu0 0.0
        %7621 = vmatprep.subr.mxu0 0.0
        %7622 = vmatpush2.msra.mxu0 0.0
        %7623 = vmatprep.subr.mxu0 0.0
        %7624 = vmatpush2.msra.mxu0 0.0
        %7625 = vmatprep.subr.mxu0 0.0
        %7626 = vmatpush2.msra.mxu0 0.0
        %7627 = vmatprep.subr.mxu0 0.0
        %7628 = vmatpush2.msra.mxu0 0.0
        %7629 = vmatprep.subr.mxu0 0.0
        %7630 = vmatpush2.msra.mxu0 0.0
        %7631 = vmatprep.subr.mxu0 0.0
        %7632 = vmatpush2.msra.mxu0 0.0
        %7633 = vmatprep.subr.mxu0 0.0
        %7634 = vmatpush2.msra.mxu0 0.0
        %7635 = vmatprep.subr.mxu0 0.0
        %7636 = vmatpush2.msra.mxu0 0.0
        %7637 = vmatprep.subr.mxu0 0.0
        %7638 = vmatpush2.msra.mxu0 0.0
        %7639 = vmatprep.subr.mxu0 0.0
        %7640 = vmatpush2.msra.mxu0 0.0
        %7641 = vmatprep.subr.mxu0 0.0
        %7642 = vmatpush2.msra.mxu0 0.0
        %7643 = vmatprep.subr.mxu0 0.0
        %7644 = vmatpush2.msra.mxu0 0.0
        %7645 = vmatprep.mubr.f32.mxu0 0.0
        %7646 = vmatmul.mubr.f32.gmra.mxu0 %v7579
        %v7647 = vpop.f32.mrf.mxu0
        %v7648 = vadd.f32 0.0, %v7647
        %v7649 = vpop.f32.mrf.mxu0
        %7650 = vdwg.mxu0
        %v7651 = vadd.f32 %v7064, %v7648
        %v7652 = vxor.u32 %v7651, 2147483648
        %v7653 = vmul.f32 %v7652, 1.442695
        %v7654 = vpow.pop %v7653
        %v7655 = vadd.f32 %v7654, 1.0
        %v7656 = vrcp.pop %v7655
        %v7657 = vmul.f32 1.0, %v7656
        %v7658 = vtanh.pop %v7651
        %v7659 = vmul.f32 %v7657, %v7462
        %7661 = vrot.lane.b32.xlu0 %v7658, 64
        %v7662 = vpop.permute.xlu0 %7661
        %v7664 = vmul.f32 %v7657, %v7662
        %7666 = vrot.lane.b32.xlu0 %v7664, 32
        %v7667 = vpop.permute.xlu0 %7666
        %v7669 = vadd.f32 %v7659, %v7667
        %v7670 = vtanh.pop %v7669
        %7672 = vrot.lane.b32.xlu0 %v7670, 64
        %v7673 = vpop.permute.xlu0 %7672
        %v7675 = vmul.f32 %v7657, %v7673
        %v7677 = vlaneseq
        %v7678 = vshrl.u32 %v7677, 7
        %v7679 = vsub.s32 0, %v7678
        %v7680 = vrot.slane %v7675, %v7679
        %7681 = vrot.lane.b32.xlu0 %v7680, 32
        %v7682 = vpop.permute.xlu0 %7681
        %7685 = vrot.lane.b32.xlu0 %v7578, 112
        %v7686 = vpop.permute.xlu0 %7685
        %v7688 = vsel %vm1437, %v7682, %v7686
        %v7690 = vsel %vm7274, %v7688, 0
        %7692 = vmatprep.subr.mxu0 0.0
        %7693 = vmatpush1.msra.mxu0 0.0
        %7694 = vmatprep.subr.mxu0 0.0
        %7695 = vmatpush1.msra.mxu0 0.0
        %7696 = vmatprep.subr.mxu0 0.0
        %7697 = vmatpush1.msra.mxu0 0.0
        %7698 = vmatprep.subr.mxu0 0.0
        %7699 = vmatpush1.msra.mxu0 0.0
        %7700 = vmatprep.subr.mxu0 0.0
        %7701 = vmatpush1.msra.mxu0 0.0
        %7702 = vmatprep.subr.mxu0 0.0
        %7703 = vmatpush1.msra.mxu0 0.0
        %7704 = vmatprep.subr.mxu0 0.0
        %7705 = vmatpush1.msra.mxu0 0.0
        %7706 = vmatprep.subr.mxu0 0.0
        %7707 = vmatpush1.msra.mxu0 0.0
        %7708 = vmatprep.subr.mxu0 0.0
        %7709 = vmatpush1.msra.mxu0 0.0
        %7710 = vmatprep.subr.mxu0 0.0
        %7711 = vmatpush1.msra.mxu0 0.0
        %7712 = vmatprep.subr.mxu0 0.0
        %7713 = vmatpush1.msra.mxu0 %v7165
        %7714 = vmatprep.subr.mxu0 0.0
        %7715 = vmatpush1.msra.mxu0 %v7164
        %7716 = vmatprep.subr.mxu0 0.0
        %7717 = vmatpush1.msra.mxu0 %v7163
        %7718 = vmatprep.subr.mxu0 0.0
        %7719 = vmatpush1.msra.mxu0 %v7162
        %7720 = vmatprep.subr.mxu0 0.0
        %7721 = vmatpush1.msra.mxu0 %v7161
        %7722 = vmatprep.subr.mxu0 0.0
        %7723 = vmatpush1.msra.mxu0 %v7160
        %7724 = vmatprep.subr.mxu0 0.0
        %7725 = vmatpush2.msra.mxu0 0.0
        %7726 = vmatprep.subr.mxu0 0.0
        %7727 = vmatpush2.msra.mxu0 0.0
        %7728 = vmatprep.subr.mxu0 0.0
        %7729 = vmatpush2.msra.mxu0 0.0
        %7730 = vmatprep.subr.mxu0 0.0
        %7731 = vmatpush2.msra.mxu0 0.0
        %7732 = vmatprep.subr.mxu0 0.0
        %7733 = vmatpush2.msra.mxu0 0.0
        %7734 = vmatprep.subr.mxu0 0.0
        %7735 = vmatpush2.msra.mxu0 0.0
        %7736 = vmatprep.subr.mxu0 0.0
        %7737 = vmatpush2.msra.mxu0 0.0
        %7738 = vmatprep.subr.mxu0 0.0
        %7739 = vmatpush2.msra.mxu0 0.0
        %7740 = vmatprep.subr.mxu0 0.0
        %7741 = vmatpush2.msra.mxu0 0.0
        %7742 = vmatprep.subr.mxu0 0.0
        %7743 = vmatpush2.msra.mxu0 0.0
        %7744 = vmatprep.subr.mxu0 0.0
        %7745 = vmatpush2.msra.mxu0 0.0
        %7746 = vmatprep.subr.mxu0 0.0
        %7747 = vmatpush2.msra.mxu0 0.0
        %7748 = vmatprep.subr.mxu0 0.0
        %7749 = vmatpush2.msra.mxu0 0.0
        %7750 = vmatprep.subr.mxu0 0.0
        %7751 = vmatpush2.msra.mxu0 0.0
        %7752 = vmatprep.subr.mxu0 0.0
        %7753 = vmatpush2.msra.mxu0 0.0
        %7754 = vmatprep.subr.mxu0 0.0
        %7755 = vmatpush2.msra.mxu0 0.0
        %7756 = vmatprep.mubr.f32.mxu0 0.0
        %7757 = vmatmul.mubr.f32.gmra.mxu0 %v7690
        %v7758 = vpop.f32.mrf.mxu0
        %v7759 = vadd.f32 %v7166, %v7758
        %v7760 = vpop.f32.mrf.mxu0
        %7761 = vdwg.mxu0
        %v7762 = vxor.u32 %v7759, 2147483648
        %v7763 = vmul.f32 %v7762, 1.442695
        %v7764 = vpow.pop %v7763
        %v7765 = vadd.f32 %v7764, 1.0
        %v7766 = vrcp.pop %v7765
        %v7767 = vmul.f32 1.0, %v7766
        %v7768 = vtanh.pop %v7759
        %v7769 = vmul.f32 %v7767, %v7572
        %7771 = vrot.lane.b32.xlu0 %v7768, 96
        %v7772 = vpop.permute.xlu0 %7771
        %v7774 = vmul.f32 %v7767, %v7772
        %7776 = vrot.lane.b32.xlu0 %v7774, 16
        %v7777 = vpop.permute.xlu0 %7776
        %v7779 = vadd.f32 %v7769, %v7777
        %v7780 = vtanh.pop %v7779
        %7782 = vrot.lane.b32.xlu0 %v7780, 32
        %v7783 = vpop.permute.xlu0 %7782
        %v7785 = vmul.f32 %v7767, %v7783
        %v7786 = vsel %vm1437, %v7682, 0
        %7788 = vmatprep.subr.mxu0 0.0
        %7789 = vmatpush1.msra.mxu0 0.0
        %7790 = vmatprep.subr.mxu0 0.0
        %7791 = vmatpush1.msra.mxu0 0.0
        %7792 = vmatprep.subr.mxu0 0.0
        %7793 = vmatpush1.msra.mxu0 0.0
        %7794 = vmatprep.subr.mxu0 0.0
        %7795 = vmatpush1.msra.mxu0 0.0
        %7796 = vmatprep.subr.mxu0 0.0
        %7797 = vmatpush1.msra.mxu0 0.0
        %7798 = vmatprep.subr.mxu0 0.0
        %7799 = vmatpush1.msra.mxu0 0.0
        %7800 = vmatprep.subr.mxu0 0.0
        %7801 = vmatpush1.msra.mxu0 0.0
        %7802 = vmatprep.subr.mxu0 0.0
        %7803 = vmatpush1.msra.mxu0 0.0
        %7804 = vmatprep.subr.mxu0 0.0
        %7805 = vmatpush1.msra.mxu0 0.0
        %7806 = vmatprep.subr.mxu0 0.0
        %7807 = vmatpush1.msra.mxu0 0.0
        %7808 = vmatprep.subr.mxu0 0.0
        %7809 = vmatpush1.msra.mxu0 0.0
        %7810 = vmatprep.subr.mxu0 0.0
        %7811 = vmatpush1.msra.mxu0 0.0
        %7812 = vmatprep.subr.mxu0 0.0
        %7813 = vmatpush1.msra.mxu0 %v7159
        %7814 = vmatprep.subr.mxu0 0.0
        %7815 = vmatpush1.msra.mxu0 %v7158
        %7816 = vmatprep.subr.mxu0 0.0
        %7817 = vmatpush1.msra.mxu0 %v7157
        %7818 = vmatprep.subr.mxu0 0.0
        %7819 = vmatpush1.msra.mxu0 %v7156
        %7820 = vmatprep.subr.mxu0 0.0
        %7821 = vmatpush2.msra.mxu0 0.0
        %7822 = vmatprep.subr.mxu0 0.0
        %7823 = vmatpush2.msra.mxu0 0.0
        %7824 = vmatprep.subr.mxu0 0.0
        %7825 = vmatpush2.msra.mxu0 0.0
        %7826 = vmatprep.subr.mxu0 0.0
        %7827 = vmatpush2.msra.mxu0 0.0
        %7828 = vmatprep.subr.mxu0 0.0
        %7829 = vmatpush2.msra.mxu0 0.0
        %7830 = vmatprep.subr.mxu0 0.0
        %7831 = vmatpush2.msra.mxu0 0.0
        %7832 = vmatprep.subr.mxu0 0.0
        %7833 = vmatpush2.msra.mxu0 0.0
        %7834 = vmatprep.subr.mxu0 0.0
        %7835 = vmatpush2.msra.mxu0 0.0
        %7836 = vmatprep.subr.mxu0 0.0
        %7837 = vmatpush2.msra.mxu0 0.0
        %7838 = vmatprep.subr.mxu0 0.0
        %7839 = vmatpush2.msra.mxu0 0.0
        %7840 = vmatprep.subr.mxu0 0.0
        %7841 = vmatpush2.msra.mxu0 0.0
        %7842 = vmatprep.subr.mxu0 0.0
        %7843 = vmatpush2.msra.mxu0 0.0
        %7844 = vmatprep.subr.mxu0 0.0
        %7845 = vmatpush2.msra.mxu0 0.0
        %7846 = vmatprep.subr.mxu0 0.0
        %7847 = vmatpush2.msra.mxu0 0.0
        %7848 = vmatprep.subr.mxu0 0.0
        %7849 = vmatpush2.msra.mxu0 0.0
        %7850 = vmatprep.subr.mxu0 0.0
        %7851 = vmatpush2.msra.mxu0 0.0
        %7852 = vmatprep.mubr.f32.mxu0 0.0
        %7853 = vmatmul.mubr.f32.gmra.mxu0 %v7786
        %v7854 = vpop.f32.mrf.mxu0
        %v7855 = vadd.f32 0.0, %v7854
        %v7856 = vpop.f32.mrf.mxu0
        %7857 = vdwg.mxu0
        %v7858 = vadd.f32 %v7155, %v7855
        %v7859 = vxor.u32 %v7858, 2147483648
        %v7860 = vmul.f32 %v7859, 1.442695
        %v7861 = vpow.pop %v7860
        %v7862 = vadd.f32 %v7861, 1.0
        %v7863 = vrcp.pop %v7862
        %v7864 = vmul.f32 1.0, %v7863
        %v7865 = vtanh.pop %v7858
        %v7866 = vmul.f32 %v7864, %v7669
        %7868 = vrot.lane.b32.xlu0 %v7865, 64
        %v7869 = vpop.permute.xlu0 %7868
        %v7871 = vmul.f32 %v7864, %v7869
        %7873 = vrot.lane.b32.xlu0 %v7871, 32
        %v7874 = vpop.permute.xlu0 %7873
        %v7876 = vadd.f32 %v7866, %v7874
        %v7877 = vtanh.pop %v7876
        %7879 = vrot.lane.b32.xlu0 %v7877, 64
        %v7880 = vpop.permute.xlu0 %7879
        %v7882 = vmul.f32 %v7864, %v7880
        %v7884 = vlaneseq
        %v7885 = vshrl.u32 %v7884, 7
        %v7886 = vsub.s32 0, %v7885
        %v7887 = vrot.slane %v7882, %v7886
        %7888 = vrot.lane.b32.xlu0 %v7887, 32
        %v7889 = vpop.permute.xlu0 %7888
        %7892 = vrot.lane.b32.xlu0 %v7785, 112
        %v7893 = vpop.permute.xlu0 %7892
        %v7895 = vsel %vm1437, %v7889, %v7893
        %v7897 = vsel %vm7274, %v7895, 0
        %7899 = vmatprep.subr.mxu0 0.0
        %7900 = vmatpush1.msra.mxu0 0.0
        %7901 = vmatprep.subr.mxu0 0.0
        %7902 = vmatpush1.msra.mxu0 0.0
        %7903 = vmatprep.subr.mxu0 0.0
        %7904 = vmatpush1.msra.mxu0 0.0
        %7905 = vmatprep.subr.mxu0 0.0
        %7906 = vmatpush1.msra.mxu0 0.0
        %7907 = vmatprep.subr.mxu0 0.0
        %7908 = vmatpush1.msra.mxu0 0.0
        %7909 = vmatprep.subr.mxu0 0.0
        %7910 = vmatpush1.msra.mxu0 0.0
        %7911 = vmatprep.subr.mxu0 0.0
        %7912 = vmatpush1.msra.mxu0 0.0
        %7913 = vmatprep.subr.mxu0 0.0
        %7914 = vmatpush1.msra.mxu0 0.0
        %7915 = vmatprep.subr.mxu0 0.0
        %7916 = vmatpush1.msra.mxu0 0.0
        %7917 = vmatprep.subr.mxu0 0.0
        %7918 = vmatpush1.msra.mxu0 0.0
        %7919 = vmatprep.subr.mxu0 0.0
        %7920 = vmatpush1.msra.mxu0 %v7165
        %7921 = vmatprep.subr.mxu0 0.0
        %7922 = vmatpush1.msra.mxu0 %v7164
        %7923 = vmatprep.subr.mxu0 0.0
        %7924 = vmatpush1.msra.mxu0 %v7163
        %7925 = vmatprep.subr.mxu0 0.0
        %7926 = vmatpush1.msra.mxu0 %v7162
        %7927 = vmatprep.subr.mxu0 0.0
        %7928 = vmatpush1.msra.mxu0 %v7161
        %7929 = vmatprep.subr.mxu0 0.0
        %7930 = vmatpush1.msra.mxu0 %v7160
        %7931 = vmatprep.subr.mxu0 0.0
        %7932 = vmatpush2.msra.mxu0 0.0
        %7933 = vmatprep.subr.mxu0 0.0
        %7934 = vmatpush2.msra.mxu0 0.0
        %7935 = vmatprep.subr.mxu0 0.0
        %7936 = vmatpush2.msra.mxu0 0.0
        %7937 = vmatprep.subr.mxu0 0.0
        %7938 = vmatpush2.msra.mxu0 0.0
        %7939 = vmatprep.subr.mxu0 0.0
        %7940 = vmatpush2.msra.mxu0 0.0
        %7941 = vmatprep.subr.mxu0 0.0
        %7942 = vmatpush2.msra.mxu0 0.0
        %7943 = vmatprep.subr.mxu0 0.0
        %7944 = vmatpush2.msra.mxu0 0.0
        %7945 = vmatprep.subr.mxu0 0.0
        %7946 = vmatpush2.msra.mxu0 0.0
        %7947 = vmatprep.subr.mxu0 0.0
        %7948 = vmatpush2.msra.mxu0 0.0
        %7949 = vmatprep.subr.mxu0 0.0
        %7950 = vmatpush2.msra.mxu0 0.0
        %7951 = vmatprep.subr.mxu0 0.0
        %7952 = vmatpush2.msra.mxu0 0.0
        %7953 = vmatprep.subr.mxu0 0.0
        %7954 = vmatpush2.msra.mxu0 0.0
        %7955 = vmatprep.subr.mxu0 0.0
        %7956 = vmatpush2.msra.mxu0 0.0
        %7957 = vmatprep.subr.mxu0 0.0
        %7958 = vmatpush2.msra.mxu0 0.0
        %7959 = vmatprep.subr.mxu0 0.0
        %7960 = vmatpush2.msra.mxu0 0.0
        %7961 = vmatprep.subr.mxu0 0.0
        %7962 = vmatpush2.msra.mxu0 0.0
        %7963 = vmatprep.mubr.f32.mxu0 0.0
        %7964 = vmatmul.mubr.f32.gmra.mxu0 %v7897
        %v7965 = vpop.f32.mrf.mxu0
        %v7966 = vadd.f32 %v7166, %v7965
        %v7967 = vpop.f32.mrf.mxu0
        %7968 = vdwg.mxu0
        %v7969 = vxor.u32 %v7966, 2147483648
        %v7970 = vmul.f32 %v7969, 1.442695
        %v7971 = vpow.pop %v7970
        %v7972 = vadd.f32 %v7971, 1.0
        %v7973 = vrcp.pop %v7972
        %v7974 = vmul.f32 1.0, %v7973
        %v7975 = vtanh.pop %v7966
        %v7976 = vmul.f32 %v7974, %v7779
        %7978 = vrot.lane.b32.xlu0 %v7975, 96
        %v7979 = vpop.permute.xlu0 %7978
        %v7981 = vmul.f32 %v7974, %v7979
        %7983 = vrot.lane.b32.xlu0 %v7981, 16
        %v7984 = vpop.permute.xlu0 %7983
        %v7986 = vadd.f32 %v7976, %v7984
        %v7987 = vtanh.pop %v7986
        %7989 = vrot.lane.b32.xlu0 %v7987, 32
        %v7990 = vpop.permute.xlu0 %7989
        %v7992 = vmul.f32 %v7974, %v7990
        %v7993 = vld [vmem:[#allocation18] sm:$0xff]
        %v7994 = vld [vmem:[#allocation18 + $0x8] sm:$0xff]
        %v7995 = vld [vmem:[#allocation20] sm:$0x1]
        %7997 = vrot.lane.b32.xlu0 %v7992, 80
        %v7998 = vpop.permute.xlu0 %7997
        %vm7999 = vcmask 130048
        %v8000 = vsel %vm7999, %v7998, 0
        %8002 = vmatprep.subr.mxu0 0.0
        %8003 = vmatpush1.msra.mxu0 0.0
        %8004 = vmatprep.subr.mxu0 0.0
        %8005 = vmatpush1.msra.mxu0 0.0
        %8006 = vmatprep.subr.mxu0 0.0
        %8007 = vmatpush1.msra.mxu0 0.0
        %8008 = vmatprep.subr.mxu0 0.0
        %8009 = vmatpush1.msra.mxu0 0.0
        %8010 = vmatprep.subr.mxu0 0.0
        %8011 = vmatpush1.msra.mxu0 0.0
        %8012 = vmatprep.subr.mxu0 0.0
        %8013 = vmatpush1.msra.mxu0 0.0
        %8014 = vmatprep.subr.mxu0 0.0
        %8015 = vmatpush1.msra.mxu0 0.0
        %8016 = vmatprep.subr.mxu0 0.0
        %8017 = vmatpush1.msra.mxu0 0.0
        %8018 = vmatprep.subr.mxu0 0.0
        %8019 = vmatpush1.msra.mxu0 0.0
        %8020 = vmatprep.subr.mxu0 0.0
        %8021 = vmatpush1.msra.mxu0 0.0
        %8022 = vmatprep.subr.mxu0 0.0
        %8023 = vmatpush1.msra.mxu0 0.0
        %8024 = vmatprep.subr.mxu0 0.0
        %8025 = vmatpush1.msra.mxu0 0.0
        %8026 = vmatprep.subr.mxu0 0.0
        %8027 = vmatpush1.msra.mxu0 0.0
        %8028 = vmatprep.subr.mxu0 0.0
        %8029 = vmatpush1.msra.mxu0 0.0
        %8030 = vmatprep.subr.mxu0 0.0
        %8031 = vmatpush1.msra.mxu0 %v7994
        %8032 = vmatprep.subr.mxu0 0.0
        %8033 = vmatpush1.msra.mxu0 %v7993
        %8034 = vmatprep.subr.mxu0 0.0
        %8035 = vmatpush2.msra.mxu0 0.0
        %8036 = vmatprep.subr.mxu0 0.0
        %8037 = vmatpush2.msra.mxu0 0.0
        %8038 = vmatprep.subr.mxu0 0.0
        %8039 = vmatpush2.msra.mxu0 0.0
        %8040 = vmatprep.subr.mxu0 0.0
        %8041 = vmatpush2.msra.mxu0 0.0
        %8042 = vmatprep.subr.mxu0 0.0
        %8043 = vmatpush2.msra.mxu0 0.0
        %8044 = vmatprep.subr.mxu0 0.0
        %8045 = vmatpush2.msra.mxu0 0.0
        %8046 = vmatprep.subr.mxu0 0.0
        %8047 = vmatpush2.msra.mxu0 0.0
        %8048 = vmatprep.subr.mxu0 0.0
        %8049 = vmatpush2.msra.mxu0 0.0
        %8050 = vmatprep.subr.mxu0 0.0
        %8051 = vmatpush2.msra.mxu0 0.0
        %8052 = vmatprep.subr.mxu0 0.0
        %8053 = vmatpush2.msra.mxu0 0.0
        %8054 = vmatprep.subr.mxu0 0.0
        %8055 = vmatpush2.msra.mxu0 0.0
        %8056 = vmatprep.subr.mxu0 0.0
        %8057 = vmatpush2.msra.mxu0 0.0
        %8058 = vmatprep.subr.mxu0 0.0
        %8059 = vmatpush2.msra.mxu0 0.0
        %8060 = vmatprep.subr.mxu0 0.0
        %8061 = vmatpush2.msra.mxu0 0.0
        %8062 = vmatprep.subr.mxu0 0.0
        %8063 = vmatpush2.msra.mxu0 0.0
        %8064 = vmatprep.subr.mxu0 0.0
        %8065 = vmatpush2.msra.mxu0 0.0
        %8066 = vmatprep.mubr.f32.mxu0 0.0
        %8067 = vmatmul.mubr.f32.gmra.mxu0 %v8000
        %v8068 = vpop.f32.mrf.mxu0
        %v8069 = vadd.f32 %v7995, %v8068
        %v8070 = vpop.f32.mrf.mxu0
        %8071 = vdwg.mxu0
        %v8072 = vmax.f32 %v8069, 0.0
        %v8073 = vld [vmem:[#allocation21] sm:$0xff]
        %v8074 = vld [vmem:[#allocation21 + $0x8] sm:$0xff]
        %v8075 = vld [vmem:[#allocation21 + $0x10] sm:$0xff]
        %v8076 = vld [vmem:[#allocation21 + $0x18] sm:$0xff]
        %v8077 = vld [vmem:[#allocation23] sm:$0x1]
        %v8079 = vsel %vm1437, %v8072, 0
        %8081 = vmatprep.subr.mxu0 0.0
        %8082 = vmatpush1.msra.mxu0 0.0
        %8083 = vmatprep.subr.mxu0 0.0
        %8084 = vmatpush1.msra.mxu0 0.0
        %8085 = vmatprep.subr.mxu0 0.0
        %8086 = vmatpush1.msra.mxu0 0.0
        %8087 = vmatprep.subr.mxu0 0.0
        %8088 = vmatpush1.msra.mxu0 0.0
        %8089 = vmatprep.subr.mxu0 0.0
        %8090 = vmatpush1.msra.mxu0 0.0
        %8091 = vmatprep.subr.mxu0 0.0
        %8092 = vmatpush1.msra.mxu0 0.0
        %8093 = vmatprep.subr.mxu0 0.0
        %8094 = vmatpush1.msra.mxu0 0.0
        %8095 = vmatprep.subr.mxu0 0.0
        %8096 = vmatpush1.msra.mxu0 0.0
        %8097 = vmatprep.subr.mxu0 0.0
        %8098 = vmatpush1.msra.mxu0 0.0
        %8099 = vmatprep.subr.mxu0 0.0
        %8100 = vmatpush1.msra.mxu0 0.0
        %8101 = vmatprep.subr.mxu0 0.0
        %8102 = vmatpush1.msra.mxu0 0.0
        %8103 = vmatprep.subr.mxu0 0.0
        %8104 = vmatpush1.msra.mxu0 0.0
        %8105 = vmatprep.subr.mxu0 0.0
        %8106 = vmatpush1.msra.mxu0 %v8076
        %8107 = vmatprep.subr.mxu0 0.0
        %8108 = vmatpush1.msra.mxu0 %v8075
        %8109 = vmatprep.subr.mxu0 0.0
        %8110 = vmatpush1.msra.mxu0 %v8074
        %8111 = vmatprep.subr.mxu0 0.0
        %8112 = vmatpush1.msra.mxu0 %v8073
        %8113 = vmatprep.subr.mxu0 0.0
        %8114 = vmatpush2.msra.mxu0 0.0
        %8115 = vmatprep.subr.mxu0 0.0
        %8116 = vmatpush2.msra.mxu0 0.0
        %8117 = vmatprep.subr.mxu0 0.0
        %8118 = vmatpush2.msra.mxu0 0.0
        %8119 = vmatprep.subr.mxu0 0.0
        %8120 = vmatpush2.msra.mxu0 0.0
        %8121 = vmatprep.subr.mxu0 0.0
        %8122 = vmatpush2.msra.mxu0 0.0
        %8123 = vmatprep.subr.mxu0 0.0
        %8124 = vmatpush2.msra.mxu0 0.0
        %8125 = vmatprep.subr.mxu0 0.0
        %8126 = vmatpush2.msra.mxu0 0.0
        %8127 = vmatprep.subr.mxu0 0.0
        %8128 = vmatpush2.msra.mxu0 0.0
        %8129 = vmatprep.subr.mxu0 0.0
        %8130 = vmatpush2.msra.mxu0 0.0
        %8131 = vmatprep.subr.mxu0 0.0
        %8132 = vmatpush2.msra.mxu0 0.0
        %8133 = vmatprep.subr.mxu0 0.0
        %8134 = vmatpush2.msra.mxu0 0.0
        %8135 = vmatprep.subr.mxu0 0.0
        %8136 = vmatpush2.msra.mxu0 0.0
        %8137 = vmatprep.subr.mxu0 0.0
        %8138 = vmatpush2.msra.mxu0 0.0
        %8139 = vmatprep.subr.mxu0 0.0
        %8140 = vmatpush2.msra.mxu0 0.0
        %8141 = vmatprep.subr.mxu0 0.0
        %8142 = vmatpush2.msra.mxu0 0.0
        %8143 = vmatprep.subr.mxu0 0.0
        %8144 = vmatpush2.msra.mxu0 0.0
        %8145 = vmatprep.mubr.f32.mxu0 0.0
        %8146 = vmatmul.mubr.f32.gmra.mxu0 %v8079
        %v8147 = vpop.f32.mrf.mxu0
        %v8148 = vadd.f32 %v8077, %v8147
        %v8149 = vpop.f32.mrf.mxu0
        %8150 = vdwg.mxu0
        %8151 = vst [vmem:[%s687] sm:$0x1] %v8148
        %p8152 = scmp.lt.s32.totalorder %s33, 1
        %s8153 = scalar_select %p8152, %s33, 1
        %s8154 = scalar_lea.vmem %s15, %s8153
        // Predicated region
        $region133: #{lstm_model_forward.1} parent=79 // pred_check
          %p8155 = pneg %p376
        $region134: #{lstm_model_forward.1} parent=79 // pred_check_branch
          %8157 = sbr.rel (%p8155) target = $region136
        $region135: #{lstm_model_forward.1} parent=79 // pred_region
          _
        $region136: #{lstm_model_forward.1} parent=79 // pred_fallthru
          _
      $region80: #{lstm_model_forward.1} parent=5 // pred_fallthru
        _
      %p8158 = scmp.le.s32.totalorder 2, %s28
      // Predicated region
      $region137: #{lstm_model_forward.1} parent=5 // pred_check
        %p8159 = pneg %p8158
      $region138: #{lstm_model_forward.1} parent=5 // pred_check_branch
        %8161 = sbr.rel (%p8159) target = $region140
      $region139: #{lstm_model_forward.1} parent=5 // pred_region
        %s8162 = ssub.s32 %s28, 2
        // Predicated region
        $region141: #{lstm_model_forward.1} parent=139 // pred_check
          %p8163 = pneg %p382
        $region142: #{lstm_model_forward.1} parent=139 // pred_check_branch
          %8165 = sbr.rel (%p8163) target = $region144
        $region143: #{lstm_model_forward.1} parent=139 // pred_region
          %p8166 = scmp.lt.s32.totalorder %s34, 1
          %s8167 = scalar_select %p8166, %s34, 1
          %s8168 = scalar_lea.vmem %s15, %s8167
        $region144: #{lstm_model_forward.1} parent=139 // pred_fallthru
          _
      $region140: #{lstm_model_forward.1} parent=5 // pred_fallthru
        _
    $region6: #{lstm_model_forward.1} parent=1 // loop_footer
      %s32 = sadd.s32 1, %s28
    $region7: #{lstm_model_forward.1} parent=1 // loop_footer_branch
      %27 = sbr.rel target = $region3
    $region8: #{lstm_model_forward.1} parent=1 // loop_exit
      _
    %8169 = vsyncpa [#allocation5], 1
    %s8170 = scalar_lea.sflag [#allocation5], 1
    %8171 = vsyncpa %s8170, 1
    %8172 = vsyncpa [#allocation7], 1
    %8173 = vsyncpa [#allocation10], 1
    %8174 = vsyncpa [#allocation13], 1
    %8175 = vsyncpa [#allocation16], 1
    %8176 = vsyncpa [#allocation19], 1
    %8177 = vsyncpa [#allocation22], 1

</llo_original>
